<compile_context>
chip_gen: v7x
topology: tpu7x:2x2x1
jax: 0.10.0
libtpu: 0.0.40
codegen_flags: <defaults>
</compile_context>

<pallas_src>
from functools import partial

import numpy as np
import jax
import jax.numpy as jnp
from jax import lax
from jax.experimental import pallas as pl
from jax.experimental.pallas import tpu as pltpu

RATES = (3, 6, 9)
RMAX = max(RATES)
BN_EPS = 1e-5
LANE = 128


def _ceil_to(x, m):
    return ((x + m - 1) // m) * m


# ----------------------------------------------------------------------------
# Pallas kernel.  Grid = (batch, row_tile).  One grid step produces a
# (TILE_H * W, Cout_p) slab of the output.
# ----------------------------------------------------------------------------
def _aspp_kernel(x_hbm, mean_ref, w1_ref, w2_ref, w3_ref, w4_ref,
                 wp_ref, wo_ref, b_ref, out_ref, xbuf, sem, pool_sc):
    n = pl.program_id(0)
    r = pl.program_id(1)
    num_r = pl.num_programs(1)

    _, th_in, wpad, cin = xbuf.shape
    th = th_in - 2 * RMAX            # output rows produced by this tile
    w = wpad - 2 * RMAX              # output cols (full width)
    tile = th * w
    cout = wo_ref.shape[1]           # lane-padded output channels
    cdt = w1_ref.dtype               # compute dtype (bf16 fast path / f32 check path)

    # ---- manual halo-window DMA, double-buffered along the row-tile axis ----
    def fetch(row_tile, slot):
        pltpu.make_async_copy(
            x_hbm.at[n, pl.ds(row_tile * th, th_in)],
            xbuf.at[slot], sem.at[slot]).start()

    @pl.when(r == 0)
    def _():
        fetch(0, 0)                                    # prime this image

    slot = lax.rem(r, 2)
    pltpu.make_async_copy(                             # wait for the current tile
        x_hbm.at[n, pl.ds(0, th_in)], xbuf.at[slot], sem.at[slot]).wait()

    @pl.when(r + 1 < num_r)
    def _():
        fetch(r + 1, 1 - slot)                         # prefetch next row tile

    # ---- helpers ----
    def relu_bias(acc, i):                   # BN scale already folded into weights
        return jnp.maximum(acc + b_ref[i:i + 1, :], 0.0)

    def tap(ky, kx, rate):                   # zero-padded shifted view, flattened
        ro = RMAX + (ky - 1) * rate
        co = RMAX + (kx - 1) * rate
        return xbuf[slot, ro:ro + th, co:co + w, :].reshape(tile, cin)

    # ---- pooled branch: per-image (1, Cout) broadcast bias, computed once per
    #      image (r == 0), stashed in VMEM scratch and reused by all row tiles.
    @pl.when(r == 0)
    def _():
        x5 = relu_bias(jnp.dot(mean_ref[...], wp_ref[...],
                               preferred_element_type=jnp.float32), 4)
        pool_sc[...] = (jnp.dot(x5.astype(cdt), wo_ref[4 * cout:5 * cout, :],
                                preferred_element_type=jnp.float32)
                        + b_ref[5:6, :])

    # ---- branch 1 (1x1 conv), fused straight into the output conv ----
    center = tap(1, 1, 0)                    # shared center slab (rate-independent)
    x1 = relu_bias(jnp.dot(center, w1_ref[...],
                           preferred_element_type=jnp.float32), 0)
    y = jnp.dot(x1.astype(cdt), wo_ref[0:cout, :],
                preferred_element_type=jnp.float32)

    # ---- dilated 3x3 branches: im2col in VMEM -> one K=9*Cin matmul each ----
    for bi, (rate, w_ref) in enumerate(zip(RATES, (w2_ref, w3_ref, w4_ref)), 1):
        cols = [center if (ky == 1 and kx == 1) else tap(ky, kx, rate)
                for ky in range(3) for kx in range(3)]
        cat = jnp.concatenate(cols, axis=1)
        xb = relu_bias(jnp.dot(cat, w_ref[...],
                               preferred_element_type=jnp.float32), bi)
        y = y + jnp.dot(xb.astype(cdt), wo_ref[bi * cout:(bi + 1) * cout, :],
                        preferred_element_type=jnp.float32)

    # ---- finalize: pooled-branch bias (+ output-conv bias already folded in) ----
    out_ref[...] = jnp.maximum(y + pool_sc[...], 0.0).astype(out_ref.dtype)


# ----------------------------------------------------------------------------
# Wrapper
# ----------------------------------------------------------------------------
def _pick_tile_h(h, w, tile_h):
    for th in range(min(tile_h, h), 0, -1):
        if h % th == 0 and (th * w) % 8 == 0:
            return th
    return h


@partial(jax.jit, static_argnames=("out_channels", "tile_h", "compute_dtype", "nchw"))
def aspp_forward(x, params, *, out_channels, tile_h=8,
                 compute_dtype=jnp.bfloat16, nchw=True):
    """x: (N, Cin, H, W) if nchw else (N, H, W, Cin). Returns same layout, Cout channels."""
    if nchw:
        x = jnp.transpose(x, (0, 2, 3, 1))             # NCHW -> NHWC (fused under jit)
    n, h, w, cin = x.shape
    cin_p, cout_p = params["w1"].shape
    th = _pick_tile_h(h, w, tile_h)
    num_r = h // th
    th_in = th + 2 * RMAX
    wpad = w + 2 * RMAX
    tile = th * w

    # pooled-branch mean (exact f32 cross-tile reduction done here, not in-kernel)
    mean = jnp.mean(x, axis=(1, 2), dtype=jnp.float32)                  # (N, Cin)
    mean = jnp.pad(mean, ((0, 0), (0, cin_p - cin)))[:, None, :].astype(compute_dtype)

    # single zero-padded activation copy; channels padded to a lane multiple
    xp = jnp.pad(x.astype(compute_dtype),
                 ((0, 0), (RMAX, RMAX), (RMAX, RMAX), (0, cin_p - cin)))

    wts = [params[k].astype(compute_dtype) for k in ("w1", "w2", "w3", "w4", "wp", "wo")]
    biases = params["biases"]                                            # (6, Cout_p) f32

    def const_spec(a):
        nd = a.ndim
        return pl.BlockSpec(a.shape, lambda i, j, _nd=nd: (0,) * _nd)

    in_specs = [pl.BlockSpec(memory_space=pl.ANY),                       # padded x (HBM)
                pl.BlockSpec((None, 1, cin_p), lambda i, j: (i, 0, 0))]  # per-image mean
    in_specs += [const_spec(a) for a in wts] + [const_spec(biases)]
    out_specs = pl.BlockSpec((None, tile, cout_p), lambda i, j: (i, j, 0))

    itemsize = np.dtype(compute_dtype).itemsize
    w_bytes = sum(int(np.prod(p.shape)) for p in wts) * itemsize + int(biases.size) * 4
    vmem_est = (2 * th_in * wpad * cin_p * itemsize       # halo double buffer
                + 2 * w_bytes                             # resident weights (conservative)
                + 2 * tile * cout_p * 4                   # output double buffer
                + 2 * 9 * tile * cin_p * itemsize         # im2col temporaries
                + (4 << 20))
    vmem_limit = int(min(max(vmem_est, 32 << 20), 48 << 20))

    out = pl.pallas_call(
        _aspp_kernel,
        out_shape=jax.ShapeDtypeStruct((n, h * w, cout_p), jnp.float32),
        grid_spec=pltpu.PrefetchScalarGridSpec(
            num_scalar_prefetch=0,
            grid=(n, num_r),
            in_specs=in_specs,
            out_specs=out_specs,
            scratch_shapes=[pltpu.VMEM((2, th_in, wpad, cin_p), compute_dtype),
                            pltpu.SemaphoreType.DMA((2,)),
                            pltpu.VMEM((1, cout_p), jnp.float32)]),
        compiler_params=pltpu.CompilerParams(
            dimension_semantics=("parallel", "arbitrary"),
            vmem_limit_bytes=vmem_limit),
    )(xp, mean, *wts, biases)

    out = out.reshape(n, h, w, cout_p)[..., :out_channels]
    if nchw:
        out = jnp.transpose(out, (0, 3, 1, 2))
    return out


# ----------------------------------------------------------------------------
# Parameter construction: PyTorch-layout params + folded/padded kernel params
# ----------------------------------------------------------------------------
def init_torch_params(key, in_channels, out_channels):
    ks = jax.random.split(key, 10)

    def conv_w(k, shape, fan_in):
        return jax.random.normal(k, shape, jnp.float32) / np.sqrt(fan_in)

    w1_t = conv_w(ks[0], (out_channels, in_channels, 1, 1), in_channels)
    w2_t = conv_w(ks[1], (out_channels, in_channels, 3, 3), in_channels * 9)
    w3_t = conv_w(ks[2], (out_channels, in_channels, 3, 3), in_channels * 9)
    w4_t = conv_w(ks[3], (out_channels, in_channels, 3, 3), in_channels * 9)
    wp_t = conv_w(ks[4], (out_channels, in_channels, 1, 1), in_channels)
    wo_t = conv_w(ks[5], (out_channels, 5 * out_channels, 1, 1), 5 * out_channels)

    gamma = 0.5 + jax.random.uniform(ks[6], (6, out_channels), jnp.float32)
    beta = 0.1 * jax.random.normal(ks[7], (6, out_channels), jnp.float32)
    rmean = 0.1 * jax.random.normal(ks[8], (6, out_channels), jnp.float32)
    rvar = 0.5 + jax.random.uniform(ks[9], (6, out_channels), jnp.float32)
    return dict(w1_t=w1_t, w2_t=w2_t, w3_t=w3_t, w4_t=w4_t, wp_t=wp_t, wo_t=wo_t,
                gamma=gamma, beta=beta, rmean=rmean, rvar=rvar)


def prepare_kernel_params(tp, in_channels, out_channels):
    cin_p = _ceil_to(in_channels, LANE)
    cout_p = _ceil_to(out_channels, LANE)
    scale = tp["gamma"] / jnp.sqrt(tp["rvar"] + BN_EPS)       # (6, Cout)
    bias = tp["beta"] - tp["rmean"] * scale

    def fold_1x1(w_t, s):      # (O, I, 1, 1) -> (I_p, O_p), BN scale folded on O
        wm = jnp.transpose(w_t[:, :, 0, 0], (1, 0)) * s[None, :]
        return jnp.pad(wm, ((0, cin_p - in_channels), (0, cout_p - out_channels)))

    def fold_3x3(w_t, s):      # (O, I, 3, 3) -> (9*I_p, O_p), tap index = ky*3+kx
        wm = jnp.transpose(w_t, (2, 3, 1, 0)).reshape(9, in_channels, out_channels)
        wm = wm * s[None, None, :]
        wm = jnp.pad(wm, ((0, 0), (0, cin_p - in_channels), (0, cout_p - out_channels)))
        return wm.reshape(9 * cin_p, cout_p)

    # conv_out weight: rows grouped per branch, each branch padded to Cout_p rows
    wo = jnp.transpose(tp["wo_t"][:, :, 0, 0], (1, 0)) * scale[5][None, :]
    wo = wo.reshape(5, out_channels, out_channels)
    wo = jnp.pad(wo, ((0, 0), (0, cout_p - out_channels), (0, cout_p - out_channels)))
    wo = wo.reshape(5 * cout_p, cout_p)

    return dict(w1=fold_1x1(tp["w1_t"], scale[0]),
                w2=fold_3x3(tp["w2_t"], scale[1]),
                w3=fold_3x3(tp["w3_t"], scale[2]),
                w4=fold_3x3(tp["w4_t"], scale[3]),
                wp=fold_1x1(tp["wp_t"], scale[4]),
                wo=wo,
                biases=jnp.pad(bias, ((0, 0), (0, cout_p - out_channels))))


# ----------------------------------------------------------------------------
# Pure-JAX reference (mirrors the PyTorch forward, for validation only)
# ----------------------------------------------------------------------------
def aspp_reference(x, p):
    def bn(y, i):
        g, b = p["gamma"][i], p["beta"][i]
        m, v = p["rmean"][i], p["rvar"][i]
        inv = (g / jnp.sqrt(v + BN_EPS))[None, :, None, None]
        return (y - m[None, :, None, None]) * inv + b[None, :, None, None]

    def conv(y, w, pad, dil):
        return lax.conv_general_dilated(
            y, w, (1, 1), [(pad, pad), (pad, pad)], rhs_dilation=(dil, dil),
            dimension_numbers=("NCHW", "OIHW", "NCHW"))

    relu = lambda z: jnp.maximum(z, 0.0)
    x1 = relu(bn(conv(x, p["w1_t"], 0, 1), 0))
    x2 = relu(bn(conv(x, p["w2_t"], RATES[0], RATES[0]), 1))
    x3 = relu(bn(conv(x, p["w3_t"], RATES[1], RATES[1]), 2))
    x4 = relu(bn(conv(x, p["w4_t"], RATES[2], RATES[2]), 3))
    xm = jnp.mean(x, axis=(2, 3), keepdims=True)
    x5 = relu(bn(conv(xm, p["wp_t"], 0, 1), 4))
    x5 = jnp.broadcast_to(x5, x4.shape)          # bilinear from 1x1 == broadcast
    xcat = jnp.concatenate([x1, x2, x3, x4, x5], axis=1)
    return relu(bn(conv(xcat, p["wo_t"], 0, 1), 5))


if __name__ == "__main__":
    N, Cin, H, W = 2, 4, 16, 16
    Cout = 8

    key = jax.random.PRNGKey(0)
    kx, kp = jax.random.split(key)
    x = jax.random.normal(kx, (N, Cin, H, W), jnp.float32)

    torch_params = init_torch_params(kp, Cin, Cout)
    kparams = prepare_kernel_params(torch_params, Cin, Cout)
    ref = np.asarray(aspp_reference(x, torch_params))

    # f32 compute path: tight check of the kernel logic.
    out_f32 = jax.block_until_ready(
        aspp_forward(x, kparams, out_channels=Cout, tile_h=8,
                     compute_dtype=jnp.float32))
    np.testing.assert_allclose(np.asarray(out_f32), ref, rtol=1e-3, atol=1e-3)

    # bf16 fast path (default): loose tolerance appropriate for bf16 matmuls.
    out_bf16 = jax.block_until_ready(
        aspp_forward(x, kparams, out_channels=Cout, tile_h=8))
    np.testing.assert_allclose(np.asarray(out_bf16), ref, rtol=1e-1, atol=1.5e-1)

    print("KERNEL_OK")
</pallas_src>

<mosaic_0001>
module attributes {stable_mosaic.version = 11 : i64} {
  func.func @_aspp_kernel(%arg0: i32, %arg1: i32, %arg2: memref<2x34x34x128xf32, #tpu.memory_space<any>>, %arg3: memref<1x1x128xf32, #tpu.memory_space<vmem>>, %arg4: memref<128x128xf32, #tpu.memory_space<vmem>>, %arg5: memref<1152x128xf32, #tpu.memory_space<vmem>>, %arg6: memref<1152x128xf32, #tpu.memory_space<vmem>>, %arg7: memref<1152x128xf32, #tpu.memory_space<vmem>>, %arg8: memref<128x128xf32, #tpu.memory_space<vmem>>, %arg9: memref<640x128xf32, #tpu.memory_space<vmem>>, %arg10: memref<6x128xf32, #tpu.memory_space<vmem>>, %arg11: memref<1x128x128xf32, #tpu.memory_space<vmem>>, %arg12: memref<2x26x34x128xf32, #tpu.memory_space<vmem>>, %arg13: memref<2x!tpu.dma_semaphore, #tpu.memory_space<semaphore_mem>>, %arg14: memref<1x128xf32, #tpu.memory_space<vmem>>) attributes {dimension_semantics = [#tpu.dimension_semantics<parallel>, #tpu.dimension_semantics<arbitrary>], iteration_bounds = array<i64: 2, 2>, scalar_prefetch = 0 : i64, scratch_operands = 3 : i64, tpu.core_type = #tpu.core_type<tc>, window_params = [{}, {transform_indices = @transform_1, window_bounds = array<i64: 1, 1, 128>}, {pipeline_mode = #tpu.pipeline_mode<synchronous>, transform_indices = @transform_2, window_bounds = array<i64: 128, 128>}, {pipeline_mode = #tpu.pipeline_mode<synchronous>, transform_indices = @transform_3, window_bounds = array<i64: 1152, 128>}, {pipeline_mode = #tpu.pipeline_mode<synchronous>, transform_indices = @transform_4, window_bounds = array<i64: 1152, 128>}, {pipeline_mode = #tpu.pipeline_mode<synchronous>, transform_indices = @transform_5, window_bounds = array<i64: 1152, 128>}, {pipeline_mode = #tpu.pipeline_mode<synchronous>, transform_indices = @transform_6, window_bounds = array<i64: 128, 128>}, {pipeline_mode = #tpu.pipeline_mode<synchronous>, transform_indices = @transform_7, window_bounds = array<i64: 640, 128>}, {pipeline_mode = #tpu.pipeline_mode<synchronous>, transform_indices = @transform_8, window_bounds = array<i64: 6, 128>}, {transform_indices = @transform_9, window_bounds = array<i64: 1, 128, 128>}]} {
    %c0_i32 = arith.constant 0 : i32
    %0 = arith.cmpi eq, %arg1, %c0_i32 : i32
    %1 = arith.extui %0 : i1 to i32
    %c0_i32_0 = arith.constant 0 : i32
    %2 = arith.cmpi ne, %1, %c0_i32_0 : i32
    scf.if %2 {
      %c0_i32_115 = arith.constant 0 : i32
      %c0_i32_116 = arith.constant 0 : i32
      %c0_i32_117 = arith.constant 0 : i32
      %c0_i32_118 = arith.constant 0 : i32
      %c0_i32_119 = arith.constant 0 : i32
      %167 = tpu.memref_slice %arg2[%arg0, %c0_i32_117, %c0_i32_118, %c0_i32_119] : memref<2x34x34x128xf32, #tpu.memory_space<any>> -> memref<1x26x34x128xf32, #tpu.memory_space<any>>
      %168 = tpu.memref_squeeze %167 : memref<1x26x34x128xf32, #tpu.memory_space<any>> -> memref<26x34x128xf32, #tpu.memory_space<any>>
      %c0_i32_120 = arith.constant 0 : i32
      %c0_i32_121 = arith.constant 0 : i32
      %c0_i32_122 = arith.constant 0 : i32
      %169 = tpu.memref_slice %arg12[%c0_i32_115, %c0_i32_120, %c0_i32_121, %c0_i32_122] : memref<2x26x34x128xf32, #tpu.memory_space<vmem>> -> memref<1x26x34x128xf32, #tpu.memory_space<vmem>>
      %170 = tpu.memref_squeeze %169 : memref<1x26x34x128xf32, #tpu.memory_space<vmem>> -> memref<26x34x128xf32, #tpu.memory_space<vmem>>
      %171 = tpu.memref_slice %arg13[%c0_i32_116] : memref<2x!tpu.dma_semaphore, #tpu.memory_space<semaphore_mem>> -> memref<1x!tpu.dma_semaphore, #tpu.memory_space<semaphore_mem>>
      %172 = tpu.memref_squeeze %171 : memref<1x!tpu.dma_semaphore, #tpu.memory_space<semaphore_mem>> -> memref<!tpu.dma_semaphore, #tpu.memory_space<semaphore_mem>>
      tpu.enqueue_dma source(%168 : memref<26x34x128xf32, #tpu.memory_space<any>>) target(%170 : memref<26x34x128xf32, #tpu.memory_space<vmem>>) target_semaphore(%172 : memref<!tpu.dma_semaphore, #tpu.memory_space<semaphore_mem>>)
    } else {
    }
    %c2_i32 = arith.constant 2 : i32
    %3 = arith.remsi %arg1, %c2_i32 : i32
    %c0_i32_1 = arith.constant 0 : i32
    %c0_i32_2 = arith.constant 0 : i32
    %c0_i32_3 = arith.constant 0 : i32
    %4 = tpu.memref_slice %arg2[%arg0, %c0_i32_1, %c0_i32_2, %c0_i32_3] : memref<2x34x34x128xf32, #tpu.memory_space<any>> -> memref<1x26x34x128xf32, #tpu.memory_space<any>>
    %5 = tpu.memref_squeeze %4 : memref<1x26x34x128xf32, #tpu.memory_space<any>> -> memref<26x34x128xf32, #tpu.memory_space<any>>
    %c0_i32_4 = arith.constant 0 : i32
    %c0_i32_5 = arith.constant 0 : i32
    %c0_i32_6 = arith.constant 0 : i32
    %6 = tpu.memref_slice %arg12[%3, %c0_i32_4, %c0_i32_5, %c0_i32_6] : memref<2x26x34x128xf32, #tpu.memory_space<vmem>> -> memref<1x26x34x128xf32, #tpu.memory_space<vmem>>
    %7 = tpu.memref_squeeze %6 : memref<1x26x34x128xf32, #tpu.memory_space<vmem>> -> memref<26x34x128xf32, #tpu.memory_space<vmem>>
    %8 = tpu.memref_slice %arg13[%3] : memref<2x!tpu.dma_semaphore, #tpu.memory_space<semaphore_mem>> -> memref<1x!tpu.dma_semaphore, #tpu.memory_space<semaphore_mem>>
    %9 = tpu.memref_squeeze %8 : memref<1x!tpu.dma_semaphore, #tpu.memory_space<semaphore_mem>> -> memref<!tpu.dma_semaphore, #tpu.memory_space<semaphore_mem>>
    tpu.wait_dma2 semaphore(%9 : memref<!tpu.dma_semaphore, #tpu.memory_space<semaphore_mem>>) src(%5 : memref<26x34x128xf32, #tpu.memory_space<any>>) dst(%7 : memref<26x34x128xf32, #tpu.memory_space<vmem>>)
    %c1_i32 = arith.constant 1 : i32
    %10 = arith.addi %arg1, %c1_i32 : i32
    %c2_i32_7 = arith.constant 2 : i32
    %11 = arith.cmpi slt, %10, %c2_i32_7 : i32
    %12 = arith.extui %11 : i1 to i32
    %c0_i32_8 = arith.constant 0 : i32
    %13 = arith.cmpi ne, %12, %c0_i32_8 : i32
    scf.if %13 {
      %c1_i32_115 = arith.constant 1 : i32
      %167 = arith.addi %arg1, %c1_i32_115 : i32
      %c1_i32_116 = arith.constant 1 : i32
      %168 = arith.subi %c1_i32_116, %3 : i32
      %c8_i32 = arith.constant 8 : i32
      %169 = arith.muli %167, %c8_i32 : i32
      %c0_i32_117 = arith.constant 0 : i32
      %c0_i32_118 = arith.constant 0 : i32
      %170 = tpu.memref_slice %arg2[%arg0, %169, %c0_i32_117, %c0_i32_118] : memref<2x34x34x128xf32, #tpu.memory_space<any>> -> memref<1x26x34x128xf32, #tpu.memory_space<any>>
      %171 = tpu.memref_squeeze %170 : memref<1x26x34x128xf32, #tpu.memory_space<any>> -> memref<26x34x128xf32, #tpu.memory_space<any>>
      %c0_i32_119 = arith.constant 0 : i32
      %c0_i32_120 = arith.constant 0 : i32
      %c0_i32_121 = arith.constant 0 : i32
      %172 = tpu.memref_slice %arg12[%168, %c0_i32_119, %c0_i32_120, %c0_i32_121] : memref<2x26x34x128xf32, #tpu.memory_space<vmem>> -> memref<1x26x34x128xf32, #tpu.memory_space<vmem>>
      %173 = tpu.memref_squeeze %172 : memref<1x26x34x128xf32, #tpu.memory_space<vmem>> -> memref<26x34x128xf32, #tpu.memory_space<vmem>>
      %174 = tpu.memref_slice %arg13[%168] : memref<2x!tpu.dma_semaphore, #tpu.memory_space<semaphore_mem>> -> memref<1x!tpu.dma_semaphore, #tpu.memory_space<semaphore_mem>>
      %175 = tpu.memref_squeeze %174 : memref<1x!tpu.dma_semaphore, #tpu.memory_space<semaphore_mem>> -> memref<!tpu.dma_semaphore, #tpu.memory_space<semaphore_mem>>
      tpu.enqueue_dma source(%171 : memref<26x34x128xf32, #tpu.memory_space<any>>) target(%173 : memref<26x34x128xf32, #tpu.memory_space<vmem>>) target_semaphore(%175 : memref<!tpu.dma_semaphore, #tpu.memory_space<semaphore_mem>>)
    } else {
    }
    %c0_i32_9 = arith.constant 0 : i32
    %14 = arith.cmpi eq, %arg1, %c0_i32_9 : i32
    %15 = arith.extui %14 : i1 to i32
    %c0_i32_10 = arith.constant 0 : i32
    %16 = arith.cmpi ne, %15, %c0_i32_10 : i32
    scf.if %16 {
      %c0_115 = arith.constant 0 : index
      %c0_116 = arith.constant 0 : index
      %c0_117 = arith.constant 0 : index
      %167 = vector.load %arg3[%c0_115, %c0_116, %c0_117] : memref<1x1x128xf32, #tpu.memory_space<vmem>>, vector<1x1x128xf32>
      %168 = vector.shape_cast %167 : vector<1x1x128xf32> to vector<1x128xf32>
      %c0_118 = arith.constant 0 : index
      %c0_119 = arith.constant 0 : index
      %169 = vector.load %arg8[%c0_118, %c0_119] : memref<128x128xf32, #tpu.memory_space<vmem>>, vector<128x128xf32>
      %cst_120 = arith.constant dense<0.000000e+00> : vector<1x128xf32>
      %170 = tpu.matmul %168, %169, %cst_120 {dimension_numbers = #tpu.dot_dimension_numbers<[1], [0], [0], [1], [0, 0, 1, 1], [], []>} : vector<1x128xf32>, vector<128x128xf32>, vector<1x128xf32> -> vector<1x128xf32>
      %c4 = arith.constant 4 : index
      %c0_121 = arith.constant 0 : index
      %171 = vector.load %arg10[%c4, %c0_121] : memref<6x128xf32, #tpu.memory_space<vmem>>, vector<1x128xf32>
      %172 = arith.addf %170, %171 : vector<1x128xf32>
      %cst_122 = arith.constant 0.000000e+00 : f32
      %173 = vector.broadcast %cst_122 : f32 to vector<1x128xf32>
      %174 = arith.maximumf %172, %173 : vector<1x128xf32>
      %c512 = arith.constant 512 : index
      %c0_123 = arith.constant 0 : index
      %175 = vector.load %arg9[%c512, %c0_123] : memref<640x128xf32, #tpu.memory_space<vmem>>, vector<128x128xf32>
      %cst_124 = arith.constant dense<0.000000e+00> : vector<1x128xf32>
      %176 = tpu.matmul %174, %175, %cst_124 {dimension_numbers = #tpu.dot_dimension_numbers<[1], [0], [0], [1], [0, 0, 1, 1], [], []>} : vector<1x128xf32>, vector<128x128xf32>, vector<1x128xf32> -> vector<1x128xf32>
      %c5 = arith.constant 5 : index
      %c0_125 = arith.constant 0 : index
      %177 = vector.load %arg10[%c5, %c0_125] : memref<6x128xf32, #tpu.memory_space<vmem>>, vector<1x128xf32>
      %178 = arith.addf %176, %177 : vector<1x128xf32>
      %c0_126 = arith.constant 0 : index
      %c0_127 = arith.constant 0 : index
      %179 = vector.load %arg14[%c0_126, %c0_127] : memref<1x128xf32, #tpu.memory_space<vmem>>, vector<1x128xf32>
      tpu.vector_store %arg14[%c0_126, %c0_127], %178 {strides = array<i32>} : memref<1x128xf32, #tpu.memory_space<vmem>>, vector<1x128xf32>,
    } else {
    }
    %17 = arith.index_cast %3 : i32 to index
    %c9 = arith.constant 9 : index
    %c9_11 = arith.constant 9 : index
    %c0 = arith.constant 0 : index
    %18 = vector.load %arg12[%17, %c9, %c9_11, %c0] : memref<2x26x34x128xf32, #tpu.memory_space<vmem>>, vector<1x8x16x128xf32>
    %19 = vector.shape_cast %18 : vector<1x8x16x128xf32> to vector<8x16x128xf32>
    %20 = vector.shape_cast %19 : vector<8x16x128xf32> to vector<128x128xf32>
    %c0_12 = arith.constant 0 : index
    %c0_13 = arith.constant 0 : index
    %21 = vector.load %arg4[%c0_12, %c0_13] : memref<128x128xf32, #tpu.memory_space<vmem>>, vector<128x128xf32>
    %cst = arith.constant dense<0.000000e+00> : vector<128x128xf32>
    %22 = tpu.matmul %20, %21, %cst {dimension_numbers = #tpu.dot_dimension_numbers<[1], [0], [0], [1], [0, 0, 1, 1], [], []>} : vector<128x128xf32>, vector<128x128xf32>, vector<128x128xf32> -> vector<128x128xf32>
    %c0_14 = arith.constant 0 : index
    %c0_15 = arith.constant 0 : index
    %23 = vector.load %arg10[%c0_14, %c0_15] : memref<6x128xf32, #tpu.memory_space<vmem>>, vector<1x128xf32>
    %24 = vector.broadcast %23 : vector<1x128xf32> to vector<128x128xf32>
    %25 = arith.addf %22, %24 : vector<128x128xf32>
    %cst_16 = arith.constant 0.000000e+00 : f32
    %26 = vector.broadcast %cst_16 : f32 to vector<128x128xf32>
    %27 = arith.maximumf %25, %26 : vector<128x128xf32>
    %c0_17 = arith.constant 0 : index
    %c0_18 = arith.constant 0 : index
    %28 = vector.load %arg9[%c0_17, %c0_18] : memref<640x128xf32, #tpu.memory_space<vmem>>, vector<128x128xf32>
    %cst_19 = arith.constant dense<0.000000e+00> : vector<128x128xf32>
    %29 = tpu.matmul %27, %28, %cst_19 {dimension_numbers = #tpu.dot_dimension_numbers<[1], [0], [0], [1], [0, 0, 1, 1], [], []>} : vector<128x128xf32>, vector<128x128xf32>, vector<128x128xf32> -> vector<128x128xf32>
    %30 = arith.index_cast %3 : i32 to index
    %c6 = arith.constant 6 : index
    %c6_20 = arith.constant 6 : index
    %c0_21 = arith.constant 0 : index
    %31 = vector.load %arg12[%30, %c6, %c6_20, %c0_21] : memref<2x26x34x128xf32, #tpu.memory_space<vmem>>, vector<1x8x16x128xf32>
    %32 = vector.shape_cast %31 : vector<1x8x16x128xf32> to vector<8x16x128xf32>
    %33 = vector.shape_cast %32 : vector<8x16x128xf32> to vector<128x128xf32>
    %34 = arith.index_cast %3 : i32 to index
    %c6_22 = arith.constant 6 : index
    %c9_23 = arith.constant 9 : index
    %c0_24 = arith.constant 0 : index
    %35 = vector.load %arg12[%34, %c6_22, %c9_23, %c0_24] : memref<2x26x34x128xf32, #tpu.memory_space<vmem>>, vector<1x8x16x128xf32>
    %36 = vector.shape_cast %35 : vector<1x8x16x128xf32> to vector<8x16x128xf32>
    %37 = vector.shape_cast %36 : vector<8x16x128xf32> to vector<128x128xf32>
    %38 = arith.index_cast %3 : i32 to index
    %c6_25 = arith.constant 6 : index
    %c12 = arith.constant 12 : index
    %c0_26 = arith.constant 0 : index
    %39 = vector.load %arg12[%38, %c6_25, %c12, %c0_26] : memref<2x26x34x128xf32, #tpu.memory_space<vmem>>, vector<1x8x16x128xf32>
    %40 = vector.shape_cast %39 : vector<1x8x16x128xf32> to vector<8x16x128xf32>
    %41 = vector.shape_cast %40 : vector<8x16x128xf32> to vector<128x128xf32>
    %42 = arith.index_cast %3 : i32 to index
    %c9_27 = arith.constant 9 : index
    %c6_28 = arith.constant 6 : index
    %c0_29 = arith.constant 0 : index
    %43 = vector.load %arg12[%42, %c9_27, %c6_28, %c0_29] : memref<2x26x34x128xf32, #tpu.memory_space<vmem>>, vector<1x8x16x128xf32>
    %44 = vector.shape_cast %43 : vector<1x8x16x128xf32> to vector<8x16x128xf32>
    %45 = vector.shape_cast %44 : vector<8x16x128xf32> to vector<128x128xf32>
    %46 = arith.index_cast %3 : i32 to index
    %c9_30 = arith.constant 9 : index
    %c12_31 = arith.constant 12 : index
    %c0_32 = arith.constant 0 : index
    %47 = vector.load %arg12[%46, %c9_30, %c12_31, %c0_32] : memref<2x26x34x128xf32, #tpu.memory_space<vmem>>, vector<1x8x16x128xf32>
    %48 = vector.shape_cast %47 : vector<1x8x16x128xf32> to vector<8x16x128xf32>
    %49 = vector.shape_cast %48 : vector<8x16x128xf32> to vector<128x128xf32>
    %50 = arith.index_cast %3 : i32 to index
    %c12_33 = arith.constant 12 : index
    %c6_34 = arith.constant 6 : index
    %c0_35 = arith.constant 0 : index
    %51 = vector.load %arg12[%50, %c12_33, %c6_34, %c0_35] : memref<2x26x34x128xf32, #tpu.memory_space<vmem>>, vector<1x8x16x128xf32>
    %52 = vector.shape_cast %51 : vector<1x8x16x128xf32> to vector<8x16x128xf32>
    %53 = vector.shape_cast %52 : vector<8x16x128xf32> to vector<128x128xf32>
    %54 = arith.index_cast %3 : i32 to index
    %c12_36 = arith.constant 12 : index
    %c9_37 = arith.constant 9 : index
    %c0_38 = arith.constant 0 : index
    %55 = vector.load %arg12[%54, %c12_36, %c9_37, %c0_38] : memref<2x26x34x128xf32, #tpu.memory_space<vmem>>, vector<1x8x16x128xf32>
    %56 = vector.shape_cast %55 : vector<1x8x16x128xf32> to vector<8x16x128xf32>
    %57 = vector.shape_cast %56 : vector<8x16x128xf32> to vector<128x128xf32>
    %58 = arith.index_cast %3 : i32 to index
    %c12_39 = arith.constant 12 : index
    %c12_40 = arith.constant 12 : index
    %c0_41 = arith.constant 0 : index
    %59 = vector.load %arg12[%58, %c12_39, %c12_40, %c0_41] : memref<2x26x34x128xf32, #tpu.memory_space<vmem>>, vector<1x8x16x128xf32>
    %60 = vector.shape_cast %59 : vector<1x8x16x128xf32> to vector<8x16x128xf32>
    %61 = vector.shape_cast %60 : vector<8x16x128xf32> to vector<128x128xf32>
    %62 = tpu.concatenate %33, %37, %41, %45, %20, %49, %53, %57, %61 in 1 : vector<128x128xf32>, vector<128x128xf32>, vector<128x128xf32>, vector<128x128xf32>, vector<128x128xf32>, vector<128x128xf32>, vector<128x128xf32>, vector<128x128xf32>, vector<128x128xf32> -> vector<128x1152xf32>
    %c0_42 = arith.constant 0 : index
    %c0_43 = arith.constant 0 : index
    %63 = vector.load %arg5[%c0_42, %c0_43] : memref<1152x128xf32, #tpu.memory_space<vmem>>, vector<1152x128xf32>
    %cst_44 = arith.constant dense<0.000000e+00> : vector<128x128xf32>
    %64 = tpu.matmul %62, %63, %cst_44 {dimension_numbers = #tpu.dot_dimension_numbers<[1], [0], [0], [1], [0, 0, 1, 1], [], []>} : vector<128x1152xf32>, vector<1152x128xf32>, vector<128x128xf32> -> vector<128x128xf32>
    %c1 = arith.constant 1 : index
    %c0_45 = arith.constant 0 : index
    %65 = vector.load %arg10[%c1, %c0_45] : memref<6x128xf32, #tpu.memory_space<vmem>>, vector<1x128xf32>
    %66 = vector.broadcast %65 : vector<1x128xf32> to vector<128x128xf32>
    %67 = arith.addf %64, %66 : vector<128x128xf32>
    %cst_46 = arith.constant 0.000000e+00 : f32
    %68 = vector.broadcast %cst_46 : f32 to vector<128x128xf32>
    %69 = arith.maximumf %67, %68 : vector<128x128xf32>
    %c128 = arith.constant 128 : index
    %c0_47 = arith.constant 0 : index
    %70 = vector.load %arg9[%c128, %c0_47] : memref<640x128xf32, #tpu.memory_space<vmem>>, vector<128x128xf32>
    %cst_48 = arith.constant dense<0.000000e+00> : vector<128x128xf32>
    %71 = tpu.matmul %69, %70, %cst_48 {dimension_numbers = #tpu.dot_dimension_numbers<[1], [0], [0], [1], [0, 0, 1, 1], [], []>} : vector<128x128xf32>, vector<128x128xf32>, vector<128x128xf32> -> vector<128x128xf32>
    %72 = arith.addf %29, %71 : vector<128x128xf32>
    %73 = arith.index_cast %3 : i32 to index
    %c3 = arith.constant 3 : index
    %c3_49 = arith.constant 3 : index
    %c0_50 = arith.constant 0 : index
    %74 = vector.load %arg12[%73, %c3, %c3_49, %c0_50] : memref<2x26x34x128xf32, #tpu.memory_space<vmem>>, vector<1x8x16x128xf32>
    %75 = vector.shape_cast %74 : vector<1x8x16x128xf32> to vector<8x16x128xf32>
    %76 = vector.shape_cast %75 : vector<8x16x128xf32> to vector<128x128xf32>
    %77 = arith.index_cast %3 : i32 to index
    %c3_51 = arith.constant 3 : index
    %c9_52 = arith.constant 9 : index
    %c0_53 = arith.constant 0 : index
    %78 = vector.load %arg12[%77, %c3_51, %c9_52, %c0_53] : memref<2x26x34x128xf32, #tpu.memory_space<vmem>>, vector<1x8x16x128xf32>
    %79 = vector.shape_cast %78 : vector<1x8x16x128xf32> to vector<8x16x128xf32>
    %80 = vector.shape_cast %79 : vector<8x16x128xf32> to vector<128x128xf32>
    %81 = arith.index_cast %3 : i32 to index
    %c3_54 = arith.constant 3 : index
    %c15 = arith.constant 15 : index
    %c0_55 = arith.constant 0 : index
    %82 = vector.load %arg12[%81, %c3_54, %c15, %c0_55] : memref<2x26x34x128xf32, #tpu.memory_space<vmem>>, vector<1x8x16x128xf32>
    %83 = vector.shape_cast %82 : vector<1x8x16x128xf32> to vector<8x16x128xf32>
    %84 = vector.shape_cast %83 : vector<8x16x128xf32> to vector<128x128xf32>
    %85 = arith.index_cast %3 : i32 to index
    %c9_56 = arith.constant 9 : index
    %c3_57 = arith.constant 3 : index
    %c0_58 = arith.constant 0 : index
    %86 = vector.load %arg12[%85, %c9_56, %c3_57, %c0_58] : memref<2x26x34x128xf32, #tpu.memory_space<vmem>>, vector<1x8x16x128xf32>
    %87 = vector.shape_cast %86 : vector<1x8x16x128xf32> to vector<8x16x128xf32>
    %88 = vector.shape_cast %87 : vector<8x16x128xf32> to vector<128x128xf32>
    %89 = arith.index_cast %3 : i32 to index
    %c9_59 = arith.constant 9 : index
    %c15_60 = arith.constant 15 : index
    %c0_61 = arith.constant 0 : index
    %90 = vector.load %arg12[%89, %c9_59, %c15_60, %c0_61] : memref<2x26x34x128xf32, #tpu.memory_space<vmem>>, vector<1x8x16x128xf32>
    %91 = vector.shape_cast %90 : vector<1x8x16x128xf32> to vector<8x16x128xf32>
    %92 = vector.shape_cast %91 : vector<8x16x128xf32> to vector<128x128xf32>
    %93 = arith.index_cast %3 : i32 to index
    %c15_62 = arith.constant 15 : index
    %c3_63 = arith.constant 3 : index
    %c0_64 = arith.constant 0 : index
    %94 = vector.load %arg12[%93, %c15_62, %c3_63, %c0_64] : memref<2x26x34x128xf32, #tpu.memory_space<vmem>>, vector<1x8x16x128xf32>
    %95 = vector.shape_cast %94 : vector<1x8x16x128xf32> to vector<8x16x128xf32>
    %96 = vector.shape_cast %95 : vector<8x16x128xf32> to vector<128x128xf32>
    %97 = arith.index_cast %3 : i32 to index
    %c15_65 = arith.constant 15 : index
    %c9_66 = arith.constant 9 : index
    %c0_67 = arith.constant 0 : index
    %98 = vector.load %arg12[%97, %c15_65, %c9_66, %c0_67] : memref<2x26x34x128xf32, #tpu.memory_space<vmem>>, vector<1x8x16x128xf32>
    %99 = vector.shape_cast %98 : vector<1x8x16x128xf32> to vector<8x16x128xf32>
    %100 = vector.shape_cast %99 : vector<8x16x128xf32> to vector<128x128xf32>
    %101 = arith.index_cast %3 : i32 to index
    %c15_68 = arith.constant 15 : index
    %c15_69 = arith.constant 15 : index
    %c0_70 = arith.constant 0 : index
    %102 = vector.load %arg12[%101, %c15_68, %c15_69, %c0_70] : memref<2x26x34x128xf32, #tpu.memory_space<vmem>>, vector<1x8x16x128xf32>
    %103 = vector.shape_cast %102 : vector<1x8x16x128xf32> to vector<8x16x128xf32>
    %104 = vector.shape_cast %103 : vector<8x16x128xf32> to vector<128x128xf32>
    %105 = tpu.concatenate %76, %80, %84, %88, %20, %92, %96, %100, %104 in 1 : vector<128x128xf32>, vector<128x128xf32>, vector<128x128xf32>, vector<128x128xf32>, vector<128x128xf32>, vector<128x128xf32>, vector<128x128xf32>, vector<128x128xf32>, vector<128x128xf32> -> vector<128x1152xf32>
    %c0_71 = arith.constant 0 : index
    %c0_72 = arith.constant 0 : index
    %106 = vector.load %arg6[%c0_71, %c0_72] : memref<1152x128xf32, #tpu.memory_space<vmem>>, vector<1152x128xf32>
    %cst_73 = arith.constant dense<0.000000e+00> : vector<128x128xf32>
    %107 = tpu.matmul %105, %106, %cst_73 {dimension_numbers = #tpu.dot_dimension_numbers<[1], [0], [0], [1], [0, 0, 1, 1], [], []>} : vector<128x1152xf32>, vector<1152x128xf32>, vector<128x128xf32> -> vector<128x128xf32>
    %c2 = arith.constant 2 : index
    %c0_74 = arith.constant 0 : index
    %108 = vector.load %arg10[%c2, %c0_74] : memref<6x128xf32, #tpu.memory_space<vmem>>, vector<1x128xf32>
    %109 = vector.broadcast %108 : vector<1x128xf32> to vector<128x128xf32>
    %110 = arith.addf %107, %109 : vector<128x128xf32>
    %cst_75 = arith.constant 0.000000e+00 : f32
    %111 = vector.broadcast %cst_75 : f32 to vector<128x128xf32>
    %112 = arith.maximumf %110, %111 : vector<128x128xf32>
    %c256 = arith.constant 256 : index
    %c0_76 = arith.constant 0 : index
    %113 = vector.load %arg9[%c256, %c0_76] : memref<640x128xf32, #tpu.memory_space<vmem>>, vector<128x128xf32>
    %cst_77 = arith.constant dense<0.000000e+00> : vector<128x128xf32>
    %114 = tpu.matmul %112, %113, %cst_77 {dimension_numbers = #tpu.dot_dimension_numbers<[1], [0], [0], [1], [0, 0, 1, 1], [], []>} : vector<128x128xf32>, vector<128x128xf32>, vector<128x128xf32> -> vector<128x128xf32>
    %115 = arith.addf %72, %114 : vector<128x128xf32>
    %116 = arith.index_cast %3 : i32 to index
    %c0_78 = arith.constant 0 : index
    %c0_79 = arith.constant 0 : index
    %c0_80 = arith.constant 0 : index
    %117 = vector.load %arg12[%116, %c0_78, %c0_79, %c0_80] : memref<2x26x34x128xf32, #tpu.memory_space<vmem>>, vector<1x8x16x128xf32>
    %118 = vector.shape_cast %117 : vector<1x8x16x128xf32> to vector<8x16x128xf32>
    %119 = vector.shape_cast %118 : vector<8x16x128xf32> to vector<128x128xf32>
    %120 = arith.index_cast %3 : i32 to index
    %c0_81 = arith.constant 0 : index
    %c9_82 = arith.constant 9 : index
    %c0_83 = arith.constant 0 : index
    %121 = vector.load %arg12[%120, %c0_81, %c9_82, %c0_83] : memref<2x26x34x128xf32, #tpu.memory_space<vmem>>, vector<1x8x16x128xf32>
    %122 = vector.shape_cast %121 : vector<1x8x16x128xf32> to vector<8x16x128xf32>
    %123 = vector.shape_cast %122 : vector<8x16x128xf32> to vector<128x128xf32>
    %124 = arith.index_cast %3 : i32 to index
    %c0_84 = arith.constant 0 : index
    %c18 = arith.constant 18 : index
    %c0_85 = arith.constant 0 : index
    %125 = vector.load %arg12[%124, %c0_84, %c18, %c0_85] : memref<2x26x34x128xf32, #tpu.memory_space<vmem>>, vector<1x8x16x128xf32>
    %126 = vector.shape_cast %125 : vector<1x8x16x128xf32> to vector<8x16x128xf32>
    %127 = vector.shape_cast %126 : vector<8x16x128xf32> to vector<128x128xf32>
    %128 = arith.index_cast %3 : i32 to index
    %c9_86 = arith.constant 9 : index
    %c0_87 = arith.constant 0 : index
    %c0_88 = arith.constant 0 : index
    %129 = vector.load %arg12[%128, %c9_86, %c0_87, %c0_88] : memref<2x26x34x128xf32, #tpu.memory_space<vmem>>, vector<1x8x16x128xf32>
    %130 = vector.shape_cast %129 : vector<1x8x16x128xf32> to vector<8x16x128xf32>
    %131 = vector.shape_cast %130 : vector<8x16x128xf32> to vector<128x128xf32>
    %132 = arith.index_cast %3 : i32 to index
    %c9_89 = arith.constant 9 : index
    %c18_90 = arith.constant 18 : index
    %c0_91 = arith.constant 0 : index
    %133 = vector.load %arg12[%132, %c9_89, %c18_90, %c0_91] : memref<2x26x34x128xf32, #tpu.memory_space<vmem>>, vector<1x8x16x128xf32>
    %134 = vector.shape_cast %133 : vector<1x8x16x128xf32> to vector<8x16x128xf32>
    %135 = vector.shape_cast %134 : vector<8x16x128xf32> to vector<128x128xf32>
    %136 = arith.index_cast %3 : i32 to index
    %c18_92 = arith.constant 18 : index
    %c0_93 = arith.constant 0 : index
    %c0_94 = arith.constant 0 : index
    %137 = vector.load %arg12[%136, %c18_92, %c0_93, %c0_94] : memref<2x26x34x128xf32, #tpu.memory_space<vmem>>, vector<1x8x16x128xf32>
    %138 = vector.shape_cast %137 : vector<1x8x16x128xf32> to vector<8x16x128xf32>
    %139 = vector.shape_cast %138 : vector<8x16x128xf32> to vector<128x128xf32>
    %140 = arith.index_cast %3 : i32 to index
    %c18_95 = arith.constant 18 : index
    %c9_96 = arith.constant 9 : index
    %c0_97 = arith.constant 0 : index
    %141 = vector.load %arg12[%140, %c18_95, %c9_96, %c0_97] : memref<2x26x34x128xf32, #tpu.memory_space<vmem>>, vector<1x8x16x128xf32>
    %142 = vector.shape_cast %141 : vector<1x8x16x128xf32> to vector<8x16x128xf32>
    %143 = vector.shape_cast %142 : vector<8x16x128xf32> to vector<128x128xf32>
    %144 = arith.index_cast %3 : i32 to index
    %c18_98 = arith.constant 18 : index
    %c18_99 = arith.constant 18 : index
    %c0_100 = arith.constant 0 : index
    %145 = vector.load %arg12[%144, %c18_98, %c18_99, %c0_100] : memref<2x26x34x128xf32, #tpu.memory_space<vmem>>, vector<1x8x16x128xf32>
    %146 = vector.shape_cast %145 : vector<1x8x16x128xf32> to vector<8x16x128xf32>
    %147 = vector.shape_cast %146 : vector<8x16x128xf32> to vector<128x128xf32>
    %148 = tpu.concatenate %119, %123, %127, %131, %20, %135, %139, %143, %147 in 1 : vector<128x128xf32>, vector<128x128xf32>, vector<128x128xf32>, vector<128x128xf32>, vector<128x128xf32>, vector<128x128xf32>, vector<128x128xf32>, vector<128x128xf32>, vector<128x128xf32> -> vector<128x1152xf32>
    %c0_101 = arith.constant 0 : index
    %c0_102 = arith.constant 0 : index
    %149 = vector.load %arg7[%c0_101, %c0_102] : memref<1152x128xf32, #tpu.memory_space<vmem>>, vector<1152x128xf32>
    %cst_103 = arith.constant dense<0.000000e+00> : vector<128x128xf32>
    %150 = tpu.matmul %148, %149, %cst_103 {dimension_numbers = #tpu.dot_dimension_numbers<[1], [0], [0], [1], [0, 0, 1, 1], [], []>} : vector<128x1152xf32>, vector<1152x128xf32>, vector<128x128xf32> -> vector<128x128xf32>
    %c3_104 = arith.constant 3 : index
    %c0_105 = arith.constant 0 : index
    %151 = vector.load %arg10[%c3_104, %c0_105] : memref<6x128xf32, #tpu.memory_space<vmem>>, vector<1x128xf32>
    %152 = vector.broadcast %151 : vector<1x128xf32> to vector<128x128xf32>
    %153 = arith.addf %150, %152 : vector<128x128xf32>
    %cst_106 = arith.constant 0.000000e+00 : f32
    %154 = vector.broadcast %cst_106 : f32 to vector<128x128xf32>
    %155 = arith.maximumf %153, %154 : vector<128x128xf32>
    %c384 = arith.constant 384 : index
    %c0_107 = arith.constant 0 : index
    %156 = vector.load %arg9[%c384, %c0_107] : memref<640x128xf32, #tpu.memory_space<vmem>>, vector<128x128xf32>
    %cst_108 = arith.constant dense<0.000000e+00> : vector<128x128xf32>
    %157 = tpu.matmul %155, %156, %cst_108 {dimension_numbers = #tpu.dot_dimension_numbers<[1], [0], [0], [1], [0, 0, 1, 1], [], []>} : vector<128x128xf32>, vector<128x128xf32>, vector<128x128xf32> -> vector<128x128xf32>
    %158 = arith.addf %115, %157 : vector<128x128xf32>
    %c0_109 = arith.constant 0 : index
    %c0_110 = arith.constant 0 : index
    %159 = vector.load %arg14[%c0_109, %c0_110] : memref<1x128xf32, #tpu.memory_space<vmem>>, vector<1x128xf32>
    %160 = vector.broadcast %159 : vector<1x128xf32> to vector<128x128xf32>
    %161 = arith.addf %158, %160 : vector<128x128xf32>
    %cst_111 = arith.constant 0.000000e+00 : f32
    %162 = vector.broadcast %cst_111 : f32 to vector<128x128xf32>
    %163 = arith.maximumf %161, %162 : vector<128x128xf32>
    %c0_112 = arith.constant 0 : index
    %c0_113 = arith.constant 0 : index
    %c0_114 = arith.constant 0 : index
    %164 = vector.load %arg11[%c0_112, %c0_113, %c0_114] : memref<1x128x128xf32, #tpu.memory_space<vmem>>, vector<1x128x128xf32>
    %165 = vector.shape_cast %164 : vector<1x128x128xf32> to vector<128x128xf32>
    %166 = vector.shape_cast %163 : vector<128x128xf32> to vector<1x128x128xf32>
    tpu.vector_store %arg11[%c0_112, %c0_113, %c0_114], %166 {strides = array<i32>} : memref<1x128x128xf32, #tpu.memory_space<vmem>>, vector<1x128x128xf32>,
    return
  }
  func.func @transform_1(%arg0: i32, %arg1: i32) -> (i32, i32, i32) {
    %c0_i32 = arith.constant 0 : i32
    %c0_i32_0 = arith.constant 0 : i32
    %c0_i32_1 = arith.constant 0 : i32
    return %arg0, %c0_i32, %c0_i32_0 : i32, i32, i32
  }
  func.func @transform_2(%arg0: i32, %arg1: i32) -> (i32, i32) {
    %c0_i32 = arith.constant 0 : i32
    %c0_i32_0 = arith.constant 0 : i32
    %c0_i32_1 = arith.constant 0 : i32
    return %c0_i32, %c0_i32_0 : i32, i32
  }
  func.func @transform_3(%arg0: i32, %arg1: i32) -> (i32, i32) {
    %c0_i32 = arith.constant 0 : i32
    %c0_i32_0 = arith.constant 0 : i32
    %c0_i32_1 = arith.constant 0 : i32
    return %c0_i32, %c0_i32_0 : i32, i32
  }
  func.func @transform_4(%arg0: i32, %arg1: i32) -> (i32, i32) {
    %c0_i32 = arith.constant 0 : i32
    %c0_i32_0 = arith.constant 0 : i32
    %c0_i32_1 = arith.constant 0 : i32
    return %c0_i32, %c0_i32_0 : i32, i32
  }
  func.func @transform_5(%arg0: i32, %arg1: i32) -> (i32, i32) {
    %c0_i32 = arith.constant 0 : i32
    %c0_i32_0 = arith.constant 0 : i32
    %c0_i32_1 = arith.constant 0 : i32
    return %c0_i32, %c0_i32_0 : i32, i32
  }
  func.func @transform_6(%arg0: i32, %arg1: i32) -> (i32, i32) {
    %c0_i32 = arith.constant 0 : i32
    %c0_i32_0 = arith.constant 0 : i32
    %c0_i32_1 = arith.constant 0 : i32
    return %c0_i32, %c0_i32_0 : i32, i32
  }
  func.func @transform_7(%arg0: i32, %arg1: i32) -> (i32, i32) {
    %c0_i32 = arith.constant 0 : i32
    %c0_i32_0 = arith.constant 0 : i32
    %c0_i32_1 = arith.constant 0 : i32
    return %c0_i32, %c0_i32_0 : i32, i32
  }
  func.func @transform_8(%arg0: i32, %arg1: i32) -> (i32, i32) {
    %c0_i32 = arith.constant 0 : i32
    %c0_i32_0 = arith.constant 0 : i32
    %c0_i32_1 = arith.constant 0 : i32
    return %c0_i32, %c0_i32_0 : i32, i32
  }
  func.func @transform_9(%arg0: i32, %arg1: i32) -> (i32, i32, i32) {
    %c0_i32 = arith.constant 0 : i32
    %c0_i32_0 = arith.constant 0 : i32
    return %arg0, %arg1, %c0_i32 : i32, i32, i32
  }
}

</mosaic_0001>

<llo_original>
// kernel: aspp_forward.1
$region0: #{aspp_forward.1}
  #allocation0 [shape = 'u32[]', space=smem, size = 0x4, offset = 0x4, fixed_abs, tag = 'smem constant byte address 0x4 - core index']
  #allocation1 [shape = 'u32[144,128]{1,0:T(1,128)}', space=vmem, size = 0x12000, scoped, tag = 'internal scratch']
  #allocation2 [shape = 'f32[2,26,34,128]{3,2,1,0:T(8,128)}', space=vmem, size = 0x104000, scoped, tag = 'scratch operand']
  #allocation3 [shape = 's32[2]{0}', space=sflag, size = 0x8, scoped, tag = 'scratch operand']
  #allocation4 [shape = 'f32[1,128]{1,0:T(1,128)}', space=vmem, size = 0x200, scoped, tag = 'scratch operand']
  #allocation5 [shape = 's32[]', space=sflag, size = 0x4, offset = 0, fixed_abs, tag = 'sflag constant byte address 0x0 - dummy sync flag']
  #allocation6 [shape = 's32[]', space=sflag, size = 0x4, offset = 0, fixed_abs, tag = 'sflag constant byte address 0x0 - dummy sync flag']
  %s0 = inlined_call_operand.vmem [shape: f32[2,34,34,128], index: 0, kind: input, shape index: {}]
  %s1 = inlined_call_operand.vmem [shape: f32[2,1,128], index: 1, kind: input, shape index: {}]
  %s2 = inlined_call_operand.vmem [shape: f32[128,128], index: 2, kind: input, shape index: {}]
  %s3 = inlined_call_operand.vmem [shape: f32[1152,128], index: 3, kind: input, shape index: {}]
  %s4 = inlined_call_operand.vmem [shape: f32[1152,128], index: 4, kind: input, shape index: {}]
  %s5 = inlined_call_operand.vmem [shape: f32[1152,128], index: 5, kind: input, shape index: {}]
  %s6 = inlined_call_operand.vmem [shape: f32[128,128], index: 6, kind: input, shape index: {}]
  %s7 = inlined_call_operand.vmem [shape: f32[640,128], index: 7, kind: input, shape index: {}]
  %s8 = inlined_call_operand.vmem [shape: f32[6,128], index: 8, kind: input, shape index: {}]
  %s9 = inlined_call_operand.vmem [shape: f32[2,256,128], index: 9, kind: output, shape index: {}]
  %s10 = sld [smem:[#allocation0]]
  $region151: #{aspp_forward.1} parent=0
    _
  %s12 = ssub.s32 1, %s10
  %s13 = scalar_select 0, %s12, %s10
  loop: start=0, step=1, limit=6
  $region2: #{aspp_forward.1} parent=0 // loop_pre_header
    _
  $region3: #{aspp_forward.1} parent=0 // loop_header
    %s15 = sphi 0, %s19
    %p16 = scmp.ge.s32.totalorder %s15, 6
    %s22 = sphi 0, %s34
    %s23 = sphi 0, %s30
    %s24 = sphi 0, %s22
    %s25 = sphi 0, %s23
    %s26 = sphi 0, %s24
    %s27 = sphi 0, %s25
    %s37 = sphi 0, %s39
    %s40 = sphi 0, %s37
    %s41 = sphi 0, %s40
    %s57 = sphi 0, %s41
    %s61 = sphi 0, %s61
    %s63 = sphi 0, %s61
    %s64 = sphi 0, %s63
    %s78 = sphi 0, %s64
    %s82 = sphi 0, %s82
    %s84 = sphi 0, %s82
    %s85 = sphi 0, %s84
    %s99 = sphi 0, %s85
    %s103 = sphi 0, %s103
    %s105 = sphi 0, %s103
    %s106 = sphi 0, %s105
    %s120 = sphi 0, %s106
    %s124 = sphi 0, %s124
    %s126 = sphi 0, %s124
    %s127 = sphi 0, %s126
    %s141 = sphi 0, %s127
    %s145 = sphi 0, %s145
    %s147 = sphi 0, %s145
    %s148 = sphi 0, %s147
    %s162 = sphi 0, %s148
    %s166 = sphi 0, %s166
    %s168 = sphi 0, %s166
    %s169 = sphi 0, %s168
    %s183 = sphi 0, %s169
    %s187 = sphi 0, %s187
    %s189 = sphi 0, %s187
    %s190 = sphi 0, %s189
    %s204 = sphi 0, %s190
    %s212 = sphi 0, %s214
    %s215 = sphi 0, %s212
    %s216 = sphi 0, %s215
    %s232 = sphi 0, %s216
  $region4: #{aspp_forward.1} parent=0 // loop_header_branch
    %18 = sbr.rel (%p16) target = $region8
  $region5: #{aspp_forward.1} parent=0 // loop_body
    %s20 = ssub.s32 %s15, 1
    %s21 = ssub.s32 %s15, 2
    %s28 = sadd.s32 1, %s23
    %p29 = scmp.ge.s32.totalorder %s28, 2
    %s30 = scalar_select %p29, 0, %s28
    %s31 = sadd.s32 1, %s22
    %s32 = scalar_select %p29, %s31, %s22
    %p33 = scmp.ge.s32.totalorder %s32, 2
    %s34 = scalar_select %p33, 0, %s32
    %s35 = ssub.s32 %s22, %s34
    %p36 = scmp.eq.s32.totalorder %s35, 0
    %s38 = sadd.s32 %s37, 1
    %s39 = scalar_select %p36, %s37, %s38
    %p42 = pneg %p36
    %p43 = scmp.eq.s32.totalorder %s15, 3
    %p44 = por %p42, %p43
    %p45 = scmp.ne.s32.totalorder %s37, %s40
    %p46 = scmp.eq.s32.totalorder %s15, 0
    %p47 = por %p45, %p46
    %p48 = scmp.ne.s32.totalorder %s37, %s40
    %p49 = scmp.eq.s32.totalorder %s20, 3
    %p50 = por %p48, %p49
    %p51 = scmp.ne.s32.totalorder %s40, %s41
    %p52 = scmp.eq.s32.totalorder %s20, 0
    %p53 = por %p51, %p52
    %p54 = scmp.ne.s32.totalorder %s40, %s41
    %p55 = scmp.eq.s32.totalorder %s21, 3
    %p56 = por %p54, %p55
    %p58 = scmp.ne.s32.totalorder %s41, %s57
    %p59 = scmp.eq.s32.totalorder %s21, 0
    %p60 = por %p58, %p59
    %s62 = sadd.s32 %s61, 1
    %p65 = scmp.eq.s32.totalorder %s15, 3
    %p66 = scmp.ne.s32.totalorder %s61, %s63
    %p67 = scmp.eq.s32.totalorder %s15, 0
    %p68 = por %p66, %p67
    %p69 = scmp.ne.s32.totalorder %s61, %s63
    %p70 = scmp.eq.s32.totalorder %s20, 3
    %p71 = por %p69, %p70
    %p72 = scmp.ne.s32.totalorder %s63, %s64
    %p73 = scmp.eq.s32.totalorder %s20, 0
    %p74 = por %p72, %p73
    %p75 = scmp.ne.s32.totalorder %s63, %s64
    %p76 = scmp.eq.s32.totalorder %s21, 3
    %p77 = por %p75, %p76
    %p79 = scmp.ne.s32.totalorder %s64, %s78
    %p80 = scmp.eq.s32.totalorder %s21, 0
    %p81 = por %p79, %p80
    %s83 = sadd.s32 %s82, 1
    %p86 = scmp.eq.s32.totalorder %s15, 3
    %p87 = scmp.ne.s32.totalorder %s82, %s84
    %p88 = scmp.eq.s32.totalorder %s15, 0
    %p89 = por %p87, %p88
    %p90 = scmp.ne.s32.totalorder %s82, %s84
    %p91 = scmp.eq.s32.totalorder %s20, 3
    %p92 = por %p90, %p91
    %p93 = scmp.ne.s32.totalorder %s84, %s85
    %p94 = scmp.eq.s32.totalorder %s20, 0
    %p95 = por %p93, %p94
    %p96 = scmp.ne.s32.totalorder %s84, %s85
    %p97 = scmp.eq.s32.totalorder %s21, 3
    %p98 = por %p96, %p97
    %p100 = scmp.ne.s32.totalorder %s85, %s99
    %p101 = scmp.eq.s32.totalorder %s21, 0
    %p102 = por %p100, %p101
    %s104 = sadd.s32 %s103, 1
    %p107 = scmp.eq.s32.totalorder %s15, 3
    %p108 = scmp.ne.s32.totalorder %s103, %s105
    %p109 = scmp.eq.s32.totalorder %s15, 0
    %p110 = por %p108, %p109
    %p111 = scmp.ne.s32.totalorder %s103, %s105
    %p112 = scmp.eq.s32.totalorder %s20, 3
    %p113 = por %p111, %p112
    %p114 = scmp.ne.s32.totalorder %s105, %s106
    %p115 = scmp.eq.s32.totalorder %s20, 0
    %p116 = por %p114, %p115
    %p117 = scmp.ne.s32.totalorder %s105, %s106
    %p118 = scmp.eq.s32.totalorder %s21, 3
    %p119 = por %p117, %p118
    %p121 = scmp.ne.s32.totalorder %s106, %s120
    %p122 = scmp.eq.s32.totalorder %s21, 0
    %p123 = por %p121, %p122
    %s125 = sadd.s32 %s124, 1
    %p128 = scmp.eq.s32.totalorder %s15, 3
    %p129 = scmp.ne.s32.totalorder %s124, %s126
    %p130 = scmp.eq.s32.totalorder %s15, 0
    %p131 = por %p129, %p130
    %p132 = scmp.ne.s32.totalorder %s124, %s126
    %p133 = scmp.eq.s32.totalorder %s20, 3
    %p134 = por %p132, %p133
    %p135 = scmp.ne.s32.totalorder %s126, %s127
    %p136 = scmp.eq.s32.totalorder %s20, 0
    %p137 = por %p135, %p136
    %p138 = scmp.ne.s32.totalorder %s126, %s127
    %p139 = scmp.eq.s32.totalorder %s21, 3
    %p140 = por %p138, %p139
    %p142 = scmp.ne.s32.totalorder %s127, %s141
    %p143 = scmp.eq.s32.totalorder %s21, 0
    %p144 = por %p142, %p143
    %s146 = sadd.s32 %s145, 1
    %p149 = scmp.eq.s32.totalorder %s15, 3
    %p150 = scmp.ne.s32.totalorder %s145, %s147
    %p151 = scmp.eq.s32.totalorder %s15, 0
    %p152 = por %p150, %p151
    %p153 = scmp.ne.s32.totalorder %s145, %s147
    %p154 = scmp.eq.s32.totalorder %s20, 3
    %p155 = por %p153, %p154
    %p156 = scmp.ne.s32.totalorder %s147, %s148
    %p157 = scmp.eq.s32.totalorder %s20, 0
    %p158 = por %p156, %p157
    %p159 = scmp.ne.s32.totalorder %s147, %s148
    %p160 = scmp.eq.s32.totalorder %s21, 3
    %p161 = por %p159, %p160
    %p163 = scmp.ne.s32.totalorder %s148, %s162
    %p164 = scmp.eq.s32.totalorder %s21, 0
    %p165 = por %p163, %p164
    %s167 = sadd.s32 %s166, 1
    %p170 = scmp.eq.s32.totalorder %s15, 3
    %p171 = scmp.ne.s32.totalorder %s166, %s168
    %p172 = scmp.eq.s32.totalorder %s15, 0
    %p173 = por %p171, %p172
    %p174 = scmp.ne.s32.totalorder %s166, %s168
    %p175 = scmp.eq.s32.totalorder %s20, 3
    %p176 = por %p174, %p175
    %p177 = scmp.ne.s32.totalorder %s168, %s169
    %p178 = scmp.eq.s32.totalorder %s20, 0
    %p179 = por %p177, %p178
    %p180 = scmp.ne.s32.totalorder %s168, %s169
    %p181 = scmp.eq.s32.totalorder %s21, 3
    %p182 = por %p180, %p181
    %p184 = scmp.ne.s32.totalorder %s169, %s183
    %p185 = scmp.eq.s32.totalorder %s21, 0
    %p186 = por %p184, %p185
    %s188 = sadd.s32 %s187, 1
    %p191 = scmp.eq.s32.totalorder %s15, 3
    %p192 = scmp.ne.s32.totalorder %s187, %s189
    %p193 = scmp.eq.s32.totalorder %s15, 0
    %p194 = por %p192, %p193
    %p195 = scmp.ne.s32.totalorder %s187, %s189
    %p196 = scmp.eq.s32.totalorder %s20, 3
    %p197 = por %p195, %p196
    %p198 = scmp.ne.s32.totalorder %s189, %s190
    %p199 = scmp.eq.s32.totalorder %s20, 0
    %p200 = por %p198, %p199
    %p201 = scmp.ne.s32.totalorder %s189, %s190
    %p202 = scmp.eq.s32.totalorder %s21, 3
    %p203 = por %p201, %p202
    %p205 = scmp.ne.s32.totalorder %s190, %s204
    %p206 = scmp.eq.s32.totalorder %s21, 0
    %p207 = por %p205, %p206
    %s208 = ssub.s32 %s22, %s34
    %s209 = ssub.s32 %s23, %s30
    %s210 = sor.u32 %s208, %s209
    %p211 = scmp.eq.s32.totalorder %s210, 0
    %s213 = sadd.s32 %s212, 1
    %s214 = scalar_select %p211, %s212, %s213
    %p217 = pneg %p211
    %p218 = scmp.eq.s32.totalorder %s15, 3
    %p219 = por %p217, %p218
    %p220 = scmp.ne.s32.totalorder %s212, %s215
    %p221 = scmp.eq.s32.totalorder %s15, 0
    %p222 = por %p220, %p221
    %p223 = scmp.ne.s32.totalorder %s212, %s215
    %p224 = scmp.eq.s32.totalorder %s20, 3
    %p225 = por %p223, %p224
    %p226 = scmp.ne.s32.totalorder %s215, %s216
    %p227 = scmp.eq.s32.totalorder %s20, 0
    %p228 = por %p226, %p227
    %p229 = scmp.ne.s32.totalorder %s215, %s216
    %p230 = scmp.eq.s32.totalorder %s21, 3
    %p231 = por %p229, %p230
    %p233 = scmp.ne.s32.totalorder %s216, %s232
    %p234 = scmp.eq.s32.totalorder %s21, 0
    %p235 = por %p233, %p234
    %p236 = scmp.le.s32.totalorder 1, %s15
    %p237 = scmp.lt.s32.totalorder %s15, 5
    %p238 = pnand %p236, %p237
    %p239 = pneg %p238
    // Predicated region
    $region9: #{aspp_forward.1} parent=5 // pred_check
      _
    $region10: #{aspp_forward.1} parent=5 // pred_check_branch
      %241 = sbr.rel (%p238) target = $region12
    $region11: #{aspp_forward.1} parent=5 // pred_region
      %s242 = ssub.s32 %s15, 1
      // Predicated region
      $region13: #{aspp_forward.1} parent=11 // pred_check
        %p243 = pneg %p74
      $region14: #{aspp_forward.1} parent=11 // pred_check_branch
        %245 = sbr.rel (%p243) target = $region16
      $region15: #{aspp_forward.1} parent=11 // pred_region
        _
      $region16: #{aspp_forward.1} parent=11 // pred_fallthru
        _
      // Predicated region
      $region17: #{aspp_forward.1} parent=11 // pred_check
        %p246 = pneg %p95
      $region18: #{aspp_forward.1} parent=11 // pred_check_branch
        %248 = sbr.rel (%p246) target = $region20
      $region19: #{aspp_forward.1} parent=11 // pred_region
        _
      $region20: #{aspp_forward.1} parent=11 // pred_fallthru
        _
      // Predicated region
      $region21: #{aspp_forward.1} parent=11 // pred_check
        %p249 = pneg %p116
      $region22: #{aspp_forward.1} parent=11 // pred_check_branch
        %251 = sbr.rel (%p249) target = $region24
      $region23: #{aspp_forward.1} parent=11 // pred_region
        _
      $region24: #{aspp_forward.1} parent=11 // pred_fallthru
        _
      // Predicated region
      $region25: #{aspp_forward.1} parent=11 // pred_check
        %p252 = pneg %p137
      $region26: #{aspp_forward.1} parent=11 // pred_check_branch
        %254 = sbr.rel (%p252) target = $region28
      $region27: #{aspp_forward.1} parent=11 // pred_region
        _
      $region28: #{aspp_forward.1} parent=11 // pred_fallthru
        _
      // Predicated region
      $region29: #{aspp_forward.1} parent=11 // pred_check
        %p255 = pneg %p158
      $region30: #{aspp_forward.1} parent=11 // pred_check_branch
        %257 = sbr.rel (%p255) target = $region32
      $region31: #{aspp_forward.1} parent=11 // pred_region
        _
      $region32: #{aspp_forward.1} parent=11 // pred_fallthru
        _
      // Predicated region
      $region33: #{aspp_forward.1} parent=11 // pred_check
        %p258 = pneg %p179
      $region34: #{aspp_forward.1} parent=11 // pred_check_branch
        %260 = sbr.rel (%p258) target = $region36
      $region35: #{aspp_forward.1} parent=11 // pred_region
        _
      $region36: #{aspp_forward.1} parent=11 // pred_fallthru
        _
      // Predicated region
      $region37: #{aspp_forward.1} parent=11 // pred_check
        %p261 = pneg %p200
      $region38: #{aspp_forward.1} parent=11 // pred_check_branch
        %263 = sbr.rel (%p261) target = $region40
      $region39: #{aspp_forward.1} parent=11 // pred_region
        _
      $region40: #{aspp_forward.1} parent=11 // pred_fallthru
        _
    $region12: #{aspp_forward.1} parent=5 // pred_fallthru
      _
    %p264 = scmp.lt.s32.totalorder %s15, 4
    // Predicated region
    $region41: #{aspp_forward.1} parent=5 // pred_check
      %p265 = pneg %p264
    $region42: #{aspp_forward.1} parent=5 // pred_check_branch
      %267 = sbr.rel (%p265) target = $region44
    $region43: #{aspp_forward.1} parent=5 // pred_region
      // Predicated region
      $region45: #{aspp_forward.1} parent=43 // pred_check
        %p268 = pneg %p47
      $region46: #{aspp_forward.1} parent=43 // pred_check_branch
        %270 = sbr.rel (%p268) target = $region48
      $region47: #{aspp_forward.1} parent=43 // pred_region
        %p271 = scmp.lt.s32.totalorder %s22, 1
        %s272 = scalar_select %p271, %s22, 1
        %s273 = scalar_lea.vmem %s1, %s272
      $region48: #{aspp_forward.1} parent=43 // pred_fallthru
        _
    $region44: #{aspp_forward.1} parent=5 // pred_fallthru
      _
    %p274 = scmp.le.s32.totalorder 1, %s15
    %p275 = scmp.lt.s32.totalorder %s15, 5
    %p276 = pnand %p274, %p275
    %p277 = pneg %p276
    // Predicated region
    $region49: #{aspp_forward.1} parent=5 // pred_check
      _
    $region50: #{aspp_forward.1} parent=5 // pred_check_branch
      %279 = sbr.rel (%p276) target = $region52
    $region51: #{aspp_forward.1} parent=5 // pred_region
      %s280 = ssub.s32 %s15, 1
      %p281 = scmp.lt.s32.totalorder %s24, 1
      %s282 = scalar_select %p281, %s24, 1
      %s283 = scalar_lea.vmem %s1, %s282
      %p284 = pneg %p53
      %p285 = pneg %p50
      %p286 = pneg %p74
      %p287 = pneg %p71
      %p288 = pneg %p95
      %p289 = pneg %p92
      %p290 = pneg %p116
      %p291 = pneg %p113
      %p292 = pneg %p137
      %p293 = pneg %p134
      %p294 = pneg %p158
      %p295 = pneg %p155
      %p296 = pneg %p179
      %p297 = pneg %p176
      %p298 = pneg %p200
      %p299 = pneg %p197
      %p300 = pneg %p228
      %p301 = pneg %p225
      %s302 = smul.u32 16, %s25
      %p303 = scmp.lt.s32.totalorder %s24, 1
      %s304 = scalar_select %p303, %s24, 1
      %p305 = scmp.lt.s32.totalorder %s302, 31
      %s306 = scalar_select %p305, %s302, 31
      %s307 = smul.addr %s304, 32
      %s308 = sadd.s32 %s306, %s307
      %s309 = smul.addr %s308, 8
      %s310 = scalar_lea.vmem %s9, %s309
      %p311 = scmp.lt.s32.totalorder %s24, 1
      %s312 = scalar_select %p311, %s24, 1
      %s313 = scalar_lea.vmem %s1, %s312
      %s314 = smul.u32 16, %s25
      %p315 = scmp.lt.s32.totalorder %s24, 1
      %s316 = scalar_select %p315, %s24, 1
      %p317 = scmp.lt.s32.totalorder %s314, 31
      %s318 = scalar_select %p317, %s314, 31
      %s319 = smul.addr %s316, 32
      %s320 = sadd.s32 %s318, %s319
      %s321 = smul.addr %s320, 8
      %s322 = scalar_lea.vmem %s9, %s321
      %s323 = smul.u32 16, %s25
      %p324 = scmp.eq.s32.totalorder %s25, 0
      // Predicated region
      $region53: #{aspp_forward.1} parent=51 // pred_check
        %p325 = pneg %p324
      $region54: #{aspp_forward.1} parent=51 // pred_check_branch
        %327 = sbr.rel (%p325) target = $region56
      $region55: #{aspp_forward.1} parent=51 // pred_region
        %s328 = smul.u32 %s24, 1360
        %s329 = scalar_lea.vmem %s0, %s328
        %p331 = scmp.lt.u32.totalorder 34, 8
        %p332 = pneg %p331
        // Predicated region
        $region57: #{aspp_forward.1} parent=55 // pred_check
          _
        $region58: #{aspp_forward.1} parent=55 // pred_check_branch
          %334 = sbr.rel (%p331) target = $region60
        $region59: #{aspp_forward.1} parent=55 // pred_region
          %s399 = sand.u32 34, 7
          %p400 = scmp.eq.s32.totalorder %s399, 0
          %p401 = pneg %p400
          // Predicated region
          $region72: #{aspp_forward.1} parent=59 // pred_check
            _
          $region73: #{aspp_forward.1} parent=59 // pred_check_branch
            %403 = sbr.rel (%p400) target = $region75
          $region74: #{aspp_forward.1} parent=59 // pred_region
            %s404 = sand.u32 34, 7
            %s405 = ssub.s32 34, %s404
            %s406 = scalar_lea.vmem %s329, %s405
            %s407 = ssub.s32 34, %s404
            %s408 = scalar_lea.vmem [#allocation2], %s407
            loop: start=0, step=1, limit=1
            $region76: #{aspp_forward.1} parent=74 // loop_pre_header
              _
            $region77: #{aspp_forward.1} parent=74 // loop_header
              %s410 = sphi 0, %s414
              %p411 = scmp.ge.s32.totalorder %s410, 1
              %s415 = sphi %s329, %s329
              %s416 = sphi [#allocation2], [#allocation2]
            $region78: #{aspp_forward.1} parent=74 // loop_header_branch
              %413 = sbr.rel (%p411) target = $region82
            $region79: #{aspp_forward.1} parent=74 // loop_body
              %v417 = vld [vmem:[%s415] sm:$0xff]
              %418 = vst [vmem:[%s416] sm:$0xff] %v417
              %v419 = vld [vmem:[%s415 + $0x8] sm:$0xff]
              %420 = vst [vmem:[%s416 + $0x8] sm:$0xff] %v419
              %v421 = vld [vmem:[%s415 + $0x10] sm:$0xff]
              %422 = vst [vmem:[%s416 + $0x10] sm:$0xff] %v421
              %v423 = vld [vmem:[%s415 + $0x18] sm:$0xff]
              %424 = vst [vmem:[%s416 + $0x18] sm:$0xff] %v423
              %v425 = vld [vmem:[%s415 + $0x28] sm:$0xff]
              %426 = vst [vmem:[%s416 + $0x28] sm:$0xff] %v425
              %v427 = vld [vmem:[%s415 + $0x30] sm:$0xff]
              %428 = vst [vmem:[%s416 + $0x30] sm:$0xff] %v427
              %v429 = vld [vmem:[%s415 + $0x38] sm:$0xff]
              %430 = vst [vmem:[%s416 + $0x38] sm:$0xff] %v429
              %v431 = vld [vmem:[%s415 + $0x40] sm:$0xff]
              %432 = vst [vmem:[%s416 + $0x40] sm:$0xff] %v431
              %v433 = vld [vmem:[%s415 + $0x50] sm:$0xff]
              %434 = vst [vmem:[%s416 + $0x50] sm:$0xff] %v433
              %v435 = vld [vmem:[%s415 + $0x58] sm:$0xff]
              %436 = vst [vmem:[%s416 + $0x58] sm:$0xff] %v435
              %v437 = vld [vmem:[%s415 + $0x60] sm:$0xff]
              %438 = vst [vmem:[%s416 + $0x60] sm:$0xff] %v437
              %v439 = vld [vmem:[%s415 + $0x68] sm:$0xff]
              %440 = vst [vmem:[%s416 + $0x68] sm:$0xff] %v439
              %v441 = vld [vmem:[%s415 + $0x78] sm:$0xff]
              %442 = vst [vmem:[%s416 + $0x78] sm:$0xff] %v441
              %v443 = vld [vmem:[%s415 + $0x80] sm:$0xff]
              %444 = vst [vmem:[%s416 + $0x80] sm:$0xff] %v443
              %v445 = vld [vmem:[%s415 + $0x88] sm:$0xff]
              %446 = vst [vmem:[%s416 + $0x88] sm:$0xff] %v445
              %v447 = vld [vmem:[%s415 + $0x90] sm:$0xff]
              %448 = vst [vmem:[%s416 + $0x90] sm:$0xff] %v447
              %v449 = vld [vmem:[%s415 + $0xa0] sm:$0xff]
              %450 = vst [vmem:[%s416 + $0xa0] sm:$0xff] %v449
              %v451 = vld [vmem:[%s415 + $0xa8] sm:$0xff]
              %452 = vst [vmem:[%s416 + $0xa8] sm:$0xff] %v451
              %v453 = vld [vmem:[%s415 + $0xb0] sm:$0xff]
              %454 = vst [vmem:[%s416 + $0xb0] sm:$0xff] %v453
              %v455 = vld [vmem:[%s415 + $0xb8] sm:$0xff]
              %456 = vst [vmem:[%s416 + $0xb8] sm:$0xff] %v455
              %v457 = vld [vmem:[%s415 + $0xc8] sm:$0xff]
              %458 = vst [vmem:[%s416 + $0xc8] sm:$0xff] %v457
              %v459 = vld [vmem:[%s415 + $0xd0] sm:$0xff]
              %460 = vst [vmem:[%s416 + $0xd0] sm:$0xff] %v459
              %v461 = vld [vmem:[%s415 + $0xd8] sm:$0xff]
              %462 = vst [vmem:[%s416 + $0xd8] sm:$0xff] %v461
              %v463 = vld [vmem:[%s415 + $0xe0] sm:$0xff]
              %464 = vst [vmem:[%s416 + $0xe0] sm:$0xff] %v463
              %v465 = vld [vmem:[%s415 + $0xf0] sm:$0xff]
              %466 = vst [vmem:[%s416 + $0xf0] sm:$0xff] %v465
              %v467 = vld [vmem:[%s415 + $0xf8] sm:$0xff]
              %468 = vst [vmem:[%s416 + $0xf8] sm:$0xff] %v467
              %v469 = vld [vmem:[%s415 + $0x100] sm:$0xff]
              %470 = vst [vmem:[%s416 + $0x100] sm:$0xff] %v469
              %v471 = vld [vmem:[%s415 + $0x108] sm:$0xff]
              %472 = vst [vmem:[%s416 + $0x108] sm:$0xff] %v471
              %v473 = vld [vmem:[%s415 + $0x118] sm:$0xff]
              %474 = vst [vmem:[%s416 + $0x118] sm:$0xff] %v473
              %v475 = vld [vmem:[%s415 + $0x120] sm:$0xff]
              %476 = vst [vmem:[%s416 + $0x120] sm:$0xff] %v475
              %v477 = vld [vmem:[%s415 + $0x128] sm:$0xff]
              %478 = vst [vmem:[%s416 + $0x128] sm:$0xff] %v477
              %v479 = vld [vmem:[%s415 + $0x130] sm:$0xff]
              %480 = vst [vmem:[%s416 + $0x130] sm:$0xff] %v479
              %v481 = vld [vmem:[%s415 + $0x140] sm:$0xff]
              %482 = vst [vmem:[%s416 + $0x140] sm:$0xff] %v481
              %v483 = vld [vmem:[%s415 + $0x148] sm:$0xff]
              %484 = vst [vmem:[%s416 + $0x148] sm:$0xff] %v483
              %v485 = vld [vmem:[%s415 + $0x150] sm:$0xff]
              %486 = vst [vmem:[%s416 + $0x150] sm:$0xff] %v485
              %v487 = vld [vmem:[%s415 + $0x158] sm:$0xff]
              %488 = vst [vmem:[%s416 + $0x158] sm:$0xff] %v487
              %v489 = vld [vmem:[%s415 + $0x168] sm:$0xff]
              %490 = vst [vmem:[%s416 + $0x168] sm:$0xff] %v489
              %v491 = vld [vmem:[%s415 + $0x170] sm:$0xff]
              %492 = vst [vmem:[%s416 + $0x170] sm:$0xff] %v491
              %v493 = vld [vmem:[%s415 + $0x178] sm:$0xff]
              %494 = vst [vmem:[%s416 + $0x178] sm:$0xff] %v493
              %v495 = vld [vmem:[%s415 + $0x180] sm:$0xff]
              %496 = vst [vmem:[%s416 + $0x180] sm:$0xff] %v495
              %v497 = vld [vmem:[%s415 + $0x190] sm:$0xff]
              %498 = vst [vmem:[%s416 + $0x190] sm:$0xff] %v497
              %v499 = vld [vmem:[%s415 + $0x198] sm:$0xff]
              %500 = vst [vmem:[%s416 + $0x198] sm:$0xff] %v499
              %v501 = vld [vmem:[%s415 + $0x1a0] sm:$0xff]
              %502 = vst [vmem:[%s416 + $0x1a0] sm:$0xff] %v501
              %v503 = vld [vmem:[%s415 + $0x1a8] sm:$0xff]
              %504 = vst [vmem:[%s416 + $0x1a8] sm:$0xff] %v503
              %v505 = vld [vmem:[%s415 + $0x1b8] sm:$0xff]
              %506 = vst [vmem:[%s416 + $0x1b8] sm:$0xff] %v505
              %v507 = vld [vmem:[%s415 + $0x1c0] sm:$0xff]
              %508 = vst [vmem:[%s416 + $0x1c0] sm:$0xff] %v507
              %v509 = vld [vmem:[%s415 + $0x1c8] sm:$0xff]
              %510 = vst [vmem:[%s416 + $0x1c8] sm:$0xff] %v509
              %v511 = vld [vmem:[%s415 + $0x1d0] sm:$0xff]
              %512 = vst [vmem:[%s416 + $0x1d0] sm:$0xff] %v511
              %v513 = vld [vmem:[%s415 + $0x1e0] sm:$0xff]
              %514 = vst [vmem:[%s416 + $0x1e0] sm:$0xff] %v513
              %v515 = vld [vmem:[%s415 + $0x1e8] sm:$0xff]
              %516 = vst [vmem:[%s416 + $0x1e8] sm:$0xff] %v515
              %v517 = vld [vmem:[%s415 + $0x1f0] sm:$0xff]
              %518 = vst [vmem:[%s416 + $0x1f0] sm:$0xff] %v517
              %v519 = vld [vmem:[%s415 + $0x1f8] sm:$0xff]
              %520 = vst [vmem:[%s416 + $0x1f8] sm:$0xff] %v519
              %v521 = vld [vmem:[%s415 + $0x208] sm:$0xff]
              %522 = vst [vmem:[%s416 + $0x208] sm:$0xff] %v521
              %v523 = vld [vmem:[%s415 + $0x210] sm:$0xff]
              %524 = vst [vmem:[%s416 + $0x210] sm:$0xff] %v523
              %v525 = vld [vmem:[%s415 + $0x218] sm:$0xff]
              %526 = vst [vmem:[%s416 + $0x218] sm:$0xff] %v525
              %v527 = vld [vmem:[%s415 + $0x220] sm:$0xff]
              %528 = vst [vmem:[%s416 + $0x220] sm:$0xff] %v527
              %v529 = vld [vmem:[%s415 + $0x230] sm:$0xff]
              %530 = vst [vmem:[%s416 + $0x230] sm:$0xff] %v529
              %v531 = vld [vmem:[%s415 + $0x238] sm:$0xff]
              %532 = vst [vmem:[%s416 + $0x238] sm:$0xff] %v531
              %v533 = vld [vmem:[%s415 + $0x240] sm:$0xff]
              %534 = vst [vmem:[%s416 + $0x240] sm:$0xff] %v533
              %v535 = vld [vmem:[%s415 + $0x248] sm:$0xff]
              %536 = vst [vmem:[%s416 + $0x248] sm:$0xff] %v535
              %v537 = vld [vmem:[%s415 + $0x258] sm:$0xff]
              %538 = vst [vmem:[%s416 + $0x258] sm:$0xff] %v537
              %v539 = vld [vmem:[%s415 + $0x260] sm:$0xff]
              %540 = vst [vmem:[%s416 + $0x260] sm:$0xff] %v539
              %v541 = vld [vmem:[%s415 + $0x268] sm:$0xff]
              %542 = vst [vmem:[%s416 + $0x268] sm:$0xff] %v541
              %v543 = vld [vmem:[%s415 + $0x270] sm:$0xff]
              %544 = vst [vmem:[%s416 + $0x270] sm:$0xff] %v543
              %v545 = vld [vmem:[%s415 + $0x280] sm:$0xff]
              %546 = vst [vmem:[%s416 + $0x280] sm:$0xff] %v545
              %v547 = vld [vmem:[%s415 + $0x288] sm:$0xff]
              %548 = vst [vmem:[%s416 + $0x288] sm:$0xff] %v547
              %v549 = vld [vmem:[%s415 + $0x290] sm:$0xff]
              %550 = vst [vmem:[%s416 + $0x290] sm:$0xff] %v549
              %v551 = vld [vmem:[%s415 + $0x298] sm:$0xff]
              %552 = vst [vmem:[%s416 + $0x298] sm:$0xff] %v551
              %v553 = vld [vmem:[%s415 + $0x2a8] sm:$0xff]
              %554 = vst [vmem:[%s416 + $0x2a8] sm:$0xff] %v553
              %v555 = vld [vmem:[%s415 + $0x2b0] sm:$0xff]
              %556 = vst [vmem:[%s416 + $0x2b0] sm:$0xff] %v555
              %v557 = vld [vmem:[%s415 + $0x2b8] sm:$0xff]
              %558 = vst [vmem:[%s416 + $0x2b8] sm:$0xff] %v557
              %v559 = vld [vmem:[%s415 + $0x2c0] sm:$0xff]
              %560 = vst [vmem:[%s416 + $0x2c0] sm:$0xff] %v559
              %v561 = vld [vmem:[%s415 + $0x2d0] sm:$0xff]
              %562 = vst [vmem:[%s416 + $0x2d0] sm:$0xff] %v561
              %v563 = vld [vmem:[%s415 + $0x2d8] sm:$0xff]
              %564 = vst [vmem:[%s416 + $0x2d8] sm:$0xff] %v563
              %v565 = vld [vmem:[%s415 + $0x2e0] sm:$0xff]
              %566 = vst [vmem:[%s416 + $0x2e0] sm:$0xff] %v565
              %v567 = vld [vmem:[%s415 + $0x2e8] sm:$0xff]
              %568 = vst [vmem:[%s416 + $0x2e8] sm:$0xff] %v567
              %v569 = vld [vmem:[%s415 + $0x2f8] sm:$0xff]
              %570 = vst [vmem:[%s416 + $0x2f8] sm:$0xff] %v569
              %v571 = vld [vmem:[%s415 + $0x300] sm:$0xff]
              %572 = vst [vmem:[%s416 + $0x300] sm:$0xff] %v571
              %v573 = vld [vmem:[%s415 + $0x308] sm:$0xff]
              %574 = vst [vmem:[%s416 + $0x308] sm:$0xff] %v573
              %v575 = vld [vmem:[%s415 + $0x310] sm:$0xff]
              %576 = vst [vmem:[%s416 + $0x310] sm:$0xff] %v575
              %v577 = vld [vmem:[%s415 + $0x320] sm:$0xff]
              %578 = vst [vmem:[%s416 + $0x320] sm:$0xff] %v577
              %v579 = vld [vmem:[%s415 + $0x328] sm:$0xff]
              %580 = vst [vmem:[%s416 + $0x328] sm:$0xff] %v579
              %v581 = vld [vmem:[%s415 + $0x330] sm:$0xff]
              %582 = vst [vmem:[%s416 + $0x330] sm:$0xff] %v581
              %v583 = vld [vmem:[%s415 + $0x338] sm:$0xff]
              %584 = vst [vmem:[%s416 + $0x338] sm:$0xff] %v583
              %v585 = vld [vmem:[%s415 + $0x348] sm:$0xff]
              %586 = vst [vmem:[%s416 + $0x348] sm:$0xff] %v585
              %v587 = vld [vmem:[%s415 + $0x350] sm:$0xff]
              %588 = vst [vmem:[%s416 + $0x350] sm:$0xff] %v587
              %v589 = vld [vmem:[%s415 + $0x358] sm:$0xff]
              %590 = vst [vmem:[%s416 + $0x358] sm:$0xff] %v589
              %v591 = vld [vmem:[%s415 + $0x360] sm:$0xff]
              %592 = vst [vmem:[%s416 + $0x360] sm:$0xff] %v591
              %v593 = vld [vmem:[%s415 + $0x370] sm:$0xff]
              %594 = vst [vmem:[%s416 + $0x370] sm:$0xff] %v593
              %v595 = vld [vmem:[%s415 + $0x378] sm:$0xff]
              %596 = vst [vmem:[%s416 + $0x378] sm:$0xff] %v595
              %v597 = vld [vmem:[%s415 + $0x380] sm:$0xff]
              %598 = vst [vmem:[%s416 + $0x380] sm:$0xff] %v597
              %v599 = vld [vmem:[%s415 + $0x388] sm:$0xff]
              %600 = vst [vmem:[%s416 + $0x388] sm:$0xff] %v599
              %v601 = vld [vmem:[%s415 + $0x398] sm:$0xff]
              %602 = vst [vmem:[%s416 + $0x398] sm:$0xff] %v601
              %v603 = vld [vmem:[%s415 + $0x3a0] sm:$0xff]
              %604 = vst [vmem:[%s416 + $0x3a0] sm:$0xff] %v603
              %v605 = vld [vmem:[%s415 + $0x3a8] sm:$0xff]
              %606 = vst [vmem:[%s416 + $0x3a8] sm:$0xff] %v605
              %v607 = vld [vmem:[%s415 + $0x3b0] sm:$0xff]
              %608 = vst [vmem:[%s416 + $0x3b0] sm:$0xff] %v607
              %v609 = vld [vmem:[%s415 + $0x3c0] sm:$0xff]
              %610 = vst [vmem:[%s416 + $0x3c0] sm:$0xff] %v609
              %v611 = vld [vmem:[%s415 + $0x3c8] sm:$0xff]
              %612 = vst [vmem:[%s416 + $0x3c8] sm:$0xff] %v611
              %v613 = vld [vmem:[%s415 + $0x3d0] sm:$0xff]
              %614 = vst [vmem:[%s416 + $0x3d0] sm:$0xff] %v613
              %v615 = vld [vmem:[%s415 + $0x3d8] sm:$0xff]
              %616 = vst [vmem:[%s416 + $0x3d8] sm:$0xff] %v615
              %v617 = vld [vmem:[%s415 + $0x3e8] sm:$0xff]
              %618 = vst [vmem:[%s416 + $0x3e8] sm:$0xff] %v617
              %v619 = vld [vmem:[%s415 + $0x3f0] sm:$0xff]
              %620 = vst [vmem:[%s416 + $0x3f0] sm:$0xff] %v619
              %v621 = vld [vmem:[%s415 + $0x3f8] sm:$0xff]
              %622 = vst [vmem:[%s416 + $0x3f8] sm:$0xff] %v621
              %v623 = vld [vmem:[%s415 + $0x400] sm:$0xff]
              %624 = vst [vmem:[%s416 + $0x400] sm:$0xff] %v623
            $region80: #{aspp_forward.1} parent=74 // loop_footer
              %s414 = sadd.s32 1, %s410
            $region81: #{aspp_forward.1} parent=74 // loop_footer_branch
              %409 = sbr.rel target = $region77
            $region82: #{aspp_forward.1} parent=74 // loop_exit
              _
            %s625 = sshllo.u32 0, %s404
            loop: start=0, step=1, limit=1
            $region83: #{aspp_forward.1} parent=74 // loop_pre_header
              _
            $region84: #{aspp_forward.1} parent=74 // loop_header
              %s627 = sphi 0, %s631
              %p628 = scmp.ge.s32.totalorder %s627, 1
              %s632 = sphi %s406, %s406
              %s633 = sphi %s408, %s408
            $region85: #{aspp_forward.1} parent=74 // loop_header_branch
              %630 = sbr.rel (%p628) target = $region89
            $region86: #{aspp_forward.1} parent=74 // loop_body
              %v634 = vld [vmem:[%s632] sm:%s625]
              %635 = vst [vmem:[%s633] sm:%s625] %v634
              %v636 = vld [vmem:[%s632 + $0x28] sm:%s625]
              %637 = vst [vmem:[%s633 + $0x28] sm:%s625] %v636
              %v638 = vld [vmem:[%s632 + $0x50] sm:%s625]
              %639 = vst [vmem:[%s633 + $0x50] sm:%s625] %v638
              %v640 = vld [vmem:[%s632 + $0x78] sm:%s625]
              %641 = vst [vmem:[%s633 + $0x78] sm:%s625] %v640
              %v642 = vld [vmem:[%s632 + $0xa0] sm:%s625]
              %643 = vst [vmem:[%s633 + $0xa0] sm:%s625] %v642
              %v644 = vld [vmem:[%s632 + $0xc8] sm:%s625]
              %645 = vst [vmem:[%s633 + $0xc8] sm:%s625] %v644
              %v646 = vld [vmem:[%s632 + $0xf0] sm:%s625]
              %647 = vst [vmem:[%s633 + $0xf0] sm:%s625] %v646
              %v648 = vld [vmem:[%s632 + $0x118] sm:%s625]
              %649 = vst [vmem:[%s633 + $0x118] sm:%s625] %v648
              %v650 = vld [vmem:[%s632 + $0x140] sm:%s625]
              %651 = vst [vmem:[%s633 + $0x140] sm:%s625] %v650
              %v652 = vld [vmem:[%s632 + $0x168] sm:%s625]
              %653 = vst [vmem:[%s633 + $0x168] sm:%s625] %v652
              %v654 = vld [vmem:[%s632 + $0x190] sm:%s625]
              %655 = vst [vmem:[%s633 + $0x190] sm:%s625] %v654
              %v656 = vld [vmem:[%s632 + $0x1b8] sm:%s625]
              %657 = vst [vmem:[%s633 + $0x1b8] sm:%s625] %v656
              %v658 = vld [vmem:[%s632 + $0x1e0] sm:%s625]
              %659 = vst [vmem:[%s633 + $0x1e0] sm:%s625] %v658
              %v660 = vld [vmem:[%s632 + $0x208] sm:%s625]
              %661 = vst [vmem:[%s633 + $0x208] sm:%s625] %v660
              %v662 = vld [vmem:[%s632 + $0x230] sm:%s625]
              %663 = vst [vmem:[%s633 + $0x230] sm:%s625] %v662
              %v664 = vld [vmem:[%s632 + $0x258] sm:%s625]
              %665 = vst [vmem:[%s633 + $0x258] sm:%s625] %v664
              %v666 = vld [vmem:[%s632 + $0x280] sm:%s625]
              %667 = vst [vmem:[%s633 + $0x280] sm:%s625] %v666
              %v668 = vld [vmem:[%s632 + $0x2a8] sm:%s625]
              %669 = vst [vmem:[%s633 + $0x2a8] sm:%s625] %v668
              %v670 = vld [vmem:[%s632 + $0x2d0] sm:%s625]
              %671 = vst [vmem:[%s633 + $0x2d0] sm:%s625] %v670
              %v672 = vld [vmem:[%s632 + $0x2f8] sm:%s625]
              %673 = vst [vmem:[%s633 + $0x2f8] sm:%s625] %v672
              %v674 = vld [vmem:[%s632 + $0x320] sm:%s625]
              %675 = vst [vmem:[%s633 + $0x320] sm:%s625] %v674
              %v676 = vld [vmem:[%s632 + $0x348] sm:%s625]
              %677 = vst [vmem:[%s633 + $0x348] sm:%s625] %v676
              %v678 = vld [vmem:[%s632 + $0x370] sm:%s625]
              %679 = vst [vmem:[%s633 + $0x370] sm:%s625] %v678
              %v680 = vld [vmem:[%s632 + $0x398] sm:%s625]
              %681 = vst [vmem:[%s633 + $0x398] sm:%s625] %v680
              %v682 = vld [vmem:[%s632 + $0x3c0] sm:%s625]
              %683 = vst [vmem:[%s633 + $0x3c0] sm:%s625] %v682
              %v684 = vld [vmem:[%s632 + $0x3e8] sm:%s625]
              %685 = vst [vmem:[%s633 + $0x3e8] sm:%s625] %v684
            $region87: #{aspp_forward.1} parent=74 // loop_footer
              %s631 = sadd.s32 1, %s627
            $region88: #{aspp_forward.1} parent=74 // loop_footer_branch
              %626 = sbr.rel target = $region84
            $region89: #{aspp_forward.1} parent=74 // loop_exit
              _
          $region75: #{aspp_forward.1} parent=59 // pred_fallthru
            _
        $region60: #{aspp_forward.1} parent=55 // pred_fallthru
          _
        // Predicated region
        $region61: #{aspp_forward.1} parent=55 // pred_check
          %p335 = pneg %p331
        $region62: #{aspp_forward.1} parent=55 // pred_check_branch
          %337 = sbr.rel (%p335) target = $region64
        $region63: #{aspp_forward.1} parent=55 // pred_region
          %s338 = sshllo.u32 0, 34
          loop: start=0, step=1, limit=1
          $region65: #{aspp_forward.1} parent=63 // loop_pre_header
            _
          $region66: #{aspp_forward.1} parent=63 // loop_header
            %s340 = sphi 0, %s344
            %p341 = scmp.ge.s32.totalorder %s340, 1
            %s345 = sphi %s329, %s329
            %s346 = sphi [#allocation2], [#allocation2]
          $region67: #{aspp_forward.1} parent=63 // loop_header_branch
            %343 = sbr.rel (%p341) target = $region71
          $region68: #{aspp_forward.1} parent=63 // loop_body
            %v347 = vld [vmem:[%s345] sm:%s338]
            %348 = vst [vmem:[%s346] sm:%s338] %v347
            %v349 = vld [vmem:[%s345 + $0x28] sm:%s338]
            %350 = vst [vmem:[%s346 + $0x28] sm:%s338] %v349
            %v351 = vld [vmem:[%s345 + $0x50] sm:%s338]
            %352 = vst [vmem:[%s346 + $0x50] sm:%s338] %v351
            %v353 = vld [vmem:[%s345 + $0x78] sm:%s338]
            %354 = vst [vmem:[%s346 + $0x78] sm:%s338] %v353
            %v355 = vld [vmem:[%s345 + $0xa0] sm:%s338]
            %356 = vst [vmem:[%s346 + $0xa0] sm:%s338] %v355
            %v357 = vld [vmem:[%s345 + $0xc8] sm:%s338]
            %358 = vst [vmem:[%s346 + $0xc8] sm:%s338] %v357
            %v359 = vld [vmem:[%s345 + $0xf0] sm:%s338]
            %360 = vst [vmem:[%s346 + $0xf0] sm:%s338] %v359
            %v361 = vld [vmem:[%s345 + $0x118] sm:%s338]
            %362 = vst [vmem:[%s346 + $0x118] sm:%s338] %v361
            %v363 = vld [vmem:[%s345 + $0x140] sm:%s338]
            %364 = vst [vmem:[%s346 + $0x140] sm:%s338] %v363
            %v365 = vld [vmem:[%s345 + $0x168] sm:%s338]
            %366 = vst [vmem:[%s346 + $0x168] sm:%s338] %v365
            %v367 = vld [vmem:[%s345 + $0x190] sm:%s338]
            %368 = vst [vmem:[%s346 + $0x190] sm:%s338] %v367
            %v369 = vld [vmem:[%s345 + $0x1b8] sm:%s338]
            %370 = vst [vmem:[%s346 + $0x1b8] sm:%s338] %v369
            %v371 = vld [vmem:[%s345 + $0x1e0] sm:%s338]
            %372 = vst [vmem:[%s346 + $0x1e0] sm:%s338] %v371
            %v373 = vld [vmem:[%s345 + $0x208] sm:%s338]
            %374 = vst [vmem:[%s346 + $0x208] sm:%s338] %v373
            %v375 = vld [vmem:[%s345 + $0x230] sm:%s338]
            %376 = vst [vmem:[%s346 + $0x230] sm:%s338] %v375
            %v377 = vld [vmem:[%s345 + $0x258] sm:%s338]
            %378 = vst [vmem:[%s346 + $0x258] sm:%s338] %v377
            %v379 = vld [vmem:[%s345 + $0x280] sm:%s338]
            %380 = vst [vmem:[%s346 + $0x280] sm:%s338] %v379
            %v381 = vld [vmem:[%s345 + $0x2a8] sm:%s338]
            %382 = vst [vmem:[%s346 + $0x2a8] sm:%s338] %v381
            %v383 = vld [vmem:[%s345 + $0x2d0] sm:%s338]
            %384 = vst [vmem:[%s346 + $0x2d0] sm:%s338] %v383
            %v385 = vld [vmem:[%s345 + $0x2f8] sm:%s338]
            %386 = vst [vmem:[%s346 + $0x2f8] sm:%s338] %v385
            %v387 = vld [vmem:[%s345 + $0x320] sm:%s338]
            %388 = vst [vmem:[%s346 + $0x320] sm:%s338] %v387
            %v389 = vld [vmem:[%s345 + $0x348] sm:%s338]
            %390 = vst [vmem:[%s346 + $0x348] sm:%s338] %v389
            %v391 = vld [vmem:[%s345 + $0x370] sm:%s338]
            %392 = vst [vmem:[%s346 + $0x370] sm:%s338] %v391
            %v393 = vld [vmem:[%s345 + $0x398] sm:%s338]
            %394 = vst [vmem:[%s346 + $0x398] sm:%s338] %v393
            %v395 = vld [vmem:[%s345 + $0x3c0] sm:%s338]
            %396 = vst [vmem:[%s346 + $0x3c0] sm:%s338] %v395
            %v397 = vld [vmem:[%s345 + $0x3e8] sm:%s338]
            %398 = vst [vmem:[%s346 + $0x3e8] sm:%s338] %v397
          $region69: #{aspp_forward.1} parent=63 // loop_footer
            %s344 = sadd.s32 1, %s340
          $region70: #{aspp_forward.1} parent=63 // loop_footer_branch
            %339 = sbr.rel target = $region66
          $region71: #{aspp_forward.1} parent=63 // loop_exit
            _
        $region64: #{aspp_forward.1} parent=55 // pred_fallthru
          _
        // Predicated region
        $region90: #{aspp_forward.1} parent=55 // pred_check
          _
        $region91: #{aspp_forward.1} parent=55 // pred_check_branch
          %688 = sbr.rel (0) target = $region93
        $region92: #{aspp_forward.1} parent=55 // pred_region
          %689 = vsyncadd [#allocation3], 14144
        $region93: #{aspp_forward.1} parent=55 // pred_fallthru
          _
      $region56: #{aspp_forward.1} parent=51 // pred_fallthru
        _
      %p690 = scmp.lt.s32.totalorder %s25, 0
      %s691 = ssub.s32 0, %s25
      %s692 = scalar_select %p690, %s691, %s25
      %s693 = sand.u32 %s692, 1
      %s694 = ssub.s32 0, %s693
      %s695 = scalar_select %p690, %s694, %s693
      %s696 = scalar_lea.sflag [#allocation3], %s695
      %s697 = smul.u32 26, 34
      %s698 = smul.u32 %s697, 1
      %s699 = sshll.u32 %s698, 4
      %700 = dma.done %s696, %s699
      %s701 = sadd.s32 %s25, 1
      %p702 = scmp.lt.s32.totalorder %s701, 2
      // Predicated region
      $region94: #{aspp_forward.1} parent=51 // pred_check
        %p703 = pneg %p702
      $region95: #{aspp_forward.1} parent=51 // pred_check_branch
        %705 = sbr.rel (%p703) target = $region97
      $region96: #{aspp_forward.1} parent=51 // pred_region
        %s706 = ssub.s32 1, %s695
        %s707 = smul.u32 %s701, 8
        %s708 = smul.u32 %s707, 40
        %s709 = smul.u32 %s24, 1360
        %s710 = sadd.s32 %s708, %s709
        %s711 = scalar_lea.vmem %s0, %s710
        %s712 = smul.u32 %s706, 1040
        %s713 = scalar_lea.vmem [#allocation2], %s712
        %s714 = scalar_lea.sflag [#allocation3], %s706
        %p716 = scmp.lt.u32.totalorder 34, 8
        %p717 = pneg %p716
        // Predicated region
        $region98: #{aspp_forward.1} parent=96 // pred_check
          _
        $region99: #{aspp_forward.1} parent=96 // pred_check_branch
          %719 = sbr.rel (%p716) target = $region101
        $region100: #{aspp_forward.1} parent=96 // pred_region
          %s784 = sand.u32 34, 7
          %p785 = scmp.eq.s32.totalorder %s784, 0
          %p786 = pneg %p785
          // Predicated region
          $region113: #{aspp_forward.1} parent=100 // pred_check
            _
          $region114: #{aspp_forward.1} parent=100 // pred_check_branch
            %788 = sbr.rel (%p785) target = $region116
          $region115: #{aspp_forward.1} parent=100 // pred_region
            %s789 = sand.u32 34, 7
            %s790 = ssub.s32 34, %s789
            %s791 = scalar_lea.vmem %s711, %s790
            %s792 = ssub.s32 34, %s789
            %s793 = scalar_lea.vmem %s713, %s792 [#allocation2]
            loop: start=0, step=1, limit=1
            $region117: #{aspp_forward.1} parent=115 // loop_pre_header
              _
            $region118: #{aspp_forward.1} parent=115 // loop_header
              %s795 = sphi 0, %s799
              %p796 = scmp.ge.s32.totalorder %s795, 1
              %s800 = sphi %s711, %s711
              %s801 = sphi %s713, %s713
            $region119: #{aspp_forward.1} parent=115 // loop_header_branch
              %798 = sbr.rel (%p796) target = $region123
            $region120: #{aspp_forward.1} parent=115 // loop_body
              %v802 = vld [vmem:[%s800] sm:$0xff]
              %803 = vst [vmem:[%s801] sm:$0xff] %v802
              %v804 = vld [vmem:[%s800 + $0x8] sm:$0xff]
              %805 = vst [vmem:[%s801 + $0x8] sm:$0xff] %v804
              %v806 = vld [vmem:[%s800 + $0x10] sm:$0xff]
              %807 = vst [vmem:[%s801 + $0x10] sm:$0xff] %v806
              %v808 = vld [vmem:[%s800 + $0x18] sm:$0xff]
              %809 = vst [vmem:[%s801 + $0x18] sm:$0xff] %v808
              %v810 = vld [vmem:[%s800 + $0x28] sm:$0xff]
              %811 = vst [vmem:[%s801 + $0x28] sm:$0xff] %v810
              %v812 = vld [vmem:[%s800 + $0x30] sm:$0xff]
              %813 = vst [vmem:[%s801 + $0x30] sm:$0xff] %v812
              %v814 = vld [vmem:[%s800 + $0x38] sm:$0xff]
              %815 = vst [vmem:[%s801 + $0x38] sm:$0xff] %v814
              %v816 = vld [vmem:[%s800 + $0x40] sm:$0xff]
              %817 = vst [vmem:[%s801 + $0x40] sm:$0xff] %v816
              %v818 = vld [vmem:[%s800 + $0x50] sm:$0xff]
              %819 = vst [vmem:[%s801 + $0x50] sm:$0xff] %v818
              %v820 = vld [vmem:[%s800 + $0x58] sm:$0xff]
              %821 = vst [vmem:[%s801 + $0x58] sm:$0xff] %v820
              %v822 = vld [vmem:[%s800 + $0x60] sm:$0xff]
              %823 = vst [vmem:[%s801 + $0x60] sm:$0xff] %v822
              %v824 = vld [vmem:[%s800 + $0x68] sm:$0xff]
              %825 = vst [vmem:[%s801 + $0x68] sm:$0xff] %v824
              %v826 = vld [vmem:[%s800 + $0x78] sm:$0xff]
              %827 = vst [vmem:[%s801 + $0x78] sm:$0xff] %v826
              %v828 = vld [vmem:[%s800 + $0x80] sm:$0xff]
              %829 = vst [vmem:[%s801 + $0x80] sm:$0xff] %v828
              %v830 = vld [vmem:[%s800 + $0x88] sm:$0xff]
              %831 = vst [vmem:[%s801 + $0x88] sm:$0xff] %v830
              %v832 = vld [vmem:[%s800 + $0x90] sm:$0xff]
              %833 = vst [vmem:[%s801 + $0x90] sm:$0xff] %v832
              %v834 = vld [vmem:[%s800 + $0xa0] sm:$0xff]
              %835 = vst [vmem:[%s801 + $0xa0] sm:$0xff] %v834
              %v836 = vld [vmem:[%s800 + $0xa8] sm:$0xff]
              %837 = vst [vmem:[%s801 + $0xa8] sm:$0xff] %v836
              %v838 = vld [vmem:[%s800 + $0xb0] sm:$0xff]
              %839 = vst [vmem:[%s801 + $0xb0] sm:$0xff] %v838
              %v840 = vld [vmem:[%s800 + $0xb8] sm:$0xff]
              %841 = vst [vmem:[%s801 + $0xb8] sm:$0xff] %v840
              %v842 = vld [vmem:[%s800 + $0xc8] sm:$0xff]
              %843 = vst [vmem:[%s801 + $0xc8] sm:$0xff] %v842
              %v844 = vld [vmem:[%s800 + $0xd0] sm:$0xff]
              %845 = vst [vmem:[%s801 + $0xd0] sm:$0xff] %v844
              %v846 = vld [vmem:[%s800 + $0xd8] sm:$0xff]
              %847 = vst [vmem:[%s801 + $0xd8] sm:$0xff] %v846
              %v848 = vld [vmem:[%s800 + $0xe0] sm:$0xff]
              %849 = vst [vmem:[%s801 + $0xe0] sm:$0xff] %v848
              %v850 = vld [vmem:[%s800 + $0xf0] sm:$0xff]
              %851 = vst [vmem:[%s801 + $0xf0] sm:$0xff] %v850
              %v852 = vld [vmem:[%s800 + $0xf8] sm:$0xff]
              %853 = vst [vmem:[%s801 + $0xf8] sm:$0xff] %v852
              %v854 = vld [vmem:[%s800 + $0x100] sm:$0xff]
              %855 = vst [vmem:[%s801 + $0x100] sm:$0xff] %v854
              %v856 = vld [vmem:[%s800 + $0x108] sm:$0xff]
              %857 = vst [vmem:[%s801 + $0x108] sm:$0xff] %v856
              %v858 = vld [vmem:[%s800 + $0x118] sm:$0xff]
              %859 = vst [vmem:[%s801 + $0x118] sm:$0xff] %v858
              %v860 = vld [vmem:[%s800 + $0x120] sm:$0xff]
              %861 = vst [vmem:[%s801 + $0x120] sm:$0xff] %v860
              %v862 = vld [vmem:[%s800 + $0x128] sm:$0xff]
              %863 = vst [vmem:[%s801 + $0x128] sm:$0xff] %v862
              %v864 = vld [vmem:[%s800 + $0x130] sm:$0xff]
              %865 = vst [vmem:[%s801 + $0x130] sm:$0xff] %v864
              %v866 = vld [vmem:[%s800 + $0x140] sm:$0xff]
              %867 = vst [vmem:[%s801 + $0x140] sm:$0xff] %v866
              %v868 = vld [vmem:[%s800 + $0x148] sm:$0xff]
              %869 = vst [vmem:[%s801 + $0x148] sm:$0xff] %v868
              %v870 = vld [vmem:[%s800 + $0x150] sm:$0xff]
              %871 = vst [vmem:[%s801 + $0x150] sm:$0xff] %v870
              %v872 = vld [vmem:[%s800 + $0x158] sm:$0xff]
              %873 = vst [vmem:[%s801 + $0x158] sm:$0xff] %v872
              %v874 = vld [vmem:[%s800 + $0x168] sm:$0xff]
              %875 = vst [vmem:[%s801 + $0x168] sm:$0xff] %v874
              %v876 = vld [vmem:[%s800 + $0x170] sm:$0xff]
              %877 = vst [vmem:[%s801 + $0x170] sm:$0xff] %v876
              %v878 = vld [vmem:[%s800 + $0x178] sm:$0xff]
              %879 = vst [vmem:[%s801 + $0x178] sm:$0xff] %v878
              %v880 = vld [vmem:[%s800 + $0x180] sm:$0xff]
              %881 = vst [vmem:[%s801 + $0x180] sm:$0xff] %v880
              %v882 = vld [vmem:[%s800 + $0x190] sm:$0xff]
              %883 = vst [vmem:[%s801 + $0x190] sm:$0xff] %v882
              %v884 = vld [vmem:[%s800 + $0x198] sm:$0xff]
              %885 = vst [vmem:[%s801 + $0x198] sm:$0xff] %v884
              %v886 = vld [vmem:[%s800 + $0x1a0] sm:$0xff]
              %887 = vst [vmem:[%s801 + $0x1a0] sm:$0xff] %v886
              %v888 = vld [vmem:[%s800 + $0x1a8] sm:$0xff]
              %889 = vst [vmem:[%s801 + $0x1a8] sm:$0xff] %v888
              %v890 = vld [vmem:[%s800 + $0x1b8] sm:$0xff]
              %891 = vst [vmem:[%s801 + $0x1b8] sm:$0xff] %v890
              %v892 = vld [vmem:[%s800 + $0x1c0] sm:$0xff]
              %893 = vst [vmem:[%s801 + $0x1c0] sm:$0xff] %v892
              %v894 = vld [vmem:[%s800 + $0x1c8] sm:$0xff]
              %895 = vst [vmem:[%s801 + $0x1c8] sm:$0xff] %v894
              %v896 = vld [vmem:[%s800 + $0x1d0] sm:$0xff]
              %897 = vst [vmem:[%s801 + $0x1d0] sm:$0xff] %v896
              %v898 = vld [vmem:[%s800 + $0x1e0] sm:$0xff]
              %899 = vst [vmem:[%s801 + $0x1e0] sm:$0xff] %v898
              %v900 = vld [vmem:[%s800 + $0x1e8] sm:$0xff]
              %901 = vst [vmem:[%s801 + $0x1e8] sm:$0xff] %v900
              %v902 = vld [vmem:[%s800 + $0x1f0] sm:$0xff]
              %903 = vst [vmem:[%s801 + $0x1f0] sm:$0xff] %v902
              %v904 = vld [vmem:[%s800 + $0x1f8] sm:$0xff]
              %905 = vst [vmem:[%s801 + $0x1f8] sm:$0xff] %v904
              %v906 = vld [vmem:[%s800 + $0x208] sm:$0xff]
              %907 = vst [vmem:[%s801 + $0x208] sm:$0xff] %v906
              %v908 = vld [vmem:[%s800 + $0x210] sm:$0xff]
              %909 = vst [vmem:[%s801 + $0x210] sm:$0xff] %v908
              %v910 = vld [vmem:[%s800 + $0x218] sm:$0xff]
              %911 = vst [vmem:[%s801 + $0x218] sm:$0xff] %v910
              %v912 = vld [vmem:[%s800 + $0x220] sm:$0xff]
              %913 = vst [vmem:[%s801 + $0x220] sm:$0xff] %v912
              %v914 = vld [vmem:[%s800 + $0x230] sm:$0xff]
              %915 = vst [vmem:[%s801 + $0x230] sm:$0xff] %v914
              %v916 = vld [vmem:[%s800 + $0x238] sm:$0xff]
              %917 = vst [vmem:[%s801 + $0x238] sm:$0xff] %v916
              %v918 = vld [vmem:[%s800 + $0x240] sm:$0xff]
              %919 = vst [vmem:[%s801 + $0x240] sm:$0xff] %v918
              %v920 = vld [vmem:[%s800 + $0x248] sm:$0xff]
              %921 = vst [vmem:[%s801 + $0x248] sm:$0xff] %v920
              %v922 = vld [vmem:[%s800 + $0x258] sm:$0xff]
              %923 = vst [vmem:[%s801 + $0x258] sm:$0xff] %v922
              %v924 = vld [vmem:[%s800 + $0x260] sm:$0xff]
              %925 = vst [vmem:[%s801 + $0x260] sm:$0xff] %v924
              %v926 = vld [vmem:[%s800 + $0x268] sm:$0xff]
              %927 = vst [vmem:[%s801 + $0x268] sm:$0xff] %v926
              %v928 = vld [vmem:[%s800 + $0x270] sm:$0xff]
              %929 = vst [vmem:[%s801 + $0x270] sm:$0xff] %v928
              %v930 = vld [vmem:[%s800 + $0x280] sm:$0xff]
              %931 = vst [vmem:[%s801 + $0x280] sm:$0xff] %v930
              %v932 = vld [vmem:[%s800 + $0x288] sm:$0xff]
              %933 = vst [vmem:[%s801 + $0x288] sm:$0xff] %v932
              %v934 = vld [vmem:[%s800 + $0x290] sm:$0xff]
              %935 = vst [vmem:[%s801 + $0x290] sm:$0xff] %v934
              %v936 = vld [vmem:[%s800 + $0x298] sm:$0xff]
              %937 = vst [vmem:[%s801 + $0x298] sm:$0xff] %v936
              %v938 = vld [vmem:[%s800 + $0x2a8] sm:$0xff]
              %939 = vst [vmem:[%s801 + $0x2a8] sm:$0xff] %v938
              %v940 = vld [vmem:[%s800 + $0x2b0] sm:$0xff]
              %941 = vst [vmem:[%s801 + $0x2b0] sm:$0xff] %v940
              %v942 = vld [vmem:[%s800 + $0x2b8] sm:$0xff]
              %943 = vst [vmem:[%s801 + $0x2b8] sm:$0xff] %v942
              %v944 = vld [vmem:[%s800 + $0x2c0] sm:$0xff]
              %945 = vst [vmem:[%s801 + $0x2c0] sm:$0xff] %v944
              %v946 = vld [vmem:[%s800 + $0x2d0] sm:$0xff]
              %947 = vst [vmem:[%s801 + $0x2d0] sm:$0xff] %v946
              %v948 = vld [vmem:[%s800 + $0x2d8] sm:$0xff]
              %949 = vst [vmem:[%s801 + $0x2d8] sm:$0xff] %v948
              %v950 = vld [vmem:[%s800 + $0x2e0] sm:$0xff]
              %951 = vst [vmem:[%s801 + $0x2e0] sm:$0xff] %v950
              %v952 = vld [vmem:[%s800 + $0x2e8] sm:$0xff]
              %953 = vst [vmem:[%s801 + $0x2e8] sm:$0xff] %v952
              %v954 = vld [vmem:[%s800 + $0x2f8] sm:$0xff]
              %955 = vst [vmem:[%s801 + $0x2f8] sm:$0xff] %v954
              %v956 = vld [vmem:[%s800 + $0x300] sm:$0xff]
              %957 = vst [vmem:[%s801 + $0x300] sm:$0xff] %v956
              %v958 = vld [vmem:[%s800 + $0x308] sm:$0xff]
              %959 = vst [vmem:[%s801 + $0x308] sm:$0xff] %v958
              %v960 = vld [vmem:[%s800 + $0x310] sm:$0xff]
              %961 = vst [vmem:[%s801 + $0x310] sm:$0xff] %v960
              %v962 = vld [vmem:[%s800 + $0x320] sm:$0xff]
              %963 = vst [vmem:[%s801 + $0x320] sm:$0xff] %v962
              %v964 = vld [vmem:[%s800 + $0x328] sm:$0xff]
              %965 = vst [vmem:[%s801 + $0x328] sm:$0xff] %v964
              %v966 = vld [vmem:[%s800 + $0x330] sm:$0xff]
              %967 = vst [vmem:[%s801 + $0x330] sm:$0xff] %v966
              %v968 = vld [vmem:[%s800 + $0x338] sm:$0xff]
              %969 = vst [vmem:[%s801 + $0x338] sm:$0xff] %v968
              %v970 = vld [vmem:[%s800 + $0x348] sm:$0xff]
              %971 = vst [vmem:[%s801 + $0x348] sm:$0xff] %v970
              %v972 = vld [vmem:[%s800 + $0x350] sm:$0xff]
              %973 = vst [vmem:[%s801 + $0x350] sm:$0xff] %v972
              %v974 = vld [vmem:[%s800 + $0x358] sm:$0xff]
              %975 = vst [vmem:[%s801 + $0x358] sm:$0xff] %v974
              %v976 = vld [vmem:[%s800 + $0x360] sm:$0xff]
              %977 = vst [vmem:[%s801 + $0x360] sm:$0xff] %v976
              %v978 = vld [vmem:[%s800 + $0x370] sm:$0xff]
              %979 = vst [vmem:[%s801 + $0x370] sm:$0xff] %v978
              %v980 = vld [vmem:[%s800 + $0x378] sm:$0xff]
              %981 = vst [vmem:[%s801 + $0x378] sm:$0xff] %v980
              %v982 = vld [vmem:[%s800 + $0x380] sm:$0xff]
              %983 = vst [vmem:[%s801 + $0x380] sm:$0xff] %v982
              %v984 = vld [vmem:[%s800 + $0x388] sm:$0xff]
              %985 = vst [vmem:[%s801 + $0x388] sm:$0xff] %v984
              %v986 = vld [vmem:[%s800 + $0x398] sm:$0xff]
              %987 = vst [vmem:[%s801 + $0x398] sm:$0xff] %v986
              %v988 = vld [vmem:[%s800 + $0x3a0] sm:$0xff]
              %989 = vst [vmem:[%s801 + $0x3a0] sm:$0xff] %v988
              %v990 = vld [vmem:[%s800 + $0x3a8] sm:$0xff]
              %991 = vst [vmem:[%s801 + $0x3a8] sm:$0xff] %v990
              %v992 = vld [vmem:[%s800 + $0x3b0] sm:$0xff]
              %993 = vst [vmem:[%s801 + $0x3b0] sm:$0xff] %v992
              %v994 = vld [vmem:[%s800 + $0x3c0] sm:$0xff]
              %995 = vst [vmem:[%s801 + $0x3c0] sm:$0xff] %v994
              %v996 = vld [vmem:[%s800 + $0x3c8] sm:$0xff]
              %997 = vst [vmem:[%s801 + $0x3c8] sm:$0xff] %v996
              %v998 = vld [vmem:[%s800 + $0x3d0] sm:$0xff]
              %999 = vst [vmem:[%s801 + $0x3d0] sm:$0xff] %v998
              %v1000 = vld [vmem:[%s800 + $0x3d8] sm:$0xff]
              %1001 = vst [vmem:[%s801 + $0x3d8] sm:$0xff] %v1000
              %v1002 = vld [vmem:[%s800 + $0x3e8] sm:$0xff]
              %1003 = vst [vmem:[%s801 + $0x3e8] sm:$0xff] %v1002
              %v1004 = vld [vmem:[%s800 + $0x3f0] sm:$0xff]
              %1005 = vst [vmem:[%s801 + $0x3f0] sm:$0xff] %v1004
              %v1006 = vld [vmem:[%s800 + $0x3f8] sm:$0xff]
              %1007 = vst [vmem:[%s801 + $0x3f8] sm:$0xff] %v1006
              %v1008 = vld [vmem:[%s800 + $0x400] sm:$0xff]
              %1009 = vst [vmem:[%s801 + $0x400] sm:$0xff] %v1008
            $region121: #{aspp_forward.1} parent=115 // loop_footer
              %s799 = sadd.s32 1, %s795
            $region122: #{aspp_forward.1} parent=115 // loop_footer_branch
              %794 = sbr.rel target = $region118
            $region123: #{aspp_forward.1} parent=115 // loop_exit
              _
            %s1010 = sshllo.u32 0, %s789
            loop: start=0, step=1, limit=1
            $region124: #{aspp_forward.1} parent=115 // loop_pre_header
              _
            $region125: #{aspp_forward.1} parent=115 // loop_header
              %s1012 = sphi 0, %s1016
              %p1013 = scmp.ge.s32.totalorder %s1012, 1
              %s1017 = sphi %s791, %s791
              %s1018 = sphi %s793, %s793
            $region126: #{aspp_forward.1} parent=115 // loop_header_branch
              %1015 = sbr.rel (%p1013) target = $region130
            $region127: #{aspp_forward.1} parent=115 // loop_body
              %v1019 = vld [vmem:[%s1017] sm:%s1010]
              %1020 = vst [vmem:[%s1018] sm:%s1010] %v1019
              %v1021 = vld [vmem:[%s1017 + $0x28] sm:%s1010]
              %1022 = vst [vmem:[%s1018 + $0x28] sm:%s1010] %v1021
              %v1023 = vld [vmem:[%s1017 + $0x50] sm:%s1010]
              %1024 = vst [vmem:[%s1018 + $0x50] sm:%s1010] %v1023
              %v1025 = vld [vmem:[%s1017 + $0x78] sm:%s1010]
              %1026 = vst [vmem:[%s1018 + $0x78] sm:%s1010] %v1025
              %v1027 = vld [vmem:[%s1017 + $0xa0] sm:%s1010]
              %1028 = vst [vmem:[%s1018 + $0xa0] sm:%s1010] %v1027
              %v1029 = vld [vmem:[%s1017 + $0xc8] sm:%s1010]
              %1030 = vst [vmem:[%s1018 + $0xc8] sm:%s1010] %v1029
              %v1031 = vld [vmem:[%s1017 + $0xf0] sm:%s1010]
              %1032 = vst [vmem:[%s1018 + $0xf0] sm:%s1010] %v1031
              %v1033 = vld [vmem:[%s1017 + $0x118] sm:%s1010]
              %1034 = vst [vmem:[%s1018 + $0x118] sm:%s1010] %v1033
              %v1035 = vld [vmem:[%s1017 + $0x140] sm:%s1010]
              %1036 = vst [vmem:[%s1018 + $0x140] sm:%s1010] %v1035
              %v1037 = vld [vmem:[%s1017 + $0x168] sm:%s1010]
              %1038 = vst [vmem:[%s1018 + $0x168] sm:%s1010] %v1037
              %v1039 = vld [vmem:[%s1017 + $0x190] sm:%s1010]
              %1040 = vst [vmem:[%s1018 + $0x190] sm:%s1010] %v1039
              %v1041 = vld [vmem:[%s1017 + $0x1b8] sm:%s1010]
              %1042 = vst [vmem:[%s1018 + $0x1b8] sm:%s1010] %v1041
              %v1043 = vld [vmem:[%s1017 + $0x1e0] sm:%s1010]
              %1044 = vst [vmem:[%s1018 + $0x1e0] sm:%s1010] %v1043
              %v1045 = vld [vmem:[%s1017 + $0x208] sm:%s1010]
              %1046 = vst [vmem:[%s1018 + $0x208] sm:%s1010] %v1045
              %v1047 = vld [vmem:[%s1017 + $0x230] sm:%s1010]
              %1048 = vst [vmem:[%s1018 + $0x230] sm:%s1010] %v1047
              %v1049 = vld [vmem:[%s1017 + $0x258] sm:%s1010]
              %1050 = vst [vmem:[%s1018 + $0x258] sm:%s1010] %v1049
              %v1051 = vld [vmem:[%s1017 + $0x280] sm:%s1010]
              %1052 = vst [vmem:[%s1018 + $0x280] sm:%s1010] %v1051
              %v1053 = vld [vmem:[%s1017 + $0x2a8] sm:%s1010]
              %1054 = vst [vmem:[%s1018 + $0x2a8] sm:%s1010] %v1053
              %v1055 = vld [vmem:[%s1017 + $0x2d0] sm:%s1010]
              %1056 = vst [vmem:[%s1018 + $0x2d0] sm:%s1010] %v1055
              %v1057 = vld [vmem:[%s1017 + $0x2f8] sm:%s1010]
              %1058 = vst [vmem:[%s1018 + $0x2f8] sm:%s1010] %v1057
              %v1059 = vld [vmem:[%s1017 + $0x320] sm:%s1010]
              %1060 = vst [vmem:[%s1018 + $0x320] sm:%s1010] %v1059
              %v1061 = vld [vmem:[%s1017 + $0x348] sm:%s1010]
              %1062 = vst [vmem:[%s1018 + $0x348] sm:%s1010] %v1061
              %v1063 = vld [vmem:[%s1017 + $0x370] sm:%s1010]
              %1064 = vst [vmem:[%s1018 + $0x370] sm:%s1010] %v1063
              %v1065 = vld [vmem:[%s1017 + $0x398] sm:%s1010]
              %1066 = vst [vmem:[%s1018 + $0x398] sm:%s1010] %v1065
              %v1067 = vld [vmem:[%s1017 + $0x3c0] sm:%s1010]
              %1068 = vst [vmem:[%s1018 + $0x3c0] sm:%s1010] %v1067
              %v1069 = vld [vmem:[%s1017 + $0x3e8] sm:%s1010]
              %1070 = vst [vmem:[%s1018 + $0x3e8] sm:%s1010] %v1069
            $region128: #{aspp_forward.1} parent=115 // loop_footer
              %s1016 = sadd.s32 1, %s1012
            $region129: #{aspp_forward.1} parent=115 // loop_footer_branch
              %1011 = sbr.rel target = $region125
            $region130: #{aspp_forward.1} parent=115 // loop_exit
              _
          $region116: #{aspp_forward.1} parent=100 // pred_fallthru
            _
        $region101: #{aspp_forward.1} parent=96 // pred_fallthru
          _
        // Predicated region
        $region102: #{aspp_forward.1} parent=96 // pred_check
          %p720 = pneg %p716
        $region103: #{aspp_forward.1} parent=96 // pred_check_branch
          %722 = sbr.rel (%p720) target = $region105
        $region104: #{aspp_forward.1} parent=96 // pred_region
          %s723 = sshllo.u32 0, 34
          loop: start=0, step=1, limit=1
          $region106: #{aspp_forward.1} parent=104 // loop_pre_header
            _
          $region107: #{aspp_forward.1} parent=104 // loop_header
            %s725 = sphi 0, %s729
            %p726 = scmp.ge.s32.totalorder %s725, 1
            %s730 = sphi %s711, %s711
            %s731 = sphi %s713, %s713
          $region108: #{aspp_forward.1} parent=104 // loop_header_branch
            %728 = sbr.rel (%p726) target = $region112
          $region109: #{aspp_forward.1} parent=104 // loop_body
            %v732 = vld [vmem:[%s730] sm:%s723]
            %733 = vst [vmem:[%s731] sm:%s723] %v732
            %v734 = vld [vmem:[%s730 + $0x28] sm:%s723]
            %735 = vst [vmem:[%s731 + $0x28] sm:%s723] %v734
            %v736 = vld [vmem:[%s730 + $0x50] sm:%s723]
            %737 = vst [vmem:[%s731 + $0x50] sm:%s723] %v736
            %v738 = vld [vmem:[%s730 + $0x78] sm:%s723]
            %739 = vst [vmem:[%s731 + $0x78] sm:%s723] %v738
            %v740 = vld [vmem:[%s730 + $0xa0] sm:%s723]
            %741 = vst [vmem:[%s731 + $0xa0] sm:%s723] %v740
            %v742 = vld [vmem:[%s730 + $0xc8] sm:%s723]
            %743 = vst [vmem:[%s731 + $0xc8] sm:%s723] %v742
            %v744 = vld [vmem:[%s730 + $0xf0] sm:%s723]
            %745 = vst [vmem:[%s731 + $0xf0] sm:%s723] %v744
            %v746 = vld [vmem:[%s730 + $0x118] sm:%s723]
            %747 = vst [vmem:[%s731 + $0x118] sm:%s723] %v746
            %v748 = vld [vmem:[%s730 + $0x140] sm:%s723]
            %749 = vst [vmem:[%s731 + $0x140] sm:%s723] %v748
            %v750 = vld [vmem:[%s730 + $0x168] sm:%s723]
            %751 = vst [vmem:[%s731 + $0x168] sm:%s723] %v750
            %v752 = vld [vmem:[%s730 + $0x190] sm:%s723]
            %753 = vst [vmem:[%s731 + $0x190] sm:%s723] %v752
            %v754 = vld [vmem:[%s730 + $0x1b8] sm:%s723]
            %755 = vst [vmem:[%s731 + $0x1b8] sm:%s723] %v754
            %v756 = vld [vmem:[%s730 + $0x1e0] sm:%s723]
            %757 = vst [vmem:[%s731 + $0x1e0] sm:%s723] %v756
            %v758 = vld [vmem:[%s730 + $0x208] sm:%s723]
            %759 = vst [vmem:[%s731 + $0x208] sm:%s723] %v758
            %v760 = vld [vmem:[%s730 + $0x230] sm:%s723]
            %761 = vst [vmem:[%s731 + $0x230] sm:%s723] %v760
            %v762 = vld [vmem:[%s730 + $0x258] sm:%s723]
            %763 = vst [vmem:[%s731 + $0x258] sm:%s723] %v762
            %v764 = vld [vmem:[%s730 + $0x280] sm:%s723]
            %765 = vst [vmem:[%s731 + $0x280] sm:%s723] %v764
            %v766 = vld [vmem:[%s730 + $0x2a8] sm:%s723]
            %767 = vst [vmem:[%s731 + $0x2a8] sm:%s723] %v766
            %v768 = vld [vmem:[%s730 + $0x2d0] sm:%s723]
            %769 = vst [vmem:[%s731 + $0x2d0] sm:%s723] %v768
            %v770 = vld [vmem:[%s730 + $0x2f8] sm:%s723]
            %771 = vst [vmem:[%s731 + $0x2f8] sm:%s723] %v770
            %v772 = vld [vmem:[%s730 + $0x320] sm:%s723]
            %773 = vst [vmem:[%s731 + $0x320] sm:%s723] %v772
            %v774 = vld [vmem:[%s730 + $0x348] sm:%s723]
            %775 = vst [vmem:[%s731 + $0x348] sm:%s723] %v774
            %v776 = vld [vmem:[%s730 + $0x370] sm:%s723]
            %777 = vst [vmem:[%s731 + $0x370] sm:%s723] %v776
            %v778 = vld [vmem:[%s730 + $0x398] sm:%s723]
            %779 = vst [vmem:[%s731 + $0x398] sm:%s723] %v778
            %v780 = vld [vmem:[%s730 + $0x3c0] sm:%s723]
            %781 = vst [vmem:[%s731 + $0x3c0] sm:%s723] %v780
            %v782 = vld [vmem:[%s730 + $0x3e8] sm:%s723]
            %783 = vst [vmem:[%s731 + $0x3e8] sm:%s723] %v782
          $region110: #{aspp_forward.1} parent=104 // loop_footer
            %s729 = sadd.s32 1, %s725
          $region111: #{aspp_forward.1} parent=104 // loop_footer_branch
            %724 = sbr.rel target = $region107
          $region112: #{aspp_forward.1} parent=104 // loop_exit
            _
        $region105: #{aspp_forward.1} parent=96 // pred_fallthru
          _
        // Predicated region
        $region131: #{aspp_forward.1} parent=96 // pred_check
          _
        $region132: #{aspp_forward.1} parent=96 // pred_check_branch
          %1073 = sbr.rel (0) target = $region134
        $region133: #{aspp_forward.1} parent=96 // pred_region
          %1074 = vsyncadd %s714, 14144
        $region134: #{aspp_forward.1} parent=96 // pred_fallthru
          _
      $region97: #{aspp_forward.1} parent=51 // pred_fallthru
        _
      // Predicated region
      $region135: #{aspp_forward.1} parent=51 // pred_check
        %p1075 = pneg %p324
      $region136: #{aspp_forward.1} parent=51 // pred_check_branch
        %1077 = sbr.rel (%p1075) target = $region138
      $region137: #{aspp_forward.1} parent=51 // pred_region
        %v1078 = vld [vmem:[%s313] sm:$0x1]
        %v1079 = vld [vmem:[%s6] sm:$0xff]
        %v1080 = vld [vmem:[%s6 + $0x8] sm:$0xff]
        %v1081 = vld [vmem:[%s6 + $0x10] sm:$0xff]
        %v1082 = vld [vmem:[%s6 + $0x18] sm:$0xff]
        %v1083 = vld [vmem:[%s6 + $0x20] sm:$0xff]
        %v1084 = vld [vmem:[%s6 + $0x28] sm:$0xff]
        %v1085 = vld [vmem:[%s6 + $0x30] sm:$0xff]
        %v1086 = vld [vmem:[%s6 + $0x38] sm:$0xff]
        %v1087 = vld [vmem:[%s6 + $0x40] sm:$0xff]
        %v1088 = vld [vmem:[%s6 + $0x48] sm:$0xff]
        %v1089 = vld [vmem:[%s6 + $0x50] sm:$0xff]
        %v1090 = vld [vmem:[%s6 + $0x58] sm:$0xff]
        %v1091 = vld [vmem:[%s6 + $0x60] sm:$0xff]
        %v1092 = vld [vmem:[%s6 + $0x68] sm:$0xff]
        %v1093 = vld [vmem:[%s6 + $0x70] sm:$0xff]
        %v1094 = vld [vmem:[%s6 + $0x78] sm:$0xff]
        %v1095 = vld [vmem:[%s8 + $0x4] sm:$0x1]
        %1096 = vmatprep.subr.mxu0 0.0
        %1097 = vmatpush1.msra.mxu0 %v1079
        %1098 = vmatprep.subr.mxu0 0.0
        %1099 = vmatpush1.msra.mxu0 %v1080
        %1100 = vmatprep.subr.mxu0 0.0
        %1101 = vmatpush1.msra.mxu0 %v1081
        %1102 = vmatprep.subr.mxu0 0.0
        %1103 = vmatpush1.msra.mxu0 %v1082
        %1104 = vmatprep.subr.mxu0 0.0
        %1105 = vmatpush1.msra.mxu0 %v1083
        %1106 = vmatprep.subr.mxu0 0.0
        %1107 = vmatpush1.msra.mxu0 %v1084
        %1108 = vmatprep.subr.mxu0 0.0
        %1109 = vmatpush1.msra.mxu0 %v1085
        %1110 = vmatprep.subr.mxu0 0.0
        %1111 = vmatpush1.msra.mxu0 %v1086
        %1112 = vmatprep.subr.mxu0 0.0
        %1113 = vmatpush1.msra.mxu0 %v1087
        %1114 = vmatprep.subr.mxu0 0.0
        %1115 = vmatpush1.msra.mxu0 %v1088
        %1116 = vmatprep.subr.mxu0 0.0
        %1117 = vmatpush1.msra.mxu0 %v1089
        %1118 = vmatprep.subr.mxu0 0.0
        %1119 = vmatpush1.msra.mxu0 %v1090
        %1120 = vmatprep.subr.mxu0 0.0
        %1121 = vmatpush1.msra.mxu0 %v1091
        %1122 = vmatprep.subr.mxu0 0.0
        %1123 = vmatpush1.msra.mxu0 %v1092
        %1124 = vmatprep.subr.mxu0 0.0
        %1125 = vmatpush1.msra.mxu0 %v1093
        %1126 = vmatprep.subr.mxu0 0.0
        %1127 = vmatpush1.msra.mxu0 %v1094
        %1128 = vmatprep.subr.mxu0 0.0
        %1129 = vmatpush1.msra.mxu0 0.0
        %1130 = vmatprep.subr.mxu0 0.0
        %1131 = vmatpush1.msra.mxu0 0.0
        %1132 = vmatprep.subr.mxu0 0.0
        %1133 = vmatpush1.msra.mxu0 0.0
        %1134 = vmatprep.subr.mxu0 0.0
        %1135 = vmatpush1.msra.mxu0 0.0
        %1136 = vmatprep.subr.mxu0 0.0
        %1137 = vmatpush1.msra.mxu0 0.0
        %1138 = vmatprep.subr.mxu0 0.0
        %1139 = vmatpush1.msra.mxu0 0.0
        %1140 = vmatprep.subr.mxu0 0.0
        %1141 = vmatpush1.msra.mxu0 0.0
        %1142 = vmatprep.subr.mxu0 0.0
        %1143 = vmatpush1.msra.mxu0 0.0
        %1144 = vmatprep.subr.mxu0 0.0
        %1145 = vmatpush1.msra.mxu0 0.0
        %1146 = vmatprep.subr.mxu0 0.0
        %1147 = vmatpush1.msra.mxu0 0.0
        %1148 = vmatprep.subr.mxu0 0.0
        %1149 = vmatpush1.msra.mxu0 0.0
        %1150 = vmatprep.subr.mxu0 0.0
        %1151 = vmatpush1.msra.mxu0 0.0
        %1152 = vmatprep.subr.mxu0 0.0
        %1153 = vmatpush1.msra.mxu0 0.0
        %1154 = vmatprep.subr.mxu0 0.0
        %1155 = vmatpush1.msra.mxu0 0.0
        %1156 = vmatprep.subr.mxu0 0.0
        %1157 = vmatpush1.msra.mxu0 0.0
        %1158 = vmatprep.subr.mxu0 0.0
        %1159 = vmatpush1.msra.mxu0 0.0
        %1160 = vmatprep.mubr.f32.mxu0 0.0
        %1161 = vmatmul.mubr.f32.gmra.mrb[0].mxu0 %v1078
        %v1162 = vpop.f32.mrb[0].mxu0
        %v1163 = vadd.f32 %v1095, %v1162
        %v1164 = vpop.f32.mrb[0].mxu0
        %1165 = vdwg.mxu0
        %v1166 = vmax.f32 %v1163, 0.0
        %v1167 = vld [vmem:[%s7 + $0x200] sm:$0xff]
        %v1168 = vld [vmem:[%s7 + $0x208] sm:$0xff]
        %v1169 = vld [vmem:[%s7 + $0x210] sm:$0xff]
        %v1170 = vld [vmem:[%s7 + $0x218] sm:$0xff]
        %v1171 = vld [vmem:[%s7 + $0x220] sm:$0xff]
        %v1172 = vld [vmem:[%s7 + $0x228] sm:$0xff]
        %v1173 = vld [vmem:[%s7 + $0x230] sm:$0xff]
        %v1174 = vld [vmem:[%s7 + $0x238] sm:$0xff]
        %v1175 = vld [vmem:[%s7 + $0x240] sm:$0xff]
        %v1176 = vld [vmem:[%s7 + $0x248] sm:$0xff]
        %v1177 = vld [vmem:[%s7 + $0x250] sm:$0xff]
        %v1178 = vld [vmem:[%s7 + $0x258] sm:$0xff]
        %v1179 = vld [vmem:[%s7 + $0x260] sm:$0xff]
        %v1180 = vld [vmem:[%s7 + $0x268] sm:$0xff]
        %v1181 = vld [vmem:[%s7 + $0x270] sm:$0xff]
        %v1182 = vld [vmem:[%s7 + $0x278] sm:$0xff]
        %v1183 = vld [vmem:[%s8 + $0x5] sm:$0x1]
        %1184 = vmatprep.subr.mxu0 0.0
        %1185 = vmatpush1.msra.mxu0 %v1167
        %1186 = vmatprep.subr.mxu0 0.0
        %1187 = vmatpush1.msra.mxu0 %v1168
        %1188 = vmatprep.subr.mxu0 0.0
        %1189 = vmatpush1.msra.mxu0 %v1169
        %1190 = vmatprep.subr.mxu0 0.0
        %1191 = vmatpush1.msra.mxu0 %v1170
        %1192 = vmatprep.subr.mxu0 0.0
        %1193 = vmatpush1.msra.mxu0 %v1171
        %1194 = vmatprep.subr.mxu0 0.0
        %1195 = vmatpush1.msra.mxu0 %v1172
        %1196 = vmatprep.subr.mxu0 0.0
        %1197 = vmatpush1.msra.mxu0 %v1173
        %1198 = vmatprep.subr.mxu0 0.0
        %1199 = vmatpush1.msra.mxu0 %v1174
        %1200 = vmatprep.subr.mxu0 0.0
        %1201 = vmatpush1.msra.mxu0 %v1175
        %1202 = vmatprep.subr.mxu0 0.0
        %1203 = vmatpush1.msra.mxu0 %v1176
        %1204 = vmatprep.subr.mxu0 0.0
        %1205 = vmatpush1.msra.mxu0 %v1177
        %1206 = vmatprep.subr.mxu0 0.0
        %1207 = vmatpush1.msra.mxu0 %v1178
        %1208 = vmatprep.subr.mxu0 0.0
        %1209 = vmatpush1.msra.mxu0 %v1179
        %1210 = vmatprep.subr.mxu0 0.0
        %1211 = vmatpush1.msra.mxu0 %v1180
        %1212 = vmatprep.subr.mxu0 0.0
        %1213 = vmatpush1.msra.mxu0 %v1181
        %1214 = vmatprep.subr.mxu0 0.0
        %1215 = vmatpush1.msra.mxu0 %v1182
        %1216 = vmatprep.subr.mxu0 0.0
        %1217 = vmatpush1.msra.mxu0 0.0
        %1218 = vmatprep.subr.mxu0 0.0
        %1219 = vmatpush1.msra.mxu0 0.0
        %1220 = vmatprep.subr.mxu0 0.0
        %1221 = vmatpush1.msra.mxu0 0.0
        %1222 = vmatprep.subr.mxu0 0.0
        %1223 = vmatpush1.msra.mxu0 0.0
        %1224 = vmatprep.subr.mxu0 0.0
        %1225 = vmatpush1.msra.mxu0 0.0
        %1226 = vmatprep.subr.mxu0 0.0
        %1227 = vmatpush1.msra.mxu0 0.0
        %1228 = vmatprep.subr.mxu0 0.0
        %1229 = vmatpush1.msra.mxu0 0.0
        %1230 = vmatprep.subr.mxu0 0.0
        %1231 = vmatpush1.msra.mxu0 0.0
        %1232 = vmatprep.subr.mxu0 0.0
        %1233 = vmatpush1.msra.mxu0 0.0
        %1234 = vmatprep.subr.mxu0 0.0
        %1235 = vmatpush1.msra.mxu0 0.0
        %1236 = vmatprep.subr.mxu0 0.0
        %1237 = vmatpush1.msra.mxu0 0.0
        %1238 = vmatprep.subr.mxu0 0.0
        %1239 = vmatpush1.msra.mxu0 0.0
        %1240 = vmatprep.subr.mxu0 0.0
        %1241 = vmatpush1.msra.mxu0 0.0
        %1242 = vmatprep.subr.mxu0 0.0
        %1243 = vmatpush1.msra.mxu0 0.0
        %1244 = vmatprep.subr.mxu0 0.0
        %1245 = vmatpush1.msra.mxu0 0.0
        %1246 = vmatprep.subr.mxu0 0.0
        %1247 = vmatpush1.msra.mxu0 0.0
        %1248 = vmatprep.mubr.f32.mxu0 0.0
        %1249 = vmatmul.mubr.f32.gmra.mrb[0].mxu0 %v1166
        %v1250 = vpop.f32.mrb[0].mxu0
        %v1251 = vadd.f32 %v1183, %v1250
        %v1252 = vpop.f32.mrb[0].mxu0
        %1253 = vdwg.mxu0
        %1254 = vst [vmem:[#allocation4] sm:$0x1] %v1251
      $region138: #{aspp_forward.1} parent=51 // pred_fallthru
        _
      %s1255 = smul.u32 %s695, 1040
      %s1256 = sadd.s32 360, %s1255
      %s1257 = scalar_lea.vmem [#allocation2], %s1256
      %v1258 = vld [vmem:[%s1257 + $0x9] sm:$0xff]
      %v1259 = vld [vmem:[%s1257 + $0x11] sm:$0xff]
      %v1260 = vld [vmem:[%s1257 + $0x31] sm:$0xff]
      %v1261 = vld [vmem:[%s1257 + $0x39] sm:$0xff]
      %v1262 = vld [vmem:[%s1257 + $0x59] sm:$0xff]
      %v1263 = vld [vmem:[%s1257 + $0x61] sm:$0xff]
      %v1264 = vld [vmem:[%s1257 + $0x81] sm:$0xff]
      %v1265 = vld [vmem:[%s1257 + $0x89] sm:$0xff]
      %v1266 = vld [vmem:[%s1257 + $0xa9] sm:$0xff]
      %v1267 = vld [vmem:[%s1257 + $0xb1] sm:$0xff]
      %v1268 = vld [vmem:[%s1257 + $0xd1] sm:$0xff]
      %v1269 = vld [vmem:[%s1257 + $0xd9] sm:$0xff]
      %v1270 = vld [vmem:[%s1257 + $0xf9] sm:$0xff]
      %v1271 = vld [vmem:[%s1257 + $0x101] sm:$0xff]
      %v1272 = vld [vmem:[%s1257 + $0x121] sm:$0xff]
      %v1273 = vld [vmem:[%s1257 + $0x129] sm:$0xff]
      %v1274 = vld [vmem:[%s2] sm:$0xff]
      %v1275 = vld [vmem:[%s2 + $0x8] sm:$0xff]
      %v1276 = vld [vmem:[%s2 + $0x10] sm:$0xff]
      %v1277 = vld [vmem:[%s2 + $0x18] sm:$0xff]
      %v1278 = vld [vmem:[%s2 + $0x20] sm:$0xff]
      %v1279 = vld [vmem:[%s2 + $0x28] sm:$0xff]
      %v1280 = vld [vmem:[%s2 + $0x30] sm:$0xff]
      %v1281 = vld [vmem:[%s2 + $0x38] sm:$0xff]
      %v1282 = vld [vmem:[%s2 + $0x40] sm:$0xff]
      %v1283 = vld [vmem:[%s2 + $0x48] sm:$0xff]
      %v1284 = vld [vmem:[%s2 + $0x50] sm:$0xff]
      %v1285 = vld [vmem:[%s2 + $0x58] sm:$0xff]
      %v1286 = vld [vmem:[%s2 + $0x60] sm:$0xff]
      %v1287 = vld [vmem:[%s2 + $0x68] sm:$0xff]
      %v1288 = vld [vmem:[%s2 + $0x70] sm:$0xff]
      %v1289 = vld [vmem:[%s2 + $0x78] sm:$0xff]
      %v1290 = vld [vmem:[%s8] sm:$0x1]
      %v1291 = vlaneseq
      %v1292 = vshrl.u32 %v1291, 7
      %v1293 = vsub.s32 0, %v1292
      %v1294 = vrot.slane %v1290, %v1293
      %1295 = vmatprep.subr.mxu0 0.0
      %1296 = vmatpush1.msra.mxu0 %v1274
      %1297 = vmatprep.subr.mxu0 0.0
      %1298 = vmatpush1.msra.mxu0 %v1275
      %1299 = vmatprep.subr.mxu0 0.0
      %1300 = vmatpush1.msra.mxu0 %v1276
      %1301 = vmatprep.subr.mxu0 0.0
      %1302 = vmatpush1.msra.mxu0 %v1277
      %1303 = vmatprep.subr.mxu0 0.0
      %1304 = vmatpush1.msra.mxu0 %v1278
      %1305 = vmatprep.subr.mxu0 0.0
      %1306 = vmatpush1.msra.mxu0 %v1279
      %1307 = vmatprep.subr.mxu0 0.0
      %1308 = vmatpush1.msra.mxu0 %v1280
      %1309 = vmatprep.subr.mxu0 0.0
      %1310 = vmatpush1.msra.mxu0 %v1281
      %1311 = vmatprep.subr.mxu0 0.0
      %1312 = vmatpush1.msra.mxu0 %v1282
      %1313 = vmatprep.subr.mxu0 0.0
      %1314 = vmatpush1.msra.mxu0 %v1283
      %1315 = vmatprep.subr.mxu0 0.0
      %1316 = vmatpush1.msra.mxu0 %v1284
      %1317 = vmatprep.subr.mxu0 0.0
      %1318 = vmatpush1.msra.mxu0 %v1285
      %1319 = vmatprep.subr.mxu0 0.0
      %1320 = vmatpush1.msra.mxu0 %v1286
      %1321 = vmatprep.subr.mxu0 0.0
      %1322 = vmatpush1.msra.mxu0 %v1287
      %1323 = vmatprep.subr.mxu0 0.0
      %1324 = vmatpush1.msra.mxu0 %v1288
      %1325 = vmatprep.subr.mxu0 0.0
      %1326 = vmatpush1.msra.mxu0 %v1289
      %1327 = vmatprep.subr.mxu0 0.0
      %1328 = vmatpush1.msra.mxu0 0.0
      %1329 = vmatprep.subr.mxu0 0.0
      %1330 = vmatpush1.msra.mxu0 0.0
      %1331 = vmatprep.subr.mxu0 0.0
      %1332 = vmatpush1.msra.mxu0 0.0
      %1333 = vmatprep.subr.mxu0 0.0
      %1334 = vmatpush1.msra.mxu0 0.0
      %1335 = vmatprep.subr.mxu0 0.0
      %1336 = vmatpush1.msra.mxu0 0.0
      %1337 = vmatprep.subr.mxu0 0.0
      %1338 = vmatpush1.msra.mxu0 0.0
      %1339 = vmatprep.subr.mxu0 0.0
      %1340 = vmatpush1.msra.mxu0 0.0
      %1341 = vmatprep.subr.mxu0 0.0
      %1342 = vmatpush1.msra.mxu0 0.0
      %1343 = vmatprep.subr.mxu0 0.0
      %1344 = vmatpush1.msra.mxu0 0.0
      %1345 = vmatprep.subr.mxu0 0.0
      %1346 = vmatpush1.msra.mxu0 0.0
      %1347 = vmatprep.subr.mxu0 0.0
      %1348 = vmatpush1.msra.mxu0 0.0
      %1349 = vmatprep.subr.mxu0 0.0
      %1350 = vmatpush1.msra.mxu0 0.0
      %1351 = vmatprep.subr.mxu0 0.0
      %1352 = vmatpush1.msra.mxu0 0.0
      %1353 = vmatprep.subr.mxu0 0.0
      %1354 = vmatpush1.msra.mxu0 0.0
      %1355 = vmatprep.subr.mxu0 0.0
      %1356 = vmatpush1.msra.mxu0 0.0
      %1357 = vmatprep.subr.mxu0 0.0
      %1358 = vmatpush1.msra.mxu0 0.0
      %1359 = vmatprep.mubr.f32.mxu0 0.0
      %1360 = vmatmul.mubr.f32.gmra.mrb[0].mxu0 %v1258
      %v1361 = vpop.f32.mrb[0].mxu0
      %v1362 = vadd.f32 %v1294, %v1361
      %v1363 = vpop.f32.mrb[0].mxu0
      %1364 = vmatprep.mubr.f32.mxu0 0.0
      %1365 = vmatmul.mubr.f32.gmra.mrb[0].mxu0 %v1259
      %v1366 = vpop.f32.mrb[0].mxu0
      %v1367 = vadd.f32 %v1294, %v1366
      %v1368 = vpop.f32.mrb[0].mxu0
      %1369 = vmatprep.mubr.f32.mxu0 0.0
      %1370 = vmatmul.mubr.f32.gmra.mrb[0].mxu0 %v1260
      %v1371 = vpop.f32.mrb[0].mxu0
      %v1372 = vadd.f32 %v1294, %v1371
      %v1373 = vpop.f32.mrb[0].mxu0
      %1374 = vmatprep.mubr.f32.mxu0 0.0
      %1375 = vmatmul.mubr.f32.gmra.mrb[0].mxu0 %v1261
      %v1376 = vpop.f32.mrb[0].mxu0
      %v1377 = vadd.f32 %v1294, %v1376
      %v1378 = vpop.f32.mrb[0].mxu0
      %1379 = vmatprep.mubr.f32.mxu0 0.0
      %1380 = vmatmul.mubr.f32.gmra.mrb[0].mxu0 %v1262
      %v1381 = vpop.f32.mrb[0].mxu0
      %v1382 = vadd.f32 %v1294, %v1381
      %v1383 = vpop.f32.mrb[0].mxu0
      %1384 = vmatprep.mubr.f32.mxu0 0.0
      %1385 = vmatmul.mubr.f32.gmra.mrb[0].mxu0 %v1263
      %v1386 = vpop.f32.mrb[0].mxu0
      %v1387 = vadd.f32 %v1294, %v1386
      %v1388 = vpop.f32.mrb[0].mxu0
      %1389 = vmatprep.mubr.f32.mxu0 0.0
      %1390 = vmatmul.mubr.f32.gmra.mrb[0].mxu0 %v1264
      %v1391 = vpop.f32.mrb[0].mxu0
      %v1392 = vadd.f32 %v1294, %v1391
      %v1393 = vpop.f32.mrb[0].mxu0
      %1394 = vmatprep.mubr.f32.mxu0 0.0
      %1395 = vmatmul.mubr.f32.gmra.mrb[0].mxu0 %v1265
      %v1396 = vpop.f32.mrb[0].mxu0
      %v1397 = vadd.f32 %v1294, %v1396
      %v1398 = vpop.f32.mrb[0].mxu0
      %1399 = vmatprep.mubr.f32.mxu0 0.0
      %1400 = vmatmul.mubr.f32.gmra.mrb[0].mxu0 %v1266
      %v1401 = vpop.f32.mrb[0].mxu0
      %v1402 = vadd.f32 %v1294, %v1401
      %v1403 = vpop.f32.mrb[0].mxu0
      %1404 = vmatprep.mubr.f32.mxu0 0.0
      %1405 = vmatmul.mubr.f32.gmra.mrb[0].mxu0 %v1267
      %v1406 = vpop.f32.mrb[0].mxu0
      %v1407 = vadd.f32 %v1294, %v1406
      %v1408 = vpop.f32.mrb[0].mxu0
      %1409 = vmatprep.mubr.f32.mxu0 0.0
      %1410 = vmatmul.mubr.f32.gmra.mrb[0].mxu0 %v1268
      %v1411 = vpop.f32.mrb[0].mxu0
      %v1412 = vadd.f32 %v1294, %v1411
      %v1413 = vpop.f32.mrb[0].mxu0
      %1414 = vmatprep.mubr.f32.mxu0 0.0
      %1415 = vmatmul.mubr.f32.gmra.mrb[0].mxu0 %v1269
      %v1416 = vpop.f32.mrb[0].mxu0
      %v1417 = vadd.f32 %v1294, %v1416
      %v1418 = vpop.f32.mrb[0].mxu0
      %1419 = vmatprep.mubr.f32.mxu0 0.0
      %1420 = vmatmul.mubr.f32.gmra.mrb[0].mxu0 %v1270
      %v1421 = vpop.f32.mrb[0].mxu0
      %v1422 = vadd.f32 %v1294, %v1421
      %v1423 = vpop.f32.mrb[0].mxu0
      %1424 = vmatprep.mubr.f32.mxu0 0.0
      %1425 = vmatmul.mubr.f32.gmra.mrb[0].mxu0 %v1271
      %v1426 = vpop.f32.mrb[0].mxu0
      %v1427 = vadd.f32 %v1294, %v1426
      %v1428 = vpop.f32.mrb[0].mxu0
      %1429 = vmatprep.mubr.f32.mxu0 0.0
      %1430 = vmatmul.mubr.f32.gmra.mrb[0].mxu0 %v1272
      %v1431 = vpop.f32.mrb[0].mxu0
      %v1432 = vadd.f32 %v1294, %v1431
      %v1433 = vpop.f32.mrb[0].mxu0
      %1434 = vmatprep.mubr.f32.mxu0 0.0
      %1435 = vmatmul.mubr.f32.gmra.mrb[0].mxu0 %v1273
      %v1436 = vpop.f32.mrb[0].mxu0
      %v1437 = vadd.f32 %v1294, %v1436
      %v1438 = vpop.f32.mrb[0].mxu0
      %1439 = vdwg.mxu0
      %v1440 = vmax.f32 %v1362, 0.0
      %v1441 = vmax.f32 %v1367, 0.0
      %v1442 = vmax.f32 %v1372, 0.0
      %v1443 = vmax.f32 %v1377, 0.0
      %v1444 = vmax.f32 %v1382, 0.0
      %v1445 = vmax.f32 %v1387, 0.0
      %v1446 = vmax.f32 %v1392, 0.0
      %v1447 = vmax.f32 %v1397, 0.0
      %v1448 = vmax.f32 %v1402, 0.0
      %v1449 = vmax.f32 %v1407, 0.0
      %v1450 = vmax.f32 %v1412, 0.0
      %v1451 = vmax.f32 %v1417, 0.0
      %v1452 = vmax.f32 %v1422, 0.0
      %v1453 = vmax.f32 %v1427, 0.0
      %v1454 = vmax.f32 %v1432, 0.0
      %v1455 = vmax.f32 %v1437, 0.0
      %v1456 = vld [vmem:[%s7] sm:$0xff]
      %v1457 = vld [vmem:[%s7 + $0x8] sm:$0xff]
      %v1458 = vld [vmem:[%s7 + $0x10] sm:$0xff]
      %v1459 = vld [vmem:[%s7 + $0x18] sm:$0xff]
      %v1460 = vld [vmem:[%s7 + $0x20] sm:$0xff]
      %v1461 = vld [vmem:[%s7 + $0x28] sm:$0xff]
      %v1462 = vld [vmem:[%s7 + $0x30] sm:$0xff]
      %v1463 = vld [vmem:[%s7 + $0x38] sm:$0xff]
      %v1464 = vld [vmem:[%s7 + $0x40] sm:$0xff]
      %v1465 = vld [vmem:[%s7 + $0x48] sm:$0xff]
      %v1466 = vld [vmem:[%s7 + $0x50] sm:$0xff]
      %v1467 = vld [vmem:[%s7 + $0x58] sm:$0xff]
      %v1468 = vld [vmem:[%s7 + $0x60] sm:$0xff]
      %v1469 = vld [vmem:[%s7 + $0x68] sm:$0xff]
      %v1470 = vld [vmem:[%s7 + $0x70] sm:$0xff]
      %v1471 = vld [vmem:[%s7 + $0x78] sm:$0xff]
      %s1472 = sadd.s32 240, %s1255
      %s1473 = scalar_lea.vmem [#allocation2], %s1472
      %v1474 = vld [vmem:[%s1473 + $0x6] sm:$0xff]
      %v1475 = vld [vmem:[%s1473 + $0xe] sm:$0xff]
      %v1476 = vld [vmem:[%s1473 + $0x2e] sm:$0xff]
      %v1477 = vld [vmem:[%s1473 + $0x36] sm:$0xff]
      %v1478 = vld [vmem:[%s1473 + $0x56] sm:$0xff]
      %v1479 = vld [vmem:[%s1473 + $0x5e] sm:$0xff]
      %v1480 = vld [vmem:[%s1473 + $0x7e] sm:$0xff]
      %v1481 = vld [vmem:[%s1473 + $0x86] sm:$0xff]
      %v1482 = vld [vmem:[%s1473 + $0xa6] sm:$0xff]
      %v1483 = vld [vmem:[%s1473 + $0xae] sm:$0xff]
      %v1484 = vld [vmem:[%s1473 + $0xce] sm:$0xff]
      %v1485 = vld [vmem:[%s1473 + $0xd6] sm:$0xff]
      %v1486 = vld [vmem:[%s1473 + $0xf6] sm:$0xff]
      %v1487 = vld [vmem:[%s1473 + $0xfe] sm:$0xff]
      %v1488 = vld [vmem:[%s1473 + $0x11e] sm:$0xff]
      %v1489 = vld [vmem:[%s1473 + $0x126] sm:$0xff]
      %v1490 = vld [vmem:[%s1473 + $0x9] sm:$0xff]
      %v1491 = vld [vmem:[%s1473 + $0x11] sm:$0xff]
      %v1492 = vld [vmem:[%s1473 + $0x31] sm:$0xff]
      %v1493 = vld [vmem:[%s1473 + $0x39] sm:$0xff]
      %v1494 = vld [vmem:[%s1473 + $0x59] sm:$0xff]
      %v1495 = vld [vmem:[%s1473 + $0x61] sm:$0xff]
      %v1496 = vld [vmem:[%s1473 + $0x81] sm:$0xff]
      %v1497 = vld [vmem:[%s1473 + $0x89] sm:$0xff]
      %v1498 = vld [vmem:[%s1473 + $0xa9] sm:$0xff]
      %v1499 = vld [vmem:[%s1473 + $0xb1] sm:$0xff]
      %v1500 = vld [vmem:[%s1473 + $0xd1] sm:$0xff]
      %v1501 = vld [vmem:[%s1473 + $0xd9] sm:$0xff]
      %v1502 = vld [vmem:[%s1473 + $0xf9] sm:$0xff]
      %v1503 = vld [vmem:[%s1473 + $0x101] sm:$0xff]
      %v1504 = vld [vmem:[%s1473 + $0x121] sm:$0xff]
      %v1505 = vld [vmem:[%s1473 + $0x129] sm:$0xff]
      %v1506 = vld [vmem:[%s1473 + $0xc] sm:$0xff]
      %v1507 = vld [vmem:[%s1473 + $0x14] sm:$0xff]
      %v1508 = vld [vmem:[%s1473 + $0x34] sm:$0xff]
      %v1509 = vld [vmem:[%s1473 + $0x3c] sm:$0xff]
      %v1510 = vld [vmem:[%s1473 + $0x5c] sm:$0xff]
      %v1511 = vld [vmem:[%s1473 + $0x64] sm:$0xff]
      %v1512 = vld [vmem:[%s1473 + $0x84] sm:$0xff]
      %v1513 = vld [vmem:[%s1473 + $0x8c] sm:$0xff]
      %v1514 = vld [vmem:[%s1473 + $0xac] sm:$0xff]
      %v1515 = vld [vmem:[%s1473 + $0xb4] sm:$0xff]
      %v1516 = vld [vmem:[%s1473 + $0xd4] sm:$0xff]
      %v1517 = vld [vmem:[%s1473 + $0xdc] sm:$0xff]
      %v1518 = vld [vmem:[%s1473 + $0xfc] sm:$0xff]
      %v1519 = vld [vmem:[%s1473 + $0x104] sm:$0xff]
      %v1520 = vld [vmem:[%s1473 + $0x124] sm:$0xff]
      %v1521 = vld [vmem:[%s1473 + $0x12c] sm:$0xff]
      %v1522 = vld [vmem:[%s1257 + $0x6] sm:$0xff]
      %v1523 = vld [vmem:[%s1257 + $0xe] sm:$0xff]
      %v1524 = vld [vmem:[%s1257 + $0x2e] sm:$0xff]
      %v1525 = vld [vmem:[%s1257 + $0x36] sm:$0xff]
      %v1526 = vld [vmem:[%s1257 + $0x56] sm:$0xff]
      %v1527 = vld [vmem:[%s1257 + $0x5e] sm:$0xff]
      %v1528 = vld [vmem:[%s1257 + $0x7e] sm:$0xff]
      %v1529 = vld [vmem:[%s1257 + $0x86] sm:$0xff]
      %v1530 = vld [vmem:[%s1257 + $0xa6] sm:$0xff]
      %v1531 = vld [vmem:[%s1257 + $0xae] sm:$0xff]
      %v1532 = vld [vmem:[%s1257 + $0xce] sm:$0xff]
      %v1533 = vld [vmem:[%s1257 + $0xd6] sm:$0xff]
      %v1534 = vld [vmem:[%s1257 + $0xf6] sm:$0xff]
      %v1535 = vld [vmem:[%s1257 + $0xfe] sm:$0xff]
      %v1536 = vld [vmem:[%s1257 + $0x11e] sm:$0xff]
      %v1537 = vld [vmem:[%s1257 + $0x126] sm:$0xff]
      %v1538 = vld [vmem:[%s1257 + $0xc] sm:$0xff]
      %v1539 = vld [vmem:[%s1257 + $0x14] sm:$0xff]
      %v1540 = vld [vmem:[%s1257 + $0x34] sm:$0xff]
      %v1541 = vld [vmem:[%s1257 + $0x3c] sm:$0xff]
      %v1542 = vld [vmem:[%s1257 + $0x5c] sm:$0xff]
      %v1543 = vld [vmem:[%s1257 + $0x64] sm:$0xff]
      %v1544 = vld [vmem:[%s1257 + $0x84] sm:$0xff]
      %v1545 = vld [vmem:[%s1257 + $0x8c] sm:$0xff]
      %v1546 = vld [vmem:[%s1257 + $0xac] sm:$0xff]
      %v1547 = vld [vmem:[%s1257 + $0xb4] sm:$0xff]
      %v1548 = vld [vmem:[%s1257 + $0xd4] sm:$0xff]
      %v1549 = vld [vmem:[%s1257 + $0xdc] sm:$0xff]
      %v1550 = vld [vmem:[%s1257 + $0xfc] sm:$0xff]
      %v1551 = vld [vmem:[%s1257 + $0x104] sm:$0xff]
      %v1552 = vld [vmem:[%s1257 + $0x124] sm:$0xff]
      %v1553 = vld [vmem:[%s1257 + $0x12c] sm:$0xff]
      %s1554 = sadd.s32 480, %s1255
      %s1555 = scalar_lea.vmem [#allocation2], %s1554
      %v1556 = vld [vmem:[%s1555 + $0x6] sm:$0xff]
      %v1557 = vld [vmem:[%s1555 + $0xe] sm:$0xff]
      %v1558 = vld [vmem:[%s1555 + $0x2e] sm:$0xff]
      %v1559 = vld [vmem:[%s1555 + $0x36] sm:$0xff]
      %v1560 = vld [vmem:[%s1555 + $0x56] sm:$0xff]
      %v1561 = vld [vmem:[%s1555 + $0x5e] sm:$0xff]
      %v1562 = vld [vmem:[%s1555 + $0x7e] sm:$0xff]
      %v1563 = vld [vmem:[%s1555 + $0x86] sm:$0xff]
      %v1564 = vld [vmem:[%s1555 + $0xa6] sm:$0xff]
      %v1565 = vld [vmem:[%s1555 + $0xae] sm:$0xff]
      %v1566 = vld [vmem:[%s1555 + $0xce] sm:$0xff]
      %v1567 = vld [vmem:[%s1555 + $0xd6] sm:$0xff]
      %v1568 = vld [vmem:[%s1555 + $0xf6] sm:$0xff]
      %v1569 = vld [vmem:[%s1555 + $0xfe] sm:$0xff]
      %v1570 = vld [vmem:[%s1555 + $0x11e] sm:$0xff]
      %v1571 = vld [vmem:[%s1555 + $0x126] sm:$0xff]
      %v1572 = vld [vmem:[%s1555 + $0x9] sm:$0xff]
      %v1573 = vld [vmem:[%s1555 + $0x11] sm:$0xff]
      %v1574 = vld [vmem:[%s1555 + $0x31] sm:$0xff]
      %v1575 = vld [vmem:[%s1555 + $0x39] sm:$0xff]
      %v1576 = vld [vmem:[%s1555 + $0x59] sm:$0xff]
      %v1577 = vld [vmem:[%s1555 + $0x61] sm:$0xff]
      %v1578 = vld [vmem:[%s1555 + $0x81] sm:$0xff]
      %v1579 = vld [vmem:[%s1555 + $0x89] sm:$0xff]
      %v1580 = vld [vmem:[%s1555 + $0xa9] sm:$0xff]
      %v1581 = vld [vmem:[%s1555 + $0xb1] sm:$0xff]
      %v1582 = vld [vmem:[%s1555 + $0xd1] sm:$0xff]
      %v1583 = vld [vmem:[%s1555 + $0xd9] sm:$0xff]
      %v1584 = vld [vmem:[%s1555 + $0xf9] sm:$0xff]
      %v1585 = vld [vmem:[%s1555 + $0x101] sm:$0xff]
      %v1586 = vld [vmem:[%s1555 + $0x121] sm:$0xff]
      %v1587 = vld [vmem:[%s1555 + $0x129] sm:$0xff]
      %v1588 = vld [vmem:[%s1555 + $0xc] sm:$0xff]
      %v1589 = vld [vmem:[%s1555 + $0x14] sm:$0xff]
      %v1590 = vld [vmem:[%s1555 + $0x34] sm:$0xff]
      %v1591 = vld [vmem:[%s1555 + $0x3c] sm:$0xff]
      %v1592 = vld [vmem:[%s1555 + $0x5c] sm:$0xff]
      %v1593 = vld [vmem:[%s1555 + $0x64] sm:$0xff]
      %v1594 = vld [vmem:[%s1555 + $0x84] sm:$0xff]
      %v1595 = vld [vmem:[%s1555 + $0x8c] sm:$0xff]
      %v1596 = vld [vmem:[%s1555 + $0xac] sm:$0xff]
      %v1597 = vld [vmem:[%s1555 + $0xb4] sm:$0xff]
      %v1598 = vld [vmem:[%s1555 + $0xd4] sm:$0xff]
      %v1599 = vld [vmem:[%s1555 + $0xdc] sm:$0xff]
      %v1600 = vld [vmem:[%s1555 + $0xfc] sm:$0xff]
      %v1601 = vld [vmem:[%s1555 + $0x104] sm:$0xff]
      %v1602 = vld [vmem:[%s1555 + $0x124] sm:$0xff]
      %v1603 = vld [vmem:[%s1555 + $0x12c] sm:$0xff]
      %v1604 = vld [vmem:[%s3] sm:$0xff]
      %v1605 = vld [vmem:[%s3 + $0x8] sm:$0xff]
      %v1606 = vld [vmem:[%s3 + $0x10] sm:$0xff]
      %v1607 = vld [vmem:[%s3 + $0x18] sm:$0xff]
      %v1608 = vld [vmem:[%s3 + $0x20] sm:$0xff]
      %v1609 = vld [vmem:[%s3 + $0x28] sm:$0xff]
      %v1610 = vld [vmem:[%s3 + $0x30] sm:$0xff]
      %v1611 = vld [vmem:[%s3 + $0x38] sm:$0xff]
      %v1612 = vld [vmem:[%s3 + $0x40] sm:$0xff]
      %v1613 = vld [vmem:[%s3 + $0x48] sm:$0xff]
      %v1614 = vld [vmem:[%s3 + $0x50] sm:$0xff]
      %v1615 = vld [vmem:[%s3 + $0x58] sm:$0xff]
      %v1616 = vld [vmem:[%s3 + $0x60] sm:$0xff]
      %v1617 = vld [vmem:[%s3 + $0x68] sm:$0xff]
      %v1618 = vld [vmem:[%s3 + $0x70] sm:$0xff]
      %v1619 = vld [vmem:[%s3 + $0x78] sm:$0xff]
      %v1620 = vld [vmem:[%s3 + $0x80] sm:$0xff]
      %v1621 = vld [vmem:[%s3 + $0x88] sm:$0xff]
      %v1622 = vld [vmem:[%s3 + $0x90] sm:$0xff]
      %v1623 = vld [vmem:[%s3 + $0x98] sm:$0xff]
      %v1624 = vld [vmem:[%s3 + $0xa0] sm:$0xff]
      %v1625 = vld [vmem:[%s3 + $0xa8] sm:$0xff]
      %v1626 = vld [vmem:[%s3 + $0xb0] sm:$0xff]
      %v1627 = vld [vmem:[%s3 + $0xb8] sm:$0xff]
      %v1628 = vld [vmem:[%s3 + $0xc0] sm:$0xff]
      %v1629 = vld [vmem:[%s3 + $0xc8] sm:$0xff]
      %v1630 = vld [vmem:[%s3 + $0xd0] sm:$0xff]
      %v1631 = vld [vmem:[%s3 + $0xd8] sm:$0xff]
      %v1632 = vld [vmem:[%s3 + $0xe0] sm:$0xff]
      %v1633 = vld [vmem:[%s3 + $0xe8] sm:$0xff]
      %v1634 = vld [vmem:[%s3 + $0xf0] sm:$0xff]
      %v1635 = vld [vmem:[%s3 + $0xf8] sm:$0xff]
      %v1636 = vld [vmem:[%s3 + $0x100] sm:$0xff]
      %v1637 = vld [vmem:[%s3 + $0x108] sm:$0xff]
      %v1638 = vld [vmem:[%s3 + $0x110] sm:$0xff]
      %v1639 = vld [vmem:[%s3 + $0x118] sm:$0xff]
      %v1640 = vld [vmem:[%s3 + $0x120] sm:$0xff]
      %v1641 = vld [vmem:[%s3 + $0x128] sm:$0xff]
      %v1642 = vld [vmem:[%s3 + $0x130] sm:$0xff]
      %v1643 = vld [vmem:[%s3 + $0x138] sm:$0xff]
      %v1644 = vld [vmem:[%s3 + $0x140] sm:$0xff]
      %v1645 = vld [vmem:[%s3 + $0x148] sm:$0xff]
      %v1646 = vld [vmem:[%s3 + $0x150] sm:$0xff]
      %v1647 = vld [vmem:[%s3 + $0x158] sm:$0xff]
      %v1648 = vld [vmem:[%s3 + $0x160] sm:$0xff]
      %v1649 = vld [vmem:[%s3 + $0x168] sm:$0xff]
      %v1650 = vld [vmem:[%s3 + $0x170] sm:$0xff]
      %v1651 = vld [vmem:[%s3 + $0x178] sm:$0xff]
      %v1652 = vld [vmem:[%s3 + $0x180] sm:$0xff]
      %v1653 = vld [vmem:[%s3 + $0x188] sm:$0xff]
      %v1654 = vld [vmem:[%s3 + $0x190] sm:$0xff]
      %v1655 = vld [vmem:[%s3 + $0x198] sm:$0xff]
      %v1656 = vld [vmem:[%s3 + $0x1a0] sm:$0xff]
      %v1657 = vld [vmem:[%s3 + $0x1a8] sm:$0xff]
      %v1658 = vld [vmem:[%s3 + $0x1b0] sm:$0xff]
      %v1659 = vld [vmem:[%s3 + $0x1b8] sm:$0xff]
      %v1660 = vld [vmem:[%s3 + $0x1c0] sm:$0xff]
      %v1661 = vld [vmem:[%s3 + $0x1c8] sm:$0xff]
      %v1662 = vld [vmem:[%s3 + $0x1d0] sm:$0xff]
      %v1663 = vld [vmem:[%s3 + $0x1d8] sm:$0xff]
      %v1664 = vld [vmem:[%s3 + $0x1e0] sm:$0xff]
      %v1665 = vld [vmem:[%s3 + $0x1e8] sm:$0xff]
      %v1666 = vld [vmem:[%s3 + $0x1f0] sm:$0xff]
      %v1667 = vld [vmem:[%s3 + $0x1f8] sm:$0xff]
      %v1668 = vld [vmem:[%s3 + $0x200] sm:$0xff]
      %v1669 = vld [vmem:[%s3 + $0x208] sm:$0xff]
      %v1670 = vld [vmem:[%s3 + $0x210] sm:$0xff]
      %v1671 = vld [vmem:[%s3 + $0x218] sm:$0xff]
      %v1672 = vld [vmem:[%s3 + $0x220] sm:$0xff]
      %v1673 = vld [vmem:[%s3 + $0x228] sm:$0xff]
      %v1674 = vld [vmem:[%s3 + $0x230] sm:$0xff]
      %v1675 = vld [vmem:[%s3 + $0x238] sm:$0xff]
      %v1676 = vld [vmem:[%s3 + $0x240] sm:$0xff]
      %v1677 = vld [vmem:[%s3 + $0x248] sm:$0xff]
      %v1678 = vld [vmem:[%s3 + $0x250] sm:$0xff]
      %v1679 = vld [vmem:[%s3 + $0x258] sm:$0xff]
      %v1680 = vld [vmem:[%s3 + $0x260] sm:$0xff]
      %v1681 = vld [vmem:[%s3 + $0x268] sm:$0xff]
      %v1682 = vld [vmem:[%s3 + $0x270] sm:$0xff]
      %v1683 = vld [vmem:[%s3 + $0x278] sm:$0xff]
      %v1684 = vld [vmem:[%s3 + $0x280] sm:$0xff]
      %v1685 = vld [vmem:[%s3 + $0x288] sm:$0xff]
      %v1686 = vld [vmem:[%s3 + $0x290] sm:$0xff]
      %v1687 = vld [vmem:[%s3 + $0x298] sm:$0xff]
      %v1688 = vld [vmem:[%s3 + $0x2a0] sm:$0xff]
      %v1689 = vld [vmem:[%s3 + $0x2a8] sm:$0xff]
      %v1690 = vld [vmem:[%s3 + $0x2b0] sm:$0xff]
      %v1691 = vld [vmem:[%s3 + $0x2b8] sm:$0xff]
      %v1692 = vld [vmem:[%s3 + $0x2c0] sm:$0xff]
      %v1693 = vld [vmem:[%s3 + $0x2c8] sm:$0xff]
      %v1694 = vld [vmem:[%s3 + $0x2d0] sm:$0xff]
      %v1695 = vld [vmem:[%s3 + $0x2d8] sm:$0xff]
      %v1696 = vld [vmem:[%s3 + $0x2e0] sm:$0xff]
      %v1697 = vld [vmem:[%s3 + $0x2e8] sm:$0xff]
      %v1698 = vld [vmem:[%s3 + $0x2f0] sm:$0xff]
      %v1699 = vld [vmem:[%s3 + $0x2f8] sm:$0xff]
      %v1700 = vld [vmem:[%s3 + $0x300] sm:$0xff]
      %v1701 = vld [vmem:[%s3 + $0x308] sm:$0xff]
      %v1702 = vld [vmem:[%s3 + $0x310] sm:$0xff]
      %v1703 = vld [vmem:[%s3 + $0x318] sm:$0xff]
      %v1704 = vld [vmem:[%s3 + $0x320] sm:$0xff]
      %v1705 = vld [vmem:[%s3 + $0x328] sm:$0xff]
      %v1706 = vld [vmem:[%s3 + $0x330] sm:$0xff]
      %v1707 = vld [vmem:[%s3 + $0x338] sm:$0xff]
      %v1708 = vld [vmem:[%s3 + $0x340] sm:$0xff]
      %v1709 = vld [vmem:[%s3 + $0x348] sm:$0xff]
      %v1710 = vld [vmem:[%s3 + $0x350] sm:$0xff]
      %v1711 = vld [vmem:[%s3 + $0x358] sm:$0xff]
      %v1712 = vld [vmem:[%s3 + $0x360] sm:$0xff]
      %v1713 = vld [vmem:[%s3 + $0x368] sm:$0xff]
      %v1714 = vld [vmem:[%s3 + $0x370] sm:$0xff]
      %v1715 = vld [vmem:[%s3 + $0x378] sm:$0xff]
      %v1716 = vld [vmem:[%s3 + $0x380] sm:$0xff]
      %v1717 = vld [vmem:[%s3 + $0x388] sm:$0xff]
      %v1718 = vld [vmem:[%s3 + $0x390] sm:$0xff]
      %v1719 = vld [vmem:[%s3 + $0x398] sm:$0xff]
      %v1720 = vld [vmem:[%s3 + $0x3a0] sm:$0xff]
      %v1721 = vld [vmem:[%s3 + $0x3a8] sm:$0xff]
      %v1722 = vld [vmem:[%s3 + $0x3b0] sm:$0xff]
      %v1723 = vld [vmem:[%s3 + $0x3b8] sm:$0xff]
      %v1724 = vld [vmem:[%s3 + $0x3c0] sm:$0xff]
      %v1725 = vld [vmem:[%s3 + $0x3c8] sm:$0xff]
      %v1726 = vld [vmem:[%s3 + $0x3d0] sm:$0xff]
      %v1727 = vld [vmem:[%s3 + $0x3d8] sm:$0xff]
      %v1728 = vld [vmem:[%s3 + $0x3e0] sm:$0xff]
      %v1729 = vld [vmem:[%s3 + $0x3e8] sm:$0xff]
      %v1730 = vld [vmem:[%s3 + $0x3f0] sm:$0xff]
      %v1731 = vld [vmem:[%s3 + $0x3f8] sm:$0xff]
      %v1732 = vld [vmem:[%s3 + $0x400] sm:$0xff]
      %v1733 = vld [vmem:[%s3 + $0x408] sm:$0xff]
      %v1734 = vld [vmem:[%s3 + $0x410] sm:$0xff]
      %v1735 = vld [vmem:[%s3 + $0x418] sm:$0xff]
      %v1736 = vld [vmem:[%s3 + $0x420] sm:$0xff]
      %v1737 = vld [vmem:[%s3 + $0x428] sm:$0xff]
      %v1738 = vld [vmem:[%s3 + $0x430] sm:$0xff]
      %v1739 = vld [vmem:[%s3 + $0x438] sm:$0xff]
      %v1740 = vld [vmem:[%s3 + $0x440] sm:$0xff]
      %v1741 = vld [vmem:[%s3 + $0x448] sm:$0xff]
      %v1742 = vld [vmem:[%s3 + $0x450] sm:$0xff]
      %v1743 = vld [vmem:[%s3 + $0x458] sm:$0xff]
      %v1744 = vld [vmem:[%s3 + $0x460] sm:$0xff]
      %v1745 = vld [vmem:[%s3 + $0x468] sm:$0xff]
      %v1746 = vld [vmem:[%s3 + $0x470] sm:$0xff]
      %v1747 = vld [vmem:[%s3 + $0x478] sm:$0xff]
      %v1748 = vld [vmem:[%s8 + $0x1] sm:$0x1]
      %v1749 = vlaneseq
      %v1750 = vshrl.u32 %v1749, 7
      %v1751 = vsub.s32 0, %v1750
      %v1752 = vrot.slane %v1748, %v1751
      %1753 = vmatprep.subr.mxu0 0.0
      %1754 = vmatpush1.msra.mxu0 %v1604
      %1755 = vmatprep.subr.mxu0 0.0
      %1756 = vmatpush1.msra.mxu0 %v1605
      %1757 = vmatprep.subr.mxu0 0.0
      %1758 = vmatpush1.msra.mxu0 %v1606
      %1759 = vmatprep.subr.mxu0 0.0
      %1760 = vmatpush1.msra.mxu0 %v1607
      %1761 = vmatprep.subr.mxu0 0.0
      %1762 = vmatpush1.msra.mxu0 %v1608
      %1763 = vmatprep.subr.mxu0 0.0
      %1764 = vmatpush1.msra.mxu0 %v1609
      %1765 = vmatprep.subr.mxu0 0.0
      %1766 = vmatpush1.msra.mxu0 %v1610
      %1767 = vmatprep.subr.mxu0 0.0
      %1768 = vmatpush1.msra.mxu0 %v1611
      %1769 = vmatprep.subr.mxu0 0.0
      %1770 = vmatpush1.msra.mxu0 %v1612
      %1771 = vmatprep.subr.mxu0 0.0
      %1772 = vmatpush1.msra.mxu0 %v1613
      %1773 = vmatprep.subr.mxu0 0.0
      %1774 = vmatpush1.msra.mxu0 %v1614
      %1775 = vmatprep.subr.mxu0 0.0
      %1776 = vmatpush1.msra.mxu0 %v1615
      %1777 = vmatprep.subr.mxu0 0.0
      %1778 = vmatpush1.msra.mxu0 %v1616
      %1779 = vmatprep.subr.mxu0 0.0
      %1780 = vmatpush1.msra.mxu0 %v1617
      %1781 = vmatprep.subr.mxu0 0.0
      %1782 = vmatpush1.msra.mxu0 %v1618
      %1783 = vmatprep.subr.mxu0 0.0
      %1784 = vmatpush1.msra.mxu0 %v1619
      %1785 = vmatprep.subr.mxu0 0.0
      %1786 = vmatpush1.msra.mxu0 %v1620
      %1787 = vmatprep.subr.mxu0 0.0
      %1788 = vmatpush1.msra.mxu0 %v1621
      %1789 = vmatprep.subr.mxu0 0.0
      %1790 = vmatpush1.msra.mxu0 %v1622
      %1791 = vmatprep.subr.mxu0 0.0
      %1792 = vmatpush1.msra.mxu0 %v1623
      %1793 = vmatprep.subr.mxu0 0.0
      %1794 = vmatpush1.msra.mxu0 %v1624
      %1795 = vmatprep.subr.mxu0 0.0
      %1796 = vmatpush1.msra.mxu0 %v1625
      %1797 = vmatprep.subr.mxu0 0.0
      %1798 = vmatpush1.msra.mxu0 %v1626
      %1799 = vmatprep.subr.mxu0 0.0
      %1800 = vmatpush1.msra.mxu0 %v1627
      %1801 = vmatprep.subr.mxu0 0.0
      %1802 = vmatpush1.msra.mxu0 %v1628
      %1803 = vmatprep.subr.mxu0 0.0
      %1804 = vmatpush1.msra.mxu0 %v1629
      %1805 = vmatprep.subr.mxu0 0.0
      %1806 = vmatpush1.msra.mxu0 %v1630
      %1807 = vmatprep.subr.mxu0 0.0
      %1808 = vmatpush1.msra.mxu0 %v1631
      %1809 = vmatprep.subr.mxu0 0.0
      %1810 = vmatpush1.msra.mxu0 %v1632
      %1811 = vmatprep.subr.mxu0 0.0
      %1812 = vmatpush1.msra.mxu0 %v1633
      %1813 = vmatprep.subr.mxu0 0.0
      %1814 = vmatpush1.msra.mxu0 %v1634
      %1815 = vmatprep.subr.mxu0 0.0
      %1816 = vmatpush1.msra.mxu0 %v1635
      %1817 = vmatprep.mubr.f32.mxu0 %v1490
      %1818 = vmatmul.mubr.f32.gmra.mrb[0].mxu0 %v1474
      %v1819 = vpop.f32.mrb[0].mxu0
      %v1820 = vadd.f32 %v1752, %v1819
      %v1821 = vpop.f32.mrb[0].mxu0
      %1822 = vmatprep.mubr.f32.mxu0 %v1491
      %1823 = vmatmul.mubr.f32.gmra.mrb[0].mxu0 %v1475
      %v1824 = vpop.f32.mrb[0].mxu0
      %v1825 = vadd.f32 %v1752, %v1824
      %v1826 = vpop.f32.mrb[0].mxu0
      %1827 = vmatprep.mubr.f32.mxu0 %v1492
      %1828 = vmatmul.mubr.f32.gmra.mrb[0].mxu0 %v1476
      %v1829 = vpop.f32.mrb[0].mxu0
      %v1830 = vadd.f32 %v1752, %v1829
      %v1831 = vpop.f32.mrb[0].mxu0
      %1832 = vmatprep.mubr.f32.mxu0 %v1493
      %1833 = vmatmul.mubr.f32.gmra.mrb[0].mxu0 %v1477
      %v1834 = vpop.f32.mrb[0].mxu0
      %v1835 = vadd.f32 %v1752, %v1834
      %v1836 = vpop.f32.mrb[0].mxu0
      %1837 = vmatprep.mubr.f32.mxu0 %v1494
      %1838 = vmatmul.mubr.f32.gmra.mrb[0].mxu0 %v1478
      %v1839 = vpop.f32.mrb[0].mxu0
      %v1840 = vadd.f32 %v1752, %v1839
      %v1841 = vpop.f32.mrb[0].mxu0
      %1842 = vmatprep.mubr.f32.mxu0 %v1495
      %1843 = vmatmul.mubr.f32.gmra.mrb[0].mxu0 %v1479
      %v1844 = vpop.f32.mrb[0].mxu0
      %v1845 = vadd.f32 %v1752, %v1844
      %v1846 = vpop.f32.mrb[0].mxu0
      %1847 = vmatprep.mubr.f32.mxu0 %v1496
      %1848 = vmatmul.mubr.f32.gmra.mrb[0].mxu0 %v1480
      %v1849 = vpop.f32.mrb[0].mxu0
      %v1850 = vadd.f32 %v1752, %v1849
      %v1851 = vpop.f32.mrb[0].mxu0
      %1852 = vmatprep.mubr.f32.mxu0 %v1497
      %1853 = vmatmul.mubr.f32.gmra.mrb[0].mxu0 %v1481
      %v1854 = vpop.f32.mrb[0].mxu0
      %v1855 = vadd.f32 %v1752, %v1854
      %v1856 = vpop.f32.mrb[0].mxu0
      %1857 = vmatprep.mubr.f32.mxu0 %v1498
      %1858 = vmatmul.mubr.f32.gmra.mrb[0].mxu0 %v1482
      %v1859 = vpop.f32.mrb[0].mxu0
      %v1860 = vadd.f32 %v1752, %v1859
      %v1861 = vpop.f32.mrb[0].mxu0
      %1862 = vmatprep.mubr.f32.mxu0 %v1499
      %1863 = vmatmul.mubr.f32.gmra.mrb[0].mxu0 %v1483
      %v1864 = vpop.f32.mrb[0].mxu0
      %v1865 = vadd.f32 %v1752, %v1864
      %v1866 = vpop.f32.mrb[0].mxu0
      %1867 = vmatprep.mubr.f32.mxu0 %v1500
      %1868 = vmatmul.mubr.f32.gmra.mrb[0].mxu0 %v1484
      %v1869 = vpop.f32.mrb[0].mxu0
      %v1870 = vadd.f32 %v1752, %v1869
      %v1871 = vpop.f32.mrb[0].mxu0
      %1872 = vmatprep.mubr.f32.mxu0 %v1501
      %1873 = vmatmul.mubr.f32.gmra.mrb[0].mxu0 %v1485
      %v1874 = vpop.f32.mrb[0].mxu0
      %v1875 = vadd.f32 %v1752, %v1874
      %v1876 = vpop.f32.mrb[0].mxu0
      %1877 = vmatprep.mubr.f32.mxu0 %v1502
      %1878 = vmatmul.mubr.f32.gmra.mrb[0].mxu0 %v1486
      %v1879 = vpop.f32.mrb[0].mxu0
      %v1880 = vadd.f32 %v1752, %v1879
      %v1881 = vpop.f32.mrb[0].mxu0
      %1882 = vmatprep.mubr.f32.mxu0 %v1503
      %1883 = vmatmul.mubr.f32.gmra.mrb[0].mxu0 %v1487
      %v1884 = vpop.f32.mrb[0].mxu0
      %v1885 = vadd.f32 %v1752, %v1884
      %v1886 = vpop.f32.mrb[0].mxu0
      %1887 = vmatprep.mubr.f32.mxu0 %v1504
      %1888 = vmatmul.mubr.f32.gmra.mrb[0].mxu0 %v1488
      %v1889 = vpop.f32.mrb[0].mxu0
      %v1890 = vadd.f32 %v1752, %v1889
      %v1891 = vpop.f32.mrb[0].mxu0
      %1892 = vmatprep.mubr.f32.mxu0 %v1505
      %1893 = vmatmul.mubr.f32.gmra.mrb[0].mxu0 %v1489
      %v1894 = vpop.f32.mrb[0].mxu0
      %v1895 = vadd.f32 %v1752, %v1894
      %v1896 = vpop.f32.mrb[0].mxu0
      %1897 = vdwg.mxu0
      %1898 = vmatprep.subr.mxu0 0.0
      %1899 = vmatpush1.msra.mxu0 %v1636
      %1900 = vmatprep.subr.mxu0 0.0
      %1901 = vmatpush1.msra.mxu0 %v1637
      %1902 = vmatprep.subr.mxu0 0.0
      %1903 = vmatpush1.msra.mxu0 %v1638
      %1904 = vmatprep.subr.mxu0 0.0
      %1905 = vmatpush1.msra.mxu0 %v1639
      %1906 = vmatprep.subr.mxu0 0.0
      %1907 = vmatpush1.msra.mxu0 %v1640
      %1908 = vmatprep.subr.mxu0 0.0
      %1909 = vmatpush1.msra.mxu0 %v1641
      %1910 = vmatprep.subr.mxu0 0.0
      %1911 = vmatpush1.msra.mxu0 %v1642
      %1912 = vmatprep.subr.mxu0 0.0
      %1913 = vmatpush1.msra.mxu0 %v1643
      %1914 = vmatprep.subr.mxu0 0.0
      %1915 = vmatpush1.msra.mxu0 %v1644
      %1916 = vmatprep.subr.mxu0 0.0
      %1917 = vmatpush1.msra.mxu0 %v1645
      %1918 = vmatprep.subr.mxu0 0.0
      %1919 = vmatpush1.msra.mxu0 %v1646
      %1920 = vmatprep.subr.mxu0 0.0
      %1921 = vmatpush1.msra.mxu0 %v1647
      %1922 = vmatprep.subr.mxu0 0.0
      %1923 = vmatpush1.msra.mxu0 %v1648
      %1924 = vmatprep.subr.mxu0 0.0
      %1925 = vmatpush1.msra.mxu0 %v1649
      %1926 = vmatprep.subr.mxu0 0.0
      %1927 = vmatpush1.msra.mxu0 %v1650
      %1928 = vmatprep.subr.mxu0 0.0
      %1929 = vmatpush1.msra.mxu0 %v1651
      %1930 = vmatprep.subr.mxu0 0.0
      %1931 = vmatpush1.msra.mxu0 %v1652
      %1932 = vmatprep.subr.mxu0 0.0
      %1933 = vmatpush1.msra.mxu0 %v1653
      %1934 = vmatprep.subr.mxu0 0.0
      %1935 = vmatpush1.msra.mxu0 %v1654
      %1936 = vmatprep.subr.mxu0 0.0
      %1937 = vmatpush1.msra.mxu0 %v1655
      %1938 = vmatprep.subr.mxu0 0.0
      %1939 = vmatpush1.msra.mxu0 %v1656
      %1940 = vmatprep.subr.mxu0 0.0
      %1941 = vmatpush1.msra.mxu0 %v1657
      %1942 = vmatprep.subr.mxu0 0.0
      %1943 = vmatpush1.msra.mxu0 %v1658
      %1944 = vmatprep.subr.mxu0 0.0
      %1945 = vmatpush1.msra.mxu0 %v1659
      %1946 = vmatprep.subr.mxu0 0.0
      %1947 = vmatpush1.msra.mxu0 %v1660
      %1948 = vmatprep.subr.mxu0 0.0
      %1949 = vmatpush1.msra.mxu0 %v1661
      %1950 = vmatprep.subr.mxu0 0.0
      %1951 = vmatpush1.msra.mxu0 %v1662
      %1952 = vmatprep.subr.mxu0 0.0
      %1953 = vmatpush1.msra.mxu0 %v1663
      %1954 = vmatprep.subr.mxu0 0.0
      %1955 = vmatpush1.msra.mxu0 %v1664
      %1956 = vmatprep.subr.mxu0 0.0
      %1957 = vmatpush1.msra.mxu0 %v1665
      %1958 = vmatprep.subr.mxu0 0.0
      %1959 = vmatpush1.msra.mxu0 %v1666
      %1960 = vmatprep.subr.mxu0 0.0
      %1961 = vmatpush1.msra.mxu0 %v1667
      %1962 = vmatprep.mubr.f32.mxu0 %v1522
      %1963 = vmatmul.mubr.f32.gmra.mrb[0].mxu0 %v1506
      %v1964 = vpop.f32.mrb[0].mxu0
      %v1965 = vadd.f32 %v1820, %v1964
      %v1966 = vpop.f32.mrb[0].mxu0
      %1967 = vmatprep.mubr.f32.mxu0 %v1523
      %1968 = vmatmul.mubr.f32.gmra.mrb[0].mxu0 %v1507
      %v1969 = vpop.f32.mrb[0].mxu0
      %v1970 = vadd.f32 %v1825, %v1969
      %v1971 = vpop.f32.mrb[0].mxu0
      %1972 = vmatprep.mubr.f32.mxu0 %v1524
      %1973 = vmatmul.mubr.f32.gmra.mrb[0].mxu0 %v1508
      %v1974 = vpop.f32.mrb[0].mxu0
      %v1975 = vadd.f32 %v1830, %v1974
      %v1976 = vpop.f32.mrb[0].mxu0
      %1977 = vmatprep.mubr.f32.mxu0 %v1525
      %1978 = vmatmul.mubr.f32.gmra.mrb[0].mxu0 %v1509
      %v1979 = vpop.f32.mrb[0].mxu0
      %v1980 = vadd.f32 %v1835, %v1979
      %v1981 = vpop.f32.mrb[0].mxu0
      %1982 = vmatprep.mubr.f32.mxu0 %v1526
      %1983 = vmatmul.mubr.f32.gmra.mrb[0].mxu0 %v1510
      %v1984 = vpop.f32.mrb[0].mxu0
      %v1985 = vadd.f32 %v1840, %v1984
      %v1986 = vpop.f32.mrb[0].mxu0
      %1987 = vmatprep.mubr.f32.mxu0 %v1527
      %1988 = vmatmul.mubr.f32.gmra.mrb[0].mxu0 %v1511
      %v1989 = vpop.f32.mrb[0].mxu0
      %v1990 = vadd.f32 %v1845, %v1989
      %v1991 = vpop.f32.mrb[0].mxu0
      %1992 = vmatprep.mubr.f32.mxu0 %v1528
      %1993 = vmatmul.mubr.f32.gmra.mrb[0].mxu0 %v1512
      %v1994 = vpop.f32.mrb[0].mxu0
      %v1995 = vadd.f32 %v1850, %v1994
      %v1996 = vpop.f32.mrb[0].mxu0
      %1997 = vmatprep.mubr.f32.mxu0 %v1529
      %1998 = vmatmul.mubr.f32.gmra.mrb[0].mxu0 %v1513
      %v1999 = vpop.f32.mrb[0].mxu0
      %v2000 = vadd.f32 %v1855, %v1999
      %v2001 = vpop.f32.mrb[0].mxu0
      %2002 = vmatprep.mubr.f32.mxu0 %v1530
      %2003 = vmatmul.mubr.f32.gmra.mrb[0].mxu0 %v1514
      %v2004 = vpop.f32.mrb[0].mxu0
      %v2005 = vadd.f32 %v1860, %v2004
      %v2006 = vpop.f32.mrb[0].mxu0
      %2007 = vmatprep.mubr.f32.mxu0 %v1531
      %2008 = vmatmul.mubr.f32.gmra.mrb[0].mxu0 %v1515
      %v2009 = vpop.f32.mrb[0].mxu0
      %v2010 = vadd.f32 %v1865, %v2009
      %v2011 = vpop.f32.mrb[0].mxu0
      %2012 = vmatprep.mubr.f32.mxu0 %v1532
      %2013 = vmatmul.mubr.f32.gmra.mrb[0].mxu0 %v1516
      %v2014 = vpop.f32.mrb[0].mxu0
      %v2015 = vadd.f32 %v1870, %v2014
      %v2016 = vpop.f32.mrb[0].mxu0
      %2017 = vmatprep.mubr.f32.mxu0 %v1533
      %2018 = vmatmul.mubr.f32.gmra.mrb[0].mxu0 %v1517
      %v2019 = vpop.f32.mrb[0].mxu0
      %v2020 = vadd.f32 %v1875, %v2019
      %v2021 = vpop.f32.mrb[0].mxu0
      %2022 = vmatprep.mubr.f32.mxu0 %v1534
      %2023 = vmatmul.mubr.f32.gmra.mrb[0].mxu0 %v1518
      %v2024 = vpop.f32.mrb[0].mxu0
      %v2025 = vadd.f32 %v1880, %v2024
      %v2026 = vpop.f32.mrb[0].mxu0
      %2027 = vmatprep.mubr.f32.mxu0 %v1535
      %2028 = vmatmul.mubr.f32.gmra.mrb[0].mxu0 %v1519
      %v2029 = vpop.f32.mrb[0].mxu0
      %v2030 = vadd.f32 %v1885, %v2029
      %v2031 = vpop.f32.mrb[0].mxu0
      %2032 = vmatprep.mubr.f32.mxu0 %v1536
      %2033 = vmatmul.mubr.f32.gmra.mrb[0].mxu0 %v1520
      %v2034 = vpop.f32.mrb[0].mxu0
      %v2035 = vadd.f32 %v1890, %v2034
      %v2036 = vpop.f32.mrb[0].mxu0
      %2037 = vmatprep.mubr.f32.mxu0 %v1537
      %2038 = vmatmul.mubr.f32.gmra.mrb[0].mxu0 %v1521
      %v2039 = vpop.f32.mrb[0].mxu0
      %v2040 = vadd.f32 %v1895, %v2039
      %v2041 = vpop.f32.mrb[0].mxu0
      %2042 = vdwg.mxu0
      %2043 = vmatprep.subr.mxu0 0.0
      %2044 = vmatpush1.msra.mxu0 %v1668
      %2045 = vmatprep.subr.mxu0 0.0
      %2046 = vmatpush1.msra.mxu0 %v1669
      %2047 = vmatprep.subr.mxu0 0.0
      %2048 = vmatpush1.msra.mxu0 %v1670
      %2049 = vmatprep.subr.mxu0 0.0
      %2050 = vmatpush1.msra.mxu0 %v1671
      %2051 = vmatprep.subr.mxu0 0.0
      %2052 = vmatpush1.msra.mxu0 %v1672
      %2053 = vmatprep.subr.mxu0 0.0
      %2054 = vmatpush1.msra.mxu0 %v1673
      %2055 = vmatprep.subr.mxu0 0.0
      %2056 = vmatpush1.msra.mxu0 %v1674
      %2057 = vmatprep.subr.mxu0 0.0
      %2058 = vmatpush1.msra.mxu0 %v1675
      %2059 = vmatprep.subr.mxu0 0.0
      %2060 = vmatpush1.msra.mxu0 %v1676
      %2061 = vmatprep.subr.mxu0 0.0
      %2062 = vmatpush1.msra.mxu0 %v1677
      %2063 = vmatprep.subr.mxu0 0.0
      %2064 = vmatpush1.msra.mxu0 %v1678
      %2065 = vmatprep.subr.mxu0 0.0
      %2066 = vmatpush1.msra.mxu0 %v1679
      %2067 = vmatprep.subr.mxu0 0.0
      %2068 = vmatpush1.msra.mxu0 %v1680
      %2069 = vmatprep.subr.mxu0 0.0
      %2070 = vmatpush1.msra.mxu0 %v1681
      %2071 = vmatprep.subr.mxu0 0.0
      %2072 = vmatpush1.msra.mxu0 %v1682
      %2073 = vmatprep.subr.mxu0 0.0
      %2074 = vmatpush1.msra.mxu0 %v1683
      %2075 = vmatprep.subr.mxu0 0.0
      %2076 = vmatpush1.msra.mxu0 %v1684
      %2077 = vmatprep.subr.mxu0 0.0
      %2078 = vmatpush1.msra.mxu0 %v1685
      %2079 = vmatprep.subr.mxu0 0.0
      %2080 = vmatpush1.msra.mxu0 %v1686
      %2081 = vmatprep.subr.mxu0 0.0
      %2082 = vmatpush1.msra.mxu0 %v1687
      %2083 = vmatprep.subr.mxu0 0.0
      %2084 = vmatpush1.msra.mxu0 %v1688
      %2085 = vmatprep.subr.mxu0 0.0
      %2086 = vmatpush1.msra.mxu0 %v1689
      %2087 = vmatprep.subr.mxu0 0.0
      %2088 = vmatpush1.msra.mxu0 %v1690
      %2089 = vmatprep.subr.mxu0 0.0
      %2090 = vmatpush1.msra.mxu0 %v1691
      %2091 = vmatprep.subr.mxu0 0.0
      %2092 = vmatpush1.msra.mxu0 %v1692
      %2093 = vmatprep.subr.mxu0 0.0
      %2094 = vmatpush1.msra.mxu0 %v1693
      %2095 = vmatprep.subr.mxu0 0.0
      %2096 = vmatpush1.msra.mxu0 %v1694
      %2097 = vmatprep.subr.mxu0 0.0
      %2098 = vmatpush1.msra.mxu0 %v1695
      %2099 = vmatprep.subr.mxu0 0.0
      %2100 = vmatpush1.msra.mxu0 %v1696
      %2101 = vmatprep.subr.mxu0 0.0
      %2102 = vmatpush1.msra.mxu0 %v1697
      %2103 = vmatprep.subr.mxu0 0.0
      %2104 = vmatpush1.msra.mxu0 %v1698
      %2105 = vmatprep.subr.mxu0 0.0
      %2106 = vmatpush1.msra.mxu0 %v1699
      %2107 = vmatprep.mubr.f32.mxu0 %v1538
      %2108 = vmatmul.mubr.f32.gmra.mrb[0].mxu0 %v1258
      %v2109 = vpop.f32.mrb[0].mxu0
      %v2110 = vadd.f32 %v1965, %v2109
      %v2111 = vpop.f32.mrb[0].mxu0
      %2112 = vmatprep.mubr.f32.mxu0 %v1539
      %2113 = vmatmul.mubr.f32.gmra.mrb[0].mxu0 %v1259
      %v2114 = vpop.f32.mrb[0].mxu0
      %v2115 = vadd.f32 %v1970, %v2114
      %v2116 = vpop.f32.mrb[0].mxu0
      %2117 = vmatprep.mubr.f32.mxu0 %v1540
      %2118 = vmatmul.mubr.f32.gmra.mrb[0].mxu0 %v1260
      %v2119 = vpop.f32.mrb[0].mxu0
      %v2120 = vadd.f32 %v1975, %v2119
      %v2121 = vpop.f32.mrb[0].mxu0
      %2122 = vmatprep.mubr.f32.mxu0 %v1541
      %2123 = vmatmul.mubr.f32.gmra.mrb[0].mxu0 %v1261
      %v2124 = vpop.f32.mrb[0].mxu0
      %v2125 = vadd.f32 %v1980, %v2124
      %v2126 = vpop.f32.mrb[0].mxu0
      %2127 = vmatprep.mubr.f32.mxu0 %v1542
      %2128 = vmatmul.mubr.f32.gmra.mrb[0].mxu0 %v1262
      %v2129 = vpop.f32.mrb[0].mxu0
      %v2130 = vadd.f32 %v1985, %v2129
      %v2131 = vpop.f32.mrb[0].mxu0
      %2132 = vmatprep.mubr.f32.mxu0 %v1543
      %2133 = vmatmul.mubr.f32.gmra.mrb[0].mxu0 %v1263
      %v2134 = vpop.f32.mrb[0].mxu0
      %v2135 = vadd.f32 %v1990, %v2134
      %v2136 = vpop.f32.mrb[0].mxu0
      %2137 = vmatprep.mubr.f32.mxu0 %v1544
      %2138 = vmatmul.mubr.f32.gmra.mrb[0].mxu0 %v1264
      %v2139 = vpop.f32.mrb[0].mxu0
      %v2140 = vadd.f32 %v1995, %v2139
      %v2141 = vpop.f32.mrb[0].mxu0
      %2142 = vmatprep.mubr.f32.mxu0 %v1545
      %2143 = vmatmul.mubr.f32.gmra.mrb[0].mxu0 %v1265
      %v2144 = vpop.f32.mrb[0].mxu0
      %v2145 = vadd.f32 %v2000, %v2144
      %v2146 = vpop.f32.mrb[0].mxu0
      %2147 = vmatprep.mubr.f32.mxu0 %v1546
      %2148 = vmatmul.mubr.f32.gmra.mrb[0].mxu0 %v1266
      %v2149 = vpop.f32.mrb[0].mxu0
      %v2150 = vadd.f32 %v2005, %v2149
      %v2151 = vpop.f32.mrb[0].mxu0
      %2152 = vmatprep.mubr.f32.mxu0 %v1547
      %2153 = vmatmul.mubr.f32.gmra.mrb[0].mxu0 %v1267
      %v2154 = vpop.f32.mrb[0].mxu0
      %v2155 = vadd.f32 %v2010, %v2154
      %v2156 = vpop.f32.mrb[0].mxu0
      %2157 = vmatprep.mubr.f32.mxu0 %v1548
      %2158 = vmatmul.mubr.f32.gmra.mrb[0].mxu0 %v1268
      %v2159 = vpop.f32.mrb[0].mxu0
      %v2160 = vadd.f32 %v2015, %v2159
      %v2161 = vpop.f32.mrb[0].mxu0
      %2162 = vmatprep.mubr.f32.mxu0 %v1549
      %2163 = vmatmul.mubr.f32.gmra.mrb[0].mxu0 %v1269
      %v2164 = vpop.f32.mrb[0].mxu0
      %v2165 = vadd.f32 %v2020, %v2164
      %v2166 = vpop.f32.mrb[0].mxu0
      %2167 = vmatprep.mubr.f32.mxu0 %v1550
      %2168 = vmatmul.mubr.f32.gmra.mrb[0].mxu0 %v1270
      %v2169 = vpop.f32.mrb[0].mxu0
      %v2170 = vadd.f32 %v2025, %v2169
      %v2171 = vpop.f32.mrb[0].mxu0
      %2172 = vmatprep.mubr.f32.mxu0 %v1551
      %2173 = vmatmul.mubr.f32.gmra.mrb[0].mxu0 %v1271
      %v2174 = vpop.f32.mrb[0].mxu0
      %v2175 = vadd.f32 %v2030, %v2174
      %v2176 = vpop.f32.mrb[0].mxu0
      %2177 = vmatprep.mubr.f32.mxu0 %v1552
      %2178 = vmatmul.mubr.f32.gmra.mrb[0].mxu0 %v1272
      %v2179 = vpop.f32.mrb[0].mxu0
      %v2180 = vadd.f32 %v2035, %v2179
      %v2181 = vpop.f32.mrb[0].mxu0
      %2182 = vmatprep.mubr.f32.mxu0 %v1553
      %2183 = vmatmul.mubr.f32.gmra.mrb[0].mxu0 %v1273
      %v2184 = vpop.f32.mrb[0].mxu0
      %v2185 = vadd.f32 %v2040, %v2184
      %v2186 = vpop.f32.mrb[0].mxu0
      %2187 = vdwg.mxu0
      %2188 = vmatprep.subr.mxu0 0.0
      %2189 = vmatpush1.msra.mxu0 %v1700
      %2190 = vmatprep.subr.mxu0 0.0
      %2191 = vmatpush1.msra.mxu0 %v1701
      %2192 = vmatprep.subr.mxu0 0.0
      %2193 = vmatpush1.msra.mxu0 %v1702
      %2194 = vmatprep.subr.mxu0 0.0
      %2195 = vmatpush1.msra.mxu0 %v1703
      %2196 = vmatprep.subr.mxu0 0.0
      %2197 = vmatpush1.msra.mxu0 %v1704
      %2198 = vmatprep.subr.mxu0 0.0
      %2199 = vmatpush1.msra.mxu0 %v1705
      %2200 = vmatprep.subr.mxu0 0.0
      %2201 = vmatpush1.msra.mxu0 %v1706
      %2202 = vmatprep.subr.mxu0 0.0
      %2203 = vmatpush1.msra.mxu0 %v1707
      %2204 = vmatprep.subr.mxu0 0.0
      %2205 = vmatpush1.msra.mxu0 %v1708
      %2206 = vmatprep.subr.mxu0 0.0
      %2207 = vmatpush1.msra.mxu0 %v1709
      %2208 = vmatprep.subr.mxu0 0.0
      %2209 = vmatpush1.msra.mxu0 %v1710
      %2210 = vmatprep.subr.mxu0 0.0
      %2211 = vmatpush1.msra.mxu0 %v1711
      %2212 = vmatprep.subr.mxu0 0.0
      %2213 = vmatpush1.msra.mxu0 %v1712
      %2214 = vmatprep.subr.mxu0 0.0
      %2215 = vmatpush1.msra.mxu0 %v1713
      %2216 = vmatprep.subr.mxu0 0.0
      %2217 = vmatpush1.msra.mxu0 %v1714
      %2218 = vmatprep.subr.mxu0 0.0
      %2219 = vmatpush1.msra.mxu0 %v1715
      %2220 = vmatprep.subr.mxu0 0.0
      %2221 = vmatpush1.msra.mxu0 %v1716
      %2222 = vmatprep.subr.mxu0 0.0
      %2223 = vmatpush1.msra.mxu0 %v1717
      %2224 = vmatprep.subr.mxu0 0.0
      %2225 = vmatpush1.msra.mxu0 %v1718
      %2226 = vmatprep.subr.mxu0 0.0
      %2227 = vmatpush1.msra.mxu0 %v1719
      %2228 = vmatprep.subr.mxu0 0.0
      %2229 = vmatpush1.msra.mxu0 %v1720
      %2230 = vmatprep.subr.mxu0 0.0
      %2231 = vmatpush1.msra.mxu0 %v1721
      %2232 = vmatprep.subr.mxu0 0.0
      %2233 = vmatpush1.msra.mxu0 %v1722
      %2234 = vmatprep.subr.mxu0 0.0
      %2235 = vmatpush1.msra.mxu0 %v1723
      %2236 = vmatprep.subr.mxu0 0.0
      %2237 = vmatpush1.msra.mxu0 %v1724
      %2238 = vmatprep.subr.mxu0 0.0
      %2239 = vmatpush1.msra.mxu0 %v1725
      %2240 = vmatprep.subr.mxu0 0.0
      %2241 = vmatpush1.msra.mxu0 %v1726
      %2242 = vmatprep.subr.mxu0 0.0
      %2243 = vmatpush1.msra.mxu0 %v1727
      %2244 = vmatprep.subr.mxu0 0.0
      %2245 = vmatpush1.msra.mxu0 %v1728
      %2246 = vmatprep.subr.mxu0 0.0
      %2247 = vmatpush1.msra.mxu0 %v1729
      %2248 = vmatprep.subr.mxu0 0.0
      %2249 = vmatpush1.msra.mxu0 %v1730
      %2250 = vmatprep.subr.mxu0 0.0
      %2251 = vmatpush1.msra.mxu0 %v1731
      %2252 = vmatprep.mubr.f32.mxu0 %v1572
      %2253 = vmatmul.mubr.f32.gmra.mrb[0].mxu0 %v1556
      %v2254 = vpop.f32.mrb[0].mxu0
      %v2255 = vadd.f32 %v2110, %v2254
      %v2256 = vpop.f32.mrb[0].mxu0
      %2257 = vmatprep.mubr.f32.mxu0 %v1573
      %2258 = vmatmul.mubr.f32.gmra.mrb[0].mxu0 %v1557
      %v2259 = vpop.f32.mrb[0].mxu0
      %v2260 = vadd.f32 %v2115, %v2259
      %v2261 = vpop.f32.mrb[0].mxu0
      %2262 = vmatprep.mubr.f32.mxu0 %v1574
      %2263 = vmatmul.mubr.f32.gmra.mrb[0].mxu0 %v1558
      %v2264 = vpop.f32.mrb[0].mxu0
      %v2265 = vadd.f32 %v2120, %v2264
      %v2266 = vpop.f32.mrb[0].mxu0
      %2267 = vmatprep.mubr.f32.mxu0 %v1575
      %2268 = vmatmul.mubr.f32.gmra.mrb[0].mxu0 %v1559
      %v2269 = vpop.f32.mrb[0].mxu0
      %v2270 = vadd.f32 %v2125, %v2269
      %v2271 = vpop.f32.mrb[0].mxu0
      %2272 = vmatprep.mubr.f32.mxu0 %v1576
      %2273 = vmatmul.mubr.f32.gmra.mrb[0].mxu0 %v1560
      %v2274 = vpop.f32.mrb[0].mxu0
      %v2275 = vadd.f32 %v2130, %v2274
      %v2276 = vpop.f32.mrb[0].mxu0
      %2277 = vmatprep.mubr.f32.mxu0 %v1577
      %2278 = vmatmul.mubr.f32.gmra.mrb[0].mxu0 %v1561
      %v2279 = vpop.f32.mrb[0].mxu0
      %v2280 = vadd.f32 %v2135, %v2279
      %v2281 = vpop.f32.mrb[0].mxu0
      %2282 = vmatprep.mubr.f32.mxu0 %v1578
      %2283 = vmatmul.mubr.f32.gmra.mrb[0].mxu0 %v1562
      %v2284 = vpop.f32.mrb[0].mxu0
      %v2285 = vadd.f32 %v2140, %v2284
      %v2286 = vpop.f32.mrb[0].mxu0
      %2287 = vmatprep.mubr.f32.mxu0 %v1579
      %2288 = vmatmul.mubr.f32.gmra.mrb[0].mxu0 %v1563
      %v2289 = vpop.f32.mrb[0].mxu0
      %v2290 = vadd.f32 %v2145, %v2289
      %v2291 = vpop.f32.mrb[0].mxu0
      %2292 = vmatprep.mubr.f32.mxu0 %v1580
      %2293 = vmatmul.mubr.f32.gmra.mrb[0].mxu0 %v1564
      %v2294 = vpop.f32.mrb[0].mxu0
      %v2295 = vadd.f32 %v2150, %v2294
      %v2296 = vpop.f32.mrb[0].mxu0
      %2297 = vmatprep.mubr.f32.mxu0 %v1581
      %2298 = vmatmul.mubr.f32.gmra.mrb[0].mxu0 %v1565
      %v2299 = vpop.f32.mrb[0].mxu0
      %v2300 = vadd.f32 %v2155, %v2299
      %v2301 = vpop.f32.mrb[0].mxu0
      %2302 = vmatprep.mubr.f32.mxu0 %v1582
      %2303 = vmatmul.mubr.f32.gmra.mrb[0].mxu0 %v1566
      %v2304 = vpop.f32.mrb[0].mxu0
      %v2305 = vadd.f32 %v2160, %v2304
      %v2306 = vpop.f32.mrb[0].mxu0
      %2307 = vmatprep.mubr.f32.mxu0 %v1583
      %2308 = vmatmul.mubr.f32.gmra.mrb[0].mxu0 %v1567
      %v2309 = vpop.f32.mrb[0].mxu0
      %v2310 = vadd.f32 %v2165, %v2309
      %v2311 = vpop.f32.mrb[0].mxu0
      %2312 = vmatprep.mubr.f32.mxu0 %v1584
      %2313 = vmatmul.mubr.f32.gmra.mrb[0].mxu0 %v1568
      %v2314 = vpop.f32.mrb[0].mxu0
      %v2315 = vadd.f32 %v2170, %v2314
      %v2316 = vpop.f32.mrb[0].mxu0
      %2317 = vmatprep.mubr.f32.mxu0 %v1585
      %2318 = vmatmul.mubr.f32.gmra.mrb[0].mxu0 %v1569
      %v2319 = vpop.f32.mrb[0].mxu0
      %v2320 = vadd.f32 %v2175, %v2319
      %v2321 = vpop.f32.mrb[0].mxu0
      %2322 = vmatprep.mubr.f32.mxu0 %v1586
      %2323 = vmatmul.mubr.f32.gmra.mrb[0].mxu0 %v1570
      %v2324 = vpop.f32.mrb[0].mxu0
      %v2325 = vadd.f32 %v2180, %v2324
      %v2326 = vpop.f32.mrb[0].mxu0
      %2327 = vmatprep.mubr.f32.mxu0 %v1587
      %2328 = vmatmul.mubr.f32.gmra.mrb[0].mxu0 %v1571
      %v2329 = vpop.f32.mrb[0].mxu0
      %v2330 = vadd.f32 %v2185, %v2329
      %v2331 = vpop.f32.mrb[0].mxu0
      %2332 = vdwg.mxu0
      %2333 = vmatprep.subr.mxu0 0.0
      %2334 = vmatpush1.msra.mxu0 %v1732
      %2335 = vmatprep.subr.mxu0 0.0
      %2336 = vmatpush1.msra.mxu0 %v1733
      %2337 = vmatprep.subr.mxu0 0.0
      %2338 = vmatpush1.msra.mxu0 %v1734
      %2339 = vmatprep.subr.mxu0 0.0
      %2340 = vmatpush1.msra.mxu0 %v1735
      %2341 = vmatprep.subr.mxu0 0.0
      %2342 = vmatpush1.msra.mxu0 %v1736
      %2343 = vmatprep.subr.mxu0 0.0
      %2344 = vmatpush1.msra.mxu0 %v1737
      %2345 = vmatprep.subr.mxu0 0.0
      %2346 = vmatpush1.msra.mxu0 %v1738
      %2347 = vmatprep.subr.mxu0 0.0
      %2348 = vmatpush1.msra.mxu0 %v1739
      %2349 = vmatprep.subr.mxu0 0.0
      %2350 = vmatpush1.msra.mxu0 %v1740
      %2351 = vmatprep.subr.mxu0 0.0
      %2352 = vmatpush1.msra.mxu0 %v1741
      %2353 = vmatprep.subr.mxu0 0.0
      %2354 = vmatpush1.msra.mxu0 %v1742
      %2355 = vmatprep.subr.mxu0 0.0
      %2356 = vmatpush1.msra.mxu0 %v1743
      %2357 = vmatprep.subr.mxu0 0.0
      %2358 = vmatpush1.msra.mxu0 %v1744
      %2359 = vmatprep.subr.mxu0 0.0
      %2360 = vmatpush1.msra.mxu0 %v1745
      %2361 = vmatprep.subr.mxu0 0.0
      %2362 = vmatpush1.msra.mxu0 %v1746
      %2363 = vmatprep.subr.mxu0 0.0
      %2364 = vmatpush1.msra.mxu0 %v1747
      %2365 = vmatprep.subr.mxu0 0.0
      %2366 = vmatpush1.msra.mxu0 0.0
      %2367 = vmatprep.subr.mxu0 0.0
      %2368 = vmatpush1.msra.mxu0 0.0
      %2369 = vmatprep.subr.mxu0 0.0
      %2370 = vmatpush1.msra.mxu0 0.0
      %2371 = vmatprep.subr.mxu0 0.0
      %2372 = vmatpush1.msra.mxu0 0.0
      %2373 = vmatprep.subr.mxu0 0.0
      %2374 = vmatpush1.msra.mxu0 0.0
      %2375 = vmatprep.subr.mxu0 0.0
      %2376 = vmatpush1.msra.mxu0 0.0
      %2377 = vmatprep.subr.mxu0 0.0
      %2378 = vmatpush1.msra.mxu0 0.0
      %2379 = vmatprep.subr.mxu0 0.0
      %2380 = vmatpush1.msra.mxu0 0.0
      %2381 = vmatprep.subr.mxu0 0.0
      %2382 = vmatpush1.msra.mxu0 0.0
      %2383 = vmatprep.subr.mxu0 0.0
      %2384 = vmatpush1.msra.mxu0 0.0
      %2385 = vmatprep.subr.mxu0 0.0
      %2386 = vmatpush1.msra.mxu0 0.0
      %2387 = vmatprep.subr.mxu0 0.0
      %2388 = vmatpush1.msra.mxu0 0.0
      %2389 = vmatprep.subr.mxu0 0.0
      %2390 = vmatpush1.msra.mxu0 0.0
      %2391 = vmatprep.subr.mxu0 0.0
      %2392 = vmatpush1.msra.mxu0 0.0
      %2393 = vmatprep.subr.mxu0 0.0
      %2394 = vmatpush1.msra.mxu0 0.0
      %2395 = vmatprep.subr.mxu0 0.0
      %2396 = vmatpush1.msra.mxu0 0.0
      %2397 = vmatprep.mubr.f32.mxu0 0.0
      %2398 = vmatmul.mubr.f32.gmra.mrb[0].mxu0 %v1588
      %v2399 = vpop.f32.mrb[0].mxu0
      %v2400 = vadd.f32 %v2255, %v2399
      %v2401 = vpop.f32.mrb[0].mxu0
      %2402 = vmatprep.mubr.f32.mxu0 0.0
      %2403 = vmatmul.mubr.f32.gmra.mrb[0].mxu0 %v1589
      %v2404 = vpop.f32.mrb[0].mxu0
      %v2405 = vadd.f32 %v2260, %v2404
      %v2406 = vpop.f32.mrb[0].mxu0
      %2407 = vmatprep.mubr.f32.mxu0 0.0
      %2408 = vmatmul.mubr.f32.gmra.mrb[0].mxu0 %v1590
      %v2409 = vpop.f32.mrb[0].mxu0
      %v2410 = vadd.f32 %v2265, %v2409
      %v2411 = vpop.f32.mrb[0].mxu0
      %2412 = vmatprep.mubr.f32.mxu0 0.0
      %2413 = vmatmul.mubr.f32.gmra.mrb[0].mxu0 %v1591
      %v2414 = vpop.f32.mrb[0].mxu0
      %v2415 = vadd.f32 %v2270, %v2414
      %v2416 = vpop.f32.mrb[0].mxu0
      %2417 = vmatprep.mubr.f32.mxu0 0.0
      %2418 = vmatmul.mubr.f32.gmra.mrb[0].mxu0 %v1592
      %v2419 = vpop.f32.mrb[0].mxu0
      %v2420 = vadd.f32 %v2275, %v2419
      %v2421 = vpop.f32.mrb[0].mxu0
      %2422 = vmatprep.mubr.f32.mxu0 0.0
      %2423 = vmatmul.mubr.f32.gmra.mrb[0].mxu0 %v1593
      %v2424 = vpop.f32.mrb[0].mxu0
      %v2425 = vadd.f32 %v2280, %v2424
      %v2426 = vpop.f32.mrb[0].mxu0
      %2427 = vmatprep.mubr.f32.mxu0 0.0
      %2428 = vmatmul.mubr.f32.gmra.mrb[0].mxu0 %v1594
      %v2429 = vpop.f32.mrb[0].mxu0
      %v2430 = vadd.f32 %v2285, %v2429
      %v2431 = vpop.f32.mrb[0].mxu0
      %2432 = vmatprep.mubr.f32.mxu0 0.0
      %2433 = vmatmul.mubr.f32.gmra.mrb[0].mxu0 %v1595
      %v2434 = vpop.f32.mrb[0].mxu0
      %v2435 = vadd.f32 %v2290, %v2434
      %v2436 = vpop.f32.mrb[0].mxu0
      %2437 = vmatprep.mubr.f32.mxu0 0.0
      %2438 = vmatmul.mubr.f32.gmra.mrb[0].mxu0 %v1596
      %v2439 = vpop.f32.mrb[0].mxu0
      %v2440 = vadd.f32 %v2295, %v2439
      %v2441 = vpop.f32.mrb[0].mxu0
      %2442 = vmatprep.mubr.f32.mxu0 0.0
      %2443 = vmatmul.mubr.f32.gmra.mrb[0].mxu0 %v1597
      %v2444 = vpop.f32.mrb[0].mxu0
      %v2445 = vadd.f32 %v2300, %v2444
      %v2446 = vpop.f32.mrb[0].mxu0
      %2447 = vmatprep.mubr.f32.mxu0 0.0
      %2448 = vmatmul.mubr.f32.gmra.mrb[0].mxu0 %v1598
      %v2449 = vpop.f32.mrb[0].mxu0
      %v2450 = vadd.f32 %v2305, %v2449
      %v2451 = vpop.f32.mrb[0].mxu0
      %2452 = vmatprep.mubr.f32.mxu0 0.0
      %2453 = vmatmul.mubr.f32.gmra.mrb[0].mxu0 %v1599
      %v2454 = vpop.f32.mrb[0].mxu0
      %v2455 = vadd.f32 %v2310, %v2454
      %v2456 = vpop.f32.mrb[0].mxu0
      %2457 = vmatprep.mubr.f32.mxu0 0.0
      %2458 = vmatmul.mubr.f32.gmra.mrb[0].mxu0 %v1600
      %v2459 = vpop.f32.mrb[0].mxu0
      %v2460 = vadd.f32 %v2315, %v2459
      %v2461 = vpop.f32.mrb[0].mxu0
      %2462 = vmatprep.mubr.f32.mxu0 0.0
      %2463 = vmatmul.mubr.f32.gmra.mrb[0].mxu0 %v1601
      %v2464 = vpop.f32.mrb[0].mxu0
      %v2465 = vadd.f32 %v2320, %v2464
      %v2466 = vpop.f32.mrb[0].mxu0
      %2467 = vmatprep.mubr.f32.mxu0 0.0
      %2468 = vmatmul.mubr.f32.gmra.mrb[0].mxu0 %v1602
      %v2469 = vpop.f32.mrb[0].mxu0
      %v2470 = vadd.f32 %v2325, %v2469
      %v2471 = vpop.f32.mrb[0].mxu0
      %2472 = vmatprep.mubr.f32.mxu0 0.0
      %2473 = vmatmul.mubr.f32.gmra.mrb[0].mxu0 %v1603
      %v2474 = vpop.f32.mrb[0].mxu0
      %v2475 = vadd.f32 %v2330, %v2474
      %v2476 = vpop.f32.mrb[0].mxu0
      %2477 = vdwg.mxu0
      %v2478 = vmax.f32 %v2400, 0.0
      %v2479 = vmax.f32 %v2405, 0.0
      %v2480 = vmax.f32 %v2410, 0.0
      %v2481 = vmax.f32 %v2415, 0.0
      %v2482 = vmax.f32 %v2420, 0.0
      %v2483 = vmax.f32 %v2425, 0.0
      %v2484 = vmax.f32 %v2430, 0.0
      %v2485 = vmax.f32 %v2435, 0.0
      %v2486 = vmax.f32 %v2440, 0.0
      %v2487 = vmax.f32 %v2445, 0.0
      %v2488 = vmax.f32 %v2450, 0.0
      %v2489 = vmax.f32 %v2455, 0.0
      %v2490 = vmax.f32 %v2460, 0.0
      %v2491 = vmax.f32 %v2465, 0.0
      %v2492 = vmax.f32 %v2470, 0.0
      %v2493 = vmax.f32 %v2475, 0.0
      %v2494 = vld [vmem:[%s7 + $0x80] sm:$0xff]
      %v2495 = vld [vmem:[%s7 + $0x88] sm:$0xff]
      %v2496 = vld [vmem:[%s7 + $0x90] sm:$0xff]
      %v2497 = vld [vmem:[%s7 + $0x98] sm:$0xff]
      %v2498 = vld [vmem:[%s7 + $0xa0] sm:$0xff]
      %v2499 = vld [vmem:[%s7 + $0xa8] sm:$0xff]
      %v2500 = vld [vmem:[%s7 + $0xb0] sm:$0xff]
      %v2501 = vld [vmem:[%s7 + $0xb8] sm:$0xff]
      %v2502 = vld [vmem:[%s7 + $0xc0] sm:$0xff]
      %v2503 = vld [vmem:[%s7 + $0xc8] sm:$0xff]
      %v2504 = vld [vmem:[%s7 + $0xd0] sm:$0xff]
      %v2505 = vld [vmem:[%s7 + $0xd8] sm:$0xff]
      %v2506 = vld [vmem:[%s7 + $0xe0] sm:$0xff]
      %v2507 = vld [vmem:[%s7 + $0xe8] sm:$0xff]
      %v2508 = vld [vmem:[%s7 + $0xf0] sm:$0xff]
      %v2509 = vld [vmem:[%s7 + $0xf8] sm:$0xff]
      %2510 = vmatprep.subr.mxu0 0.0
      %2511 = vmatpush1.msra.mxu0 %v2494
      %2512 = vmatprep.subr.mxu0 0.0
      %2513 = vmatpush1.msra.mxu0 %v2495
      %2514 = vmatprep.subr.mxu0 0.0
      %2515 = vmatpush1.msra.mxu0 %v2496
      %2516 = vmatprep.subr.mxu0 0.0
      %2517 = vmatpush1.msra.mxu0 %v2497
      %2518 = vmatprep.subr.mxu0 0.0
      %2519 = vmatpush1.msra.mxu0 %v2498
      %2520 = vmatprep.subr.mxu0 0.0
      %2521 = vmatpush1.msra.mxu0 %v2499
      %2522 = vmatprep.subr.mxu0 0.0
      %2523 = vmatpush1.msra.mxu0 %v2500
      %2524 = vmatprep.subr.mxu0 0.0
      %2525 = vmatpush1.msra.mxu0 %v2501
      %2526 = vmatprep.subr.mxu0 0.0
      %2527 = vmatpush1.msra.mxu0 %v2502
      %2528 = vmatprep.subr.mxu0 0.0
      %2529 = vmatpush1.msra.mxu0 %v2503
      %2530 = vmatprep.subr.mxu0 0.0
      %2531 = vmatpush1.msra.mxu0 %v2504
      %2532 = vmatprep.subr.mxu0 0.0
      %2533 = vmatpush1.msra.mxu0 %v2505
      %2534 = vmatprep.subr.mxu0 0.0
      %2535 = vmatpush1.msra.mxu0 %v2506
      %2536 = vmatprep.subr.mxu0 0.0
      %2537 = vmatpush1.msra.mxu0 %v2507
      %2538 = vmatprep.subr.mxu0 0.0
      %2539 = vmatpush1.msra.mxu0 %v2508
      %2540 = vmatprep.subr.mxu0 0.0
      %2541 = vmatpush1.msra.mxu0 %v2509
      %2542 = vmatprep.subr.mxu0 0.0
      %2543 = vmatpush1.msra.mxu0 0.0
      %2544 = vmatprep.subr.mxu0 0.0
      %2545 = vmatpush1.msra.mxu0 0.0
      %2546 = vmatprep.subr.mxu0 0.0
      %2547 = vmatpush1.msra.mxu0 0.0
      %2548 = vmatprep.subr.mxu0 0.0
      %2549 = vmatpush1.msra.mxu0 0.0
      %2550 = vmatprep.subr.mxu0 0.0
      %2551 = vmatpush1.msra.mxu0 0.0
      %2552 = vmatprep.subr.mxu0 0.0
      %2553 = vmatpush1.msra.mxu0 0.0
      %2554 = vmatprep.subr.mxu0 0.0
      %2555 = vmatpush1.msra.mxu0 0.0
      %2556 = vmatprep.subr.mxu0 0.0
      %2557 = vmatpush1.msra.mxu0 0.0
      %2558 = vmatprep.subr.mxu0 0.0
      %2559 = vmatpush1.msra.mxu0 0.0
      %2560 = vmatprep.subr.mxu0 0.0
      %2561 = vmatpush1.msra.mxu0 0.0
      %2562 = vmatprep.subr.mxu0 0.0
      %2563 = vmatpush1.msra.mxu0 0.0
      %2564 = vmatprep.subr.mxu0 0.0
      %2565 = vmatpush1.msra.mxu0 0.0
      %2566 = vmatprep.subr.mxu0 0.0
      %2567 = vmatpush1.msra.mxu0 0.0
      %2568 = vmatprep.subr.mxu0 0.0
      %2569 = vmatpush1.msra.mxu0 0.0
      %2570 = vmatprep.subr.mxu0 0.0
      %2571 = vmatpush1.msra.mxu0 0.0
      %2572 = vmatprep.subr.mxu0 0.0
      %2573 = vmatpush1.msra.mxu0 0.0
      %2574 = vmatprep.mubr.f32.mxu0 0.0
      %2575 = vmatmul.mubr.f32.gmra.mrb[0].mxu0 %v2478
      %v2576 = vpop.f32.mrb[0].mxu0
      %v2577 = vadd.f32 0.0, %v2576
      %v2578 = vpop.f32.mrb[0].mxu0
      %2579 = vmatprep.mubr.f32.mxu0 0.0
      %2580 = vmatmul.mubr.f32.gmra.mrb[0].mxu0 %v2479
      %v2581 = vpop.f32.mrb[0].mxu0
      %v2582 = vadd.f32 0.0, %v2581
      %v2583 = vpop.f32.mrb[0].mxu0
      %2584 = vmatprep.mubr.f32.mxu0 0.0
      %2585 = vmatmul.mubr.f32.gmra.mrb[0].mxu0 %v2480
      %v2586 = vpop.f32.mrb[0].mxu0
      %v2587 = vadd.f32 0.0, %v2586
      %v2588 = vpop.f32.mrb[0].mxu0
      %2589 = vmatprep.mubr.f32.mxu0 0.0
      %2590 = vmatmul.mubr.f32.gmra.mrb[0].mxu0 %v2481
      %v2591 = vpop.f32.mrb[0].mxu0
      %v2592 = vadd.f32 0.0, %v2591
      %v2593 = vpop.f32.mrb[0].mxu0
      %2594 = vmatprep.mubr.f32.mxu0 0.0
      %2595 = vmatmul.mubr.f32.gmra.mrb[0].mxu0 %v2482
      %v2596 = vpop.f32.mrb[0].mxu0
      %v2597 = vadd.f32 0.0, %v2596
      %v2598 = vpop.f32.mrb[0].mxu0
      %2599 = vmatprep.mubr.f32.mxu0 0.0
      %2600 = vmatmul.mubr.f32.gmra.mrb[0].mxu0 %v2483
      %v2601 = vpop.f32.mrb[0].mxu0
      %v2602 = vadd.f32 0.0, %v2601
      %v2603 = vpop.f32.mrb[0].mxu0
      %2604 = vmatprep.mubr.f32.mxu0 0.0
      %2605 = vmatmul.mubr.f32.gmra.mrb[0].mxu0 %v2484
      %v2606 = vpop.f32.mrb[0].mxu0
      %v2607 = vadd.f32 0.0, %v2606
      %v2608 = vpop.f32.mrb[0].mxu0
      %2609 = vmatprep.mubr.f32.mxu0 0.0
      %2610 = vmatmul.mubr.f32.gmra.mrb[0].mxu0 %v2485
      %v2611 = vpop.f32.mrb[0].mxu0
      %v2612 = vadd.f32 0.0, %v2611
      %v2613 = vpop.f32.mrb[0].mxu0
      %2614 = vmatprep.mubr.f32.mxu0 0.0
      %2615 = vmatmul.mubr.f32.gmra.mrb[0].mxu0 %v2486
      %v2616 = vpop.f32.mrb[0].mxu0
      %v2617 = vadd.f32 0.0, %v2616
      %v2618 = vpop.f32.mrb[0].mxu0
      %2619 = vmatprep.mubr.f32.mxu0 0.0
      %2620 = vmatmul.mubr.f32.gmra.mrb[0].mxu0 %v2487
      %v2621 = vpop.f32.mrb[0].mxu0
      %v2622 = vadd.f32 0.0, %v2621
      %v2623 = vpop.f32.mrb[0].mxu0
      %2624 = vmatprep.mubr.f32.mxu0 0.0
      %2625 = vmatmul.mubr.f32.gmra.mrb[0].mxu0 %v2488
      %v2626 = vpop.f32.mrb[0].mxu0
      %v2627 = vadd.f32 0.0, %v2626
      %v2628 = vpop.f32.mrb[0].mxu0
      %2629 = vmatprep.mubr.f32.mxu0 0.0
      %2630 = vmatmul.mubr.f32.gmra.mrb[0].mxu0 %v2489
      %v2631 = vpop.f32.mrb[0].mxu0
      %v2632 = vadd.f32 0.0, %v2631
      %v2633 = vpop.f32.mrb[0].mxu0
      %2634 = vmatprep.mubr.f32.mxu0 0.0
      %2635 = vmatmul.mubr.f32.gmra.mrb[0].mxu0 %v2490
      %v2636 = vpop.f32.mrb[0].mxu0
      %v2637 = vadd.f32 0.0, %v2636
      %v2638 = vpop.f32.mrb[0].mxu0
      %2639 = vmatprep.mubr.f32.mxu0 0.0
      %2640 = vmatmul.mubr.f32.gmra.mrb[0].mxu0 %v2491
      %v2641 = vpop.f32.mrb[0].mxu0
      %v2642 = vadd.f32 0.0, %v2641
      %v2643 = vpop.f32.mrb[0].mxu0
      %2644 = vmatprep.mubr.f32.mxu0 0.0
      %2645 = vmatmul.mubr.f32.gmra.mrb[0].mxu0 %v2492
      %v2646 = vpop.f32.mrb[0].mxu0
      %v2647 = vadd.f32 0.0, %v2646
      %v2648 = vpop.f32.mrb[0].mxu0
      %2649 = vmatprep.mubr.f32.mxu0 0.0
      %2650 = vmatmul.mubr.f32.gmra.mrb[0].mxu0 %v2493
      %v2651 = vpop.f32.mrb[0].mxu0
      %v2652 = vadd.f32 0.0, %v2651
      %v2653 = vpop.f32.mrb[0].mxu0
      %2654 = vdwg.mxu0
      %2655 = vmatprep.subr.mxu0 0.0
      %2656 = vmatpush1.msra.mxu0 %v1456
      %2657 = vmatprep.subr.mxu0 0.0
      %2658 = vmatpush1.msra.mxu0 %v1457
      %2659 = vmatprep.subr.mxu0 0.0
      %2660 = vmatpush1.msra.mxu0 %v1458
      %2661 = vmatprep.subr.mxu0 0.0
      %2662 = vmatpush1.msra.mxu0 %v1459
      %2663 = vmatprep.subr.mxu0 0.0
      %2664 = vmatpush1.msra.mxu0 %v1460
      %2665 = vmatprep.subr.mxu0 0.0
      %2666 = vmatpush1.msra.mxu0 %v1461
      %2667 = vmatprep.subr.mxu0 0.0
      %2668 = vmatpush1.msra.mxu0 %v1462
      %2669 = vmatprep.subr.mxu0 0.0
      %2670 = vmatpush1.msra.mxu0 %v1463
      %2671 = vmatprep.subr.mxu0 0.0
      %2672 = vmatpush1.msra.mxu0 %v1464
      %2673 = vmatprep.subr.mxu0 0.0
      %2674 = vmatpush1.msra.mxu0 %v1465
      %2675 = vmatprep.subr.mxu0 0.0
      %2676 = vmatpush1.msra.mxu0 %v1466
      %2677 = vmatprep.subr.mxu0 0.0
      %2678 = vmatpush1.msra.mxu0 %v1467
      %2679 = vmatprep.subr.mxu0 0.0
      %2680 = vmatpush1.msra.mxu0 %v1468
      %2681 = vmatprep.subr.mxu0 0.0
      %2682 = vmatpush1.msra.mxu0 %v1469
      %2683 = vmatprep.subr.mxu0 0.0
      %2684 = vmatpush1.msra.mxu0 %v1470
      %2685 = vmatprep.subr.mxu0 0.0
      %2686 = vmatpush1.msra.mxu0 %v1471
      %2687 = vmatprep.subr.mxu0 0.0
      %2688 = vmatpush1.msra.mxu0 0.0
      %2689 = vmatprep.subr.mxu0 0.0
      %2690 = vmatpush1.msra.mxu0 0.0
      %2691 = vmatprep.subr.mxu0 0.0
      %2692 = vmatpush1.msra.mxu0 0.0
      %2693 = vmatprep.subr.mxu0 0.0
      %2694 = vmatpush1.msra.mxu0 0.0
      %2695 = vmatprep.subr.mxu0 0.0
      %2696 = vmatpush1.msra.mxu0 0.0
      %2697 = vmatprep.subr.mxu0 0.0
      %2698 = vmatpush1.msra.mxu0 0.0
      %2699 = vmatprep.subr.mxu0 0.0
      %2700 = vmatpush1.msra.mxu0 0.0
      %2701 = vmatprep.subr.mxu0 0.0
      %2702 = vmatpush1.msra.mxu0 0.0
      %2703 = vmatprep.subr.mxu0 0.0
      %2704 = vmatpush1.msra.mxu0 0.0
      %2705 = vmatprep.subr.mxu0 0.0
      %2706 = vmatpush1.msra.mxu0 0.0
      %2707 = vmatprep.subr.mxu0 0.0
      %2708 = vmatpush1.msra.mxu0 0.0
      %2709 = vmatprep.subr.mxu0 0.0
      %2710 = vmatpush1.msra.mxu0 0.0
      %2711 = vmatprep.subr.mxu0 0.0
      %2712 = vmatpush1.msra.mxu0 0.0
      %2713 = vmatprep.subr.mxu0 0.0
      %2714 = vmatpush1.msra.mxu0 0.0
      %2715 = vmatprep.subr.mxu0 0.0
      %2716 = vmatpush1.msra.mxu0 0.0
      %2717 = vmatprep.subr.mxu0 0.0
      %2718 = vmatpush1.msra.mxu0 0.0
      %2719 = vmatprep.mubr.f32.mxu0 0.0
      %2720 = vmatmul.mubr.f32.gmra.mrb[0].mxu0 %v1440
      %v2721 = vpop.f32.mrb[0].mxu0
      %v2722 = vadd.f32 %v2577, %v2721
      %v2723 = vpop.f32.mrb[0].mxu0
      %2724 = vmatprep.mubr.f32.mxu0 0.0
      %2725 = vmatmul.mubr.f32.gmra.mrb[0].mxu0 %v1441
      %v2726 = vpop.f32.mrb[0].mxu0
      %v2727 = vadd.f32 %v2582, %v2726
      %v2728 = vpop.f32.mrb[0].mxu0
      %2729 = vmatprep.mubr.f32.mxu0 0.0
      %2730 = vmatmul.mubr.f32.gmra.mrb[0].mxu0 %v1442
      %v2731 = vpop.f32.mrb[0].mxu0
      %v2732 = vadd.f32 %v2587, %v2731
      %v2733 = vpop.f32.mrb[0].mxu0
      %2734 = vmatprep.mubr.f32.mxu0 0.0
      %2735 = vmatmul.mubr.f32.gmra.mrb[0].mxu0 %v1443
      %v2736 = vpop.f32.mrb[0].mxu0
      %v2737 = vadd.f32 %v2592, %v2736
      %v2738 = vpop.f32.mrb[0].mxu0
      %2739 = vmatprep.mubr.f32.mxu0 0.0
      %2740 = vmatmul.mubr.f32.gmra.mrb[0].mxu0 %v1444
      %v2741 = vpop.f32.mrb[0].mxu0
      %v2742 = vadd.f32 %v2597, %v2741
      %v2743 = vpop.f32.mrb[0].mxu0
      %2744 = vmatprep.mubr.f32.mxu0 0.0
      %2745 = vmatmul.mubr.f32.gmra.mrb[0].mxu0 %v1445
      %v2746 = vpop.f32.mrb[0].mxu0
      %v2747 = vadd.f32 %v2602, %v2746
      %v2748 = vpop.f32.mrb[0].mxu0
      %2749 = vmatprep.mubr.f32.mxu0 0.0
      %2750 = vmatmul.mubr.f32.gmra.mrb[0].mxu0 %v1446
      %v2751 = vpop.f32.mrb[0].mxu0
      %v2752 = vadd.f32 %v2607, %v2751
      %v2753 = vpop.f32.mrb[0].mxu0
      %2754 = vmatprep.mubr.f32.mxu0 0.0
      %2755 = vmatmul.mubr.f32.gmra.mrb[0].mxu0 %v1447
      %v2756 = vpop.f32.mrb[0].mxu0
      %v2757 = vadd.f32 %v2612, %v2756
      %v2758 = vpop.f32.mrb[0].mxu0
      %2759 = vmatprep.mubr.f32.mxu0 0.0
      %2760 = vmatmul.mubr.f32.gmra.mrb[0].mxu0 %v1448
      %v2761 = vpop.f32.mrb[0].mxu0
      %v2762 = vadd.f32 %v2617, %v2761
      %v2763 = vpop.f32.mrb[0].mxu0
      %2764 = vmatprep.mubr.f32.mxu0 0.0
      %2765 = vmatmul.mubr.f32.gmra.mrb[0].mxu0 %v1449
      %v2766 = vpop.f32.mrb[0].mxu0
      %v2767 = vadd.f32 %v2622, %v2766
      %v2768 = vpop.f32.mrb[0].mxu0
      %2769 = vmatprep.mubr.f32.mxu0 0.0
      %2770 = vmatmul.mubr.f32.gmra.mrb[0].mxu0 %v1450
      %v2771 = vpop.f32.mrb[0].mxu0
      %v2772 = vadd.f32 %v2627, %v2771
      %v2773 = vpop.f32.mrb[0].mxu0
      %2774 = vmatprep.mubr.f32.mxu0 0.0
      %2775 = vmatmul.mubr.f32.gmra.mrb[0].mxu0 %v1451
      %v2776 = vpop.f32.mrb[0].mxu0
      %v2777 = vadd.f32 %v2632, %v2776
      %v2778 = vpop.f32.mrb[0].mxu0
      %2779 = vmatprep.mubr.f32.mxu0 0.0
      %2780 = vmatmul.mubr.f32.gmra.mrb[0].mxu0 %v1452
      %v2781 = vpop.f32.mrb[0].mxu0
      %v2782 = vadd.f32 %v2637, %v2781
      %v2783 = vpop.f32.mrb[0].mxu0
      %2784 = vmatprep.mubr.f32.mxu0 0.0
      %2785 = vmatmul.mubr.f32.gmra.mrb[0].mxu0 %v1453
      %v2786 = vpop.f32.mrb[0].mxu0
      %v2787 = vadd.f32 %v2642, %v2786
      %v2788 = vpop.f32.mrb[0].mxu0
      %2789 = vmatprep.mubr.f32.mxu0 0.0
      %2790 = vmatmul.mubr.f32.gmra.mrb[0].mxu0 %v1454
      %v2791 = vpop.f32.mrb[0].mxu0
      %v2792 = vadd.f32 %v2647, %v2791
      %v2793 = vpop.f32.mrb[0].mxu0
      %2794 = vmatprep.mubr.f32.mxu0 0.0
      %2795 = vmatmul.mubr.f32.gmra.mrb[0].mxu0 %v1455
      %v2796 = vpop.f32.mrb[0].mxu0
      %v2797 = vadd.f32 %v2652, %v2796
      %v2798 = vpop.f32.mrb[0].mxu0
      %2799 = vdwg.mxu0
      %s2800 = sadd.s32 120, %s1255
      %s2801 = scalar_lea.vmem [#allocation2], %s2800
      %v2802 = vld [vmem:[%s2801 + $0x3] sm:$0xff]
      %v2803 = vld [vmem:[%s2801 + $0xb] sm:$0xff]
      %v2804 = vld [vmem:[%s2801 + $0x2b] sm:$0xff]
      %v2805 = vld [vmem:[%s2801 + $0x33] sm:$0xff]
      %v2806 = vld [vmem:[%s2801 + $0x53] sm:$0xff]
      %v2807 = vld [vmem:[%s2801 + $0x5b] sm:$0xff]
      %v2808 = vld [vmem:[%s2801 + $0x7b] sm:$0xff]
      %v2809 = vld [vmem:[%s2801 + $0x83] sm:$0xff]
      %v2810 = vld [vmem:[%s2801 + $0xa3] sm:$0xff]
      %v2811 = vld [vmem:[%s2801 + $0xab] sm:$0xff]
      %v2812 = vld [vmem:[%s2801 + $0xcb] sm:$0xff]
      %v2813 = vld [vmem:[%s2801 + $0xd3] sm:$0xff]
      %v2814 = vld [vmem:[%s2801 + $0xf3] sm:$0xff]
      %v2815 = vld [vmem:[%s2801 + $0xfb] sm:$0xff]
      %v2816 = vld [vmem:[%s2801 + $0x11b] sm:$0xff]
      %v2817 = vld [vmem:[%s2801 + $0x123] sm:$0xff]
      %v2818 = vld [vmem:[%s2801 + $0x9] sm:$0xff]
      %v2819 = vld [vmem:[%s2801 + $0x11] sm:$0xff]
      %v2820 = vld [vmem:[%s2801 + $0x31] sm:$0xff]
      %v2821 = vld [vmem:[%s2801 + $0x39] sm:$0xff]
      %v2822 = vld [vmem:[%s2801 + $0x59] sm:$0xff]
      %v2823 = vld [vmem:[%s2801 + $0x61] sm:$0xff]
      %v2824 = vld [vmem:[%s2801 + $0x81] sm:$0xff]
      %v2825 = vld [vmem:[%s2801 + $0x89] sm:$0xff]
      %v2826 = vld [vmem:[%s2801 + $0xa9] sm:$0xff]
      %v2827 = vld [vmem:[%s2801 + $0xb1] sm:$0xff]
      %v2828 = vld [vmem:[%s2801 + $0xd1] sm:$0xff]
      %v2829 = vld [vmem:[%s2801 + $0xd9] sm:$0xff]
      %v2830 = vld [vmem:[%s2801 + $0xf9] sm:$0xff]
      %v2831 = vld [vmem:[%s2801 + $0x101] sm:$0xff]
      %v2832 = vld [vmem:[%s2801 + $0x121] sm:$0xff]
      %v2833 = vld [vmem:[%s2801 + $0x129] sm:$0xff]
      %v2834 = vld [vmem:[%s2801 + $0xf] sm:$0xff]
      %v2835 = vld [vmem:[%s2801 + $0x17] sm:$0xff]
      %v2836 = vld [vmem:[%s2801 + $0x37] sm:$0xff]
      %v2837 = vld [vmem:[%s2801 + $0x3f] sm:$0xff]
      %v2838 = vld [vmem:[%s2801 + $0x5f] sm:$0xff]
      %v2839 = vld [vmem:[%s2801 + $0x67] sm:$0xff]
      %v2840 = vld [vmem:[%s2801 + $0x87] sm:$0xff]
      %v2841 = vld [vmem:[%s2801 + $0x8f] sm:$0xff]
      %v2842 = vld [vmem:[%s2801 + $0xaf] sm:$0xff]
      %v2843 = vld [vmem:[%s2801 + $0xb7] sm:$0xff]
      %v2844 = vld [vmem:[%s2801 + $0xd7] sm:$0xff]
      %v2845 = vld [vmem:[%s2801 + $0xdf] sm:$0xff]
      %v2846 = vld [vmem:[%s2801 + $0xff] sm:$0xff]
      %v2847 = vld [vmem:[%s2801 + $0x107] sm:$0xff]
      %v2848 = vld [vmem:[%s2801 + $0x127] sm:$0xff]
      %v2849 = vld [vmem:[%s2801 + $0x12f] sm:$0xff]
      %v2850 = vld [vmem:[%s1257 + $0x3] sm:$0xff]
      %v2851 = vld [vmem:[%s1257 + $0xb] sm:$0xff]
      %v2852 = vld [vmem:[%s1257 + $0x2b] sm:$0xff]
      %v2853 = vld [vmem:[%s1257 + $0x33] sm:$0xff]
      %v2854 = vld [vmem:[%s1257 + $0x53] sm:$0xff]
      %v2855 = vld [vmem:[%s1257 + $0x5b] sm:$0xff]
      %v2856 = vld [vmem:[%s1257 + $0x7b] sm:$0xff]
      %v2857 = vld [vmem:[%s1257 + $0x83] sm:$0xff]
      %v2858 = vld [vmem:[%s1257 + $0xa3] sm:$0xff]
      %v2859 = vld [vmem:[%s1257 + $0xab] sm:$0xff]
      %v2860 = vld [vmem:[%s1257 + $0xcb] sm:$0xff]
      %v2861 = vld [vmem:[%s1257 + $0xd3] sm:$0xff]
      %v2862 = vld [vmem:[%s1257 + $0xf3] sm:$0xff]
      %v2863 = vld [vmem:[%s1257 + $0xfb] sm:$0xff]
      %v2864 = vld [vmem:[%s1257 + $0x11b] sm:$0xff]
      %v2865 = vld [vmem:[%s1257 + $0x123] sm:$0xff]
      %v2866 = vld [vmem:[%s1257 + $0xf] sm:$0xff]
      %v2867 = vld [vmem:[%s1257 + $0x17] sm:$0xff]
      %v2868 = vld [vmem:[%s1257 + $0x37] sm:$0xff]
      %v2869 = vld [vmem:[%s1257 + $0x3f] sm:$0xff]
      %v2870 = vld [vmem:[%s1257 + $0x5f] sm:$0xff]
      %v2871 = vld [vmem:[%s1257 + $0x67] sm:$0xff]
      %v2872 = vld [vmem:[%s1257 + $0x87] sm:$0xff]
      %v2873 = vld [vmem:[%s1257 + $0x8f] sm:$0xff]
      %v2874 = vld [vmem:[%s1257 + $0xaf] sm:$0xff]
      %v2875 = vld [vmem:[%s1257 + $0xb7] sm:$0xff]
      %v2876 = vld [vmem:[%s1257 + $0xd7] sm:$0xff]
      %v2877 = vld [vmem:[%s1257 + $0xdf] sm:$0xff]
      %v2878 = vld [vmem:[%s1257 + $0xff] sm:$0xff]
      %v2879 = vld [vmem:[%s1257 + $0x107] sm:$0xff]
      %v2880 = vld [vmem:[%s1257 + $0x127] sm:$0xff]
      %v2881 = vld [vmem:[%s1257 + $0x12f] sm:$0xff]
      %s2882 = sadd.s32 600, %s1255
      %s2883 = scalar_lea.vmem [#allocation2], %s2882
      %v2884 = vld [vmem:[%s2883 + $0x3] sm:$0xff]
      %v2885 = vld [vmem:[%s2883 + $0xb] sm:$0xff]
      %v2886 = vld [vmem:[%s2883 + $0x2b] sm:$0xff]
      %v2887 = vld [vmem:[%s2883 + $0x33] sm:$0xff]
      %v2888 = vld [vmem:[%s2883 + $0x53] sm:$0xff]
      %v2889 = vld [vmem:[%s2883 + $0x5b] sm:$0xff]
      %v2890 = vld [vmem:[%s2883 + $0x7b] sm:$0xff]
      %v2891 = vld [vmem:[%s2883 + $0x83] sm:$0xff]
      %v2892 = vld [vmem:[%s2883 + $0xa3] sm:$0xff]
      %v2893 = vld [vmem:[%s2883 + $0xab] sm:$0xff]
      %v2894 = vld [vmem:[%s2883 + $0xcb] sm:$0xff]
      %v2895 = vld [vmem:[%s2883 + $0xd3] sm:$0xff]
      %v2896 = vld [vmem:[%s2883 + $0xf3] sm:$0xff]
      %v2897 = vld [vmem:[%s2883 + $0xfb] sm:$0xff]
      %v2898 = vld [vmem:[%s2883 + $0x11b] sm:$0xff]
      %v2899 = vld [vmem:[%s2883 + $0x123] sm:$0xff]
      %v2900 = vld [vmem:[%s2883 + $0x9] sm:$0xff]
      %v2901 = vld [vmem:[%s2883 + $0x11] sm:$0xff]
      %v2902 = vld [vmem:[%s2883 + $0x31] sm:$0xff]
      %v2903 = vld [vmem:[%s2883 + $0x39] sm:$0xff]
      %v2904 = vld [vmem:[%s2883 + $0x59] sm:$0xff]
      %v2905 = vld [vmem:[%s2883 + $0x61] sm:$0xff]
      %v2906 = vld [vmem:[%s2883 + $0x81] sm:$0xff]
      %v2907 = vld [vmem:[%s2883 + $0x89] sm:$0xff]
      %v2908 = vld [vmem:[%s2883 + $0xa9] sm:$0xff]
      %v2909 = vld [vmem:[%s2883 + $0xb1] sm:$0xff]
      %v2910 = vld [vmem:[%s2883 + $0xd1] sm:$0xff]
      %v2911 = vld [vmem:[%s2883 + $0xd9] sm:$0xff]
      %v2912 = vld [vmem:[%s2883 + $0xf9] sm:$0xff]
      %v2913 = vld [vmem:[%s2883 + $0x101] sm:$0xff]
      %v2914 = vld [vmem:[%s2883 + $0x121] sm:$0xff]
      %v2915 = vld [vmem:[%s2883 + $0x129] sm:$0xff]
      %v2916 = vld [vmem:[%s2883 + $0xf] sm:$0xff]
      %v2917 = vld [vmem:[%s2883 + $0x17] sm:$0xff]
      %v2918 = vld [vmem:[%s2883 + $0x37] sm:$0xff]
      %v2919 = vld [vmem:[%s2883 + $0x3f] sm:$0xff]
      %v2920 = vld [vmem:[%s2883 + $0x5f] sm:$0xff]
      %v2921 = vld [vmem:[%s2883 + $0x67] sm:$0xff]
      %v2922 = vld [vmem:[%s2883 + $0x87] sm:$0xff]
      %v2923 = vld [vmem:[%s2883 + $0x8f] sm:$0xff]
      %v2924 = vld [vmem:[%s2883 + $0xaf] sm:$0xff]
      %v2925 = vld [vmem:[%s2883 + $0xb7] sm:$0xff]
      %v2926 = vld [vmem:[%s2883 + $0xd7] sm:$0xff]
      %v2927 = vld [vmem:[%s2883 + $0xdf] sm:$0xff]
      %v2928 = vld [vmem:[%s2883 + $0xff] sm:$0xff]
      %v2929 = vld [vmem:[%s2883 + $0x107] sm:$0xff]
      %v2930 = vld [vmem:[%s2883 + $0x127] sm:$0xff]
      %v2931 = vld [vmem:[%s2883 + $0x12f] sm:$0xff]
      %v2932 = vld [vmem:[%s4] sm:$0xff]
      %v2933 = vld [vmem:[%s4 + $0x8] sm:$0xff]
      %v2934 = vld [vmem:[%s4 + $0x10] sm:$0xff]
      %v2935 = vld [vmem:[%s4 + $0x18] sm:$0xff]
      %v2936 = vld [vmem:[%s4 + $0x20] sm:$0xff]
      %v2937 = vld [vmem:[%s4 + $0x28] sm:$0xff]
      %v2938 = vld [vmem:[%s4 + $0x30] sm:$0xff]
      %v2939 = vld [vmem:[%s4 + $0x38] sm:$0xff]
      %v2940 = vld [vmem:[%s4 + $0x40] sm:$0xff]
      %v2941 = vld [vmem:[%s4 + $0x48] sm:$0xff]
      %v2942 = vld [vmem:[%s4 + $0x50] sm:$0xff]
      %v2943 = vld [vmem:[%s4 + $0x58] sm:$0xff]
      %v2944 = vld [vmem:[%s4 + $0x60] sm:$0xff]
      %v2945 = vld [vmem:[%s4 + $0x68] sm:$0xff]
      %v2946 = vld [vmem:[%s4 + $0x70] sm:$0xff]
      %v2947 = vld [vmem:[%s4 + $0x78] sm:$0xff]
      %v2948 = vld [vmem:[%s4 + $0x80] sm:$0xff]
      %v2949 = vld [vmem:[%s4 + $0x88] sm:$0xff]
      %v2950 = vld [vmem:[%s4 + $0x90] sm:$0xff]
      %v2951 = vld [vmem:[%s4 + $0x98] sm:$0xff]
      %v2952 = vld [vmem:[%s4 + $0xa0] sm:$0xff]
      %v2953 = vld [vmem:[%s4 + $0xa8] sm:$0xff]
      %v2954 = vld [vmem:[%s4 + $0xb0] sm:$0xff]
      %v2955 = vld [vmem:[%s4 + $0xb8] sm:$0xff]
      %v2956 = vld [vmem:[%s4 + $0xc0] sm:$0xff]
      %v2957 = vld [vmem:[%s4 + $0xc8] sm:$0xff]
      %v2958 = vld [vmem:[%s4 + $0xd0] sm:$0xff]
      %v2959 = vld [vmem:[%s4 + $0xd8] sm:$0xff]
      %v2960 = vld [vmem:[%s4 + $0xe0] sm:$0xff]
      %v2961 = vld [vmem:[%s4 + $0xe8] sm:$0xff]
      %v2962 = vld [vmem:[%s4 + $0xf0] sm:$0xff]
      %v2963 = vld [vmem:[%s4 + $0xf8] sm:$0xff]
      %v2964 = vld [vmem:[%s4 + $0x100] sm:$0xff]
      %v2965 = vld [vmem:[%s4 + $0x108] sm:$0xff]
      %v2966 = vld [vmem:[%s4 + $0x110] sm:$0xff]
      %v2967 = vld [vmem:[%s4 + $0x118] sm:$0xff]
      %v2968 = vld [vmem:[%s4 + $0x120] sm:$0xff]
      %v2969 = vld [vmem:[%s4 + $0x128] sm:$0xff]
      %v2970 = vld [vmem:[%s4 + $0x130] sm:$0xff]
      %v2971 = vld [vmem:[%s4 + $0x138] sm:$0xff]
      %v2972 = vld [vmem:[%s4 + $0x140] sm:$0xff]
      %v2973 = vld [vmem:[%s4 + $0x148] sm:$0xff]
      %v2974 = vld [vmem:[%s4 + $0x150] sm:$0xff]
      %v2975 = vld [vmem:[%s4 + $0x158] sm:$0xff]
      %v2976 = vld [vmem:[%s4 + $0x160] sm:$0xff]
      %v2977 = vld [vmem:[%s4 + $0x168] sm:$0xff]
      %v2978 = vld [vmem:[%s4 + $0x170] sm:$0xff]
      %v2979 = vld [vmem:[%s4 + $0x178] sm:$0xff]
      %v2980 = vld [vmem:[%s4 + $0x180] sm:$0xff]
      %v2981 = vld [vmem:[%s4 + $0x188] sm:$0xff]
      %v2982 = vld [vmem:[%s4 + $0x190] sm:$0xff]
      %v2983 = vld [vmem:[%s4 + $0x198] sm:$0xff]
      %v2984 = vld [vmem:[%s4 + $0x1a0] sm:$0xff]
      %v2985 = vld [vmem:[%s4 + $0x1a8] sm:$0xff]
      %v2986 = vld [vmem:[%s4 + $0x1b0] sm:$0xff]
      %v2987 = vld [vmem:[%s4 + $0x1b8] sm:$0xff]
      %v2988 = vld [vmem:[%s4 + $0x1c0] sm:$0xff]
      %v2989 = vld [vmem:[%s4 + $0x1c8] sm:$0xff]
      %v2990 = vld [vmem:[%s4 + $0x1d0] sm:$0xff]
      %v2991 = vld [vmem:[%s4 + $0x1d8] sm:$0xff]
      %v2992 = vld [vmem:[%s4 + $0x1e0] sm:$0xff]
      %v2993 = vld [vmem:[%s4 + $0x1e8] sm:$0xff]
      %v2994 = vld [vmem:[%s4 + $0x1f0] sm:$0xff]
      %v2995 = vld [vmem:[%s4 + $0x1f8] sm:$0xff]
      %v2996 = vld [vmem:[%s4 + $0x200] sm:$0xff]
      %v2997 = vld [vmem:[%s4 + $0x208] sm:$0xff]
      %v2998 = vld [vmem:[%s4 + $0x210] sm:$0xff]
      %v2999 = vld [vmem:[%s4 + $0x218] sm:$0xff]
      %v3000 = vld [vmem:[%s4 + $0x220] sm:$0xff]
      %v3001 = vld [vmem:[%s4 + $0x228] sm:$0xff]
      %v3002 = vld [vmem:[%s4 + $0x230] sm:$0xff]
      %v3003 = vld [vmem:[%s4 + $0x238] sm:$0xff]
      %v3004 = vld [vmem:[%s4 + $0x240] sm:$0xff]
      %v3005 = vld [vmem:[%s4 + $0x248] sm:$0xff]
      %v3006 = vld [vmem:[%s4 + $0x250] sm:$0xff]
      %v3007 = vld [vmem:[%s4 + $0x258] sm:$0xff]
      %v3008 = vld [vmem:[%s4 + $0x260] sm:$0xff]
      %v3009 = vld [vmem:[%s4 + $0x268] sm:$0xff]
      %v3010 = vld [vmem:[%s4 + $0x270] sm:$0xff]
      %v3011 = vld [vmem:[%s4 + $0x278] sm:$0xff]
      %v3012 = vld [vmem:[%s4 + $0x280] sm:$0xff]
      %v3013 = vld [vmem:[%s4 + $0x288] sm:$0xff]
      %v3014 = vld [vmem:[%s4 + $0x290] sm:$0xff]
      %v3015 = vld [vmem:[%s4 + $0x298] sm:$0xff]
      %v3016 = vld [vmem:[%s4 + $0x2a0] sm:$0xff]
      %v3017 = vld [vmem:[%s4 + $0x2a8] sm:$0xff]
      %v3018 = vld [vmem:[%s4 + $0x2b0] sm:$0xff]
      %v3019 = vld [vmem:[%s4 + $0x2b8] sm:$0xff]
      %v3020 = vld [vmem:[%s4 + $0x2c0] sm:$0xff]
      %v3021 = vld [vmem:[%s4 + $0x2c8] sm:$0xff]
      %v3022 = vld [vmem:[%s4 + $0x2d0] sm:$0xff]
      %v3023 = vld [vmem:[%s4 + $0x2d8] sm:$0xff]
      %v3024 = vld [vmem:[%s4 + $0x2e0] sm:$0xff]
      %v3025 = vld [vmem:[%s4 + $0x2e8] sm:$0xff]
      %v3026 = vld [vmem:[%s4 + $0x2f0] sm:$0xff]
      %v3027 = vld [vmem:[%s4 + $0x2f8] sm:$0xff]
      %v3028 = vld [vmem:[%s4 + $0x300] sm:$0xff]
      %v3029 = vld [vmem:[%s4 + $0x308] sm:$0xff]
      %v3030 = vld [vmem:[%s4 + $0x310] sm:$0xff]
      %v3031 = vld [vmem:[%s4 + $0x318] sm:$0xff]
      %v3032 = vld [vmem:[%s4 + $0x320] sm:$0xff]
      %v3033 = vld [vmem:[%s4 + $0x328] sm:$0xff]
      %v3034 = vld [vmem:[%s4 + $0x330] sm:$0xff]
      %v3035 = vld [vmem:[%s4 + $0x338] sm:$0xff]
      %v3036 = vld [vmem:[%s4 + $0x340] sm:$0xff]
      %v3037 = vld [vmem:[%s4 + $0x348] sm:$0xff]
      %v3038 = vld [vmem:[%s4 + $0x350] sm:$0xff]
      %v3039 = vld [vmem:[%s4 + $0x358] sm:$0xff]
      %v3040 = vld [vmem:[%s4 + $0x360] sm:$0xff]
      %v3041 = vld [vmem:[%s4 + $0x368] sm:$0xff]
      %v3042 = vld [vmem:[%s4 + $0x370] sm:$0xff]
      %v3043 = vld [vmem:[%s4 + $0x378] sm:$0xff]
      %v3044 = vld [vmem:[%s4 + $0x380] sm:$0xff]
      %v3045 = vld [vmem:[%s4 + $0x388] sm:$0xff]
      %v3046 = vld [vmem:[%s4 + $0x390] sm:$0xff]
      %v3047 = vld [vmem:[%s4 + $0x398] sm:$0xff]
      %v3048 = vld [vmem:[%s4 + $0x3a0] sm:$0xff]
      %v3049 = vld [vmem:[%s4 + $0x3a8] sm:$0xff]
      %v3050 = vld [vmem:[%s4 + $0x3b0] sm:$0xff]
      %v3051 = vld [vmem:[%s4 + $0x3b8] sm:$0xff]
      %v3052 = vld [vmem:[%s4 + $0x3c0] sm:$0xff]
      %v3053 = vld [vmem:[%s4 + $0x3c8] sm:$0xff]
      %v3054 = vld [vmem:[%s4 + $0x3d0] sm:$0xff]
      %v3055 = vld [vmem:[%s4 + $0x3d8] sm:$0xff]
      %v3056 = vld [vmem:[%s4 + $0x3e0] sm:$0xff]
      %v3057 = vld [vmem:[%s4 + $0x3e8] sm:$0xff]
      %v3058 = vld [vmem:[%s4 + $0x3f0] sm:$0xff]
      %v3059 = vld [vmem:[%s4 + $0x3f8] sm:$0xff]
      %v3060 = vld [vmem:[%s4 + $0x400] sm:$0xff]
      %v3061 = vld [vmem:[%s4 + $0x408] sm:$0xff]
      %v3062 = vld [vmem:[%s4 + $0x410] sm:$0xff]
      %v3063 = vld [vmem:[%s4 + $0x418] sm:$0xff]
      %v3064 = vld [vmem:[%s4 + $0x420] sm:$0xff]
      %v3065 = vld [vmem:[%s4 + $0x428] sm:$0xff]
      %v3066 = vld [vmem:[%s4 + $0x430] sm:$0xff]
      %v3067 = vld [vmem:[%s4 + $0x438] sm:$0xff]
      %v3068 = vld [vmem:[%s4 + $0x440] sm:$0xff]
      %v3069 = vld [vmem:[%s4 + $0x448] sm:$0xff]
      %v3070 = vld [vmem:[%s4 + $0x450] sm:$0xff]
      %v3071 = vld [vmem:[%s4 + $0x458] sm:$0xff]
      %v3072 = vld [vmem:[%s4 + $0x460] sm:$0xff]
      %v3073 = vld [vmem:[%s4 + $0x468] sm:$0xff]
      %v3074 = vld [vmem:[%s4 + $0x470] sm:$0xff]
      %v3075 = vld [vmem:[%s4 + $0x478] sm:$0xff]
      %v3076 = vld [vmem:[%s8 + $0x2] sm:$0x1]
      %v3077 = vlaneseq
      %v3078 = vshrl.u32 %v3077, 7
      %v3079 = vsub.s32 0, %v3078
      %v3080 = vrot.slane %v3076, %v3079
      %3081 = vmatprep.subr.mxu0 0.0
      %3082 = vmatpush1.msra.mxu0 %v2932
      %3083 = vmatprep.subr.mxu0 0.0
      %3084 = vmatpush1.msra.mxu0 %v2933
      %3085 = vmatprep.subr.mxu0 0.0
      %3086 = vmatpush1.msra.mxu0 %v2934
      %3087 = vmatprep.subr.mxu0 0.0
      %3088 = vmatpush1.msra.mxu0 %v2935
      %3089 = vmatprep.subr.mxu0 0.0
      %3090 = vmatpush1.msra.mxu0 %v2936
      %3091 = vmatprep.subr.mxu0 0.0
      %3092 = vmatpush1.msra.mxu0 %v2937
      %3093 = vmatprep.subr.mxu0 0.0
      %3094 = vmatpush1.msra.mxu0 %v2938
      %3095 = vmatprep.subr.mxu0 0.0
      %3096 = vmatpush1.msra.mxu0 %v2939
      %3097 = vmatprep.subr.mxu0 0.0
      %3098 = vmatpush1.msra.mxu0 %v2940
      %3099 = vmatprep.subr.mxu0 0.0
      %3100 = vmatpush1.msra.mxu0 %v2941
      %3101 = vmatprep.subr.mxu0 0.0
      %3102 = vmatpush1.msra.mxu0 %v2942
      %3103 = vmatprep.subr.mxu0 0.0
      %3104 = vmatpush1.msra.mxu0 %v2943
      %3105 = vmatprep.subr.mxu0 0.0
      %3106 = vmatpush1.msra.mxu0 %v2944
      %3107 = vmatprep.subr.mxu0 0.0
      %3108 = vmatpush1.msra.mxu0 %v2945
      %3109 = vmatprep.subr.mxu0 0.0
      %3110 = vmatpush1.msra.mxu0 %v2946
      %3111 = vmatprep.subr.mxu0 0.0
      %3112 = vmatpush1.msra.mxu0 %v2947
      %3113 = vmatprep.subr.mxu0 0.0
      %3114 = vmatpush1.msra.mxu0 %v2948
      %3115 = vmatprep.subr.mxu0 0.0
      %3116 = vmatpush1.msra.mxu0 %v2949
      %3117 = vmatprep.subr.mxu0 0.0
      %3118 = vmatpush1.msra.mxu0 %v2950
      %3119 = vmatprep.subr.mxu0 0.0
      %3120 = vmatpush1.msra.mxu0 %v2951
      %3121 = vmatprep.subr.mxu0 0.0
      %3122 = vmatpush1.msra.mxu0 %v2952
      %3123 = vmatprep.subr.mxu0 0.0
      %3124 = vmatpush1.msra.mxu0 %v2953
      %3125 = vmatprep.subr.mxu0 0.0
      %3126 = vmatpush1.msra.mxu0 %v2954
      %3127 = vmatprep.subr.mxu0 0.0
      %3128 = vmatpush1.msra.mxu0 %v2955
      %3129 = vmatprep.subr.mxu0 0.0
      %3130 = vmatpush1.msra.mxu0 %v2956
      %3131 = vmatprep.subr.mxu0 0.0
      %3132 = vmatpush1.msra.mxu0 %v2957
      %3133 = vmatprep.subr.mxu0 0.0
      %3134 = vmatpush1.msra.mxu0 %v2958
      %3135 = vmatprep.subr.mxu0 0.0
      %3136 = vmatpush1.msra.mxu0 %v2959
      %3137 = vmatprep.subr.mxu0 0.0
      %3138 = vmatpush1.msra.mxu0 %v2960
      %3139 = vmatprep.subr.mxu0 0.0
      %3140 = vmatpush1.msra.mxu0 %v2961
      %3141 = vmatprep.subr.mxu0 0.0
      %3142 = vmatpush1.msra.mxu0 %v2962
      %3143 = vmatprep.subr.mxu0 0.0
      %3144 = vmatpush1.msra.mxu0 %v2963
      %3145 = vmatprep.mubr.f32.mxu0 %v2818
      %3146 = vmatmul.mubr.f32.gmra.mrb[0].mxu0 %v2802
      %v3147 = vpop.f32.mrb[0].mxu0
      %v3148 = vadd.f32 %v3080, %v3147
      %v3149 = vpop.f32.mrb[0].mxu0
      %3150 = vmatprep.mubr.f32.mxu0 %v2819
      %3151 = vmatmul.mubr.f32.gmra.mrb[0].mxu0 %v2803
      %v3152 = vpop.f32.mrb[0].mxu0
      %v3153 = vadd.f32 %v3080, %v3152
      %v3154 = vpop.f32.mrb[0].mxu0
      %3155 = vmatprep.mubr.f32.mxu0 %v2820
      %3156 = vmatmul.mubr.f32.gmra.mrb[0].mxu0 %v2804
      %v3157 = vpop.f32.mrb[0].mxu0
      %v3158 = vadd.f32 %v3080, %v3157
      %v3159 = vpop.f32.mrb[0].mxu0
      %3160 = vmatprep.mubr.f32.mxu0 %v2821
      %3161 = vmatmul.mubr.f32.gmra.mrb[0].mxu0 %v2805
      %v3162 = vpop.f32.mrb[0].mxu0
      %v3163 = vadd.f32 %v3080, %v3162
      %v3164 = vpop.f32.mrb[0].mxu0
      %3165 = vmatprep.mubr.f32.mxu0 %v2822
      %3166 = vmatmul.mubr.f32.gmra.mrb[0].mxu0 %v2806
      %v3167 = vpop.f32.mrb[0].mxu0
      %v3168 = vadd.f32 %v3080, %v3167
      %v3169 = vpop.f32.mrb[0].mxu0
      %3170 = vmatprep.mubr.f32.mxu0 %v2823
      %3171 = vmatmul.mubr.f32.gmra.mrb[0].mxu0 %v2807
      %v3172 = vpop.f32.mrb[0].mxu0
      %v3173 = vadd.f32 %v3080, %v3172
      %v3174 = vpop.f32.mrb[0].mxu0
      %3175 = vmatprep.mubr.f32.mxu0 %v2824
      %3176 = vmatmul.mubr.f32.gmra.mrb[0].mxu0 %v2808
      %v3177 = vpop.f32.mrb[0].mxu0
      %v3178 = vadd.f32 %v3080, %v3177
      %v3179 = vpop.f32.mrb[0].mxu0
      %3180 = vmatprep.mubr.f32.mxu0 %v2825
      %3181 = vmatmul.mubr.f32.gmra.mrb[0].mxu0 %v2809
      %v3182 = vpop.f32.mrb[0].mxu0
      %v3183 = vadd.f32 %v3080, %v3182
      %v3184 = vpop.f32.mrb[0].mxu0
      %3185 = vmatprep.mubr.f32.mxu0 %v2826
      %3186 = vmatmul.mubr.f32.gmra.mrb[0].mxu0 %v2810
      %v3187 = vpop.f32.mrb[0].mxu0
      %v3188 = vadd.f32 %v3080, %v3187
      %v3189 = vpop.f32.mrb[0].mxu0
      %3190 = vmatprep.mubr.f32.mxu0 %v2827
      %3191 = vmatmul.mubr.f32.gmra.mrb[0].mxu0 %v2811
      %v3192 = vpop.f32.mrb[0].mxu0
      %v3193 = vadd.f32 %v3080, %v3192
      %v3194 = vpop.f32.mrb[0].mxu0
      %3195 = vmatprep.mubr.f32.mxu0 %v2828
      %3196 = vmatmul.mubr.f32.gmra.mrb[0].mxu0 %v2812
      %v3197 = vpop.f32.mrb[0].mxu0
      %v3198 = vadd.f32 %v3080, %v3197
      %v3199 = vpop.f32.mrb[0].mxu0
      %3200 = vmatprep.mubr.f32.mxu0 %v2829
      %3201 = vmatmul.mubr.f32.gmra.mrb[0].mxu0 %v2813
      %v3202 = vpop.f32.mrb[0].mxu0
      %v3203 = vadd.f32 %v3080, %v3202
      %v3204 = vpop.f32.mrb[0].mxu0
      %3205 = vmatprep.mubr.f32.mxu0 %v2830
      %3206 = vmatmul.mubr.f32.gmra.mrb[0].mxu0 %v2814
      %v3207 = vpop.f32.mrb[0].mxu0
      %v3208 = vadd.f32 %v3080, %v3207
      %v3209 = vpop.f32.mrb[0].mxu0
      %3210 = vmatprep.mubr.f32.mxu0 %v2831
      %3211 = vmatmul.mubr.f32.gmra.mrb[0].mxu0 %v2815
      %v3212 = vpop.f32.mrb[0].mxu0
      %v3213 = vadd.f32 %v3080, %v3212
      %v3214 = vpop.f32.mrb[0].mxu0
      %3215 = vmatprep.mubr.f32.mxu0 %v2832
      %3216 = vmatmul.mubr.f32.gmra.mrb[0].mxu0 %v2816
      %v3217 = vpop.f32.mrb[0].mxu0
      %v3218 = vadd.f32 %v3080, %v3217
      %v3219 = vpop.f32.mrb[0].mxu0
      %3220 = vmatprep.mubr.f32.mxu0 %v2833
      %3221 = vmatmul.mubr.f32.gmra.mrb[0].mxu0 %v2817
      %v3222 = vpop.f32.mrb[0].mxu0
      %v3223 = vadd.f32 %v3080, %v3222
      %v3224 = vpop.f32.mrb[0].mxu0
      %3225 = vdwg.mxu0
      %3226 = vmatprep.subr.mxu0 0.0
      %3227 = vmatpush1.msra.mxu0 %v2964
      %3228 = vmatprep.subr.mxu0 0.0
      %3229 = vmatpush1.msra.mxu0 %v2965
      %3230 = vmatprep.subr.mxu0 0.0
      %3231 = vmatpush1.msra.mxu0 %v2966
      %3232 = vmatprep.subr.mxu0 0.0
      %3233 = vmatpush1.msra.mxu0 %v2967
      %3234 = vmatprep.subr.mxu0 0.0
      %3235 = vmatpush1.msra.mxu0 %v2968
      %3236 = vmatprep.subr.mxu0 0.0
      %3237 = vmatpush1.msra.mxu0 %v2969
      %3238 = vmatprep.subr.mxu0 0.0
      %3239 = vmatpush1.msra.mxu0 %v2970
      %3240 = vmatprep.subr.mxu0 0.0
      %3241 = vmatpush1.msra.mxu0 %v2971
      %3242 = vmatprep.subr.mxu0 0.0
      %3243 = vmatpush1.msra.mxu0 %v2972
      %3244 = vmatprep.subr.mxu0 0.0
      %3245 = vmatpush1.msra.mxu0 %v2973
      %3246 = vmatprep.subr.mxu0 0.0
      %3247 = vmatpush1.msra.mxu0 %v2974
      %3248 = vmatprep.subr.mxu0 0.0
      %3249 = vmatpush1.msra.mxu0 %v2975
      %3250 = vmatprep.subr.mxu0 0.0
      %3251 = vmatpush1.msra.mxu0 %v2976
      %3252 = vmatprep.subr.mxu0 0.0
      %3253 = vmatpush1.msra.mxu0 %v2977
      %3254 = vmatprep.subr.mxu0 0.0
      %3255 = vmatpush1.msra.mxu0 %v2978
      %3256 = vmatprep.subr.mxu0 0.0
      %3257 = vmatpush1.msra.mxu0 %v2979
      %3258 = vmatprep.subr.mxu0 0.0
      %3259 = vmatpush1.msra.mxu0 %v2980
      %3260 = vmatprep.subr.mxu0 0.0
      %3261 = vmatpush1.msra.mxu0 %v2981
      %3262 = vmatprep.subr.mxu0 0.0
      %3263 = vmatpush1.msra.mxu0 %v2982
      %3264 = vmatprep.subr.mxu0 0.0
      %3265 = vmatpush1.msra.mxu0 %v2983
      %3266 = vmatprep.subr.mxu0 0.0
      %3267 = vmatpush1.msra.mxu0 %v2984
      %3268 = vmatprep.subr.mxu0 0.0
      %3269 = vmatpush1.msra.mxu0 %v2985
      %3270 = vmatprep.subr.mxu0 0.0
      %3271 = vmatpush1.msra.mxu0 %v2986
      %3272 = vmatprep.subr.mxu0 0.0
      %3273 = vmatpush1.msra.mxu0 %v2987
      %3274 = vmatprep.subr.mxu0 0.0
      %3275 = vmatpush1.msra.mxu0 %v2988
      %3276 = vmatprep.subr.mxu0 0.0
      %3277 = vmatpush1.msra.mxu0 %v2989
      %3278 = vmatprep.subr.mxu0 0.0
      %3279 = vmatpush1.msra.mxu0 %v2990
      %3280 = vmatprep.subr.mxu0 0.0
      %3281 = vmatpush1.msra.mxu0 %v2991
      %3282 = vmatprep.subr.mxu0 0.0
      %3283 = vmatpush1.msra.mxu0 %v2992
      %3284 = vmatprep.subr.mxu0 0.0
      %3285 = vmatpush1.msra.mxu0 %v2993
      %3286 = vmatprep.subr.mxu0 0.0
      %3287 = vmatpush1.msra.mxu0 %v2994
      %3288 = vmatprep.subr.mxu0 0.0
      %3289 = vmatpush1.msra.mxu0 %v2995
      %3290 = vmatprep.mubr.f32.mxu0 %v2850
      %3291 = vmatmul.mubr.f32.gmra.mrb[0].mxu0 %v2834
      %v3292 = vpop.f32.mrb[0].mxu0
      %v3293 = vadd.f32 %v3148, %v3292
      %v3294 = vpop.f32.mrb[0].mxu0
      %3295 = vmatprep.mubr.f32.mxu0 %v2851
      %3296 = vmatmul.mubr.f32.gmra.mrb[0].mxu0 %v2835
      %v3297 = vpop.f32.mrb[0].mxu0
      %v3298 = vadd.f32 %v3153, %v3297
      %v3299 = vpop.f32.mrb[0].mxu0
      %3300 = vmatprep.mubr.f32.mxu0 %v2852
      %3301 = vmatmul.mubr.f32.gmra.mrb[0].mxu0 %v2836
      %v3302 = vpop.f32.mrb[0].mxu0
      %v3303 = vadd.f32 %v3158, %v3302
      %v3304 = vpop.f32.mrb[0].mxu0
      %3305 = vmatprep.mubr.f32.mxu0 %v2853
      %3306 = vmatmul.mubr.f32.gmra.mrb[0].mxu0 %v2837
      %v3307 = vpop.f32.mrb[0].mxu0
      %v3308 = vadd.f32 %v3163, %v3307
      %v3309 = vpop.f32.mrb[0].mxu0
      %3310 = vmatprep.mubr.f32.mxu0 %v2854
      %3311 = vmatmul.mubr.f32.gmra.mrb[0].mxu0 %v2838
      %v3312 = vpop.f32.mrb[0].mxu0
      %v3313 = vadd.f32 %v3168, %v3312
      %v3314 = vpop.f32.mrb[0].mxu0
      %3315 = vmatprep.mubr.f32.mxu0 %v2855
      %3316 = vmatmul.mubr.f32.gmra.mrb[0].mxu0 %v2839
      %v3317 = vpop.f32.mrb[0].mxu0
      %v3318 = vadd.f32 %v3173, %v3317
      %v3319 = vpop.f32.mrb[0].mxu0
      %3320 = vmatprep.mubr.f32.mxu0 %v2856
      %3321 = vmatmul.mubr.f32.gmra.mrb[0].mxu0 %v2840
      %v3322 = vpop.f32.mrb[0].mxu0
      %v3323 = vadd.f32 %v3178, %v3322
      %v3324 = vpop.f32.mrb[0].mxu0
      %3325 = vmatprep.mubr.f32.mxu0 %v2857
      %3326 = vmatmul.mubr.f32.gmra.mrb[0].mxu0 %v2841
      %v3327 = vpop.f32.mrb[0].mxu0
      %v3328 = vadd.f32 %v3183, %v3327
      %v3329 = vpop.f32.mrb[0].mxu0
      %3330 = vmatprep.mubr.f32.mxu0 %v2858
      %3331 = vmatmul.mubr.f32.gmra.mrb[0].mxu0 %v2842
      %v3332 = vpop.f32.mrb[0].mxu0
      %v3333 = vadd.f32 %v3188, %v3332
      %v3334 = vpop.f32.mrb[0].mxu0
      %3335 = vmatprep.mubr.f32.mxu0 %v2859
      %3336 = vmatmul.mubr.f32.gmra.mrb[0].mxu0 %v2843
      %v3337 = vpop.f32.mrb[0].mxu0
      %v3338 = vadd.f32 %v3193, %v3337
      %v3339 = vpop.f32.mrb[0].mxu0
      %3340 = vmatprep.mubr.f32.mxu0 %v2860
      %3341 = vmatmul.mubr.f32.gmra.mrb[0].mxu0 %v2844
      %v3342 = vpop.f32.mrb[0].mxu0
      %v3343 = vadd.f32 %v3198, %v3342
      %v3344 = vpop.f32.mrb[0].mxu0
      %3345 = vmatprep.mubr.f32.mxu0 %v2861
      %3346 = vmatmul.mubr.f32.gmra.mrb[0].mxu0 %v2845
      %v3347 = vpop.f32.mrb[0].mxu0
      %v3348 = vadd.f32 %v3203, %v3347
      %v3349 = vpop.f32.mrb[0].mxu0
      %3350 = vmatprep.mubr.f32.mxu0 %v2862
      %3351 = vmatmul.mubr.f32.gmra.mrb[0].mxu0 %v2846
      %v3352 = vpop.f32.mrb[0].mxu0
      %v3353 = vadd.f32 %v3208, %v3352
      %v3354 = vpop.f32.mrb[0].mxu0
      %3355 = vmatprep.mubr.f32.mxu0 %v2863
      %3356 = vmatmul.mubr.f32.gmra.mrb[0].mxu0 %v2847
      %v3357 = vpop.f32.mrb[0].mxu0
      %v3358 = vadd.f32 %v3213, %v3357
      %v3359 = vpop.f32.mrb[0].mxu0
      %3360 = vmatprep.mubr.f32.mxu0 %v2864
      %3361 = vmatmul.mubr.f32.gmra.mrb[0].mxu0 %v2848
      %v3362 = vpop.f32.mrb[0].mxu0
      %v3363 = vadd.f32 %v3218, %v3362
      %v3364 = vpop.f32.mrb[0].mxu0
      %3365 = vmatprep.mubr.f32.mxu0 %v2865
      %3366 = vmatmul.mubr.f32.gmra.mrb[0].mxu0 %v2849
      %v3367 = vpop.f32.mrb[0].mxu0
      %v3368 = vadd.f32 %v3223, %v3367
      %v3369 = vpop.f32.mrb[0].mxu0
      %3370 = vdwg.mxu0
      %3371 = vmatprep.subr.mxu0 0.0
      %3372 = vmatpush1.msra.mxu0 %v2996
      %3373 = vmatprep.subr.mxu0 0.0
      %3374 = vmatpush1.msra.mxu0 %v2997
      %3375 = vmatprep.subr.mxu0 0.0
      %3376 = vmatpush1.msra.mxu0 %v2998
      %3377 = vmatprep.subr.mxu0 0.0
      %3378 = vmatpush1.msra.mxu0 %v2999
      %3379 = vmatprep.subr.mxu0 0.0
      %3380 = vmatpush1.msra.mxu0 %v3000
      %3381 = vmatprep.subr.mxu0 0.0
      %3382 = vmatpush1.msra.mxu0 %v3001
      %3383 = vmatprep.subr.mxu0 0.0
      %3384 = vmatpush1.msra.mxu0 %v3002
      %3385 = vmatprep.subr.mxu0 0.0
      %3386 = vmatpush1.msra.mxu0 %v3003
      %3387 = vmatprep.subr.mxu0 0.0
      %3388 = vmatpush1.msra.mxu0 %v3004
      %3389 = vmatprep.subr.mxu0 0.0
      %3390 = vmatpush1.msra.mxu0 %v3005
      %3391 = vmatprep.subr.mxu0 0.0
      %3392 = vmatpush1.msra.mxu0 %v3006
      %3393 = vmatprep.subr.mxu0 0.0
      %3394 = vmatpush1.msra.mxu0 %v3007
      %3395 = vmatprep.subr.mxu0 0.0
      %3396 = vmatpush1.msra.mxu0 %v3008
      %3397 = vmatprep.subr.mxu0 0.0
      %3398 = vmatpush1.msra.mxu0 %v3009
      %3399 = vmatprep.subr.mxu0 0.0
      %3400 = vmatpush1.msra.mxu0 %v3010
      %3401 = vmatprep.subr.mxu0 0.0
      %3402 = vmatpush1.msra.mxu0 %v3011
      %3403 = vmatprep.subr.mxu0 0.0
      %3404 = vmatpush1.msra.mxu0 %v3012
      %3405 = vmatprep.subr.mxu0 0.0
      %3406 = vmatpush1.msra.mxu0 %v3013
      %3407 = vmatprep.subr.mxu0 0.0
      %3408 = vmatpush1.msra.mxu0 %v3014
      %3409 = vmatprep.subr.mxu0 0.0
      %3410 = vmatpush1.msra.mxu0 %v3015
      %3411 = vmatprep.subr.mxu0 0.0
      %3412 = vmatpush1.msra.mxu0 %v3016
      %3413 = vmatprep.subr.mxu0 0.0
      %3414 = vmatpush1.msra.mxu0 %v3017
      %3415 = vmatprep.subr.mxu0 0.0
      %3416 = vmatpush1.msra.mxu0 %v3018
      %3417 = vmatprep.subr.mxu0 0.0
      %3418 = vmatpush1.msra.mxu0 %v3019
      %3419 = vmatprep.subr.mxu0 0.0
      %3420 = vmatpush1.msra.mxu0 %v3020
      %3421 = vmatprep.subr.mxu0 0.0
      %3422 = vmatpush1.msra.mxu0 %v3021
      %3423 = vmatprep.subr.mxu0 0.0
      %3424 = vmatpush1.msra.mxu0 %v3022
      %3425 = vmatprep.subr.mxu0 0.0
      %3426 = vmatpush1.msra.mxu0 %v3023
      %3427 = vmatprep.subr.mxu0 0.0
      %3428 = vmatpush1.msra.mxu0 %v3024
      %3429 = vmatprep.subr.mxu0 0.0
      %3430 = vmatpush1.msra.mxu0 %v3025
      %3431 = vmatprep.subr.mxu0 0.0
      %3432 = vmatpush1.msra.mxu0 %v3026
      %3433 = vmatprep.subr.mxu0 0.0
      %3434 = vmatpush1.msra.mxu0 %v3027
      %3435 = vmatprep.mubr.f32.mxu0 %v2866
      %3436 = vmatmul.mubr.f32.gmra.mrb[0].mxu0 %v1258
      %v3437 = vpop.f32.mrb[0].mxu0
      %v3438 = vadd.f32 %v3293, %v3437
      %v3439 = vpop.f32.mrb[0].mxu0
      %3440 = vmatprep.mubr.f32.mxu0 %v2867
      %3441 = vmatmul.mubr.f32.gmra.mrb[0].mxu0 %v1259
      %v3442 = vpop.f32.mrb[0].mxu0
      %v3443 = vadd.f32 %v3298, %v3442
      %v3444 = vpop.f32.mrb[0].mxu0
      %3445 = vmatprep.mubr.f32.mxu0 %v2868
      %3446 = vmatmul.mubr.f32.gmra.mrb[0].mxu0 %v1260
      %v3447 = vpop.f32.mrb[0].mxu0
      %v3448 = vadd.f32 %v3303, %v3447
      %v3449 = vpop.f32.mrb[0].mxu0
      %3450 = vmatprep.mubr.f32.mxu0 %v2869
      %3451 = vmatmul.mubr.f32.gmra.mrb[0].mxu0 %v1261
      %v3452 = vpop.f32.mrb[0].mxu0
      %v3453 = vadd.f32 %v3308, %v3452
      %v3454 = vpop.f32.mrb[0].mxu0
      %3455 = vmatprep.mubr.f32.mxu0 %v2870
      %3456 = vmatmul.mubr.f32.gmra.mrb[0].mxu0 %v1262
      %v3457 = vpop.f32.mrb[0].mxu0
      %v3458 = vadd.f32 %v3313, %v3457
      %v3459 = vpop.f32.mrb[0].mxu0
      %3460 = vmatprep.mubr.f32.mxu0 %v2871
      %3461 = vmatmul.mubr.f32.gmra.mrb[0].mxu0 %v1263
      %v3462 = vpop.f32.mrb[0].mxu0
      %v3463 = vadd.f32 %v3318, %v3462
      %v3464 = vpop.f32.mrb[0].mxu0
      %3465 = vmatprep.mubr.f32.mxu0 %v2872
      %3466 = vmatmul.mubr.f32.gmra.mrb[0].mxu0 %v1264
      %v3467 = vpop.f32.mrb[0].mxu0
      %v3468 = vadd.f32 %v3323, %v3467
      %v3469 = vpop.f32.mrb[0].mxu0
      %3470 = vmatprep.mubr.f32.mxu0 %v2873
      %3471 = vmatmul.mubr.f32.gmra.mrb[0].mxu0 %v1265
      %v3472 = vpop.f32.mrb[0].mxu0
      %v3473 = vadd.f32 %v3328, %v3472
      %v3474 = vpop.f32.mrb[0].mxu0
      %3475 = vmatprep.mubr.f32.mxu0 %v2874
      %3476 = vmatmul.mubr.f32.gmra.mrb[0].mxu0 %v1266
      %v3477 = vpop.f32.mrb[0].mxu0
      %v3478 = vadd.f32 %v3333, %v3477
      %v3479 = vpop.f32.mrb[0].mxu0
      %3480 = vmatprep.mubr.f32.mxu0 %v2875
      %3481 = vmatmul.mubr.f32.gmra.mrb[0].mxu0 %v1267
      %v3482 = vpop.f32.mrb[0].mxu0
      %v3483 = vadd.f32 %v3338, %v3482
      %v3484 = vpop.f32.mrb[0].mxu0
      %3485 = vmatprep.mubr.f32.mxu0 %v2876
      %3486 = vmatmul.mubr.f32.gmra.mrb[0].mxu0 %v1268
      %v3487 = vpop.f32.mrb[0].mxu0
      %v3488 = vadd.f32 %v3343, %v3487
      %v3489 = vpop.f32.mrb[0].mxu0
      %3490 = vmatprep.mubr.f32.mxu0 %v2877
      %3491 = vmatmul.mubr.f32.gmra.mrb[0].mxu0 %v1269
      %v3492 = vpop.f32.mrb[0].mxu0
      %v3493 = vadd.f32 %v3348, %v3492
      %v3494 = vpop.f32.mrb[0].mxu0
      %3495 = vmatprep.mubr.f32.mxu0 %v2878
      %3496 = vmatmul.mubr.f32.gmra.mrb[0].mxu0 %v1270
      %v3497 = vpop.f32.mrb[0].mxu0
      %v3498 = vadd.f32 %v3353, %v3497
      %v3499 = vpop.f32.mrb[0].mxu0
      %3500 = vmatprep.mubr.f32.mxu0 %v2879
      %3501 = vmatmul.mubr.f32.gmra.mrb[0].mxu0 %v1271
      %v3502 = vpop.f32.mrb[0].mxu0
      %v3503 = vadd.f32 %v3358, %v3502
      %v3504 = vpop.f32.mrb[0].mxu0
      %3505 = vmatprep.mubr.f32.mxu0 %v2880
      %3506 = vmatmul.mubr.f32.gmra.mrb[0].mxu0 %v1272
      %v3507 = vpop.f32.mrb[0].mxu0
      %v3508 = vadd.f32 %v3363, %v3507
      %v3509 = vpop.f32.mrb[0].mxu0
      %3510 = vmatprep.mubr.f32.mxu0 %v2881
      %3511 = vmatmul.mubr.f32.gmra.mrb[0].mxu0 %v1273
      %v3512 = vpop.f32.mrb[0].mxu0
      %v3513 = vadd.f32 %v3368, %v3512
      %v3514 = vpop.f32.mrb[0].mxu0
      %3515 = vdwg.mxu0
      %3516 = vmatprep.subr.mxu0 0.0
      %3517 = vmatpush1.msra.mxu0 %v3028
      %3518 = vmatprep.subr.mxu0 0.0
      %3519 = vmatpush1.msra.mxu0 %v3029
      %3520 = vmatprep.subr.mxu0 0.0
      %3521 = vmatpush1.msra.mxu0 %v3030
      %3522 = vmatprep.subr.mxu0 0.0
      %3523 = vmatpush1.msra.mxu0 %v3031
      %3524 = vmatprep.subr.mxu0 0.0
      %3525 = vmatpush1.msra.mxu0 %v3032
      %3526 = vmatprep.subr.mxu0 0.0
      %3527 = vmatpush1.msra.mxu0 %v3033
      %3528 = vmatprep.subr.mxu0 0.0
      %3529 = vmatpush1.msra.mxu0 %v3034
      %3530 = vmatprep.subr.mxu0 0.0
      %3531 = vmatpush1.msra.mxu0 %v3035
      %3532 = vmatprep.subr.mxu0 0.0
      %3533 = vmatpush1.msra.mxu0 %v3036
      %3534 = vmatprep.subr.mxu0 0.0
      %3535 = vmatpush1.msra.mxu0 %v3037
      %3536 = vmatprep.subr.mxu0 0.0
      %3537 = vmatpush1.msra.mxu0 %v3038
      %3538 = vmatprep.subr.mxu0 0.0
      %3539 = vmatpush1.msra.mxu0 %v3039
      %3540 = vmatprep.subr.mxu0 0.0
      %3541 = vmatpush1.msra.mxu0 %v3040
      %3542 = vmatprep.subr.mxu0 0.0
      %3543 = vmatpush1.msra.mxu0 %v3041
      %3544 = vmatprep.subr.mxu0 0.0
      %3545 = vmatpush1.msra.mxu0 %v3042
      %3546 = vmatprep.subr.mxu0 0.0
      %3547 = vmatpush1.msra.mxu0 %v3043
      %3548 = vmatprep.subr.mxu0 0.0
      %3549 = vmatpush1.msra.mxu0 %v3044
      %3550 = vmatprep.subr.mxu0 0.0
      %3551 = vmatpush1.msra.mxu0 %v3045
      %3552 = vmatprep.subr.mxu0 0.0
      %3553 = vmatpush1.msra.mxu0 %v3046
      %3554 = vmatprep.subr.mxu0 0.0
      %3555 = vmatpush1.msra.mxu0 %v3047
      %3556 = vmatprep.subr.mxu0 0.0
      %3557 = vmatpush1.msra.mxu0 %v3048
      %3558 = vmatprep.subr.mxu0 0.0
      %3559 = vmatpush1.msra.mxu0 %v3049
      %3560 = vmatprep.subr.mxu0 0.0
      %3561 = vmatpush1.msra.mxu0 %v3050
      %3562 = vmatprep.subr.mxu0 0.0
      %3563 = vmatpush1.msra.mxu0 %v3051
      %3564 = vmatprep.subr.mxu0 0.0
      %3565 = vmatpush1.msra.mxu0 %v3052
      %3566 = vmatprep.subr.mxu0 0.0
      %3567 = vmatpush1.msra.mxu0 %v3053
      %3568 = vmatprep.subr.mxu0 0.0
      %3569 = vmatpush1.msra.mxu0 %v3054
      %3570 = vmatprep.subr.mxu0 0.0
      %3571 = vmatpush1.msra.mxu0 %v3055
      %3572 = vmatprep.subr.mxu0 0.0
      %3573 = vmatpush1.msra.mxu0 %v3056
      %3574 = vmatprep.subr.mxu0 0.0
      %3575 = vmatpush1.msra.mxu0 %v3057
      %3576 = vmatprep.subr.mxu0 0.0
      %3577 = vmatpush1.msra.mxu0 %v3058
      %3578 = vmatprep.subr.mxu0 0.0
      %3579 = vmatpush1.msra.mxu0 %v3059
      %3580 = vmatprep.mubr.f32.mxu0 %v2900
      %3581 = vmatmul.mubr.f32.gmra.mrb[0].mxu0 %v2884
      %v3582 = vpop.f32.mrb[0].mxu0
      %v3583 = vadd.f32 %v3438, %v3582
      %v3584 = vpop.f32.mrb[0].mxu0
      %3585 = vmatprep.mubr.f32.mxu0 %v2901
      %3586 = vmatmul.mubr.f32.gmra.mrb[0].mxu0 %v2885
      %v3587 = vpop.f32.mrb[0].mxu0
      %v3588 = vadd.f32 %v3443, %v3587
      %v3589 = vpop.f32.mrb[0].mxu0
      %3590 = vmatprep.mubr.f32.mxu0 %v2902
      %3591 = vmatmul.mubr.f32.gmra.mrb[0].mxu0 %v2886
      %v3592 = vpop.f32.mrb[0].mxu0
      %v3593 = vadd.f32 %v3448, %v3592
      %v3594 = vpop.f32.mrb[0].mxu0
      %3595 = vmatprep.mubr.f32.mxu0 %v2903
      %3596 = vmatmul.mubr.f32.gmra.mrb[0].mxu0 %v2887
      %v3597 = vpop.f32.mrb[0].mxu0
      %v3598 = vadd.f32 %v3453, %v3597
      %v3599 = vpop.f32.mrb[0].mxu0
      %3600 = vmatprep.mubr.f32.mxu0 %v2904
      %3601 = vmatmul.mubr.f32.gmra.mrb[0].mxu0 %v2888
      %v3602 = vpop.f32.mrb[0].mxu0
      %v3603 = vadd.f32 %v3458, %v3602
      %v3604 = vpop.f32.mrb[0].mxu0
      %3605 = vmatprep.mubr.f32.mxu0 %v2905
      %3606 = vmatmul.mubr.f32.gmra.mrb[0].mxu0 %v2889
      %v3607 = vpop.f32.mrb[0].mxu0
      %v3608 = vadd.f32 %v3463, %v3607
      %v3609 = vpop.f32.mrb[0].mxu0
      %3610 = vmatprep.mubr.f32.mxu0 %v2906
      %3611 = vmatmul.mubr.f32.gmra.mrb[0].mxu0 %v2890
      %v3612 = vpop.f32.mrb[0].mxu0
      %v3613 = vadd.f32 %v3468, %v3612
      %v3614 = vpop.f32.mrb[0].mxu0
      %3615 = vmatprep.mubr.f32.mxu0 %v2907
      %3616 = vmatmul.mubr.f32.gmra.mrb[0].mxu0 %v2891
      %v3617 = vpop.f32.mrb[0].mxu0
      %v3618 = vadd.f32 %v3473, %v3617
      %v3619 = vpop.f32.mrb[0].mxu0
      %3620 = vmatprep.mubr.f32.mxu0 %v2908
      %3621 = vmatmul.mubr.f32.gmra.mrb[0].mxu0 %v2892
      %v3622 = vpop.f32.mrb[0].mxu0
      %v3623 = vadd.f32 %v3478, %v3622
      %v3624 = vpop.f32.mrb[0].mxu0
      %3625 = vmatprep.mubr.f32.mxu0 %v2909
      %3626 = vmatmul.mubr.f32.gmra.mrb[0].mxu0 %v2893
      %v3627 = vpop.f32.mrb[0].mxu0
      %v3628 = vadd.f32 %v3483, %v3627
      %v3629 = vpop.f32.mrb[0].mxu0
      %3630 = vmatprep.mubr.f32.mxu0 %v2910
      %3631 = vmatmul.mubr.f32.gmra.mrb[0].mxu0 %v2894
      %v3632 = vpop.f32.mrb[0].mxu0
      %v3633 = vadd.f32 %v3488, %v3632
      %v3634 = vpop.f32.mrb[0].mxu0
      %3635 = vmatprep.mubr.f32.mxu0 %v2911
      %3636 = vmatmul.mubr.f32.gmra.mrb[0].mxu0 %v2895
      %v3637 = vpop.f32.mrb[0].mxu0
      %v3638 = vadd.f32 %v3493, %v3637
      %v3639 = vpop.f32.mrb[0].mxu0
      %3640 = vmatprep.mubr.f32.mxu0 %v2912
      %3641 = vmatmul.mubr.f32.gmra.mrb[0].mxu0 %v2896
      %v3642 = vpop.f32.mrb[0].mxu0
      %v3643 = vadd.f32 %v3498, %v3642
      %v3644 = vpop.f32.mrb[0].mxu0
      %3645 = vmatprep.mubr.f32.mxu0 %v2913
      %3646 = vmatmul.mubr.f32.gmra.mrb[0].mxu0 %v2897
      %v3647 = vpop.f32.mrb[0].mxu0
      %v3648 = vadd.f32 %v3503, %v3647
      %v3649 = vpop.f32.mrb[0].mxu0
      %3650 = vmatprep.mubr.f32.mxu0 %v2914
      %3651 = vmatmul.mubr.f32.gmra.mrb[0].mxu0 %v2898
      %v3652 = vpop.f32.mrb[0].mxu0
      %v3653 = vadd.f32 %v3508, %v3652
      %v3654 = vpop.f32.mrb[0].mxu0
      %3655 = vmatprep.mubr.f32.mxu0 %v2915
      %3656 = vmatmul.mubr.f32.gmra.mrb[0].mxu0 %v2899
      %v3657 = vpop.f32.mrb[0].mxu0
      %v3658 = vadd.f32 %v3513, %v3657
      %v3659 = vpop.f32.mrb[0].mxu0
      %3660 = vdwg.mxu0
      %3661 = vmatprep.subr.mxu0 0.0
      %3662 = vmatpush1.msra.mxu0 %v3060
      %3663 = vmatprep.subr.mxu0 0.0
      %3664 = vmatpush1.msra.mxu0 %v3061
      %3665 = vmatprep.subr.mxu0 0.0
      %3666 = vmatpush1.msra.mxu0 %v3062
      %3667 = vmatprep.subr.mxu0 0.0
      %3668 = vmatpush1.msra.mxu0 %v3063
      %3669 = vmatprep.subr.mxu0 0.0
      %3670 = vmatpush1.msra.mxu0 %v3064
      %3671 = vmatprep.subr.mxu0 0.0
      %3672 = vmatpush1.msra.mxu0 %v3065
      %3673 = vmatprep.subr.mxu0 0.0
      %3674 = vmatpush1.msra.mxu0 %v3066
      %3675 = vmatprep.subr.mxu0 0.0
      %3676 = vmatpush1.msra.mxu0 %v3067
      %3677 = vmatprep.subr.mxu0 0.0
      %3678 = vmatpush1.msra.mxu0 %v3068
      %3679 = vmatprep.subr.mxu0 0.0
      %3680 = vmatpush1.msra.mxu0 %v3069
      %3681 = vmatprep.subr.mxu0 0.0
      %3682 = vmatpush1.msra.mxu0 %v3070
      %3683 = vmatprep.subr.mxu0 0.0
      %3684 = vmatpush1.msra.mxu0 %v3071
      %3685 = vmatprep.subr.mxu0 0.0
      %3686 = vmatpush1.msra.mxu0 %v3072
      %3687 = vmatprep.subr.mxu0 0.0
      %3688 = vmatpush1.msra.mxu0 %v3073
      %3689 = vmatprep.subr.mxu0 0.0
      %3690 = vmatpush1.msra.mxu0 %v3074
      %3691 = vmatprep.subr.mxu0 0.0
      %3692 = vmatpush1.msra.mxu0 %v3075
      %3693 = vmatprep.subr.mxu0 0.0
      %3694 = vmatpush1.msra.mxu0 0.0
      %3695 = vmatprep.subr.mxu0 0.0
      %3696 = vmatpush1.msra.mxu0 0.0
      %3697 = vmatprep.subr.mxu0 0.0
      %3698 = vmatpush1.msra.mxu0 0.0
      %3699 = vmatprep.subr.mxu0 0.0
      %3700 = vmatpush1.msra.mxu0 0.0
      %3701 = vmatprep.subr.mxu0 0.0
      %3702 = vmatpush1.msra.mxu0 0.0
      %3703 = vmatprep.subr.mxu0 0.0
      %3704 = vmatpush1.msra.mxu0 0.0
      %3705 = vmatprep.subr.mxu0 0.0
      %3706 = vmatpush1.msra.mxu0 0.0
      %3707 = vmatprep.subr.mxu0 0.0
      %3708 = vmatpush1.msra.mxu0 0.0
      %3709 = vmatprep.subr.mxu0 0.0
      %3710 = vmatpush1.msra.mxu0 0.0
      %3711 = vmatprep.subr.mxu0 0.0
      %3712 = vmatpush1.msra.mxu0 0.0
      %3713 = vmatprep.subr.mxu0 0.0
      %3714 = vmatpush1.msra.mxu0 0.0
      %3715 = vmatprep.subr.mxu0 0.0
      %3716 = vmatpush1.msra.mxu0 0.0
      %3717 = vmatprep.subr.mxu0 0.0
      %3718 = vmatpush1.msra.mxu0 0.0
      %3719 = vmatprep.subr.mxu0 0.0
      %3720 = vmatpush1.msra.mxu0 0.0
      %3721 = vmatprep.subr.mxu0 0.0
      %3722 = vmatpush1.msra.mxu0 0.0
      %3723 = vmatprep.subr.mxu0 0.0
      %3724 = vmatpush1.msra.mxu0 0.0
      %3725 = vmatprep.mubr.f32.mxu0 0.0
      %3726 = vmatmul.mubr.f32.gmra.mrb[0].mxu0 %v2916
      %v3727 = vpop.f32.mrb[0].mxu0
      %v3728 = vadd.f32 %v3583, %v3727
      %v3729 = vpop.f32.mrb[0].mxu0
      %3730 = vmatprep.mubr.f32.mxu0 0.0
      %3731 = vmatmul.mubr.f32.gmra.mrb[0].mxu0 %v2917
      %v3732 = vpop.f32.mrb[0].mxu0
      %v3733 = vadd.f32 %v3588, %v3732
      %v3734 = vpop.f32.mrb[0].mxu0
      %3735 = vmatprep.mubr.f32.mxu0 0.0
      %3736 = vmatmul.mubr.f32.gmra.mrb[0].mxu0 %v2918
      %v3737 = vpop.f32.mrb[0].mxu0
      %v3738 = vadd.f32 %v3593, %v3737
      %v3739 = vpop.f32.mrb[0].mxu0
      %3740 = vmatprep.mubr.f32.mxu0 0.0
      %3741 = vmatmul.mubr.f32.gmra.mrb[0].mxu0 %v2919
      %v3742 = vpop.f32.mrb[0].mxu0
      %v3743 = vadd.f32 %v3598, %v3742
      %v3744 = vpop.f32.mrb[0].mxu0
      %3745 = vmatprep.mubr.f32.mxu0 0.0
      %3746 = vmatmul.mubr.f32.gmra.mrb[0].mxu0 %v2920
      %v3747 = vpop.f32.mrb[0].mxu0
      %v3748 = vadd.f32 %v3603, %v3747
      %v3749 = vpop.f32.mrb[0].mxu0
      %3750 = vmatprep.mubr.f32.mxu0 0.0
      %3751 = vmatmul.mubr.f32.gmra.mrb[0].mxu0 %v2921
      %v3752 = vpop.f32.mrb[0].mxu0
      %v3753 = vadd.f32 %v3608, %v3752
      %v3754 = vpop.f32.mrb[0].mxu0
      %3755 = vmatprep.mubr.f32.mxu0 0.0
      %3756 = vmatmul.mubr.f32.gmra.mrb[0].mxu0 %v2922
      %v3757 = vpop.f32.mrb[0].mxu0
      %v3758 = vadd.f32 %v3613, %v3757
      %v3759 = vpop.f32.mrb[0].mxu0
      %3760 = vmatprep.mubr.f32.mxu0 0.0
      %3761 = vmatmul.mubr.f32.gmra.mrb[0].mxu0 %v2923
      %v3762 = vpop.f32.mrb[0].mxu0
      %v3763 = vadd.f32 %v3618, %v3762
      %v3764 = vpop.f32.mrb[0].mxu0
      %3765 = vmatprep.mubr.f32.mxu0 0.0
      %3766 = vmatmul.mubr.f32.gmra.mrb[0].mxu0 %v2924
      %v3767 = vpop.f32.mrb[0].mxu0
      %v3768 = vadd.f32 %v3623, %v3767
      %v3769 = vpop.f32.mrb[0].mxu0
      %3770 = vmatprep.mubr.f32.mxu0 0.0
      %3771 = vmatmul.mubr.f32.gmra.mrb[0].mxu0 %v2925
      %v3772 = vpop.f32.mrb[0].mxu0
      %v3773 = vadd.f32 %v3628, %v3772
      %v3774 = vpop.f32.mrb[0].mxu0
      %3775 = vmatprep.mubr.f32.mxu0 0.0
      %3776 = vmatmul.mubr.f32.gmra.mrb[0].mxu0 %v2926
      %v3777 = vpop.f32.mrb[0].mxu0
      %v3778 = vadd.f32 %v3633, %v3777
      %v3779 = vpop.f32.mrb[0].mxu0
      %3780 = vmatprep.mubr.f32.mxu0 0.0
      %3781 = vmatmul.mubr.f32.gmra.mrb[0].mxu0 %v2927
      %v3782 = vpop.f32.mrb[0].mxu0
      %v3783 = vadd.f32 %v3638, %v3782
      %v3784 = vpop.f32.mrb[0].mxu0
      %3785 = vmatprep.mubr.f32.mxu0 0.0
      %3786 = vmatmul.mubr.f32.gmra.mrb[0].mxu0 %v2928
      %v3787 = vpop.f32.mrb[0].mxu0
      %v3788 = vadd.f32 %v3643, %v3787
      %v3789 = vpop.f32.mrb[0].mxu0
      %3790 = vmatprep.mubr.f32.mxu0 0.0
      %3791 = vmatmul.mubr.f32.gmra.mrb[0].mxu0 %v2929
      %v3792 = vpop.f32.mrb[0].mxu0
      %v3793 = vadd.f32 %v3648, %v3792
      %v3794 = vpop.f32.mrb[0].mxu0
      %3795 = vmatprep.mubr.f32.mxu0 0.0
      %3796 = vmatmul.mubr.f32.gmra.mrb[0].mxu0 %v2930
      %v3797 = vpop.f32.mrb[0].mxu0
      %v3798 = vadd.f32 %v3653, %v3797
      %v3799 = vpop.f32.mrb[0].mxu0
      %3800 = vmatprep.mubr.f32.mxu0 0.0
      %3801 = vmatmul.mubr.f32.gmra.mrb[0].mxu0 %v2931
      %v3802 = vpop.f32.mrb[0].mxu0
      %v3803 = vadd.f32 %v3658, %v3802
      %v3804 = vpop.f32.mrb[0].mxu0
      %3805 = vdwg.mxu0
      %v3806 = vmax.f32 %v3728, 0.0
      %v3807 = vmax.f32 %v3733, 0.0
      %v3808 = vmax.f32 %v3738, 0.0
      %v3809 = vmax.f32 %v3743, 0.0
      %v3810 = vmax.f32 %v3748, 0.0
      %v3811 = vmax.f32 %v3753, 0.0
      %v3812 = vmax.f32 %v3758, 0.0
      %v3813 = vmax.f32 %v3763, 0.0
      %v3814 = vmax.f32 %v3768, 0.0
      %v3815 = vmax.f32 %v3773, 0.0
      %v3816 = vmax.f32 %v3778, 0.0
      %v3817 = vmax.f32 %v3783, 0.0
      %v3818 = vmax.f32 %v3788, 0.0
      %v3819 = vmax.f32 %v3793, 0.0
      %v3820 = vmax.f32 %v3798, 0.0
      %v3821 = vmax.f32 %v3803, 0.0
      %v3822 = vld [vmem:[%s7 + $0x100] sm:$0xff]
      %v3823 = vld [vmem:[%s7 + $0x108] sm:$0xff]
      %v3824 = vld [vmem:[%s7 + $0x110] sm:$0xff]
      %v3825 = vld [vmem:[%s7 + $0x118] sm:$0xff]
      %v3826 = vld [vmem:[%s7 + $0x120] sm:$0xff]
      %v3827 = vld [vmem:[%s7 + $0x128] sm:$0xff]
      %v3828 = vld [vmem:[%s7 + $0x130] sm:$0xff]
      %v3829 = vld [vmem:[%s7 + $0x138] sm:$0xff]
      %v3830 = vld [vmem:[%s7 + $0x140] sm:$0xff]
      %v3831 = vld [vmem:[%s7 + $0x148] sm:$0xff]
      %v3832 = vld [vmem:[%s7 + $0x150] sm:$0xff]
      %v3833 = vld [vmem:[%s7 + $0x158] sm:$0xff]
      %v3834 = vld [vmem:[%s7 + $0x160] sm:$0xff]
      %v3835 = vld [vmem:[%s7 + $0x168] sm:$0xff]
      %v3836 = vld [vmem:[%s7 + $0x170] sm:$0xff]
      %v3837 = vld [vmem:[%s7 + $0x178] sm:$0xff]
      %3838 = vmatprep.subr.mxu0 0.0
      %3839 = vmatpush1.msra.mxu0 %v3822
      %3840 = vmatprep.subr.mxu0 0.0
      %3841 = vmatpush1.msra.mxu0 %v3823
      %3842 = vmatprep.subr.mxu0 0.0
      %3843 = vmatpush1.msra.mxu0 %v3824
      %3844 = vmatprep.subr.mxu0 0.0
      %3845 = vmatpush1.msra.mxu0 %v3825
      %3846 = vmatprep.subr.mxu0 0.0
      %3847 = vmatpush1.msra.mxu0 %v3826
      %3848 = vmatprep.subr.mxu0 0.0
      %3849 = vmatpush1.msra.mxu0 %v3827
      %3850 = vmatprep.subr.mxu0 0.0
      %3851 = vmatpush1.msra.mxu0 %v3828
      %3852 = vmatprep.subr.mxu0 0.0
      %3853 = vmatpush1.msra.mxu0 %v3829
      %3854 = vmatprep.subr.mxu0 0.0
      %3855 = vmatpush1.msra.mxu0 %v3830
      %3856 = vmatprep.subr.mxu0 0.0
      %3857 = vmatpush1.msra.mxu0 %v3831
      %3858 = vmatprep.subr.mxu0 0.0
      %3859 = vmatpush1.msra.mxu0 %v3832
      %3860 = vmatprep.subr.mxu0 0.0
      %3861 = vmatpush1.msra.mxu0 %v3833
      %3862 = vmatprep.subr.mxu0 0.0
      %3863 = vmatpush1.msra.mxu0 %v3834
      %3864 = vmatprep.subr.mxu0 0.0
      %3865 = vmatpush1.msra.mxu0 %v3835
      %3866 = vmatprep.subr.mxu0 0.0
      %3867 = vmatpush1.msra.mxu0 %v3836
      %3868 = vmatprep.subr.mxu0 0.0
      %3869 = vmatpush1.msra.mxu0 %v3837
      %3870 = vmatprep.subr.mxu0 0.0
      %3871 = vmatpush1.msra.mxu0 0.0
      %3872 = vmatprep.subr.mxu0 0.0
      %3873 = vmatpush1.msra.mxu0 0.0
      %3874 = vmatprep.subr.mxu0 0.0
      %3875 = vmatpush1.msra.mxu0 0.0
      %3876 = vmatprep.subr.mxu0 0.0
      %3877 = vmatpush1.msra.mxu0 0.0
      %3878 = vmatprep.subr.mxu0 0.0
      %3879 = vmatpush1.msra.mxu0 0.0
      %3880 = vmatprep.subr.mxu0 0.0
      %3881 = vmatpush1.msra.mxu0 0.0
      %3882 = vmatprep.subr.mxu0 0.0
      %3883 = vmatpush1.msra.mxu0 0.0
      %3884 = vmatprep.subr.mxu0 0.0
      %3885 = vmatpush1.msra.mxu0 0.0
      %3886 = vmatprep.subr.mxu0 0.0
      %3887 = vmatpush1.msra.mxu0 0.0
      %3888 = vmatprep.subr.mxu0 0.0
      %3889 = vmatpush1.msra.mxu0 0.0
      %3890 = vmatprep.subr.mxu0 0.0
      %3891 = vmatpush1.msra.mxu0 0.0
      %3892 = vmatprep.subr.mxu0 0.0
      %3893 = vmatpush1.msra.mxu0 0.0
      %3894 = vmatprep.subr.mxu0 0.0
      %3895 = vmatpush1.msra.mxu0 0.0
      %3896 = vmatprep.subr.mxu0 0.0
      %3897 = vmatpush1.msra.mxu0 0.0
      %3898 = vmatprep.subr.mxu0 0.0
      %3899 = vmatpush1.msra.mxu0 0.0
      %3900 = vmatprep.subr.mxu0 0.0
      %3901 = vmatpush1.msra.mxu0 0.0
      %3902 = vmatprep.mubr.f32.mxu0 0.0
      %3903 = vmatmul.mubr.f32.gmra.mrb[0].mxu0 %v3806
      %v3904 = vpop.f32.mrb[0].mxu0
      %v3905 = vadd.f32 0.0, %v3904
      %v3906 = vpop.f32.mrb[0].mxu0
      %3907 = vmatprep.mubr.f32.mxu0 0.0
      %3908 = vmatmul.mubr.f32.gmra.mrb[0].mxu0 %v3807
      %v3909 = vpop.f32.mrb[0].mxu0
      %v3910 = vadd.f32 0.0, %v3909
      %v3911 = vpop.f32.mrb[0].mxu0
      %3912 = vmatprep.mubr.f32.mxu0 0.0
      %3913 = vmatmul.mubr.f32.gmra.mrb[0].mxu0 %v3808
      %v3914 = vpop.f32.mrb[0].mxu0
      %v3915 = vadd.f32 0.0, %v3914
      %v3916 = vpop.f32.mrb[0].mxu0
      %3917 = vmatprep.mubr.f32.mxu0 0.0
      %3918 = vmatmul.mubr.f32.gmra.mrb[0].mxu0 %v3809
      %v3919 = vpop.f32.mrb[0].mxu0
      %v3920 = vadd.f32 0.0, %v3919
      %v3921 = vpop.f32.mrb[0].mxu0
      %3922 = vmatprep.mubr.f32.mxu0 0.0
      %3923 = vmatmul.mubr.f32.gmra.mrb[0].mxu0 %v3810
      %v3924 = vpop.f32.mrb[0].mxu0
      %v3925 = vadd.f32 0.0, %v3924
      %v3926 = vpop.f32.mrb[0].mxu0
      %3927 = vmatprep.mubr.f32.mxu0 0.0
      %3928 = vmatmul.mubr.f32.gmra.mrb[0].mxu0 %v3811
      %v3929 = vpop.f32.mrb[0].mxu0
      %v3930 = vadd.f32 0.0, %v3929
      %v3931 = vpop.f32.mrb[0].mxu0
      %3932 = vmatprep.mubr.f32.mxu0 0.0
      %3933 = vmatmul.mubr.f32.gmra.mrb[0].mxu0 %v3812
      %v3934 = vpop.f32.mrb[0].mxu0
      %v3935 = vadd.f32 0.0, %v3934
      %v3936 = vpop.f32.mrb[0].mxu0
      %3937 = vmatprep.mubr.f32.mxu0 0.0
      %3938 = vmatmul.mubr.f32.gmra.mrb[0].mxu0 %v3813
      %v3939 = vpop.f32.mrb[0].mxu0
      %v3940 = vadd.f32 0.0, %v3939
      %v3941 = vpop.f32.mrb[0].mxu0
      %3942 = vmatprep.mubr.f32.mxu0 0.0
      %3943 = vmatmul.mubr.f32.gmra.mrb[0].mxu0 %v3814
      %v3944 = vpop.f32.mrb[0].mxu0
      %v3945 = vadd.f32 0.0, %v3944
      %v3946 = vpop.f32.mrb[0].mxu0
      %3947 = vmatprep.mubr.f32.mxu0 0.0
      %3948 = vmatmul.mubr.f32.gmra.mrb[0].mxu0 %v3815
      %v3949 = vpop.f32.mrb[0].mxu0
      %v3950 = vadd.f32 0.0, %v3949
      %v3951 = vpop.f32.mrb[0].mxu0
      %3952 = vmatprep.mubr.f32.mxu0 0.0
      %3953 = vmatmul.mubr.f32.gmra.mrb[0].mxu0 %v3816
      %v3954 = vpop.f32.mrb[0].mxu0
      %v3955 = vadd.f32 0.0, %v3954
      %v3956 = vpop.f32.mrb[0].mxu0
      %3957 = vmatprep.mubr.f32.mxu0 0.0
      %3958 = vmatmul.mubr.f32.gmra.mrb[0].mxu0 %v3817
      %v3959 = vpop.f32.mrb[0].mxu0
      %v3960 = vadd.f32 0.0, %v3959
      %v3961 = vpop.f32.mrb[0].mxu0
      %3962 = vmatprep.mubr.f32.mxu0 0.0
      %3963 = vmatmul.mubr.f32.gmra.mrb[0].mxu0 %v3818
      %v3964 = vpop.f32.mrb[0].mxu0
      %v3965 = vadd.f32 0.0, %v3964
      %v3966 = vpop.f32.mrb[0].mxu0
      %3967 = vmatprep.mubr.f32.mxu0 0.0
      %3968 = vmatmul.mubr.f32.gmra.mrb[0].mxu0 %v3819
      %v3969 = vpop.f32.mrb[0].mxu0
      %v3970 = vadd.f32 0.0, %v3969
      %v3971 = vpop.f32.mrb[0].mxu0
      %3972 = vmatprep.mubr.f32.mxu0 0.0
      %3973 = vmatmul.mubr.f32.gmra.mrb[0].mxu0 %v3820
      %v3974 = vpop.f32.mrb[0].mxu0
      %v3975 = vadd.f32 0.0, %v3974
      %v3976 = vpop.f32.mrb[0].mxu0
      %3977 = vmatprep.mubr.f32.mxu0 0.0
      %3978 = vmatmul.mubr.f32.gmra.mrb[0].mxu0 %v3821
      %v3979 = vpop.f32.mrb[0].mxu0
      %v3980 = vadd.f32 0.0, %v3979
      %v3981 = vpop.f32.mrb[0].mxu0
      %3982 = vdwg.mxu0
      %v3983 = vadd.f32 %v2722, %v3905
      %v3984 = vadd.f32 %v2727, %v3910
      %v3985 = vadd.f32 %v2732, %v3915
      %v3986 = vadd.f32 %v2737, %v3920
      %v3987 = vadd.f32 %v2742, %v3925
      %v3988 = vadd.f32 %v2747, %v3930
      %v3989 = vadd.f32 %v2752, %v3935
      %v3990 = vadd.f32 %v2757, %v3940
      %v3991 = vadd.f32 %v2762, %v3945
      %v3992 = vadd.f32 %v2767, %v3950
      %v3993 = vadd.f32 %v2772, %v3955
      %v3994 = vadd.f32 %v2777, %v3960
      %v3995 = vadd.f32 %v2782, %v3965
      %v3996 = vadd.f32 %v2787, %v3970
      %v3997 = vadd.f32 %v2792, %v3975
      %v3998 = vadd.f32 %v2797, %v3980
      %s3999 = scalar_lea.vmem [#allocation2], %s1255
      %v4000 = vld [vmem:[%s3999] sm:$0xff]
      %v4001 = vld [vmem:[%s3999 + $0x8] sm:$0xff]
      %v4002 = vld [vmem:[%s3999 + $0x28] sm:$0xff]
      %v4003 = vld [vmem:[%s3999 + $0x30] sm:$0xff]
      %v4004 = vld [vmem:[%s3999 + $0x50] sm:$0xff]
      %v4005 = vld [vmem:[%s3999 + $0x58] sm:$0xff]
      %v4006 = vld [vmem:[%s3999 + $0x78] sm:$0xff]
      %v4007 = vld [vmem:[%s3999 + $0x80] sm:$0xff]
      %v4008 = vld [vmem:[%s3999 + $0xa0] sm:$0xff]
      %v4009 = vld [vmem:[%s3999 + $0xa8] sm:$0xff]
      %v4010 = vld [vmem:[%s3999 + $0xc8] sm:$0xff]
      %v4011 = vld [vmem:[%s3999 + $0xd0] sm:$0xff]
      %v4012 = vld [vmem:[%s3999 + $0xf0] sm:$0xff]
      %v4013 = vld [vmem:[%s3999 + $0xf8] sm:$0xff]
      %v4014 = vld [vmem:[%s3999 + $0x118] sm:$0xff]
      %v4015 = vld [vmem:[%s3999 + $0x120] sm:$0xff]
      %v4016 = vld [vmem:[%s3999 + $0x9] sm:$0xff]
      %v4017 = vld [vmem:[%s3999 + $0x11] sm:$0xff]
      %v4018 = vld [vmem:[%s3999 + $0x31] sm:$0xff]
      %v4019 = vld [vmem:[%s3999 + $0x39] sm:$0xff]
      %v4020 = vld [vmem:[%s3999 + $0x59] sm:$0xff]
      %v4021 = vld [vmem:[%s3999 + $0x61] sm:$0xff]
      %v4022 = vld [vmem:[%s3999 + $0x81] sm:$0xff]
      %v4023 = vld [vmem:[%s3999 + $0x89] sm:$0xff]
      %v4024 = vld [vmem:[%s3999 + $0xa9] sm:$0xff]
      %v4025 = vld [vmem:[%s3999 + $0xb1] sm:$0xff]
      %v4026 = vld [vmem:[%s3999 + $0xd1] sm:$0xff]
      %v4027 = vld [vmem:[%s3999 + $0xd9] sm:$0xff]
      %v4028 = vld [vmem:[%s3999 + $0xf9] sm:$0xff]
      %v4029 = vld [vmem:[%s3999 + $0x101] sm:$0xff]
      %v4030 = vld [vmem:[%s3999 + $0x121] sm:$0xff]
      %v4031 = vld [vmem:[%s3999 + $0x129] sm:$0xff]
      %v4032 = vld [vmem:[%s3999 + $0x12] sm:$0xff]
      %v4033 = vld [vmem:[%s3999 + $0x1a] sm:$0xff]
      %v4034 = vld [vmem:[%s3999 + $0x3a] sm:$0xff]
      %v4035 = vld [vmem:[%s3999 + $0x42] sm:$0xff]
      %v4036 = vld [vmem:[%s3999 + $0x62] sm:$0xff]
      %v4037 = vld [vmem:[%s3999 + $0x6a] sm:$0xff]
      %v4038 = vld [vmem:[%s3999 + $0x8a] sm:$0xff]
      %v4039 = vld [vmem:[%s3999 + $0x92] sm:$0xff]
      %v4040 = vld [vmem:[%s3999 + $0xb2] sm:$0xff]
      %v4041 = vld [vmem:[%s3999 + $0xba] sm:$0xff]
      %v4042 = vld [vmem:[%s3999 + $0xda] sm:$0xff]
      %v4043 = vld [vmem:[%s3999 + $0xe2] sm:$0xff]
      %v4044 = vld [vmem:[%s3999 + $0x102] sm:$0xff]
      %v4045 = vld [vmem:[%s3999 + $0x10a] sm:$0xff]
      %v4046 = vld [vmem:[%s3999 + $0x12a] sm:$0xff]
      %v4047 = vld [vmem:[%s3999 + $0x132] sm:$0xff]
      %v4048 = vld [vmem:[%s1257] sm:$0xff]
      %v4049 = vld [vmem:[%s1257 + $0x8] sm:$0xff]
      %v4050 = vld [vmem:[%s1257 + $0x28] sm:$0xff]
      %v4051 = vld [vmem:[%s1257 + $0x30] sm:$0xff]
      %v4052 = vld [vmem:[%s1257 + $0x50] sm:$0xff]
      %v4053 = vld [vmem:[%s1257 + $0x58] sm:$0xff]
      %v4054 = vld [vmem:[%s1257 + $0x78] sm:$0xff]
      %v4055 = vld [vmem:[%s1257 + $0x80] sm:$0xff]
      %v4056 = vld [vmem:[%s1257 + $0xa0] sm:$0xff]
      %v4057 = vld [vmem:[%s1257 + $0xa8] sm:$0xff]
      %v4058 = vld [vmem:[%s1257 + $0xc8] sm:$0xff]
      %v4059 = vld [vmem:[%s1257 + $0xd0] sm:$0xff]
      %v4060 = vld [vmem:[%s1257 + $0xf0] sm:$0xff]
      %v4061 = vld [vmem:[%s1257 + $0xf8] sm:$0xff]
      %v4062 = vld [vmem:[%s1257 + $0x118] sm:$0xff]
      %v4063 = vld [vmem:[%s1257 + $0x120] sm:$0xff]
      %v4064 = vld [vmem:[%s1257 + $0x12] sm:$0xff]
      %v4065 = vld [vmem:[%s1257 + $0x1a] sm:$0xff]
      %v4066 = vld [vmem:[%s1257 + $0x3a] sm:$0xff]
      %v4067 = vld [vmem:[%s1257 + $0x42] sm:$0xff]
      %v4068 = vld [vmem:[%s1257 + $0x62] sm:$0xff]
      %v4069 = vld [vmem:[%s1257 + $0x6a] sm:$0xff]
      %v4070 = vld [vmem:[%s1257 + $0x8a] sm:$0xff]
      %v4071 = vld [vmem:[%s1257 + $0x92] sm:$0xff]
      %v4072 = vld [vmem:[%s1257 + $0xb2] sm:$0xff]
      %v4073 = vld [vmem:[%s1257 + $0xba] sm:$0xff]
      %v4074 = vld [vmem:[%s1257 + $0xda] sm:$0xff]
      %v4075 = vld [vmem:[%s1257 + $0xe2] sm:$0xff]
      %v4076 = vld [vmem:[%s1257 + $0x102] sm:$0xff]
      %v4077 = vld [vmem:[%s1257 + $0x10a] sm:$0xff]
      %v4078 = vld [vmem:[%s1257 + $0x12a] sm:$0xff]
      %v4079 = vld [vmem:[%s1257 + $0x132] sm:$0xff]
      %s4080 = sadd.s32 720, %s1255
      %s4081 = scalar_lea.vmem [#allocation2], %s4080
      %v4082 = vld [vmem:[%s4081] sm:$0xff]
      %v4083 = vld [vmem:[%s4081 + $0x8] sm:$0xff]
      %v4084 = vld [vmem:[%s4081 + $0x28] sm:$0xff]
      %v4085 = vld [vmem:[%s4081 + $0x30] sm:$0xff]
      %v4086 = vld [vmem:[%s4081 + $0x50] sm:$0xff]
      %v4087 = vld [vmem:[%s4081 + $0x58] sm:$0xff]
      %v4088 = vld [vmem:[%s4081 + $0x78] sm:$0xff]
      %v4089 = vld [vmem:[%s4081 + $0x80] sm:$0xff]
      %v4090 = vld [vmem:[%s4081 + $0xa0] sm:$0xff]
      %v4091 = vld [vmem:[%s4081 + $0xa8] sm:$0xff]
      %v4092 = vld [vmem:[%s4081 + $0xc8] sm:$0xff]
      %v4093 = vld [vmem:[%s4081 + $0xd0] sm:$0xff]
      %v4094 = vld [vmem:[%s4081 + $0xf0] sm:$0xff]
      %v4095 = vld [vmem:[%s4081 + $0xf8] sm:$0xff]
      %v4096 = vld [vmem:[%s4081 + $0x118] sm:$0xff]
      %v4097 = vld [vmem:[%s4081 + $0x120] sm:$0xff]
      %v4098 = vld [vmem:[%s4081 + $0x9] sm:$0xff]
      %v4099 = vld [vmem:[%s4081 + $0x11] sm:$0xff]
      %v4100 = vld [vmem:[%s4081 + $0x31] sm:$0xff]
      %v4101 = vld [vmem:[%s4081 + $0x39] sm:$0xff]
      %v4102 = vld [vmem:[%s4081 + $0x59] sm:$0xff]
      %v4103 = vld [vmem:[%s4081 + $0x61] sm:$0xff]
      %v4104 = vld [vmem:[%s4081 + $0x81] sm:$0xff]
      %v4105 = vld [vmem:[%s4081 + $0x89] sm:$0xff]
      %v4106 = vld [vmem:[%s4081 + $0xa9] sm:$0xff]
      %v4107 = vld [vmem:[%s4081 + $0xb1] sm:$0xff]
      %v4108 = vld [vmem:[%s4081 + $0xd1] sm:$0xff]
      %v4109 = vld [vmem:[%s4081 + $0xd9] sm:$0xff]
      %v4110 = vld [vmem:[%s4081 + $0xf9] sm:$0xff]
      %v4111 = vld [vmem:[%s4081 + $0x101] sm:$0xff]
      %v4112 = vld [vmem:[%s4081 + $0x121] sm:$0xff]
      %v4113 = vld [vmem:[%s4081 + $0x129] sm:$0xff]
      %v4114 = vld [vmem:[%s4081 + $0x12] sm:$0xff]
      %v4115 = vld [vmem:[%s4081 + $0x1a] sm:$0xff]
      %v4116 = vld [vmem:[%s4081 + $0x3a] sm:$0xff]
      %v4117 = vld [vmem:[%s4081 + $0x42] sm:$0xff]
      %v4118 = vld [vmem:[%s4081 + $0x62] sm:$0xff]
      %v4119 = vld [vmem:[%s4081 + $0x6a] sm:$0xff]
      %v4120 = vld [vmem:[%s4081 + $0x8a] sm:$0xff]
      %v4121 = vld [vmem:[%s4081 + $0x92] sm:$0xff]
      %v4122 = vld [vmem:[%s4081 + $0xb2] sm:$0xff]
      %v4123 = vld [vmem:[%s4081 + $0xba] sm:$0xff]
      %v4124 = vld [vmem:[%s4081 + $0xda] sm:$0xff]
      %v4125 = vld [vmem:[%s4081 + $0xe2] sm:$0xff]
      %v4126 = vld [vmem:[%s4081 + $0x102] sm:$0xff]
      %v4127 = vld [vmem:[%s4081 + $0x10a] sm:$0xff]
      %v4128 = vld [vmem:[%s4081 + $0x12a] sm:$0xff]
      %v4129 = vld [vmem:[%s4081 + $0x132] sm:$0xff]
      %v4130 = vld [vmem:[%s5] sm:$0xff]
      %v4131 = vld [vmem:[%s5 + $0x8] sm:$0xff]
      %v4132 = vld [vmem:[%s5 + $0x10] sm:$0xff]
      %v4133 = vld [vmem:[%s5 + $0x18] sm:$0xff]
      %v4134 = vld [vmem:[%s5 + $0x20] sm:$0xff]
      %v4135 = vld [vmem:[%s5 + $0x28] sm:$0xff]
      %v4136 = vld [vmem:[%s5 + $0x30] sm:$0xff]
      %v4137 = vld [vmem:[%s5 + $0x38] sm:$0xff]
      %v4138 = vld [vmem:[%s5 + $0x40] sm:$0xff]
      %v4139 = vld [vmem:[%s5 + $0x48] sm:$0xff]
      %v4140 = vld [vmem:[%s5 + $0x50] sm:$0xff]
      %v4141 = vld [vmem:[%s5 + $0x58] sm:$0xff]
      %v4142 = vld [vmem:[%s5 + $0x60] sm:$0xff]
      %v4143 = vld [vmem:[%s5 + $0x68] sm:$0xff]
      %v4144 = vld [vmem:[%s5 + $0x70] sm:$0xff]
      %v4145 = vld [vmem:[%s5 + $0x78] sm:$0xff]
      %v4146 = vld [vmem:[%s5 + $0x80] sm:$0xff]
      %v4147 = vld [vmem:[%s5 + $0x88] sm:$0xff]
      %v4148 = vld [vmem:[%s5 + $0x90] sm:$0xff]
      %v4149 = vld [vmem:[%s5 + $0x98] sm:$0xff]
      %v4150 = vld [vmem:[%s5 + $0xa0] sm:$0xff]
      %v4151 = vld [vmem:[%s5 + $0xa8] sm:$0xff]
      %v4152 = vld [vmem:[%s5 + $0xb0] sm:$0xff]
      %v4153 = vld [vmem:[%s5 + $0xb8] sm:$0xff]
      %v4154 = vld [vmem:[%s5 + $0xc0] sm:$0xff]
      %v4155 = vld [vmem:[%s5 + $0xc8] sm:$0xff]
      %v4156 = vld [vmem:[%s5 + $0xd0] sm:$0xff]
      %v4157 = vld [vmem:[%s5 + $0xd8] sm:$0xff]
      %v4158 = vld [vmem:[%s5 + $0xe0] sm:$0xff]
      %v4159 = vld [vmem:[%s5 + $0xe8] sm:$0xff]
      %v4160 = vld [vmem:[%s5 + $0xf0] sm:$0xff]
      %v4161 = vld [vmem:[%s5 + $0xf8] sm:$0xff]
      %v4162 = vld [vmem:[%s5 + $0x100] sm:$0xff]
      %v4163 = vld [vmem:[%s5 + $0x108] sm:$0xff]
      %v4164 = vld [vmem:[%s5 + $0x110] sm:$0xff]
      %v4165 = vld [vmem:[%s5 + $0x118] sm:$0xff]
      %v4166 = vld [vmem:[%s5 + $0x120] sm:$0xff]
      %v4167 = vld [vmem:[%s5 + $0x128] sm:$0xff]
      %v4168 = vld [vmem:[%s5 + $0x130] sm:$0xff]
      %v4169 = vld [vmem:[%s5 + $0x138] sm:$0xff]
      %v4170 = vld [vmem:[%s5 + $0x140] sm:$0xff]
      %v4171 = vld [vmem:[%s5 + $0x148] sm:$0xff]
      %v4172 = vld [vmem:[%s5 + $0x150] sm:$0xff]
      %v4173 = vld [vmem:[%s5 + $0x158] sm:$0xff]
      %v4174 = vld [vmem:[%s5 + $0x160] sm:$0xff]
      %v4175 = vld [vmem:[%s5 + $0x168] sm:$0xff]
      %v4176 = vld [vmem:[%s5 + $0x170] sm:$0xff]
      %v4177 = vld [vmem:[%s5 + $0x178] sm:$0xff]
      %v4178 = vld [vmem:[%s5 + $0x180] sm:$0xff]
      %v4179 = vld [vmem:[%s5 + $0x188] sm:$0xff]
      %v4180 = vld [vmem:[%s5 + $0x190] sm:$0xff]
      %v4181 = vld [vmem:[%s5 + $0x198] sm:$0xff]
      %v4182 = vld [vmem:[%s5 + $0x1a0] sm:$0xff]
      %v4183 = vld [vmem:[%s5 + $0x1a8] sm:$0xff]
      %v4184 = vld [vmem:[%s5 + $0x1b0] sm:$0xff]
      %v4185 = vld [vmem:[%s5 + $0x1b8] sm:$0xff]
      %v4186 = vld [vmem:[%s5 + $0x1c0] sm:$0xff]
      %v4187 = vld [vmem:[%s5 + $0x1c8] sm:$0xff]
      %v4188 = vld [vmem:[%s5 + $0x1d0] sm:$0xff]
      %v4189 = vld [vmem:[%s5 + $0x1d8] sm:$0xff]
      %v4190 = vld [vmem:[%s5 + $0x1e0] sm:$0xff]
      %v4191 = vld [vmem:[%s5 + $0x1e8] sm:$0xff]
      %v4192 = vld [vmem:[%s5 + $0x1f0] sm:$0xff]
      %v4193 = vld [vmem:[%s5 + $0x1f8] sm:$0xff]
      %v4194 = vld [vmem:[%s5 + $0x200] sm:$0xff]
      %v4195 = vld [vmem:[%s5 + $0x208] sm:$0xff]
      %v4196 = vld [vmem:[%s5 + $0x210] sm:$0xff]
      %v4197 = vld [vmem:[%s5 + $0x218] sm:$0xff]
      %v4198 = vld [vmem:[%s5 + $0x220] sm:$0xff]
      %v4199 = vld [vmem:[%s5 + $0x228] sm:$0xff]
      %v4200 = vld [vmem:[%s5 + $0x230] sm:$0xff]
      %v4201 = vld [vmem:[%s5 + $0x238] sm:$0xff]
      %v4202 = vld [vmem:[%s5 + $0x240] sm:$0xff]
      %v4203 = vld [vmem:[%s5 + $0x248] sm:$0xff]
      %v4204 = vld [vmem:[%s5 + $0x250] sm:$0xff]
      %v4205 = vld [vmem:[%s5 + $0x258] sm:$0xff]
      %v4206 = vld [vmem:[%s5 + $0x260] sm:$0xff]
      %v4207 = vld [vmem:[%s5 + $0x268] sm:$0xff]
      %v4208 = vld [vmem:[%s5 + $0x270] sm:$0xff]
      %v4209 = vld [vmem:[%s5 + $0x278] sm:$0xff]
      %v4210 = vld [vmem:[%s5 + $0x280] sm:$0xff]
      %v4211 = vld [vmem:[%s5 + $0x288] sm:$0xff]
      %v4212 = vld [vmem:[%s5 + $0x290] sm:$0xff]
      %v4213 = vld [vmem:[%s5 + $0x298] sm:$0xff]
      %v4214 = vld [vmem:[%s5 + $0x2a0] sm:$0xff]
      %v4215 = vld [vmem:[%s5 + $0x2a8] sm:$0xff]
      %v4216 = vld [vmem:[%s5 + $0x2b0] sm:$0xff]
      %v4217 = vld [vmem:[%s5 + $0x2b8] sm:$0xff]
      %v4218 = vld [vmem:[%s5 + $0x2c0] sm:$0xff]
      %v4219 = vld [vmem:[%s5 + $0x2c8] sm:$0xff]
      %v4220 = vld [vmem:[%s5 + $0x2d0] sm:$0xff]
      %v4221 = vld [vmem:[%s5 + $0x2d8] sm:$0xff]
      %v4222 = vld [vmem:[%s5 + $0x2e0] sm:$0xff]
      %v4223 = vld [vmem:[%s5 + $0x2e8] sm:$0xff]
      %v4224 = vld [vmem:[%s5 + $0x2f0] sm:$0xff]
      %v4225 = vld [vmem:[%s5 + $0x2f8] sm:$0xff]
      %v4226 = vld [vmem:[%s5 + $0x300] sm:$0xff]
      %v4227 = vld [vmem:[%s5 + $0x308] sm:$0xff]
      %v4228 = vld [vmem:[%s5 + $0x310] sm:$0xff]
      %v4229 = vld [vmem:[%s5 + $0x318] sm:$0xff]
      %v4230 = vld [vmem:[%s5 + $0x320] sm:$0xff]
      %v4231 = vld [vmem:[%s5 + $0x328] sm:$0xff]
      %v4232 = vld [vmem:[%s5 + $0x330] sm:$0xff]
      %v4233 = vld [vmem:[%s5 + $0x338] sm:$0xff]
      %v4234 = vld [vmem:[%s5 + $0x340] sm:$0xff]
      %v4235 = vld [vmem:[%s5 + $0x348] sm:$0xff]
      %v4236 = vld [vmem:[%s5 + $0x350] sm:$0xff]
      %v4237 = vld [vmem:[%s5 + $0x358] sm:$0xff]
      %v4238 = vld [vmem:[%s5 + $0x360] sm:$0xff]
      %v4239 = vld [vmem:[%s5 + $0x368] sm:$0xff]
      %v4240 = vld [vmem:[%s5 + $0x370] sm:$0xff]
      %v4241 = vld [vmem:[%s5 + $0x378] sm:$0xff]
      %v4242 = vld [vmem:[%s5 + $0x380] sm:$0xff]
      %v4243 = vld [vmem:[%s5 + $0x388] sm:$0xff]
      %v4244 = vld [vmem:[%s5 + $0x390] sm:$0xff]
      %v4245 = vld [vmem:[%s5 + $0x398] sm:$0xff]
      %v4246 = vld [vmem:[%s5 + $0x3a0] sm:$0xff]
      %v4247 = vld [vmem:[%s5 + $0x3a8] sm:$0xff]
      %v4248 = vld [vmem:[%s5 + $0x3b0] sm:$0xff]
      %v4249 = vld [vmem:[%s5 + $0x3b8] sm:$0xff]
      %v4250 = vld [vmem:[%s5 + $0x3c0] sm:$0xff]
      %v4251 = vld [vmem:[%s5 + $0x3c8] sm:$0xff]
      %v4252 = vld [vmem:[%s5 + $0x3d0] sm:$0xff]
      %v4253 = vld [vmem:[%s5 + $0x3d8] sm:$0xff]
      %v4254 = vld [vmem:[%s5 + $0x3e0] sm:$0xff]
      %v4255 = vld [vmem:[%s5 + $0x3e8] sm:$0xff]
      %v4256 = vld [vmem:[%s5 + $0x3f0] sm:$0xff]
      %v4257 = vld [vmem:[%s5 + $0x3f8] sm:$0xff]
      %v4258 = vld [vmem:[%s5 + $0x400] sm:$0xff]
      %v4259 = vld [vmem:[%s5 + $0x408] sm:$0xff]
      %v4260 = vld [vmem:[%s5 + $0x410] sm:$0xff]
      %v4261 = vld [vmem:[%s5 + $0x418] sm:$0xff]
      %v4262 = vld [vmem:[%s5 + $0x420] sm:$0xff]
      %v4263 = vld [vmem:[%s5 + $0x428] sm:$0xff]
      %v4264 = vld [vmem:[%s5 + $0x430] sm:$0xff]
      %v4265 = vld [vmem:[%s5 + $0x438] sm:$0xff]
      %v4266 = vld [vmem:[%s5 + $0x440] sm:$0xff]
      %v4267 = vld [vmem:[%s5 + $0x448] sm:$0xff]
      %v4268 = vld [vmem:[%s5 + $0x450] sm:$0xff]
      %v4269 = vld [vmem:[%s5 + $0x458] sm:$0xff]
      %v4270 = vld [vmem:[%s5 + $0x460] sm:$0xff]
      %v4271 = vld [vmem:[%s5 + $0x468] sm:$0xff]
      %v4272 = vld [vmem:[%s5 + $0x470] sm:$0xff]
      %v4273 = vld [vmem:[%s5 + $0x478] sm:$0xff]
      %v4274 = vld [vmem:[%s8 + $0x3] sm:$0x1]
      %v4275 = vlaneseq
      %v4276 = vshrl.u32 %v4275, 7
      %v4277 = vsub.s32 0, %v4276
      %v4278 = vrot.slane %v4274, %v4277
      %4279 = vmatprep.subr.mxu0 0.0
      %4280 = vmatpush1.msra.mxu0 %v4130
      %4281 = vmatprep.subr.mxu0 0.0
      %4282 = vmatpush1.msra.mxu0 %v4131
      %4283 = vmatprep.subr.mxu0 0.0
      %4284 = vmatpush1.msra.mxu0 %v4132
      %4285 = vmatprep.subr.mxu0 0.0
      %4286 = vmatpush1.msra.mxu0 %v4133
      %4287 = vmatprep.subr.mxu0 0.0
      %4288 = vmatpush1.msra.mxu0 %v4134
      %4289 = vmatprep.subr.mxu0 0.0
      %4290 = vmatpush1.msra.mxu0 %v4135
      %4291 = vmatprep.subr.mxu0 0.0
      %4292 = vmatpush1.msra.mxu0 %v4136
      %4293 = vmatprep.subr.mxu0 0.0
      %4294 = vmatpush1.msra.mxu0 %v4137
      %4295 = vmatprep.subr.mxu0 0.0
      %4296 = vmatpush1.msra.mxu0 %v4138
      %4297 = vmatprep.subr.mxu0 0.0
      %4298 = vmatpush1.msra.mxu0 %v4139
      %4299 = vmatprep.subr.mxu0 0.0
      %4300 = vmatpush1.msra.mxu0 %v4140
      %4301 = vmatprep.subr.mxu0 0.0
      %4302 = vmatpush1.msra.mxu0 %v4141
      %4303 = vmatprep.subr.mxu0 0.0
      %4304 = vmatpush1.msra.mxu0 %v4142
      %4305 = vmatprep.subr.mxu0 0.0
      %4306 = vmatpush1.msra.mxu0 %v4143
      %4307 = vmatprep.subr.mxu0 0.0
      %4308 = vmatpush1.msra.mxu0 %v4144
      %4309 = vmatprep.subr.mxu0 0.0
      %4310 = vmatpush1.msra.mxu0 %v4145
      %4311 = vmatprep.subr.mxu0 0.0
      %4312 = vmatpush1.msra.mxu0 %v4146
      %4313 = vmatprep.subr.mxu0 0.0
      %4314 = vmatpush1.msra.mxu0 %v4147
      %4315 = vmatprep.subr.mxu0 0.0
      %4316 = vmatpush1.msra.mxu0 %v4148
      %4317 = vmatprep.subr.mxu0 0.0
      %4318 = vmatpush1.msra.mxu0 %v4149
      %4319 = vmatprep.subr.mxu0 0.0
      %4320 = vmatpush1.msra.mxu0 %v4150
      %4321 = vmatprep.subr.mxu0 0.0
      %4322 = vmatpush1.msra.mxu0 %v4151
      %4323 = vmatprep.subr.mxu0 0.0
      %4324 = vmatpush1.msra.mxu0 %v4152
      %4325 = vmatprep.subr.mxu0 0.0
      %4326 = vmatpush1.msra.mxu0 %v4153
      %4327 = vmatprep.subr.mxu0 0.0
      %4328 = vmatpush1.msra.mxu0 %v4154
      %4329 = vmatprep.subr.mxu0 0.0
      %4330 = vmatpush1.msra.mxu0 %v4155
      %4331 = vmatprep.subr.mxu0 0.0
      %4332 = vmatpush1.msra.mxu0 %v4156
      %4333 = vmatprep.subr.mxu0 0.0
      %4334 = vmatpush1.msra.mxu0 %v4157
      %4335 = vmatprep.subr.mxu0 0.0
      %4336 = vmatpush1.msra.mxu0 %v4158
      %4337 = vmatprep.subr.mxu0 0.0
      %4338 = vmatpush1.msra.mxu0 %v4159
      %4339 = vmatprep.subr.mxu0 0.0
      %4340 = vmatpush1.msra.mxu0 %v4160
      %4341 = vmatprep.subr.mxu0 0.0
      %4342 = vmatpush1.msra.mxu0 %v4161
      %4343 = vmatprep.mubr.f32.mxu0 %v4016
      %4344 = vmatmul.mubr.f32.gmra.mrb[0].mxu0 %v4000
      %v4345 = vpop.f32.mrb[0].mxu0
      %v4346 = vadd.f32 %v4278, %v4345
      %v4347 = vpop.f32.mrb[0].mxu0
      %4348 = vmatprep.mubr.f32.mxu0 %v4017
      %4349 = vmatmul.mubr.f32.gmra.mrb[0].mxu0 %v4001
      %v4350 = vpop.f32.mrb[0].mxu0
      %v4351 = vadd.f32 %v4278, %v4350
      %v4352 = vpop.f32.mrb[0].mxu0
      %4353 = vmatprep.mubr.f32.mxu0 %v4018
      %4354 = vmatmul.mubr.f32.gmra.mrb[0].mxu0 %v4002
      %v4355 = vpop.f32.mrb[0].mxu0
      %v4356 = vadd.f32 %v4278, %v4355
      %v4357 = vpop.f32.mrb[0].mxu0
      %4358 = vmatprep.mubr.f32.mxu0 %v4019
      %4359 = vmatmul.mubr.f32.gmra.mrb[0].mxu0 %v4003
      %v4360 = vpop.f32.mrb[0].mxu0
      %v4361 = vadd.f32 %v4278, %v4360
      %v4362 = vpop.f32.mrb[0].mxu0
      %4363 = vmatprep.mubr.f32.mxu0 %v4020
      %4364 = vmatmul.mubr.f32.gmra.mrb[0].mxu0 %v4004
      %v4365 = vpop.f32.mrb[0].mxu0
      %v4366 = vadd.f32 %v4278, %v4365
      %v4367 = vpop.f32.mrb[0].mxu0
      %4368 = vmatprep.mubr.f32.mxu0 %v4021
      %4369 = vmatmul.mubr.f32.gmra.mrb[0].mxu0 %v4005
      %v4370 = vpop.f32.mrb[0].mxu0
      %v4371 = vadd.f32 %v4278, %v4370
      %v4372 = vpop.f32.mrb[0].mxu0
      %4373 = vmatprep.mubr.f32.mxu0 %v4022
      %4374 = vmatmul.mubr.f32.gmra.mrb[0].mxu0 %v4006
      %v4375 = vpop.f32.mrb[0].mxu0
      %v4376 = vadd.f32 %v4278, %v4375
      %v4377 = vpop.f32.mrb[0].mxu0
      %4378 = vmatprep.mubr.f32.mxu0 %v4023
      %4379 = vmatmul.mubr.f32.gmra.mrb[0].mxu0 %v4007
      %v4380 = vpop.f32.mrb[0].mxu0
      %v4381 = vadd.f32 %v4278, %v4380
      %v4382 = vpop.f32.mrb[0].mxu0
      %4383 = vmatprep.mubr.f32.mxu0 %v4024
      %4384 = vmatmul.mubr.f32.gmra.mrb[0].mxu0 %v4008
      %v4385 = vpop.f32.mrb[0].mxu0
      %v4386 = vadd.f32 %v4278, %v4385
      %v4387 = vpop.f32.mrb[0].mxu0
      %4388 = vmatprep.mubr.f32.mxu0 %v4025
      %4389 = vmatmul.mubr.f32.gmra.mrb[0].mxu0 %v4009
      %v4390 = vpop.f32.mrb[0].mxu0
      %v4391 = vadd.f32 %v4278, %v4390
      %v4392 = vpop.f32.mrb[0].mxu0
      %4393 = vmatprep.mubr.f32.mxu0 %v4026
      %4394 = vmatmul.mubr.f32.gmra.mrb[0].mxu0 %v4010
      %v4395 = vpop.f32.mrb[0].mxu0
      %v4396 = vadd.f32 %v4278, %v4395
      %v4397 = vpop.f32.mrb[0].mxu0
      %4398 = vmatprep.mubr.f32.mxu0 %v4027
      %4399 = vmatmul.mubr.f32.gmra.mrb[0].mxu0 %v4011
      %v4400 = vpop.f32.mrb[0].mxu0
      %v4401 = vadd.f32 %v4278, %v4400
      %v4402 = vpop.f32.mrb[0].mxu0
      %4403 = vmatprep.mubr.f32.mxu0 %v4028
      %4404 = vmatmul.mubr.f32.gmra.mrb[0].mxu0 %v4012
      %v4405 = vpop.f32.mrb[0].mxu0
      %v4406 = vadd.f32 %v4278, %v4405
      %v4407 = vpop.f32.mrb[0].mxu0
      %4408 = vmatprep.mubr.f32.mxu0 %v4029
      %4409 = vmatmul.mubr.f32.gmra.mrb[0].mxu0 %v4013
      %v4410 = vpop.f32.mrb[0].mxu0
      %v4411 = vadd.f32 %v4278, %v4410
      %v4412 = vpop.f32.mrb[0].mxu0
      %4413 = vmatprep.mubr.f32.mxu0 %v4030
      %4414 = vmatmul.mubr.f32.gmra.mrb[0].mxu0 %v4014
      %v4415 = vpop.f32.mrb[0].mxu0
      %v4416 = vadd.f32 %v4278, %v4415
      %v4417 = vpop.f32.mrb[0].mxu0
      %4418 = vmatprep.mubr.f32.mxu0 %v4031
      %4419 = vmatmul.mubr.f32.gmra.mrb[0].mxu0 %v4015
      %v4420 = vpop.f32.mrb[0].mxu0
      %v4421 = vadd.f32 %v4278, %v4420
      %v4422 = vpop.f32.mrb[0].mxu0
      %4423 = vdwg.mxu0
      %4424 = vmatprep.subr.mxu0 0.0
      %4425 = vmatpush1.msra.mxu0 %v4162
      %4426 = vmatprep.subr.mxu0 0.0
      %4427 = vmatpush1.msra.mxu0 %v4163
      %4428 = vmatprep.subr.mxu0 0.0
      %4429 = vmatpush1.msra.mxu0 %v4164
      %4430 = vmatprep.subr.mxu0 0.0
      %4431 = vmatpush1.msra.mxu0 %v4165
      %4432 = vmatprep.subr.mxu0 0.0
      %4433 = vmatpush1.msra.mxu0 %v4166
      %4434 = vmatprep.subr.mxu0 0.0
      %4435 = vmatpush1.msra.mxu0 %v4167
      %4436 = vmatprep.subr.mxu0 0.0
      %4437 = vmatpush1.msra.mxu0 %v4168
      %4438 = vmatprep.subr.mxu0 0.0
      %4439 = vmatpush1.msra.mxu0 %v4169
      %4440 = vmatprep.subr.mxu0 0.0
      %4441 = vmatpush1.msra.mxu0 %v4170
      %4442 = vmatprep.subr.mxu0 0.0
      %4443 = vmatpush1.msra.mxu0 %v4171
      %4444 = vmatprep.subr.mxu0 0.0
      %4445 = vmatpush1.msra.mxu0 %v4172
      %4446 = vmatprep.subr.mxu0 0.0
      %4447 = vmatpush1.msra.mxu0 %v4173
      %4448 = vmatprep.subr.mxu0 0.0
      %4449 = vmatpush1.msra.mxu0 %v4174
      %4450 = vmatprep.subr.mxu0 0.0
      %4451 = vmatpush1.msra.mxu0 %v4175
      %4452 = vmatprep.subr.mxu0 0.0
      %4453 = vmatpush1.msra.mxu0 %v4176
      %4454 = vmatprep.subr.mxu0 0.0
      %4455 = vmatpush1.msra.mxu0 %v4177
      %4456 = vmatprep.subr.mxu0 0.0
      %4457 = vmatpush1.msra.mxu0 %v4178
      %4458 = vmatprep.subr.mxu0 0.0
      %4459 = vmatpush1.msra.mxu0 %v4179
      %4460 = vmatprep.subr.mxu0 0.0
      %4461 = vmatpush1.msra.mxu0 %v4180
      %4462 = vmatprep.subr.mxu0 0.0
      %4463 = vmatpush1.msra.mxu0 %v4181
      %4464 = vmatprep.subr.mxu0 0.0
      %4465 = vmatpush1.msra.mxu0 %v4182
      %4466 = vmatprep.subr.mxu0 0.0
      %4467 = vmatpush1.msra.mxu0 %v4183
      %4468 = vmatprep.subr.mxu0 0.0
      %4469 = vmatpush1.msra.mxu0 %v4184
      %4470 = vmatprep.subr.mxu0 0.0
      %4471 = vmatpush1.msra.mxu0 %v4185
      %4472 = vmatprep.subr.mxu0 0.0
      %4473 = vmatpush1.msra.mxu0 %v4186
      %4474 = vmatprep.subr.mxu0 0.0
      %4475 = vmatpush1.msra.mxu0 %v4187
      %4476 = vmatprep.subr.mxu0 0.0
      %4477 = vmatpush1.msra.mxu0 %v4188
      %4478 = vmatprep.subr.mxu0 0.0
      %4479 = vmatpush1.msra.mxu0 %v4189
      %4480 = vmatprep.subr.mxu0 0.0
      %4481 = vmatpush1.msra.mxu0 %v4190
      %4482 = vmatprep.subr.mxu0 0.0
      %4483 = vmatpush1.msra.mxu0 %v4191
      %4484 = vmatprep.subr.mxu0 0.0
      %4485 = vmatpush1.msra.mxu0 %v4192
      %4486 = vmatprep.subr.mxu0 0.0
      %4487 = vmatpush1.msra.mxu0 %v4193
      %4488 = vmatprep.mubr.f32.mxu0 %v4048
      %4489 = vmatmul.mubr.f32.gmra.mrb[0].mxu0 %v4032
      %v4490 = vpop.f32.mrb[0].mxu0
      %v4491 = vadd.f32 %v4346, %v4490
      %v4492 = vpop.f32.mrb[0].mxu0
      %4493 = vmatprep.mubr.f32.mxu0 %v4049
      %4494 = vmatmul.mubr.f32.gmra.mrb[0].mxu0 %v4033
      %v4495 = vpop.f32.mrb[0].mxu0
      %v4496 = vadd.f32 %v4351, %v4495
      %v4497 = vpop.f32.mrb[0].mxu0
      %4498 = vmatprep.mubr.f32.mxu0 %v4050
      %4499 = vmatmul.mubr.f32.gmra.mrb[0].mxu0 %v4034
      %v4500 = vpop.f32.mrb[0].mxu0
      %v4501 = vadd.f32 %v4356, %v4500
      %v4502 = vpop.f32.mrb[0].mxu0
      %4503 = vmatprep.mubr.f32.mxu0 %v4051
      %4504 = vmatmul.mubr.f32.gmra.mrb[0].mxu0 %v4035
      %v4505 = vpop.f32.mrb[0].mxu0
      %v4506 = vadd.f32 %v4361, %v4505
      %v4507 = vpop.f32.mrb[0].mxu0
      %4508 = vmatprep.mubr.f32.mxu0 %v4052
      %4509 = vmatmul.mubr.f32.gmra.mrb[0].mxu0 %v4036
      %v4510 = vpop.f32.mrb[0].mxu0
      %v4511 = vadd.f32 %v4366, %v4510
      %v4512 = vpop.f32.mrb[0].mxu0
      %4513 = vmatprep.mubr.f32.mxu0 %v4053
      %4514 = vmatmul.mubr.f32.gmra.mrb[0].mxu0 %v4037
      %v4515 = vpop.f32.mrb[0].mxu0
      %v4516 = vadd.f32 %v4371, %v4515
      %v4517 = vpop.f32.mrb[0].mxu0
      %4518 = vmatprep.mubr.f32.mxu0 %v4054
      %4519 = vmatmul.mubr.f32.gmra.mrb[0].mxu0 %v4038
      %v4520 = vpop.f32.mrb[0].mxu0
      %v4521 = vadd.f32 %v4376, %v4520
      %v4522 = vpop.f32.mrb[0].mxu0
      %4523 = vmatprep.mubr.f32.mxu0 %v4055
      %4524 = vmatmul.mubr.f32.gmra.mrb[0].mxu0 %v4039
      %v4525 = vpop.f32.mrb[0].mxu0
      %v4526 = vadd.f32 %v4381, %v4525
      %v4527 = vpop.f32.mrb[0].mxu0
      %4528 = vmatprep.mubr.f32.mxu0 %v4056
      %4529 = vmatmul.mubr.f32.gmra.mrb[0].mxu0 %v4040
      %v4530 = vpop.f32.mrb[0].mxu0
      %v4531 = vadd.f32 %v4386, %v4530
      %v4532 = vpop.f32.mrb[0].mxu0
      %4533 = vmatprep.mubr.f32.mxu0 %v4057
      %4534 = vmatmul.mubr.f32.gmra.mrb[0].mxu0 %v4041
      %v4535 = vpop.f32.mrb[0].mxu0
      %v4536 = vadd.f32 %v4391, %v4535
      %v4537 = vpop.f32.mrb[0].mxu0
      %4538 = vmatprep.mubr.f32.mxu0 %v4058
      %4539 = vmatmul.mubr.f32.gmra.mrb[0].mxu0 %v4042
      %v4540 = vpop.f32.mrb[0].mxu0
      %v4541 = vadd.f32 %v4396, %v4540
      %v4542 = vpop.f32.mrb[0].mxu0
      %4543 = vmatprep.mubr.f32.mxu0 %v4059
      %4544 = vmatmul.mubr.f32.gmra.mrb[0].mxu0 %v4043
      %v4545 = vpop.f32.mrb[0].mxu0
      %v4546 = vadd.f32 %v4401, %v4545
      %v4547 = vpop.f32.mrb[0].mxu0
      %4548 = vmatprep.mubr.f32.mxu0 %v4060
      %4549 = vmatmul.mubr.f32.gmra.mrb[0].mxu0 %v4044
      %v4550 = vpop.f32.mrb[0].mxu0
      %v4551 = vadd.f32 %v4406, %v4550
      %v4552 = vpop.f32.mrb[0].mxu0
      %4553 = vmatprep.mubr.f32.mxu0 %v4061
      %4554 = vmatmul.mubr.f32.gmra.mrb[0].mxu0 %v4045
      %v4555 = vpop.f32.mrb[0].mxu0
      %v4556 = vadd.f32 %v4411, %v4555
      %v4557 = vpop.f32.mrb[0].mxu0
      %4558 = vmatprep.mubr.f32.mxu0 %v4062
      %4559 = vmatmul.mubr.f32.gmra.mrb[0].mxu0 %v4046
      %v4560 = vpop.f32.mrb[0].mxu0
      %v4561 = vadd.f32 %v4416, %v4560
      %v4562 = vpop.f32.mrb[0].mxu0
      %4563 = vmatprep.mubr.f32.mxu0 %v4063
      %4564 = vmatmul.mubr.f32.gmra.mrb[0].mxu0 %v4047
      %v4565 = vpop.f32.mrb[0].mxu0
      %v4566 = vadd.f32 %v4421, %v4565
      %v4567 = vpop.f32.mrb[0].mxu0
      %4568 = vdwg.mxu0
      %4569 = vmatprep.subr.mxu0 0.0
      %4570 = vmatpush1.msra.mxu0 %v4194
      %4571 = vmatprep.subr.mxu0 0.0
      %4572 = vmatpush1.msra.mxu0 %v4195
      %4573 = vmatprep.subr.mxu0 0.0
      %4574 = vmatpush1.msra.mxu0 %v4196
      %4575 = vmatprep.subr.mxu0 0.0
      %4576 = vmatpush1.msra.mxu0 %v4197
      %4577 = vmatprep.subr.mxu0 0.0
      %4578 = vmatpush1.msra.mxu0 %v4198
      %4579 = vmatprep.subr.mxu0 0.0
      %4580 = vmatpush1.msra.mxu0 %v4199
      %4581 = vmatprep.subr.mxu0 0.0
      %4582 = vmatpush1.msra.mxu0 %v4200
      %4583 = vmatprep.subr.mxu0 0.0
      %4584 = vmatpush1.msra.mxu0 %v4201
      %4585 = vmatprep.subr.mxu0 0.0
      %4586 = vmatpush1.msra.mxu0 %v4202
      %4587 = vmatprep.subr.mxu0 0.0
      %4588 = vmatpush1.msra.mxu0 %v4203
      %4589 = vmatprep.subr.mxu0 0.0
      %4590 = vmatpush1.msra.mxu0 %v4204
      %4591 = vmatprep.subr.mxu0 0.0
      %4592 = vmatpush1.msra.mxu0 %v4205
      %4593 = vmatprep.subr.mxu0 0.0
      %4594 = vmatpush1.msra.mxu0 %v4206
      %4595 = vmatprep.subr.mxu0 0.0
      %4596 = vmatpush1.msra.mxu0 %v4207
      %4597 = vmatprep.subr.mxu0 0.0
      %4598 = vmatpush1.msra.mxu0 %v4208
      %4599 = vmatprep.subr.mxu0 0.0
      %4600 = vmatpush1.msra.mxu0 %v4209
      %4601 = vmatprep.subr.mxu0 0.0
      %4602 = vmatpush1.msra.mxu0 %v4210
      %4603 = vmatprep.subr.mxu0 0.0
      %4604 = vmatpush1.msra.mxu0 %v4211
      %4605 = vmatprep.subr.mxu0 0.0
      %4606 = vmatpush1.msra.mxu0 %v4212
      %4607 = vmatprep.subr.mxu0 0.0
      %4608 = vmatpush1.msra.mxu0 %v4213
      %4609 = vmatprep.subr.mxu0 0.0
      %4610 = vmatpush1.msra.mxu0 %v4214
      %4611 = vmatprep.subr.mxu0 0.0
      %4612 = vmatpush1.msra.mxu0 %v4215
      %4613 = vmatprep.subr.mxu0 0.0
      %4614 = vmatpush1.msra.mxu0 %v4216
      %4615 = vmatprep.subr.mxu0 0.0
      %4616 = vmatpush1.msra.mxu0 %v4217
      %4617 = vmatprep.subr.mxu0 0.0
      %4618 = vmatpush1.msra.mxu0 %v4218
      %4619 = vmatprep.subr.mxu0 0.0
      %4620 = vmatpush1.msra.mxu0 %v4219
      %4621 = vmatprep.subr.mxu0 0.0
      %4622 = vmatpush1.msra.mxu0 %v4220
      %4623 = vmatprep.subr.mxu0 0.0
      %4624 = vmatpush1.msra.mxu0 %v4221
      %4625 = vmatprep.subr.mxu0 0.0
      %4626 = vmatpush1.msra.mxu0 %v4222
      %4627 = vmatprep.subr.mxu0 0.0
      %4628 = vmatpush1.msra.mxu0 %v4223
      %4629 = vmatprep.subr.mxu0 0.0
      %4630 = vmatpush1.msra.mxu0 %v4224
      %4631 = vmatprep.subr.mxu0 0.0
      %4632 = vmatpush1.msra.mxu0 %v4225
      %4633 = vmatprep.mubr.f32.mxu0 %v4064
      %4634 = vmatmul.mubr.f32.gmra.mrb[0].mxu0 %v1258
      %v4635 = vpop.f32.mrb[0].mxu0
      %v4636 = vadd.f32 %v4491, %v4635
      %v4637 = vpop.f32.mrb[0].mxu0
      %4638 = vmatprep.mubr.f32.mxu0 %v4065
      %4639 = vmatmul.mubr.f32.gmra.mrb[0].mxu0 %v1259
      %v4640 = vpop.f32.mrb[0].mxu0
      %v4641 = vadd.f32 %v4496, %v4640
      %v4642 = vpop.f32.mrb[0].mxu0
      %4643 = vmatprep.mubr.f32.mxu0 %v4066
      %4644 = vmatmul.mubr.f32.gmra.mrb[0].mxu0 %v1260
      %v4645 = vpop.f32.mrb[0].mxu0
      %v4646 = vadd.f32 %v4501, %v4645
      %v4647 = vpop.f32.mrb[0].mxu0
      %4648 = vmatprep.mubr.f32.mxu0 %v4067
      %4649 = vmatmul.mubr.f32.gmra.mrb[0].mxu0 %v1261
      %v4650 = vpop.f32.mrb[0].mxu0
      %v4651 = vadd.f32 %v4506, %v4650
      %v4652 = vpop.f32.mrb[0].mxu0
      %4653 = vmatprep.mubr.f32.mxu0 %v4068
      %4654 = vmatmul.mubr.f32.gmra.mrb[0].mxu0 %v1262
      %v4655 = vpop.f32.mrb[0].mxu0
      %v4656 = vadd.f32 %v4511, %v4655
      %v4657 = vpop.f32.mrb[0].mxu0
      %4658 = vmatprep.mubr.f32.mxu0 %v4069
      %4659 = vmatmul.mubr.f32.gmra.mrb[0].mxu0 %v1263
      %v4660 = vpop.f32.mrb[0].mxu0
      %v4661 = vadd.f32 %v4516, %v4660
      %v4662 = vpop.f32.mrb[0].mxu0
      %4663 = vmatprep.mubr.f32.mxu0 %v4070
      %4664 = vmatmul.mubr.f32.gmra.mrb[0].mxu0 %v1264
      %v4665 = vpop.f32.mrb[0].mxu0
      %v4666 = vadd.f32 %v4521, %v4665
      %v4667 = vpop.f32.mrb[0].mxu0
      %4668 = vmatprep.mubr.f32.mxu0 %v4071
      %4669 = vmatmul.mubr.f32.gmra.mrb[0].mxu0 %v1265
      %v4670 = vpop.f32.mrb[0].mxu0
      %v4671 = vadd.f32 %v4526, %v4670
      %v4672 = vpop.f32.mrb[0].mxu0
      %4673 = vmatprep.mubr.f32.mxu0 %v4072
      %4674 = vmatmul.mubr.f32.gmra.mrb[0].mxu0 %v1266
      %v4675 = vpop.f32.mrb[0].mxu0
      %v4676 = vadd.f32 %v4531, %v4675
      %v4677 = vpop.f32.mrb[0].mxu0
      %4678 = vmatprep.mubr.f32.mxu0 %v4073
      %4679 = vmatmul.mubr.f32.gmra.mrb[0].mxu0 %v1267
      %v4680 = vpop.f32.mrb[0].mxu0
      %v4681 = vadd.f32 %v4536, %v4680
      %v4682 = vpop.f32.mrb[0].mxu0
      %4683 = vmatprep.mubr.f32.mxu0 %v4074
      %4684 = vmatmul.mubr.f32.gmra.mrb[0].mxu0 %v1268
      %v4685 = vpop.f32.mrb[0].mxu0
      %v4686 = vadd.f32 %v4541, %v4685
      %v4687 = vpop.f32.mrb[0].mxu0
      %4688 = vmatprep.mubr.f32.mxu0 %v4075
      %4689 = vmatmul.mubr.f32.gmra.mrb[0].mxu0 %v1269
      %v4690 = vpop.f32.mrb[0].mxu0
      %v4691 = vadd.f32 %v4546, %v4690
      %v4692 = vpop.f32.mrb[0].mxu0
      %4693 = vmatprep.mubr.f32.mxu0 %v4076
      %4694 = vmatmul.mubr.f32.gmra.mrb[0].mxu0 %v1270
      %v4695 = vpop.f32.mrb[0].mxu0
      %v4696 = vadd.f32 %v4551, %v4695
      %v4697 = vpop.f32.mrb[0].mxu0
      %4698 = vmatprep.mubr.f32.mxu0 %v4077
      %4699 = vmatmul.mubr.f32.gmra.mrb[0].mxu0 %v1271
      %v4700 = vpop.f32.mrb[0].mxu0
      %v4701 = vadd.f32 %v4556, %v4700
      %v4702 = vpop.f32.mrb[0].mxu0
      %4703 = vmatprep.mubr.f32.mxu0 %v4078
      %4704 = vmatmul.mubr.f32.gmra.mrb[0].mxu0 %v1272
      %v4705 = vpop.f32.mrb[0].mxu0
      %v4706 = vadd.f32 %v4561, %v4705
      %v4707 = vpop.f32.mrb[0].mxu0
      %4708 = vmatprep.mubr.f32.mxu0 %v4079
      %4709 = vmatmul.mubr.f32.gmra.mrb[0].mxu0 %v1273
      %v4710 = vpop.f32.mrb[0].mxu0
      %v4711 = vadd.f32 %v4566, %v4710
      %v4712 = vpop.f32.mrb[0].mxu0
      %4713 = vdwg.mxu0
      %4714 = vmatprep.subr.mxu0 0.0
      %4715 = vmatpush1.msra.mxu0 %v4226
      %4716 = vmatprep.subr.mxu0 0.0
      %4717 = vmatpush1.msra.mxu0 %v4227
      %4718 = vmatprep.subr.mxu0 0.0
      %4719 = vmatpush1.msra.mxu0 %v4228
      %4720 = vmatprep.subr.mxu0 0.0
      %4721 = vmatpush1.msra.mxu0 %v4229
      %4722 = vmatprep.subr.mxu0 0.0
      %4723 = vmatpush1.msra.mxu0 %v4230
      %4724 = vmatprep.subr.mxu0 0.0
      %4725 = vmatpush1.msra.mxu0 %v4231
      %4726 = vmatprep.subr.mxu0 0.0
      %4727 = vmatpush1.msra.mxu0 %v4232
      %4728 = vmatprep.subr.mxu0 0.0
      %4729 = vmatpush1.msra.mxu0 %v4233
      %4730 = vmatprep.subr.mxu0 0.0
      %4731 = vmatpush1.msra.mxu0 %v4234
      %4732 = vmatprep.subr.mxu0 0.0
      %4733 = vmatpush1.msra.mxu0 %v4235
      %4734 = vmatprep.subr.mxu0 0.0
      %4735 = vmatpush1.msra.mxu0 %v4236
      %4736 = vmatprep.subr.mxu0 0.0
      %4737 = vmatpush1.msra.mxu0 %v4237
      %4738 = vmatprep.subr.mxu0 0.0
      %4739 = vmatpush1.msra.mxu0 %v4238
      %4740 = vmatprep.subr.mxu0 0.0
      %4741 = vmatpush1.msra.mxu0 %v4239
      %4742 = vmatprep.subr.mxu0 0.0
      %4743 = vmatpush1.msra.mxu0 %v4240
      %4744 = vmatprep.subr.mxu0 0.0
      %4745 = vmatpush1.msra.mxu0 %v4241
      %4746 = vmatprep.subr.mxu0 0.0
      %4747 = vmatpush1.msra.mxu0 %v4242
      %4748 = vmatprep.subr.mxu0 0.0
      %4749 = vmatpush1.msra.mxu0 %v4243
      %4750 = vmatprep.subr.mxu0 0.0
      %4751 = vmatpush1.msra.mxu0 %v4244
      %4752 = vmatprep.subr.mxu0 0.0
      %4753 = vmatpush1.msra.mxu0 %v4245
      %4754 = vmatprep.subr.mxu0 0.0
      %4755 = vmatpush1.msra.mxu0 %v4246
      %4756 = vmatprep.subr.mxu0 0.0
      %4757 = vmatpush1.msra.mxu0 %v4247
      %4758 = vmatprep.subr.mxu0 0.0
      %4759 = vmatpush1.msra.mxu0 %v4248
      %4760 = vmatprep.subr.mxu0 0.0
      %4761 = vmatpush1.msra.mxu0 %v4249
      %4762 = vmatprep.subr.mxu0 0.0
      %4763 = vmatpush1.msra.mxu0 %v4250
      %4764 = vmatprep.subr.mxu0 0.0
      %4765 = vmatpush1.msra.mxu0 %v4251
      %4766 = vmatprep.subr.mxu0 0.0
      %4767 = vmatpush1.msra.mxu0 %v4252
      %4768 = vmatprep.subr.mxu0 0.0
      %4769 = vmatpush1.msra.mxu0 %v4253
      %4770 = vmatprep.subr.mxu0 0.0
      %4771 = vmatpush1.msra.mxu0 %v4254
      %4772 = vmatprep.subr.mxu0 0.0
      %4773 = vmatpush1.msra.mxu0 %v4255
      %4774 = vmatprep.subr.mxu0 0.0
      %4775 = vmatpush1.msra.mxu0 %v4256
      %4776 = vmatprep.subr.mxu0 0.0
      %4777 = vmatpush1.msra.mxu0 %v4257
      %4778 = vmatprep.mubr.f32.mxu0 %v4098
      %4779 = vmatmul.mubr.f32.gmra.mrb[0].mxu0 %v4082
      %v4780 = vpop.f32.mrb[0].mxu0
      %v4781 = vadd.f32 %v4636, %v4780
      %v4782 = vpop.f32.mrb[0].mxu0
      %4783 = vmatprep.mubr.f32.mxu0 %v4099
      %4784 = vmatmul.mubr.f32.gmra.mrb[0].mxu0 %v4083
      %v4785 = vpop.f32.mrb[0].mxu0
      %v4786 = vadd.f32 %v4641, %v4785
      %v4787 = vpop.f32.mrb[0].mxu0
      %4788 = vmatprep.mubr.f32.mxu0 %v4100
      %4789 = vmatmul.mubr.f32.gmra.mrb[0].mxu0 %v4084
      %v4790 = vpop.f32.mrb[0].mxu0
      %v4791 = vadd.f32 %v4646, %v4790
      %v4792 = vpop.f32.mrb[0].mxu0
      %4793 = vmatprep.mubr.f32.mxu0 %v4101
      %4794 = vmatmul.mubr.f32.gmra.mrb[0].mxu0 %v4085
      %v4795 = vpop.f32.mrb[0].mxu0
      %v4796 = vadd.f32 %v4651, %v4795
      %v4797 = vpop.f32.mrb[0].mxu0
      %4798 = vmatprep.mubr.f32.mxu0 %v4102
      %4799 = vmatmul.mubr.f32.gmra.mrb[0].mxu0 %v4086
      %v4800 = vpop.f32.mrb[0].mxu0
      %v4801 = vadd.f32 %v4656, %v4800
      %v4802 = vpop.f32.mrb[0].mxu0
      %4803 = vmatprep.mubr.f32.mxu0 %v4103
      %4804 = vmatmul.mubr.f32.gmra.mrb[0].mxu0 %v4087
      %v4805 = vpop.f32.mrb[0].mxu0
      %v4806 = vadd.f32 %v4661, %v4805
      %v4807 = vpop.f32.mrb[0].mxu0
      %4808 = vmatprep.mubr.f32.mxu0 %v4104
      %4809 = vmatmul.mubr.f32.gmra.mrb[0].mxu0 %v4088
      %v4810 = vpop.f32.mrb[0].mxu0
      %v4811 = vadd.f32 %v4666, %v4810
      %v4812 = vpop.f32.mrb[0].mxu0
      %4813 = vmatprep.mubr.f32.mxu0 %v4105
      %4814 = vmatmul.mubr.f32.gmra.mrb[0].mxu0 %v4089
      %v4815 = vpop.f32.mrb[0].mxu0
      %v4816 = vadd.f32 %v4671, %v4815
      %v4817 = vpop.f32.mrb[0].mxu0
      %4818 = vmatprep.mubr.f32.mxu0 %v4106
      %4819 = vmatmul.mubr.f32.gmra.mrb[0].mxu0 %v4090
      %v4820 = vpop.f32.mrb[0].mxu0
      %v4821 = vadd.f32 %v4676, %v4820
      %v4822 = vpop.f32.mrb[0].mxu0
      %4823 = vmatprep.mubr.f32.mxu0 %v4107
      %4824 = vmatmul.mubr.f32.gmra.mrb[0].mxu0 %v4091
      %v4825 = vpop.f32.mrb[0].mxu0
      %v4826 = vadd.f32 %v4681, %v4825
      %v4827 = vpop.f32.mrb[0].mxu0
      %4828 = vmatprep.mubr.f32.mxu0 %v4108
      %4829 = vmatmul.mubr.f32.gmra.mrb[0].mxu0 %v4092
      %v4830 = vpop.f32.mrb[0].mxu0
      %v4831 = vadd.f32 %v4686, %v4830
      %v4832 = vpop.f32.mrb[0].mxu0
      %4833 = vmatprep.mubr.f32.mxu0 %v4109
      %4834 = vmatmul.mubr.f32.gmra.mrb[0].mxu0 %v4093
      %v4835 = vpop.f32.mrb[0].mxu0
      %v4836 = vadd.f32 %v4691, %v4835
      %v4837 = vpop.f32.mrb[0].mxu0
      %4838 = vmatprep.mubr.f32.mxu0 %v4110
      %4839 = vmatmul.mubr.f32.gmra.mrb[0].mxu0 %v4094
      %v4840 = vpop.f32.mrb[0].mxu0
      %v4841 = vadd.f32 %v4696, %v4840
      %v4842 = vpop.f32.mrb[0].mxu0
      %4843 = vmatprep.mubr.f32.mxu0 %v4111
      %4844 = vmatmul.mubr.f32.gmra.mrb[0].mxu0 %v4095
      %v4845 = vpop.f32.mrb[0].mxu0
      %v4846 = vadd.f32 %v4701, %v4845
      %v4847 = vpop.f32.mrb[0].mxu0
      %4848 = vmatprep.mubr.f32.mxu0 %v4112
      %4849 = vmatmul.mubr.f32.gmra.mrb[0].mxu0 %v4096
      %v4850 = vpop.f32.mrb[0].mxu0
      %v4851 = vadd.f32 %v4706, %v4850
      %v4852 = vpop.f32.mrb[0].mxu0
      %4853 = vmatprep.mubr.f32.mxu0 %v4113
      %4854 = vmatmul.mubr.f32.gmra.mrb[0].mxu0 %v4097
      %v4855 = vpop.f32.mrb[0].mxu0
      %v4856 = vadd.f32 %v4711, %v4855
      %v4857 = vpop.f32.mrb[0].mxu0
      %4858 = vdwg.mxu0
      %4859 = vmatprep.subr.mxu0 0.0
      %4860 = vmatpush1.msra.mxu0 %v4258
      %4861 = vmatprep.subr.mxu0 0.0
      %4862 = vmatpush1.msra.mxu0 %v4259
      %4863 = vmatprep.subr.mxu0 0.0
      %4864 = vmatpush1.msra.mxu0 %v4260
      %4865 = vmatprep.subr.mxu0 0.0
      %4866 = vmatpush1.msra.mxu0 %v4261
      %4867 = vmatprep.subr.mxu0 0.0
      %4868 = vmatpush1.msra.mxu0 %v4262
      %4869 = vmatprep.subr.mxu0 0.0
      %4870 = vmatpush1.msra.mxu0 %v4263
      %4871 = vmatprep.subr.mxu0 0.0
      %4872 = vmatpush1.msra.mxu0 %v4264
      %4873 = vmatprep.subr.mxu0 0.0
      %4874 = vmatpush1.msra.mxu0 %v4265
      %4875 = vmatprep.subr.mxu0 0.0
      %4876 = vmatpush1.msra.mxu0 %v4266
      %4877 = vmatprep.subr.mxu0 0.0
      %4878 = vmatpush1.msra.mxu0 %v4267
      %4879 = vmatprep.subr.mxu0 0.0
      %4880 = vmatpush1.msra.mxu0 %v4268
      %4881 = vmatprep.subr.mxu0 0.0
      %4882 = vmatpush1.msra.mxu0 %v4269
      %4883 = vmatprep.subr.mxu0 0.0
      %4884 = vmatpush1.msra.mxu0 %v4270
      %4885 = vmatprep.subr.mxu0 0.0
      %4886 = vmatpush1.msra.mxu0 %v4271
      %4887 = vmatprep.subr.mxu0 0.0
      %4888 = vmatpush1.msra.mxu0 %v4272
      %4889 = vmatprep.subr.mxu0 0.0
      %4890 = vmatpush1.msra.mxu0 %v4273
      %4891 = vmatprep.subr.mxu0 0.0
      %4892 = vmatpush1.msra.mxu0 0.0
      %4893 = vmatprep.subr.mxu0 0.0
      %4894 = vmatpush1.msra.mxu0 0.0
      %4895 = vmatprep.subr.mxu0 0.0
      %4896 = vmatpush1.msra.mxu0 0.0
      %4897 = vmatprep.subr.mxu0 0.0
      %4898 = vmatpush1.msra.mxu0 0.0
      %4899 = vmatprep.subr.mxu0 0.0
      %4900 = vmatpush1.msra.mxu0 0.0
      %4901 = vmatprep.subr.mxu0 0.0
      %4902 = vmatpush1.msra.mxu0 0.0
      %4903 = vmatprep.subr.mxu0 0.0
      %4904 = vmatpush1.msra.mxu0 0.0
      %4905 = vmatprep.subr.mxu0 0.0
      %4906 = vmatpush1.msra.mxu0 0.0
      %4907 = vmatprep.subr.mxu0 0.0
      %4908 = vmatpush1.msra.mxu0 0.0
      %4909 = vmatprep.subr.mxu0 0.0
      %4910 = vmatpush1.msra.mxu0 0.0
      %4911 = vmatprep.subr.mxu0 0.0
      %4912 = vmatpush1.msra.mxu0 0.0
      %4913 = vmatprep.subr.mxu0 0.0
      %4914 = vmatpush1.msra.mxu0 0.0
      %4915 = vmatprep.subr.mxu0 0.0
      %4916 = vmatpush1.msra.mxu0 0.0
      %4917 = vmatprep.subr.mxu0 0.0
      %4918 = vmatpush1.msra.mxu0 0.0
      %4919 = vmatprep.subr.mxu0 0.0
      %4920 = vmatpush1.msra.mxu0 0.0
      %4921 = vmatprep.subr.mxu0 0.0
      %4922 = vmatpush1.msra.mxu0 0.0
      %4923 = vmatprep.mubr.f32.mxu0 0.0
      %4924 = vmatmul.mubr.f32.gmra.mrb[0].mxu0 %v4114
      %v4925 = vpop.f32.mrb[0].mxu0
      %v4926 = vadd.f32 %v4781, %v4925
      %v4927 = vpop.f32.mrb[0].mxu0
      %4928 = vmatprep.mubr.f32.mxu0 0.0
      %4929 = vmatmul.mubr.f32.gmra.mrb[0].mxu0 %v4115
      %v4930 = vpop.f32.mrb[0].mxu0
      %v4931 = vadd.f32 %v4786, %v4930
      %v4932 = vpop.f32.mrb[0].mxu0
      %4933 = vmatprep.mubr.f32.mxu0 0.0
      %4934 = vmatmul.mubr.f32.gmra.mrb[0].mxu0 %v4116
      %v4935 = vpop.f32.mrb[0].mxu0
      %v4936 = vadd.f32 %v4791, %v4935
      %v4937 = vpop.f32.mrb[0].mxu0
      %4938 = vmatprep.mubr.f32.mxu0 0.0
      %4939 = vmatmul.mubr.f32.gmra.mrb[0].mxu0 %v4117
      %v4940 = vpop.f32.mrb[0].mxu0
      %v4941 = vadd.f32 %v4796, %v4940
      %v4942 = vpop.f32.mrb[0].mxu0
      %4943 = vmatprep.mubr.f32.mxu0 0.0
      %4944 = vmatmul.mubr.f32.gmra.mrb[0].mxu0 %v4118
      %v4945 = vpop.f32.mrb[0].mxu0
      %v4946 = vadd.f32 %v4801, %v4945
      %v4947 = vpop.f32.mrb[0].mxu0
      %4948 = vmatprep.mubr.f32.mxu0 0.0
      %4949 = vmatmul.mubr.f32.gmra.mrb[0].mxu0 %v4119
      %v4950 = vpop.f32.mrb[0].mxu0
      %v4951 = vadd.f32 %v4806, %v4950
      %v4952 = vpop.f32.mrb[0].mxu0
      %4953 = vmatprep.mubr.f32.mxu0 0.0
      %4954 = vmatmul.mubr.f32.gmra.mrb[0].mxu0 %v4120
      %v4955 = vpop.f32.mrb[0].mxu0
      %v4956 = vadd.f32 %v4811, %v4955
      %v4957 = vpop.f32.mrb[0].mxu0
      %4958 = vmatprep.mubr.f32.mxu0 0.0
      %4959 = vmatmul.mubr.f32.gmra.mrb[0].mxu0 %v4121
      %v4960 = vpop.f32.mrb[0].mxu0
      %v4961 = vadd.f32 %v4816, %v4960
      %v4962 = vpop.f32.mrb[0].mxu0
      %4963 = vmatprep.mubr.f32.mxu0 0.0
      %4964 = vmatmul.mubr.f32.gmra.mrb[0].mxu0 %v4122
      %v4965 = vpop.f32.mrb[0].mxu0
      %v4966 = vadd.f32 %v4821, %v4965
      %v4967 = vpop.f32.mrb[0].mxu0
      %4968 = vmatprep.mubr.f32.mxu0 0.0
      %4969 = vmatmul.mubr.f32.gmra.mrb[0].mxu0 %v4123
      %v4970 = vpop.f32.mrb[0].mxu0
      %v4971 = vadd.f32 %v4826, %v4970
      %v4972 = vpop.f32.mrb[0].mxu0
      %4973 = vmatprep.mubr.f32.mxu0 0.0
      %4974 = vmatmul.mubr.f32.gmra.mrb[0].mxu0 %v4124
      %v4975 = vpop.f32.mrb[0].mxu0
      %v4976 = vadd.f32 %v4831, %v4975
      %v4977 = vpop.f32.mrb[0].mxu0
      %4978 = vmatprep.mubr.f32.mxu0 0.0
      %4979 = vmatmul.mubr.f32.gmra.mrb[0].mxu0 %v4125
      %v4980 = vpop.f32.mrb[0].mxu0
      %v4981 = vadd.f32 %v4836, %v4980
      %v4982 = vpop.f32.mrb[0].mxu0
      %4983 = vmatprep.mubr.f32.mxu0 0.0
      %4984 = vmatmul.mubr.f32.gmra.mrb[0].mxu0 %v4126
      %v4985 = vpop.f32.mrb[0].mxu0
      %v4986 = vadd.f32 %v4841, %v4985
      %v4987 = vpop.f32.mrb[0].mxu0
      %4988 = vmatprep.mubr.f32.mxu0 0.0
      %4989 = vmatmul.mubr.f32.gmra.mrb[0].mxu0 %v4127
      %v4990 = vpop.f32.mrb[0].mxu0
      %v4991 = vadd.f32 %v4846, %v4990
      %v4992 = vpop.f32.mrb[0].mxu0
      %4993 = vmatprep.mubr.f32.mxu0 0.0
      %4994 = vmatmul.mubr.f32.gmra.mrb[0].mxu0 %v4128
      %v4995 = vpop.f32.mrb[0].mxu0
      %v4996 = vadd.f32 %v4851, %v4995
      %v4997 = vpop.f32.mrb[0].mxu0
      %4998 = vmatprep.mubr.f32.mxu0 0.0
      %4999 = vmatmul.mubr.f32.gmra.mrb[0].mxu0 %v4129
      %v5000 = vpop.f32.mrb[0].mxu0
      %v5001 = vadd.f32 %v4856, %v5000
      %v5002 = vpop.f32.mrb[0].mxu0
      %5003 = vdwg.mxu0
      %v5004 = vmax.f32 %v4926, 0.0
      %v5005 = vmax.f32 %v4931, 0.0
      %v5006 = vmax.f32 %v4936, 0.0
      %v5007 = vmax.f32 %v4941, 0.0
      %v5008 = vmax.f32 %v4946, 0.0
      %v5009 = vmax.f32 %v4951, 0.0
      %v5010 = vmax.f32 %v4956, 0.0
      %v5011 = vmax.f32 %v4961, 0.0
      %v5012 = vmax.f32 %v4966, 0.0
      %v5013 = vmax.f32 %v4971, 0.0
      %v5014 = vmax.f32 %v4976, 0.0
      %v5015 = vmax.f32 %v4981, 0.0
      %v5016 = vmax.f32 %v4986, 0.0
      %v5017 = vmax.f32 %v4991, 0.0
      %v5018 = vmax.f32 %v4996, 0.0
      %v5019 = vmax.f32 %v5001, 0.0
      %v5020 = vld [vmem:[%s7 + $0x180] sm:$0xff]
      %v5021 = vld [vmem:[%s7 + $0x188] sm:$0xff]
      %v5022 = vld [vmem:[%s7 + $0x190] sm:$0xff]
      %v5023 = vld [vmem:[%s7 + $0x198] sm:$0xff]
      %v5024 = vld [vmem:[%s7 + $0x1a0] sm:$0xff]
      %v5025 = vld [vmem:[%s7 + $0x1a8] sm:$0xff]
      %v5026 = vld [vmem:[%s7 + $0x1b0] sm:$0xff]
      %v5027 = vld [vmem:[%s7 + $0x1b8] sm:$0xff]
      %v5028 = vld [vmem:[%s7 + $0x1c0] sm:$0xff]
      %v5029 = vld [vmem:[%s7 + $0x1c8] sm:$0xff]
      %v5030 = vld [vmem:[%s7 + $0x1d0] sm:$0xff]
      %v5031 = vld [vmem:[%s7 + $0x1d8] sm:$0xff]
      %v5032 = vld [vmem:[%s7 + $0x1e0] sm:$0xff]
      %v5033 = vld [vmem:[%s7 + $0x1e8] sm:$0xff]
      %v5034 = vld [vmem:[%s7 + $0x1f0] sm:$0xff]
      %v5035 = vld [vmem:[%s7 + $0x1f8] sm:$0xff]
      %5036 = vmatprep.subr.mxu0 0.0
      %5037 = vmatpush1.msra.mxu0 %v5020
      %5038 = vmatprep.subr.mxu0 0.0
      %5039 = vmatpush1.msra.mxu0 %v5021
      %5040 = vmatprep.subr.mxu0 0.0
      %5041 = vmatpush1.msra.mxu0 %v5022
      %5042 = vmatprep.subr.mxu0 0.0
      %5043 = vmatpush1.msra.mxu0 %v5023
      %5044 = vmatprep.subr.mxu0 0.0
      %5045 = vmatpush1.msra.mxu0 %v5024
      %5046 = vmatprep.subr.mxu0 0.0
      %5047 = vmatpush1.msra.mxu0 %v5025
      %5048 = vmatprep.subr.mxu0 0.0
      %5049 = vmatpush1.msra.mxu0 %v5026
      %5050 = vmatprep.subr.mxu0 0.0
      %5051 = vmatpush1.msra.mxu0 %v5027
      %5052 = vmatprep.subr.mxu0 0.0
      %5053 = vmatpush1.msra.mxu0 %v5028
      %5054 = vmatprep.subr.mxu0 0.0
      %5055 = vmatpush1.msra.mxu0 %v5029
      %5056 = vmatprep.subr.mxu0 0.0
      %5057 = vmatpush1.msra.mxu0 %v5030
      %5058 = vmatprep.subr.mxu0 0.0
      %5059 = vmatpush1.msra.mxu0 %v5031
      %5060 = vmatprep.subr.mxu0 0.0
      %5061 = vmatpush1.msra.mxu0 %v5032
      %5062 = vmatprep.subr.mxu0 0.0
      %5063 = vmatpush1.msra.mxu0 %v5033
      %5064 = vmatprep.subr.mxu0 0.0
      %5065 = vmatpush1.msra.mxu0 %v5034
      %5066 = vmatprep.subr.mxu0 0.0
      %5067 = vmatpush1.msra.mxu0 %v5035
      %5068 = vmatprep.subr.mxu0 0.0
      %5069 = vmatpush1.msra.mxu0 0.0
      %5070 = vmatprep.subr.mxu0 0.0
      %5071 = vmatpush1.msra.mxu0 0.0
      %5072 = vmatprep.subr.mxu0 0.0
      %5073 = vmatpush1.msra.mxu0 0.0
      %5074 = vmatprep.subr.mxu0 0.0
      %5075 = vmatpush1.msra.mxu0 0.0
      %5076 = vmatprep.subr.mxu0 0.0
      %5077 = vmatpush1.msra.mxu0 0.0
      %5078 = vmatprep.subr.mxu0 0.0
      %5079 = vmatpush1.msra.mxu0 0.0
      %5080 = vmatprep.subr.mxu0 0.0
      %5081 = vmatpush1.msra.mxu0 0.0
      %5082 = vmatprep.subr.mxu0 0.0
      %5083 = vmatpush1.msra.mxu0 0.0
      %5084 = vmatprep.subr.mxu0 0.0
      %5085 = vmatpush1.msra.mxu0 0.0
      %5086 = vmatprep.subr.mxu0 0.0
      %5087 = vmatpush1.msra.mxu0 0.0
      %5088 = vmatprep.subr.mxu0 0.0
      %5089 = vmatpush1.msra.mxu0 0.0
      %5090 = vmatprep.subr.mxu0 0.0
      %5091 = vmatpush1.msra.mxu0 0.0
      %5092 = vmatprep.subr.mxu0 0.0
      %5093 = vmatpush1.msra.mxu0 0.0
      %5094 = vmatprep.subr.mxu0 0.0
      %5095 = vmatpush1.msra.mxu0 0.0
      %5096 = vmatprep.subr.mxu0 0.0
      %5097 = vmatpush1.msra.mxu0 0.0
      %5098 = vmatprep.subr.mxu0 0.0
      %5099 = vmatpush1.msra.mxu0 0.0
      %5100 = vmatprep.mubr.f32.mxu0 0.0
      %5101 = vmatmul.mubr.f32.gmra.mrb[0].mxu0 %v5004
      %v5102 = vpop.f32.mrb[0].mxu0
      %v5103 = vadd.f32 0.0, %v5102
      %v5104 = vpop.f32.mrb[0].mxu0
      %5105 = vmatprep.mubr.f32.mxu0 0.0
      %5106 = vmatmul.mubr.f32.gmra.mrb[0].mxu0 %v5005
      %v5107 = vpop.f32.mrb[0].mxu0
      %v5108 = vadd.f32 0.0, %v5107
      %v5109 = vpop.f32.mrb[0].mxu0
      %5110 = vmatprep.mubr.f32.mxu0 0.0
      %5111 = vmatmul.mubr.f32.gmra.mrb[0].mxu0 %v5006
      %v5112 = vpop.f32.mrb[0].mxu0
      %v5113 = vadd.f32 0.0, %v5112
      %v5114 = vpop.f32.mrb[0].mxu0
      %5115 = vmatprep.mubr.f32.mxu0 0.0
      %5116 = vmatmul.mubr.f32.gmra.mrb[0].mxu0 %v5007
      %v5117 = vpop.f32.mrb[0].mxu0
      %v5118 = vadd.f32 0.0, %v5117
      %v5119 = vpop.f32.mrb[0].mxu0
      %5120 = vmatprep.mubr.f32.mxu0 0.0
      %5121 = vmatmul.mubr.f32.gmra.mrb[0].mxu0 %v5008
      %v5122 = vpop.f32.mrb[0].mxu0
      %v5123 = vadd.f32 0.0, %v5122
      %v5124 = vpop.f32.mrb[0].mxu0
      %5125 = vmatprep.mubr.f32.mxu0 0.0
      %5126 = vmatmul.mubr.f32.gmra.mrb[0].mxu0 %v5009
      %v5127 = vpop.f32.mrb[0].mxu0
      %v5128 = vadd.f32 0.0, %v5127
      %v5129 = vpop.f32.mrb[0].mxu0
      %5130 = vmatprep.mubr.f32.mxu0 0.0
      %5131 = vmatmul.mubr.f32.gmra.mrb[0].mxu0 %v5010
      %v5132 = vpop.f32.mrb[0].mxu0
      %v5133 = vadd.f32 0.0, %v5132
      %v5134 = vpop.f32.mrb[0].mxu0
      %5135 = vmatprep.mubr.f32.mxu0 0.0
      %5136 = vmatmul.mubr.f32.gmra.mrb[0].mxu0 %v5011
      %v5137 = vpop.f32.mrb[0].mxu0
      %v5138 = vadd.f32 0.0, %v5137
      %v5139 = vpop.f32.mrb[0].mxu0
      %5140 = vmatprep.mubr.f32.mxu0 0.0
      %5141 = vmatmul.mubr.f32.gmra.mrb[0].mxu0 %v5012
      %v5142 = vpop.f32.mrb[0].mxu0
      %v5143 = vadd.f32 0.0, %v5142
      %v5144 = vpop.f32.mrb[0].mxu0
      %5145 = vmatprep.mubr.f32.mxu0 0.0
      %5146 = vmatmul.mubr.f32.gmra.mrb[0].mxu0 %v5013
      %v5147 = vpop.f32.mrb[0].mxu0
      %v5148 = vadd.f32 0.0, %v5147
      %v5149 = vpop.f32.mrb[0].mxu0
      %5150 = vmatprep.mubr.f32.mxu0 0.0
      %5151 = vmatmul.mubr.f32.gmra.mrb[0].mxu0 %v5014
      %v5152 = vpop.f32.mrb[0].mxu0
      %v5153 = vadd.f32 0.0, %v5152
      %v5154 = vpop.f32.mrb[0].mxu0
      %5155 = vmatprep.mubr.f32.mxu0 0.0
      %5156 = vmatmul.mubr.f32.gmra.mrb[0].mxu0 %v5015
      %v5157 = vpop.f32.mrb[0].mxu0
      %v5158 = vadd.f32 0.0, %v5157
      %v5159 = vpop.f32.mrb[0].mxu0
      %5160 = vmatprep.mubr.f32.mxu0 0.0
      %5161 = vmatmul.mubr.f32.gmra.mrb[0].mxu0 %v5016
      %v5162 = vpop.f32.mrb[0].mxu0
      %v5163 = vadd.f32 0.0, %v5162
      %v5164 = vpop.f32.mrb[0].mxu0
      %5165 = vmatprep.mubr.f32.mxu0 0.0
      %5166 = vmatmul.mubr.f32.gmra.mrb[0].mxu0 %v5017
      %v5167 = vpop.f32.mrb[0].mxu0
      %v5168 = vadd.f32 0.0, %v5167
      %v5169 = vpop.f32.mrb[0].mxu0
      %5170 = vmatprep.mubr.f32.mxu0 0.0
      %5171 = vmatmul.mubr.f32.gmra.mrb[0].mxu0 %v5018
      %v5172 = vpop.f32.mrb[0].mxu0
      %v5173 = vadd.f32 0.0, %v5172
      %v5174 = vpop.f32.mrb[0].mxu0
      %5175 = vmatprep.mubr.f32.mxu0 0.0
      %5176 = vmatmul.mubr.f32.gmra.mrb[0].mxu0 %v5019
      %v5177 = vpop.f32.mrb[0].mxu0
      %v5178 = vadd.f32 0.0, %v5177
      %v5179 = vpop.f32.mrb[0].mxu0
      %5180 = vdwg.mxu0
      %v5181 = vadd.f32 %v3983, %v5103
      %v5182 = vadd.f32 %v3984, %v5108
      %v5183 = vadd.f32 %v3985, %v5113
      %v5184 = vadd.f32 %v3986, %v5118
      %v5185 = vadd.f32 %v3987, %v5123
      %v5186 = vadd.f32 %v3988, %v5128
      %v5187 = vadd.f32 %v3989, %v5133
      %v5188 = vadd.f32 %v3990, %v5138
      %v5189 = vadd.f32 %v3991, %v5143
      %v5190 = vadd.f32 %v3992, %v5148
      %v5191 = vadd.f32 %v3993, %v5153
      %v5192 = vadd.f32 %v3994, %v5158
      %v5193 = vadd.f32 %v3995, %v5163
      %v5194 = vadd.f32 %v3996, %v5168
      %v5195 = vadd.f32 %v3997, %v5173
      %v5196 = vadd.f32 %v3998, %v5178
      %v5197 = vld [vmem:[#allocation4] sm:$0x1]
      %v5199 = vlaneseq
      %v5200 = vshrl.u32 %v5199, 7
      %v5201 = vsub.s32 0, %v5200
      %v5202 = vrot.slane %v5197, %v5201
      %v5204 = vadd.f32 %v5181, %v5202
      %v5205 = vadd.f32 %v5182, %v5202
      %v5206 = vadd.f32 %v5183, %v5202
      %v5207 = vadd.f32 %v5184, %v5202
      %v5208 = vadd.f32 %v5185, %v5202
      %v5209 = vadd.f32 %v5186, %v5202
      %v5210 = vadd.f32 %v5187, %v5202
      %v5211 = vadd.f32 %v5188, %v5202
      %v5212 = vadd.f32 %v5189, %v5202
      %v5213 = vadd.f32 %v5190, %v5202
      %v5214 = vadd.f32 %v5191, %v5202
      %v5215 = vadd.f32 %v5192, %v5202
      %v5216 = vadd.f32 %v5193, %v5202
      %v5217 = vadd.f32 %v5194, %v5202
      %v5218 = vadd.f32 %v5195, %v5202
      %v5219 = vadd.f32 %v5196, %v5202
      %v5220 = vmax.f32 %v5204, 0.0
      %v5221 = vmax.f32 %v5205, 0.0
      %v5222 = vmax.f32 %v5206, 0.0
      %v5223 = vmax.f32 %v5207, 0.0
      %v5224 = vmax.f32 %v5208, 0.0
      %v5225 = vmax.f32 %v5209, 0.0
      %v5226 = vmax.f32 %v5210, 0.0
      %v5227 = vmax.f32 %v5211, 0.0
      %v5228 = vmax.f32 %v5212, 0.0
      %v5229 = vmax.f32 %v5213, 0.0
      %v5230 = vmax.f32 %v5214, 0.0
      %v5231 = vmax.f32 %v5215, 0.0
      %v5232 = vmax.f32 %v5216, 0.0
      %v5233 = vmax.f32 %v5217, 0.0
      %v5234 = vmax.f32 %v5218, 0.0
      %v5235 = vmax.f32 %v5219, 0.0
      %5236 = vst [vmem:[%s322] sm:$0xff] %v5220
      %5237 = vst [vmem:[%s322 + $0x8] sm:$0xff] %v5221
      %5238 = vst [vmem:[%s322 + $0x10] sm:$0xff] %v5222
      %5239 = vst [vmem:[%s322 + $0x18] sm:$0xff] %v5223
      %5240 = vst [vmem:[%s322 + $0x20] sm:$0xff] %v5224
      %5241 = vst [vmem:[%s322 + $0x28] sm:$0xff] %v5225
      %5242 = vst [vmem:[%s322 + $0x30] sm:$0xff] %v5226
      %5243 = vst [vmem:[%s322 + $0x38] sm:$0xff] %v5227
      %5244 = vst [vmem:[%s322 + $0x40] sm:$0xff] %v5228
      %5245 = vst [vmem:[%s322 + $0x48] sm:$0xff] %v5229
      %5246 = vst [vmem:[%s322 + $0x50] sm:$0xff] %v5230
      %5247 = vst [vmem:[%s322 + $0x58] sm:$0xff] %v5231
      %5248 = vst [vmem:[%s322 + $0x60] sm:$0xff] %v5232
      %5249 = vst [vmem:[%s322 + $0x68] sm:$0xff] %v5233
      %5250 = vst [vmem:[%s322 + $0x70] sm:$0xff] %v5234
      %5251 = vst [vmem:[%s322 + $0x78] sm:$0xff] %v5235
      %s5252 = smul.u32 16, %s25
      %p5253 = scmp.lt.s32.totalorder %s24, 1
      %s5254 = scalar_select %p5253, %s24, 1
      %p5255 = scmp.lt.s32.totalorder %s5252, 31
      %s5256 = scalar_select %p5255, %s5252, 31
      %s5257 = smul.addr %s5254, 32
      %s5258 = sadd.s32 %s5256, %s5257
      %s5259 = smul.addr %s5258, 8
      %s5260 = scalar_lea.vmem %s9, %s5259
      // Predicated region
      $region139: #{aspp_forward.1} parent=51 // pred_check
        %p5261 = pneg %p225
      $region140: #{aspp_forward.1} parent=51 // pred_check_branch
        %5263 = sbr.rel (%p5261) target = $region142
      $region141: #{aspp_forward.1} parent=51 // pred_region
        %s5264 = smul.u32 16, %s25
      $region142: #{aspp_forward.1} parent=51 // pred_fallthru
        _
    $region52: #{aspp_forward.1} parent=5 // pred_fallthru
      _
    %p5265 = scmp.le.s32.totalorder 2, %s15
    // Predicated region
    $region143: #{aspp_forward.1} parent=5 // pred_check
      %p5266 = pneg %p5265
    $region144: #{aspp_forward.1} parent=5 // pred_check_branch
      %5268 = sbr.rel (%p5266) target = $region146
    $region145: #{aspp_forward.1} parent=5 // pred_region
      %s5269 = ssub.s32 %s15, 2
      // Predicated region
      $region147: #{aspp_forward.1} parent=145 // pred_check
        %p5270 = pneg %p231
      $region148: #{aspp_forward.1} parent=145 // pred_check_branch
        %5272 = sbr.rel (%p5270) target = $region150
      $region149: #{aspp_forward.1} parent=145 // pred_region
        %s5273 = smul.u32 16, %s27
        %p5274 = scmp.lt.s32.totalorder %s26, 1
        %s5275 = scalar_select %p5274, %s26, 1
        %p5276 = scmp.lt.s32.totalorder %s5273, 31
        %s5277 = scalar_select %p5276, %s5273, 31
        %s5278 = smul.addr %s5275, 32
        %s5279 = sadd.s32 %s5277, %s5278
        %s5280 = smul.addr %s5279, 8
        %s5281 = scalar_lea.vmem %s9, %s5280
      $region150: #{aspp_forward.1} parent=145 // pred_fallthru
        _
    $region146: #{aspp_forward.1} parent=5 // pred_fallthru
      _
  $region6: #{aspp_forward.1} parent=0 // loop_footer
    %s19 = sadd.s32 1, %s15
  $region7: #{aspp_forward.1} parent=0 // loop_footer_branch
    %14 = sbr.rel target = $region3
  $region8: #{aspp_forward.1} parent=0 // loop_exit
    _
  %5282 = vsyncmov [#allocation3]
  %s5283 = vpop.sfrf %5282
  %p5284 = scmp.eq.s32.totalorder %s5283, 0
  %p5285 = pneg %p5284
  %5287 = shalt.err (%p5285)
  %s5288 = scalar_lea.sflag [#allocation3], 1
  %5289 = vsyncmov %s5288
  %s5290 = vpop.sfrf %5289
  %p5291 = scmp.eq.s32.totalorder %s5290, 0
  %p5292 = pneg %p5291
  %5294 = shalt.err (%p5292)

</llo_original>
